<compile_context>
chip_gen: v5e
topology: v5e:2x2
jax: 0.10.0
libtpu: 0.0.40
codegen_flags: <defaults>
</compile_context>

<pallas_src>
import numpy as np
import jax
import jax.numpy as jnp
from jax.experimental import pallas as pl
from jax.experimental.pallas import tpu as pltpu

# ---------------- small, module-consistent hyper-parameters ----------------
B = 2
C_IMG, H_IMG, W_IMG = 4, 16, 16
D_IMG = 32            # stand-in for the 512-dim ResNet18 feature
H_BERT = 32           # stand-in for BERT hidden_size (768)
D_MODEL = D_IMG + H_BERT          # concatenatedReprSize
MAX_LEN = 8
NUM_HEADS = 4
NUM_LAYERS = 2
VOCAB = 64            # answer vocab (decoder embedding + out layer)
VOCAB_PAD = 128       # out-layer columns padded to 128 lanes (sliced off in wrapper)
Q_VOCAB = 50          # question token vocab for the BERT-stub embedding
DFF_DEC = 128         # decoder feed-forward width (stand-in for 2048)
DFF_ENC = 64          # encoder-stub feed-forward width
EPS = 1e-5

# MXU-native operand dtype on v5e/v6e/v7x; accumulation stays float32.
# Set to jnp.float32 for bit-faithful f32 matmuls.
MXU_DTYPE = jnp.bfloat16

# ------- canonical flattening order (wrapper and kernel both use these) -------
ATTN_KEYS = ("q_w", "q_b", "k_w", "k_b", "v_w", "v_b", "o_w", "o_b")
IMG_KEYS = ("w", "b", "bn_g", "bn_b", "bn_m", "bn_v")
QENC_KEYS = ATTN_KEYS + ("ln1_w", "ln1_b", "f1_w", "f1_b", "f2_w", "f2_b",
                         "ln2_w", "ln2_b", "bn_g", "bn_b", "bn_m", "bn_v")
DEC_KEYS = (tuple("sa_" + k for k in ATTN_KEYS) + ("ln1_w", "ln1_b")
            + tuple("ca_" + k for k in ATTN_KEYS) + ("ln2_w", "ln2_b")
            + ("f1_w", "f1_b", "f2_w", "f2_b", "ln3_w", "ln3_b"))
OUT_KEYS = ("w", "b")


# ---------------- helpers traced inside the fused kernel ----------------
def _dot(a, b):
    """2-D matmul with bf16 operands and f32 accumulation."""
    return jnp.dot(a.astype(MXU_DTYPE), b.astype(MXU_DTYPE),
                   preferred_element_type=jnp.float32)


def _bdot_qk(q, k):
    """(B, Lq, hd) x (B, Lk, hd) -> (B, Lq, Lk), batched over B."""
    return jnp.einsum('bqd,bkd->bqk', q.astype(MXU_DTYPE), k.astype(MXU_DTYPE),
                      preferred_element_type=jnp.float32)


def _bdot_pv(p, v):
    """(B, Lq, Lk) x (B, Lk, hd) -> (B, Lq, hd), batched over B."""
    return jnp.einsum('bqk,bkd->bqd', p.astype(MXU_DTYPE), v.astype(MXU_DTYPE),
                      preferred_element_type=jnp.float32)


def _linear(x, w_ref, b_ref):
    return _dot(x, w_ref[...]) + b_ref[...]


def _layer_norm(x, w_ref, b_ref):
    mu = jnp.mean(x, axis=-1, keepdims=True)
    var = jnp.mean(jnp.square(x - mu), axis=-1, keepdims=True)
    return (x - mu) * jax.lax.rsqrt(var + EPS) * w_ref[...] + b_ref[...]


def _batch_norm(x, p):
    """BatchNorm1d, eval mode (running statistics), per-feature affine."""
    return (p["bn_g"][...] * (x - p["bn_m"][...])
            * jax.lax.rsqrt(p["bn_v"][...] + EPS) + p["bn_b"][...])


def _mha(q_flat, kv_flat, bsz, lq, lk, p, pre, mask_full=None):
    """PyTorch-style MultiheadAttention on flattened (batch*len, d) activations.

    Heads are pre-split host-side: wq/wk/wv (nh, d, hd), biases (nh, 1, hd),
    wo (nh, hd, d).  Per-head outputs are accumulated straight into the
    out-projection, so there is no in-kernel lane slicing / concat; scores and
    value contractions are batched over the batch axis.
    """
    wq, wk, wv, wo = p[pre + "q_w"], p[pre + "k_w"], p[pre + "v_w"], p[pre + "o_w"]
    bq, bk, bv = p[pre + "q_b"], p[pre + "k_b"], p[pre + "v_b"]
    nh, _, hd = wq.shape
    d = wo.shape[-1]
    scale = 1.0 / float(np.sqrt(hd))
    o = jnp.zeros((bsz * lq, d), jnp.float32)
    for h in range(nh):                       # nh = 4, fully unrolled, tiny
        qh = (_dot(q_flat, wq[h]) + bq[h]).reshape(bsz, lq, hd)
        kh = (_dot(kv_flat, wk[h]) + bk[h]).reshape(bsz, lk, hd)
        vh = (_dot(kv_flat, wv[h]) + bv[h]).reshape(bsz, lk, hd)
        s = _bdot_qk(qh, kh) * scale                           # (B, Lq, Lk) f32
        if mask_full is not None:
            s = s + mask_full                                  # broadcast hoisted
        s = s - jnp.max(s, axis=-1, keepdims=True)
        pr = jnp.exp(s)
        pr = pr * pl.reciprocal(jnp.sum(pr, axis=-1, keepdims=True), approx=True)
        oh = _bdot_pv(pr, vh).reshape(bsz * lq, hd)
        o = o + _dot(oh, wo[h])
    return o + p[pre + "o_b"][...]


def _ffn_relu(x, p):
    h = jnp.maximum(_linear(x, p["f1_w"], p["f1_b"]), 0.0)
    return _linear(h, p["f2_w"], p["f2_b"])


def _image_encoder(img_ref, p):
    # TODO(synk): pretrained ResNet18 backbone replaced by GAP + linear projection stub.
    feat = jnp.mean(img_ref[...], axis=-1)                     # (B, C)
    return _batch_norm(_linear(feat, p["w"], p["b"]), p)       # (B, D_IMG)


def _question_encoder(tok_ref, mask_ref, p):
    # TODO(synk): pretrained multi-layer BERT reduced to one masked self-attn + FFN block.
    bsz, seq, hdim = tok_ref.shape
    mask_full = jnp.broadcast_to(mask_ref[...], (bsz, seq, seq))   # hoisted once
    x = tok_ref[...].reshape(bsz * seq, hdim)
    sa = _mha(x, x, bsz, seq, seq, p, "", mask_full)
    x = _layer_norm(x + sa, p["ln1_w"], p["ln1_b"])
    x = _layer_norm(x + _ffn_relu(x, p), p["ln2_w"], p["ln2_b"])
    return _batch_norm(x, p)                                   # (B*L, H_BERT)


def _decoder_layer(x, mem, bsz, seq, lp):
    sa = _mha(x, x, bsz, seq, seq, lp, "sa_")
    x = _layer_norm(x + sa, lp["ln1_w"], lp["ln1_b"])
    ca = _mha(x, mem, bsz, seq, seq, lp, "ca_")
    x = _layer_norm(x + ca, lp["ln2_w"], lp["ln2_b"])
    return _layer_norm(x + _ffn_relu(x, lp), lp["ln3_w"], lp["ln3_b"])


# ---------------- the single fused Pallas kernel ----------------
def _vqa_fused_kernel(*refs):
    out_ref = refs[-1]
    it = iter(refs[:-1])
    img_ref = next(it)                              # (B, C, H*W)
    tok_ref = next(it)                              # (B, L, H_BERT)
    mask_ref = next(it)                             # (B, 1, L) additive bias
    tgt_ref = next(it)                              # (B, L, D_MODEL)
    img_p = {k: next(it) for k in IMG_KEYS}
    q_p = {k: next(it) for k in QENC_KEYS}
    dec_ps = [{k: next(it) for k in DEC_KEYS} for _ in range(NUM_LAYERS)]
    out_p = {k: next(it) for k in OUT_KEYS}

    bsz, seq, _ = tok_ref.shape

    # image branch: ResNet18-stub + imageBatchNorm
    img_e = _image_encoder(img_ref, img_p)                      # (B, D_IMG)
    # question branch: BERT-stub + questionBatchNorm
    q_hid = _question_encoder(tok_ref, mask_ref, q_p)           # (B*L, H_BERT)

    # memory = cat(imageEmbed.repeat(1, L, 1), questionHidden) built in VMEM
    img_rep = jnp.broadcast_to(img_e[:, None, :], (bsz, seq, img_e.shape[-1]))
    mem = jnp.concatenate([img_rep.reshape(bsz * seq, -1), q_hid], axis=-1)

    # transformer decoder (targetMask is None branch: no tgt / memory masks)
    x = tgt_ref[...].reshape(bsz * seq, -1)
    for lp in dec_ps:
        x = _decoder_layer(x, mem, bsz, seq, lp)

    # out layer: weight/bias padded to VOCAB_PAD=128 -> lane-dense store
    logits = _linear(x, out_p["w"], out_p["b"])                 # (B*L, VOCAB_PAD)
    out_ref[...] = logits.reshape(bsz, seq, VOCAB_PAD)


# ---------------- wrapper: one pallas_call for the whole forward ----------------
def vqa_forward(params, image, que_input_id, que_attention_mask, target):
    bsz = image.shape[0]
    img = image.reshape(bsz, C_IMG, H_IMG * W_IMG)
    tok = jnp.take(params["question"]["emb"], que_input_id, axis=0)       # (B, L, H)
    mask_bias = ((que_attention_mask.astype(jnp.float32) - 1.0) * 1e9)[:, None, :]
    tgt = jnp.take(params["dec_emb"], target, axis=0) * float(np.sqrt(D_MODEL))

    flat = [img, tok, mask_bias, tgt]
    flat += [params["image"][k] for k in IMG_KEYS]
    flat += [params["question"][k] for k in QENC_KEYS]
    for lp in params["dec_layers"]:
        flat += [lp[k] for k in DEC_KEYS]
    flat += [params["out"][k] for k in OUT_KEYS]

    # TODO(synk): on v7x a batch grid axis with dimension_semantics=("parallel",)
    # (or pl.core_map) could occupy the second TensorCore; B=2 is too small to matter.
    out_pad = pl.pallas_call(
        _vqa_fused_kernel,
        out_shape=jax.ShapeDtypeStruct((bsz, MAX_LEN, VOCAB_PAD), jnp.float32),
        compiler_params=pltpu.CompilerParams(vmem_limit_bytes=32 * 1024 * 1024),
    )(*flat)
    return out_pad[:, :, :VOCAB]


# ---------------- deterministic parameter init ----------------
def _init_attention(p, d, nh):
    """Create PyTorch-style combined qkv / out projections, then pre-split them
    host-side into per-head (nh, d, hd) / (nh, hd, d) arrays so the kernel never
    slices weight lanes (pure layout plumbing, numerically identical)."""
    hd = d // nh
    in_w = p((d, 3 * d))            # transposed in_proj_weight
    in_b = p((1, 3 * d))
    out_w = p((d, d))               # transposed out_proj.weight
    out_b = p((1, d))

    def split_w(block):             # (d, d) -> (nh, d, hd)
        return block.reshape(d, nh, hd).transpose(1, 0, 2)

    def split_b(block):             # (1, d) -> (nh, 1, hd)
        return block.reshape(1, nh, hd).transpose(1, 0, 2)

    return dict(
        q_w=split_w(in_w[:, :d]), q_b=split_b(in_b[:, :d]),
        k_w=split_w(in_w[:, d:2 * d]), k_b=split_b(in_b[:, d:2 * d]),
        v_w=split_w(in_w[:, 2 * d:]), v_b=split_b(in_b[:, 2 * d:]),
        o_w=out_w.reshape(nh, hd, d), o_b=out_b,
    )


def init_params(key):
    keys = iter(jax.random.split(key, 512))

    def p(shape, scale=0.05):
        return scale * jax.random.normal(next(keys), shape, dtype=jnp.float32)

    params = {}
    params["image"] = dict(
        w=p((C_IMG, D_IMG)), b=p((1, D_IMG)),
        bn_g=1.0 + p((1, D_IMG)), bn_b=p((1, D_IMG)),
        bn_m=p((1, D_IMG)), bn_v=1.0 + jnp.abs(p((1, D_IMG))),
    )
    q_attn = _init_attention(p, H_BERT, NUM_HEADS)
    params["question"] = dict(
        emb=p((Q_VOCAB, H_BERT), scale=0.1),
        **q_attn,
        ln1_w=1.0 + p((1, H_BERT)), ln1_b=p((1, H_BERT)),
        f1_w=p((H_BERT, DFF_ENC)), f1_b=p((1, DFF_ENC)),
        f2_w=p((DFF_ENC, H_BERT)), f2_b=p((1, H_BERT)),
        ln2_w=1.0 + p((1, H_BERT)), ln2_b=p((1, H_BERT)),
        bn_g=1.0 + p((1, H_BERT)), bn_b=p((1, H_BERT)),
        bn_m=p((1, H_BERT)), bn_v=1.0 + jnp.abs(p((1, H_BERT))),
    )
    params["dec_emb"] = p((VOCAB, D_MODEL), scale=0.1)
    params["dec_layers"] = []
    for _ in range(NUM_LAYERS):
        sa = _init_attention(p, D_MODEL, NUM_HEADS)
        ca = _init_attention(p, D_MODEL, NUM_HEADS)
        layer = {("sa_" + k): v for k, v in sa.items()}
        layer.update({("ca_" + k): v for k, v in ca.items()})
        layer.update(dict(
            ln1_w=1.0 + p((1, D_MODEL)), ln1_b=p((1, D_MODEL)),
            ln2_w=1.0 + p((1, D_MODEL)), ln2_b=p((1, D_MODEL)),
            f1_w=p((D_MODEL, DFF_DEC)), f1_b=p((1, DFF_DEC)),
            f2_w=p((DFF_DEC, D_MODEL)), f2_b=p((1, D_MODEL)),
            ln3_w=1.0 + p((1, D_MODEL)), ln3_b=p((1, D_MODEL)),
        ))
        params["dec_layers"].append(layer)
    # out layer, padded host-side to a lane-dense 128-column store (zeros beyond VOCAB)
    ow, ob = p((D_MODEL, VOCAB)), p((1, VOCAB))
    params["out"] = dict(
        w=jnp.pad(ow, ((0, 0), (0, VOCAB_PAD - VOCAB))),
        b=jnp.pad(ob, ((0, 0), (0, VOCAB_PAD - VOCAB))),
    )
    return params


if __name__ == "__main__":
    key = jax.random.PRNGKey(0)
    pkey, ikey, qkey, tkey = jax.random.split(key, 4)
    params = init_params(pkey)

    image = jax.random.normal(ikey, (B, C_IMG, H_IMG, W_IMG), dtype=jnp.float32)
    que_input_id = jax.random.randint(qkey, (B, MAX_LEN), 0, Q_VOCAB, dtype=jnp.int32)
    que_len = jnp.array([MAX_LEN, MAX_LEN - 3])
    que_attention_mask = (jnp.arange(MAX_LEN)[None, :] < que_len[:, None]).astype(jnp.float32)
    target = jax.random.randint(tkey, (B, MAX_LEN), 0, VOCAB, dtype=jnp.int32)

    out = jax.jit(vqa_forward)(params, image, que_input_id, que_attention_mask, target)
    out = jax.block_until_ready(out)

    assert out.shape == (B, MAX_LEN, VOCAB), out.shape
    assert bool(jnp.all(jnp.isfinite(out)))
    print("KERNEL_OK")
</pallas_src>

<mosaic_0001>
module attributes {stable_mosaic.version = 11 : i64} {
  func.func @_vqa_fused_kernel(%arg0: memref<2x4x256xf32, #tpu.memory_space<vmem>>, %arg1: memref<2x8x32xf32, #tpu.memory_space<vmem>>, %arg2: memref<2x1x8xf32, #tpu.memory_space<vmem>>, %arg3: memref<2x8x64xf32, #tpu.memory_space<vmem>>, %arg4: memref<4x32xf32, #tpu.memory_space<vmem>>, %arg5: memref<1x32xf32, #tpu.memory_space<vmem>>, %arg6: memref<1x32xf32, #tpu.memory_space<vmem>>, %arg7: memref<1x32xf32, #tpu.memory_space<vmem>>, %arg8: memref<1x32xf32, #tpu.memory_space<vmem>>, %arg9: memref<1x32xf32, #tpu.memory_space<vmem>>, %arg10: memref<4x32x8xf32, #tpu.memory_space<vmem>>, %arg11: memref<4x1x8xf32, #tpu.memory_space<vmem>>, %arg12: memref<4x32x8xf32, #tpu.memory_space<vmem>>, %arg13: memref<4x1x8xf32, #tpu.memory_space<vmem>>, %arg14: memref<4x32x8xf32, #tpu.memory_space<vmem>>, %arg15: memref<4x1x8xf32, #tpu.memory_space<vmem>>, %arg16: memref<4x8x32xf32, #tpu.memory_space<vmem>>, %arg17: memref<1x32xf32, #tpu.memory_space<vmem>>, %arg18: memref<1x32xf32, #tpu.memory_space<vmem>>, %arg19: memref<1x32xf32, #tpu.memory_space<vmem>>, %arg20: memref<32x64xf32, #tpu.memory_space<vmem>>, %arg21: memref<1x64xf32, #tpu.memory_space<vmem>>, %arg22: memref<64x32xf32, #tpu.memory_space<vmem>>, %arg23: memref<1x32xf32, #tpu.memory_space<vmem>>, %arg24: memref<1x32xf32, #tpu.memory_space<vmem>>, %arg25: memref<1x32xf32, #tpu.memory_space<vmem>>, %arg26: memref<1x32xf32, #tpu.memory_space<vmem>>, %arg27: memref<1x32xf32, #tpu.memory_space<vmem>>, %arg28: memref<1x32xf32, #tpu.memory_space<vmem>>, %arg29: memref<1x32xf32, #tpu.memory_space<vmem>>, %arg30: memref<4x64x16xf32, #tpu.memory_space<vmem>>, %arg31: memref<4x1x16xf32, #tpu.memory_space<vmem>>, %arg32: memref<4x64x16xf32, #tpu.memory_space<vmem>>, %arg33: memref<4x1x16xf32, #tpu.memory_space<vmem>>, %arg34: memref<4x64x16xf32, #tpu.memory_space<vmem>>, %arg35: memref<4x1x16xf32, #tpu.memory_space<vmem>>, %arg36: memref<4x16x64xf32, #tpu.memory_space<vmem>>, %arg37: memref<1x64xf32, #tpu.memory_space<vmem>>, %arg38: memref<1x64xf32, #tpu.memory_space<vmem>>, %arg39: memref<1x64xf32, #tpu.memory_space<vmem>>, %arg40: memref<4x64x16xf32, #tpu.memory_space<vmem>>, %arg41: memref<4x1x16xf32, #tpu.memory_space<vmem>>, %arg42: memref<4x64x16xf32, #tpu.memory_space<vmem>>, %arg43: memref<4x1x16xf32, #tpu.memory_space<vmem>>, %arg44: memref<4x64x16xf32, #tpu.memory_space<vmem>>, %arg45: memref<4x1x16xf32, #tpu.memory_space<vmem>>, %arg46: memref<4x16x64xf32, #tpu.memory_space<vmem>>, %arg47: memref<1x64xf32, #tpu.memory_space<vmem>>, %arg48: memref<1x64xf32, #tpu.memory_space<vmem>>, %arg49: memref<1x64xf32, #tpu.memory_space<vmem>>, %arg50: memref<64x128xf32, #tpu.memory_space<vmem>>, %arg51: memref<1x128xf32, #tpu.memory_space<vmem>>, %arg52: memref<128x64xf32, #tpu.memory_space<vmem>>, %arg53: memref<1x64xf32, #tpu.memory_space<vmem>>, %arg54: memref<1x64xf32, #tpu.memory_space<vmem>>, %arg55: memref<1x64xf32, #tpu.memory_space<vmem>>, %arg56: memref<4x64x16xf32, #tpu.memory_space<vmem>>, %arg57: memref<4x1x16xf32, #tpu.memory_space<vmem>>, %arg58: memref<4x64x16xf32, #tpu.memory_space<vmem>>, %arg59: memref<4x1x16xf32, #tpu.memory_space<vmem>>, %arg60: memref<4x64x16xf32, #tpu.memory_space<vmem>>, %arg61: memref<4x1x16xf32, #tpu.memory_space<vmem>>, %arg62: memref<4x16x64xf32, #tpu.memory_space<vmem>>, %arg63: memref<1x64xf32, #tpu.memory_space<vmem>>, %arg64: memref<1x64xf32, #tpu.memory_space<vmem>>, %arg65: memref<1x64xf32, #tpu.memory_space<vmem>>, %arg66: memref<4x64x16xf32, #tpu.memory_space<vmem>>, %arg67: memref<4x1x16xf32, #tpu.memory_space<vmem>>, %arg68: memref<4x64x16xf32, #tpu.memory_space<vmem>>, %arg69: memref<4x1x16xf32, #tpu.memory_space<vmem>>, %arg70: memref<4x64x16xf32, #tpu.memory_space<vmem>>, %arg71: memref<4x1x16xf32, #tpu.memory_space<vmem>>, %arg72: memref<4x16x64xf32, #tpu.memory_space<vmem>>, %arg73: memref<1x64xf32, #tpu.memory_space<vmem>>, %arg74: memref<1x64xf32, #tpu.memory_space<vmem>>, %arg75: memref<1x64xf32, #tpu.memory_space<vmem>>, %arg76: memref<64x128xf32, #tpu.memory_space<vmem>>, %arg77: memref<1x128xf32, #tpu.memory_space<vmem>>, %arg78: memref<128x64xf32, #tpu.memory_space<vmem>>, %arg79: memref<1x64xf32, #tpu.memory_space<vmem>>, %arg80: memref<1x64xf32, #tpu.memory_space<vmem>>, %arg81: memref<1x64xf32, #tpu.memory_space<vmem>>, %arg82: memref<64x128xf32, #tpu.memory_space<vmem>>, %arg83: memref<1x128xf32, #tpu.memory_space<vmem>>, %arg84: memref<2x8x128xf32, #tpu.memory_space<vmem>>) attributes {dimension_semantics = [], scalar_prefetch = 0 : i64, scratch_operands = 0 : i64, tpu.core_type = #tpu.core_type<tc>} {
    %c0 = arith.constant 0 : index
    %c0_0 = arith.constant 0 : index
    %c0_1 = arith.constant 0 : index
    %0 = vector.load %arg0[%c0, %c0_0, %c0_1] : memref<2x4x256xf32, #tpu.memory_space<vmem>>, vector<2x4x256xf32>
    %cst = arith.constant dense<0.000000e+00> : vector<2x4xf32>
    %1 = vector.multi_reduction <add>, %0, %cst [2] : vector<2x4x256xf32> to vector<2x4xf32>
    %cst_2 = arith.constant 2.560000e+02 : f32
    %2 = vector.broadcast %cst_2 : f32 to vector<2x4xf32>
    %3 = arith.divf %1, %2 : vector<2x4xf32>
    %c0_3 = arith.constant 0 : index
    %c0_4 = arith.constant 0 : index
    %4 = vector.load %arg4[%c0_3, %c0_4] : memref<4x32xf32, #tpu.memory_space<vmem>>, vector<4x32xf32>
    %5 = arith.truncf %3 : vector<2x4xf32> to vector<2x4xbf16>
    %6 = arith.truncf %4 : vector<4x32xf32> to vector<4x32xbf16>
    %cst_5 = arith.constant dense<0.000000e+00> : vector<2x32xf32>
    %7 = tpu.matmul %5, %6, %cst_5 {dimension_numbers = #tpu.dot_dimension_numbers<[1], [0], [0], [1], [0, 0, 1, 1], [], []>} : vector<2x4xbf16>, vector<4x32xbf16>, vector<2x32xf32> -> vector<2x32xf32>
    %c0_6 = arith.constant 0 : index
    %c0_7 = arith.constant 0 : index
    %8 = vector.load %arg5[%c0_6, %c0_7] : memref<1x32xf32, #tpu.memory_space<vmem>>, vector<1x32xf32>
    %9 = vector.broadcast %8 : vector<1x32xf32> to vector<2x32xf32>
    %10 = arith.addf %7, %9 : vector<2x32xf32>
    %c0_8 = arith.constant 0 : index
    %c0_9 = arith.constant 0 : index
    %11 = vector.load %arg6[%c0_8, %c0_9] : memref<1x32xf32, #tpu.memory_space<vmem>>, vector<1x32xf32>
    %c0_10 = arith.constant 0 : index
    %c0_11 = arith.constant 0 : index
    %12 = vector.load %arg8[%c0_10, %c0_11] : memref<1x32xf32, #tpu.memory_space<vmem>>, vector<1x32xf32>
    %13 = vector.broadcast %12 : vector<1x32xf32> to vector<2x32xf32>
    %14 = arith.subf %10, %13 : vector<2x32xf32>
    %15 = vector.broadcast %11 : vector<1x32xf32> to vector<2x32xf32>
    %16 = arith.mulf %15, %14 : vector<2x32xf32>
    %c0_12 = arith.constant 0 : index
    %c0_13 = arith.constant 0 : index
    %17 = vector.load %arg9[%c0_12, %c0_13] : memref<1x32xf32, #tpu.memory_space<vmem>>, vector<1x32xf32>
    %cst_14 = arith.constant 9.99999974E-6 : f32
    %18 = vector.broadcast %cst_14 : f32 to vector<1x32xf32>
    %19 = arith.addf %17, %18 : vector<1x32xf32>
    %20 = math.rsqrt %19 : vector<1x32xf32>
    %21 = vector.broadcast %20 : vector<1x32xf32> to vector<2x32xf32>
    %22 = arith.mulf %16, %21 : vector<2x32xf32>
    %c0_15 = arith.constant 0 : index
    %c0_16 = arith.constant 0 : index
    %23 = vector.load %arg7[%c0_15, %c0_16] : memref<1x32xf32, #tpu.memory_space<vmem>>, vector<1x32xf32>
    %24 = vector.broadcast %23 : vector<1x32xf32> to vector<2x32xf32>
    %25 = arith.addf %22, %24 : vector<2x32xf32>
    %c0_17 = arith.constant 0 : index
    %c0_18 = arith.constant 0 : index
    %c0_19 = arith.constant 0 : index
    %26 = vector.load %arg2[%c0_17, %c0_18, %c0_19] : memref<2x1x8xf32, #tpu.memory_space<vmem>>, vector<2x1x8xf32>
    %27 = vector.shape_cast %26 : vector<2x1x8xf32> to vector<2x1x8xf32>
    %28 = vector.broadcast %27 : vector<2x1x8xf32> to vector<2x8x8xf32>
    %c0_20 = arith.constant 0 : index
    %c0_21 = arith.constant 0 : index
    %c0_22 = arith.constant 0 : index
    %29 = vector.load %arg1[%c0_20, %c0_21, %c0_22] : memref<2x8x32xf32, #tpu.memory_space<vmem>>, vector<2x8x32xf32>
    %30 = vector.shape_cast %29 : vector<2x8x32xf32> to vector<16x32xf32>
    %cst_23 = arith.constant 0.000000e+00 : f32
    %31 = vector.broadcast %cst_23 : f32 to vector<16x32xf32>
    %c0_24 = arith.constant 0 : index
    %c0_25 = arith.constant 0 : index
    %c0_26 = arith.constant 0 : index
    %32 = vector.load %arg10[%c0_24, %c0_25, %c0_26] : memref<4x32x8xf32, #tpu.memory_space<vmem>>, vector<1x32x8xf32>
    %33 = vector.shape_cast %32 : vector<1x32x8xf32> to vector<32x8xf32>
    %34 = arith.truncf %30 : vector<16x32xf32> to vector<16x32xbf16>
    %35 = arith.truncf %33 : vector<32x8xf32> to vector<32x8xbf16>
    %cst_27 = arith.constant dense<0.000000e+00> : vector<16x8xf32>
    %36 = tpu.matmul %34, %35, %cst_27 {dimension_numbers = #tpu.dot_dimension_numbers<[1], [0], [0], [1], [0, 0, 1, 1], [], []>} : vector<16x32xbf16>, vector<32x8xbf16>, vector<16x8xf32> -> vector<16x8xf32>
    %c0_28 = arith.constant 0 : index
    %c0_29 = arith.constant 0 : index
    %c0_30 = arith.constant 0 : index
    %37 = vector.load %arg11[%c0_28, %c0_29, %c0_30] : memref<4x1x8xf32, #tpu.memory_space<vmem>>, vector<1x1x8xf32>
    %38 = vector.shape_cast %37 : vector<1x1x8xf32> to vector<1x8xf32>
    %39 = vector.broadcast %38 : vector<1x8xf32> to vector<16x8xf32>
    %40 = arith.addf %36, %39 : vector<16x8xf32>
    %41 = vector.shape_cast %40 : vector<16x8xf32> to vector<2x8x8xf32>
    %c0_31 = arith.constant 0 : index
    %c0_32 = arith.constant 0 : index
    %c0_33 = arith.constant 0 : index
    %42 = vector.load %arg12[%c0_31, %c0_32, %c0_33] : memref<4x32x8xf32, #tpu.memory_space<vmem>>, vector<1x32x8xf32>
    %43 = vector.shape_cast %42 : vector<1x32x8xf32> to vector<32x8xf32>
    %44 = arith.truncf %30 : vector<16x32xf32> to vector<16x32xbf16>
    %45 = arith.truncf %43 : vector<32x8xf32> to vector<32x8xbf16>
    %cst_34 = arith.constant dense<0.000000e+00> : vector<16x8xf32>
    %46 = tpu.matmul %44, %45, %cst_34 {dimension_numbers = #tpu.dot_dimension_numbers<[1], [0], [0], [1], [0, 0, 1, 1], [], []>} : vector<16x32xbf16>, vector<32x8xbf16>, vector<16x8xf32> -> vector<16x8xf32>
    %c0_35 = arith.constant 0 : index
    %c0_36 = arith.constant 0 : index
    %c0_37 = arith.constant 0 : index
    %47 = vector.load %arg13[%c0_35, %c0_36, %c0_37] : memref<4x1x8xf32, #tpu.memory_space<vmem>>, vector<1x1x8xf32>
    %48 = vector.shape_cast %47 : vector<1x1x8xf32> to vector<1x8xf32>
    %49 = vector.broadcast %48 : vector<1x8xf32> to vector<16x8xf32>
    %50 = arith.addf %46, %49 : vector<16x8xf32>
    %51 = vector.shape_cast %50 : vector<16x8xf32> to vector<2x8x8xf32>
    %c0_38 = arith.constant 0 : index
    %c0_39 = arith.constant 0 : index
    %c0_40 = arith.constant 0 : index
    %52 = vector.load %arg14[%c0_38, %c0_39, %c0_40] : memref<4x32x8xf32, #tpu.memory_space<vmem>>, vector<1x32x8xf32>
    %53 = vector.shape_cast %52 : vector<1x32x8xf32> to vector<32x8xf32>
    %54 = arith.truncf %30 : vector<16x32xf32> to vector<16x32xbf16>
    %55 = arith.truncf %53 : vector<32x8xf32> to vector<32x8xbf16>
    %cst_41 = arith.constant dense<0.000000e+00> : vector<16x8xf32>
    %56 = tpu.matmul %54, %55, %cst_41 {dimension_numbers = #tpu.dot_dimension_numbers<[1], [0], [0], [1], [0, 0, 1, 1], [], []>} : vector<16x32xbf16>, vector<32x8xbf16>, vector<16x8xf32> -> vector<16x8xf32>
    %c0_42 = arith.constant 0 : index
    %c0_43 = arith.constant 0 : index
    %c0_44 = arith.constant 0 : index
    %57 = vector.load %arg15[%c0_42, %c0_43, %c0_44] : memref<4x1x8xf32, #tpu.memory_space<vmem>>, vector<1x1x8xf32>
    %58 = vector.shape_cast %57 : vector<1x1x8xf32> to vector<1x8xf32>
    %59 = vector.broadcast %58 : vector<1x8xf32> to vector<16x8xf32>
    %60 = arith.addf %56, %59 : vector<16x8xf32>
    %61 = vector.shape_cast %60 : vector<16x8xf32> to vector<2x8x8xf32>
    %62 = arith.truncf %41 : vector<2x8x8xf32> to vector<2x8x8xbf16>
    %63 = arith.truncf %51 : vector<2x8x8xf32> to vector<2x8x8xbf16>
    "tpu.trace_start"() <{level = 10 : i32, message = "bqd,bkd->bqk"}> : () -> ()
    %cst_45 = arith.constant dense<0.000000e+00> : vector<2x8x8xf32>
    %64 = tpu.matmul %62, %63, %cst_45 {dimension_numbers = #tpu.dot_dimension_numbers<[2], [2], [1], [1], [0, 0, 0, 1, 1, 1], [0], [0]>} : vector<2x8x8xbf16>, vector<2x8x8xbf16>, vector<2x8x8xf32> -> vector<2x8x8xf32>
    "tpu.trace_stop"() : () -> ()
    %cst_46 = arith.constant 0.353553385 : f32
    %65 = vector.broadcast %cst_46 : f32 to vector<2x8x8xf32>
    %66 = arith.mulf %64, %65 : vector<2x8x8xf32>
    %67 = arith.addf %66, %28 : vector<2x8x8xf32>
    %cst_47 = arith.constant dense<0xFF800000> : vector<2x8xf32>
    %68 = vector.multi_reduction <maximumf>, %67, %cst_47 [2] : vector<2x8x8xf32> to vector<2x8xf32>
    %69 = vector.shape_cast %68 : vector<2x8xf32> to vector<2x8x1xf32>
    %70 = vector.broadcast %69 : vector<2x8x1xf32> to vector<2x8x8xf32>
    %71 = arith.subf %67, %70 : vector<2x8x8xf32>
    %72 = math.exp %71 : vector<2x8x8xf32>
    %cst_48 = arith.constant dense<0.000000e+00> : vector<2x8xf32>
    %73 = vector.multi_reduction <add>, %72, %cst_48 [2] : vector<2x8x8xf32> to vector<2x8xf32>
    %74 = vector.shape_cast %73 : vector<2x8xf32> to vector<2x8x1xf32>
    %75 = tpu.reciprocal %74 {approx = true} : vector<2x8x1xf32> -> vector<2x8x1xf32>
    %76 = vector.broadcast %75 : vector<2x8x1xf32> to vector<2x8x8xf32>
    %77 = arith.mulf %72, %76 : vector<2x8x8xf32>
    %78 = arith.truncf %77 : vector<2x8x8xf32> to vector<2x8x8xbf16>
    %79 = arith.truncf %61 : vector<2x8x8xf32> to vector<2x8x8xbf16>
    "tpu.trace_start"() <{level = 10 : i32, message = "bqk,bkd->bqd"}> : () -> ()
    %cst_49 = arith.constant dense<0.000000e+00> : vector<2x8x8xf32>
    %80 = tpu.matmul %78, %79, %cst_49 {dimension_numbers = #tpu.dot_dimension_numbers<[2], [1], [1], [2], [0, 0, 0, 1, 1, 2], [0], [0]>} : vector<2x8x8xbf16>, vector<2x8x8xbf16>, vector<2x8x8xf32> -> vector<2x8x8xf32>
    "tpu.trace_stop"() : () -> ()
    %81 = vector.shape_cast %80 : vector<2x8x8xf32> to vector<16x8xf32>
    %c0_50 = arith.constant 0 : index
    %c0_51 = arith.constant 0 : index
    %c0_52 = arith.constant 0 : index
    %82 = vector.load %arg16[%c0_50, %c0_51, %c0_52] : memref<4x8x32xf32, #tpu.memory_space<vmem>>, vector<1x8x32xf32>
    %83 = vector.shape_cast %82 : vector<1x8x32xf32> to vector<8x32xf32>
    %84 = arith.truncf %81 : vector<16x8xf32> to vector<16x8xbf16>
    %85 = arith.truncf %83 : vector<8x32xf32> to vector<8x32xbf16>
    %cst_53 = arith.constant dense<0.000000e+00> : vector<16x32xf32>
    %86 = tpu.matmul %84, %85, %cst_53 {dimension_numbers = #tpu.dot_dimension_numbers<[1], [0], [0], [1], [0, 0, 1, 1], [], []>} : vector<16x8xbf16>, vector<8x32xbf16>, vector<16x32xf32> -> vector<16x32xf32>
    %87 = arith.addf %31, %86 : vector<16x32xf32>
    %c1 = arith.constant 1 : index
    %c0_54 = arith.constant 0 : index
    %c0_55 = arith.constant 0 : index
    %88 = vector.load %arg10[%c1, %c0_54, %c0_55] : memref<4x32x8xf32, #tpu.memory_space<vmem>>, vector<1x32x8xf32>
    %89 = vector.shape_cast %88 : vector<1x32x8xf32> to vector<32x8xf32>
    %90 = arith.truncf %30 : vector<16x32xf32> to vector<16x32xbf16>
    %91 = arith.truncf %89 : vector<32x8xf32> to vector<32x8xbf16>
    %cst_56 = arith.constant dense<0.000000e+00> : vector<16x8xf32>
    %92 = tpu.matmul %90, %91, %cst_56 {dimension_numbers = #tpu.dot_dimension_numbers<[1], [0], [0], [1], [0, 0, 1, 1], [], []>} : vector<16x32xbf16>, vector<32x8xbf16>, vector<16x8xf32> -> vector<16x8xf32>
    %c1_57 = arith.constant 1 : index
    %c0_58 = arith.constant 0 : index
    %c0_59 = arith.constant 0 : index
    %93 = vector.load %arg11[%c1_57, %c0_58, %c0_59] : memref<4x1x8xf32, #tpu.memory_space<vmem>>, vector<1x1x8xf32>
    %94 = vector.shape_cast %93 : vector<1x1x8xf32> to vector<1x8xf32>
    %95 = vector.broadcast %94 : vector<1x8xf32> to vector<16x8xf32>
    %96 = arith.addf %92, %95 : vector<16x8xf32>
    %97 = vector.shape_cast %96 : vector<16x8xf32> to vector<2x8x8xf32>
    %c1_60 = arith.constant 1 : index
    %c0_61 = arith.constant 0 : index
    %c0_62 = arith.constant 0 : index
    %98 = vector.load %arg12[%c1_60, %c0_61, %c0_62] : memref<4x32x8xf32, #tpu.memory_space<vmem>>, vector<1x32x8xf32>
    %99 = vector.shape_cast %98 : vector<1x32x8xf32> to vector<32x8xf32>
    %100 = arith.truncf %30 : vector<16x32xf32> to vector<16x32xbf16>
    %101 = arith.truncf %99 : vector<32x8xf32> to vector<32x8xbf16>
    %cst_63 = arith.constant dense<0.000000e+00> : vector<16x8xf32>
    %102 = tpu.matmul %100, %101, %cst_63 {dimension_numbers = #tpu.dot_dimension_numbers<[1], [0], [0], [1], [0, 0, 1, 1], [], []>} : vector<16x32xbf16>, vector<32x8xbf16>, vector<16x8xf32> -> vector<16x8xf32>
    %c1_64 = arith.constant 1 : index
    %c0_65 = arith.constant 0 : index
    %c0_66 = arith.constant 0 : index
    %103 = vector.load %arg13[%c1_64, %c0_65, %c0_66] : memref<4x1x8xf32, #tpu.memory_space<vmem>>, vector<1x1x8xf32>
    %104 = vector.shape_cast %103 : vector<1x1x8xf32> to vector<1x8xf32>
    %105 = vector.broadcast %104 : vector<1x8xf32> to vector<16x8xf32>
    %106 = arith.addf %102, %105 : vector<16x8xf32>
    %107 = vector.shape_cast %106 : vector<16x8xf32> to vector<2x8x8xf32>
    %c1_67 = arith.constant 1 : index
    %c0_68 = arith.constant 0 : index
    %c0_69 = arith.constant 0 : index
    %108 = vector.load %arg14[%c1_67, %c0_68, %c0_69] : memref<4x32x8xf32, #tpu.memory_space<vmem>>, vector<1x32x8xf32>
    %109 = vector.shape_cast %108 : vector<1x32x8xf32> to vector<32x8xf32>
    %110 = arith.truncf %30 : vector<16x32xf32> to vector<16x32xbf16>
    %111 = arith.truncf %109 : vector<32x8xf32> to vector<32x8xbf16>
    %cst_70 = arith.constant dense<0.000000e+00> : vector<16x8xf32>
    %112 = tpu.matmul %110, %111, %cst_70 {dimension_numbers = #tpu.dot_dimension_numbers<[1], [0], [0], [1], [0, 0, 1, 1], [], []>} : vector<16x32xbf16>, vector<32x8xbf16>, vector<16x8xf32> -> vector<16x8xf32>
    %c1_71 = arith.constant 1 : index
    %c0_72 = arith.constant 0 : index
    %c0_73 = arith.constant 0 : index
    %113 = vector.load %arg15[%c1_71, %c0_72, %c0_73] : memref<4x1x8xf32, #tpu.memory_space<vmem>>, vector<1x1x8xf32>
    %114 = vector.shape_cast %113 : vector<1x1x8xf32> to vector<1x8xf32>
    %115 = vector.broadcast %114 : vector<1x8xf32> to vector<16x8xf32>
    %116 = arith.addf %112, %115 : vector<16x8xf32>
    %117 = vector.shape_cast %116 : vector<16x8xf32> to vector<2x8x8xf32>
    %118 = arith.truncf %97 : vector<2x8x8xf32> to vector<2x8x8xbf16>
    %119 = arith.truncf %107 : vector<2x8x8xf32> to vector<2x8x8xbf16>
    "tpu.trace_start"() <{level = 10 : i32, message = "bqd,bkd->bqk"}> : () -> ()
    %cst_74 = arith.constant dense<0.000000e+00> : vector<2x8x8xf32>
    %120 = tpu.matmul %118, %119, %cst_74 {dimension_numbers = #tpu.dot_dimension_numbers<[2], [2], [1], [1], [0, 0, 0, 1, 1, 1], [0], [0]>} : vector<2x8x8xbf16>, vector<2x8x8xbf16>, vector<2x8x8xf32> -> vector<2x8x8xf32>
    "tpu.trace_stop"() : () -> ()
    %cst_75 = arith.constant 0.353553385 : f32
    %121 = vector.broadcast %cst_75 : f32 to vector<2x8x8xf32>
    %122 = arith.mulf %120, %121 : vector<2x8x8xf32>
    %123 = arith.addf %122, %28 : vector<2x8x8xf32>
    %cst_76 = arith.constant dense<0xFF800000> : vector<2x8xf32>
    %124 = vector.multi_reduction <maximumf>, %123, %cst_76 [2] : vector<2x8x8xf32> to vector<2x8xf32>
    %125 = vector.shape_cast %124 : vector<2x8xf32> to vector<2x8x1xf32>
    %126 = vector.broadcast %125 : vector<2x8x1xf32> to vector<2x8x8xf32>
    %127 = arith.subf %123, %126 : vector<2x8x8xf32>
    %128 = math.exp %127 : vector<2x8x8xf32>
    %cst_77 = arith.constant dense<0.000000e+00> : vector<2x8xf32>
    %129 = vector.multi_reduction <add>, %128, %cst_77 [2] : vector<2x8x8xf32> to vector<2x8xf32>
    %130 = vector.shape_cast %129 : vector<2x8xf32> to vector<2x8x1xf32>
    %131 = tpu.reciprocal %130 {approx = true} : vector<2x8x1xf32> -> vector<2x8x1xf32>
    %132 = vector.broadcast %131 : vector<2x8x1xf32> to vector<2x8x8xf32>
    %133 = arith.mulf %128, %132 : vector<2x8x8xf32>
    %134 = arith.truncf %133 : vector<2x8x8xf32> to vector<2x8x8xbf16>
    %135 = arith.truncf %117 : vector<2x8x8xf32> to vector<2x8x8xbf16>
    "tpu.trace_start"() <{level = 10 : i32, message = "bqk,bkd->bqd"}> : () -> ()
    %cst_78 = arith.constant dense<0.000000e+00> : vector<2x8x8xf32>
    %136 = tpu.matmul %134, %135, %cst_78 {dimension_numbers = #tpu.dot_dimension_numbers<[2], [1], [1], [2], [0, 0, 0, 1, 1, 2], [0], [0]>} : vector<2x8x8xbf16>, vector<2x8x8xbf16>, vector<2x8x8xf32> -> vector<2x8x8xf32>
    "tpu.trace_stop"() : () -> ()
    %137 = vector.shape_cast %136 : vector<2x8x8xf32> to vector<16x8xf32>
    %c1_79 = arith.constant 1 : index
    %c0_80 = arith.constant 0 : index
    %c0_81 = arith.constant 0 : index
    %138 = vector.load %arg16[%c1_79, %c0_80, %c0_81] : memref<4x8x32xf32, #tpu.memory_space<vmem>>, vector<1x8x32xf32>
    %139 = vector.shape_cast %138 : vector<1x8x32xf32> to vector<8x32xf32>
    %140 = arith.truncf %137 : vector<16x8xf32> to vector<16x8xbf16>
    %141 = arith.truncf %139 : vector<8x32xf32> to vector<8x32xbf16>
    %cst_82 = arith.constant dense<0.000000e+00> : vector<16x32xf32>
    %142 = tpu.matmul %140, %141, %cst_82 {dimension_numbers = #tpu.dot_dimension_numbers<[1], [0], [0], [1], [0, 0, 1, 1], [], []>} : vector<16x8xbf16>, vector<8x32xbf16>, vector<16x32xf32> -> vector<16x32xf32>
    %143 = arith.addf %87, %142 : vector<16x32xf32>
    %c2 = arith.constant 2 : index
    %c0_83 = arith.constant 0 : index
    %c0_84 = arith.constant 0 : index
    %144 = vector.load %arg10[%c2, %c0_83, %c0_84] : memref<4x32x8xf32, #tpu.memory_space<vmem>>, vector<1x32x8xf32>
    %145 = vector.shape_cast %144 : vector<1x32x8xf32> to vector<32x8xf32>
    %146 = arith.truncf %30 : vector<16x32xf32> to vector<16x32xbf16>
    %147 = arith.truncf %145 : vector<32x8xf32> to vector<32x8xbf16>
    %cst_85 = arith.constant dense<0.000000e+00> : vector<16x8xf32>
    %148 = tpu.matmul %146, %147, %cst_85 {dimension_numbers = #tpu.dot_dimension_numbers<[1], [0], [0], [1], [0, 0, 1, 1], [], []>} : vector<16x32xbf16>, vector<32x8xbf16>, vector<16x8xf32> -> vector<16x8xf32>
    %c2_86 = arith.constant 2 : index
    %c0_87 = arith.constant 0 : index
    %c0_88 = arith.constant 0 : index
    %149 = vector.load %arg11[%c2_86, %c0_87, %c0_88] : memref<4x1x8xf32, #tpu.memory_space<vmem>>, vector<1x1x8xf32>
    %150 = vector.shape_cast %149 : vector<1x1x8xf32> to vector<1x8xf32>
    %151 = vector.broadcast %150 : vector<1x8xf32> to vector<16x8xf32>
    %152 = arith.addf %148, %151 : vector<16x8xf32>
    %153 = vector.shape_cast %152 : vector<16x8xf32> to vector<2x8x8xf32>
    %c2_89 = arith.constant 2 : index
    %c0_90 = arith.constant 0 : index
    %c0_91 = arith.constant 0 : index
    %154 = vector.load %arg12[%c2_89, %c0_90, %c0_91] : memref<4x32x8xf32, #tpu.memory_space<vmem>>, vector<1x32x8xf32>
    %155 = vector.shape_cast %154 : vector<1x32x8xf32> to vector<32x8xf32>
    %156 = arith.truncf %30 : vector<16x32xf32> to vector<16x32xbf16>
    %157 = arith.truncf %155 : vector<32x8xf32> to vector<32x8xbf16>
    %cst_92 = arith.constant dense<0.000000e+00> : vector<16x8xf32>
    %158 = tpu.matmul %156, %157, %cst_92 {dimension_numbers = #tpu.dot_dimension_numbers<[1], [0], [0], [1], [0, 0, 1, 1], [], []>} : vector<16x32xbf16>, vector<32x8xbf16>, vector<16x8xf32> -> vector<16x8xf32>
    %c2_93 = arith.constant 2 : index
    %c0_94 = arith.constant 0 : index
    %c0_95 = arith.constant 0 : index
    %159 = vector.load %arg13[%c2_93, %c0_94, %c0_95] : memref<4x1x8xf32, #tpu.memory_space<vmem>>, vector<1x1x8xf32>
    %160 = vector.shape_cast %159 : vector<1x1x8xf32> to vector<1x8xf32>
    %161 = vector.broadcast %160 : vector<1x8xf32> to vector<16x8xf32>
    %162 = arith.addf %158, %161 : vector<16x8xf32>
    %163 = vector.shape_cast %162 : vector<16x8xf32> to vector<2x8x8xf32>
    %c2_96 = arith.constant 2 : index
    %c0_97 = arith.constant 0 : index
    %c0_98 = arith.constant 0 : index
    %164 = vector.load %arg14[%c2_96, %c0_97, %c0_98] : memref<4x32x8xf32, #tpu.memory_space<vmem>>, vector<1x32x8xf32>
    %165 = vector.shape_cast %164 : vector<1x32x8xf32> to vector<32x8xf32>
    %166 = arith.truncf %30 : vector<16x32xf32> to vector<16x32xbf16>
    %167 = arith.truncf %165 : vector<32x8xf32> to vector<32x8xbf16>
    %cst_99 = arith.constant dense<0.000000e+00> : vector<16x8xf32>
    %168 = tpu.matmul %166, %167, %cst_99 {dimension_numbers = #tpu.dot_dimension_numbers<[1], [0], [0], [1], [0, 0, 1, 1], [], []>} : vector<16x32xbf16>, vector<32x8xbf16>, vector<16x8xf32> -> vector<16x8xf32>
    %c2_100 = arith.constant 2 : index
    %c0_101 = arith.constant 0 : index
    %c0_102 = arith.constant 0 : index
    %169 = vector.load %arg15[%c2_100, %c0_101, %c0_102] : memref<4x1x8xf32, #tpu.memory_space<vmem>>, vector<1x1x8xf32>
    %170 = vector.shape_cast %169 : vector<1x1x8xf32> to vector<1x8xf32>
    %171 = vector.broadcast %170 : vector<1x8xf32> to vector<16x8xf32>
    %172 = arith.addf %168, %171 : vector<16x8xf32>
    %173 = vector.shape_cast %172 : vector<16x8xf32> to vector<2x8x8xf32>
    %174 = arith.truncf %153 : vector<2x8x8xf32> to vector<2x8x8xbf16>
    %175 = arith.truncf %163 : vector<2x8x8xf32> to vector<2x8x8xbf16>
    "tpu.trace_start"() <{level = 10 : i32, message = "bqd,bkd->bqk"}> : () -> ()
    %cst_103 = arith.constant dense<0.000000e+00> : vector<2x8x8xf32>
    %176 = tpu.matmul %174, %175, %cst_103 {dimension_numbers = #tpu.dot_dimension_numbers<[2], [2], [1], [1], [0, 0, 0, 1, 1, 1], [0], [0]>} : vector<2x8x8xbf16>, vector<2x8x8xbf16>, vector<2x8x8xf32> -> vector<2x8x8xf32>
    "tpu.trace_stop"() : () -> ()
    %cst_104 = arith.constant 0.353553385 : f32
    %177 = vector.broadcast %cst_104 : f32 to vector<2x8x8xf32>
    %178 = arith.mulf %176, %177 : vector<2x8x8xf32>
    %179 = arith.addf %178, %28 : vector<2x8x8xf32>
    %cst_105 = arith.constant dense<0xFF800000> : vector<2x8xf32>
    %180 = vector.multi_reduction <maximumf>, %179, %cst_105 [2] : vector<2x8x8xf32> to vector<2x8xf32>
    %181 = vector.shape_cast %180 : vector<2x8xf32> to vector<2x8x1xf32>
    %182 = vector.broadcast %181 : vector<2x8x1xf32> to vector<2x8x8xf32>
    %183 = arith.subf %179, %182 : vector<2x8x8xf32>
    %184 = math.exp %183 : vector<2x8x8xf32>
    %cst_106 = arith.constant dense<0.000000e+00> : vector<2x8xf32>
    %185 = vector.multi_reduction <add>, %184, %cst_106 [2] : vector<2x8x8xf32> to vector<2x8xf32>
    %186 = vector.shape_cast %185 : vector<2x8xf32> to vector<2x8x1xf32>
    %187 = tpu.reciprocal %186 {approx = true} : vector<2x8x1xf32> -> vector<2x8x1xf32>
    %188 = vector.broadcast %187 : vector<2x8x1xf32> to vector<2x8x8xf32>
    %189 = arith.mulf %184, %188 : vector<2x8x8xf32>
    %190 = arith.truncf %189 : vector<2x8x8xf32> to vector<2x8x8xbf16>
    %191 = arith.truncf %173 : vector<2x8x8xf32> to vector<2x8x8xbf16>
    "tpu.trace_start"() <{level = 10 : i32, message = "bqk,bkd->bqd"}> : () -> ()
    %cst_107 = arith.constant dense<0.000000e+00> : vector<2x8x8xf32>
    %192 = tpu.matmul %190, %191, %cst_107 {dimension_numbers = #tpu.dot_dimension_numbers<[2], [1], [1], [2], [0, 0, 0, 1, 1, 2], [0], [0]>} : vector<2x8x8xbf16>, vector<2x8x8xbf16>, vector<2x8x8xf32> -> vector<2x8x8xf32>
    "tpu.trace_stop"() : () -> ()
    %193 = vector.shape_cast %192 : vector<2x8x8xf32> to vector<16x8xf32>
    %c2_108 = arith.constant 2 : index
    %c0_109 = arith.constant 0 : index
    %c0_110 = arith.constant 0 : index
    %194 = vector.load %arg16[%c2_108, %c0_109, %c0_110] : memref<4x8x32xf32, #tpu.memory_space<vmem>>, vector<1x8x32xf32>
    %195 = vector.shape_cast %194 : vector<1x8x32xf32> to vector<8x32xf32>
    %196 = arith.truncf %193 : vector<16x8xf32> to vector<16x8xbf16>
    %197 = arith.truncf %195 : vector<8x32xf32> to vector<8x32xbf16>
    %cst_111 = arith.constant dense<0.000000e+00> : vector<16x32xf32>
    %198 = tpu.matmul %196, %197, %cst_111 {dimension_numbers = #tpu.dot_dimension_numbers<[1], [0], [0], [1], [0, 0, 1, 1], [], []>} : vector<16x8xbf16>, vector<8x32xbf16>, vector<16x32xf32> -> vector<16x32xf32>
    %199 = arith.addf %143, %198 : vector<16x32xf32>
    %c3 = arith.constant 3 : index
    %c0_112 = arith.constant 0 : index
    %c0_113 = arith.constant 0 : index
    %200 = vector.load %arg10[%c3, %c0_112, %c0_113] : memref<4x32x8xf32, #tpu.memory_space<vmem>>, vector<1x32x8xf32>
    %201 = vector.shape_cast %200 : vector<1x32x8xf32> to vector<32x8xf32>
    %202 = arith.truncf %30 : vector<16x32xf32> to vector<16x32xbf16>
    %203 = arith.truncf %201 : vector<32x8xf32> to vector<32x8xbf16>
    %cst_114 = arith.constant dense<0.000000e+00> : vector<16x8xf32>
    %204 = tpu.matmul %202, %203, %cst_114 {dimension_numbers = #tpu.dot_dimension_numbers<[1], [0], [0], [1], [0, 0, 1, 1], [], []>} : vector<16x32xbf16>, vector<32x8xbf16>, vector<16x8xf32> -> vector<16x8xf32>
    %c3_115 = arith.constant 3 : index
    %c0_116 = arith.constant 0 : index
    %c0_117 = arith.constant 0 : index
    %205 = vector.load %arg11[%c3_115, %c0_116, %c0_117] : memref<4x1x8xf32, #tpu.memory_space<vmem>>, vector<1x1x8xf32>
    %206 = vector.shape_cast %205 : vector<1x1x8xf32> to vector<1x8xf32>
    %207 = vector.broadcast %206 : vector<1x8xf32> to vector<16x8xf32>
    %208 = arith.addf %204, %207 : vector<16x8xf32>
    %209 = vector.shape_cast %208 : vector<16x8xf32> to vector<2x8x8xf32>
    %c3_118 = arith.constant 3 : index
    %c0_119 = arith.constant 0 : index
    %c0_120 = arith.constant 0 : index
    %210 = vector.load %arg12[%c3_118, %c0_119, %c0_120] : memref<4x32x8xf32, #tpu.memory_space<vmem>>, vector<1x32x8xf32>
    %211 = vector.shape_cast %210 : vector<1x32x8xf32> to vector<32x8xf32>
    %212 = arith.truncf %30 : vector<16x32xf32> to vector<16x32xbf16>
    %213 = arith.truncf %211 : vector<32x8xf32> to vector<32x8xbf16>
    %cst_121 = arith.constant dense<0.000000e+00> : vector<16x8xf32>
    %214 = tpu.matmul %212, %213, %cst_121 {dimension_numbers = #tpu.dot_dimension_numbers<[1], [0], [0], [1], [0, 0, 1, 1], [], []>} : vector<16x32xbf16>, vector<32x8xbf16>, vector<16x8xf32> -> vector<16x8xf32>
    %c3_122 = arith.constant 3 : index
    %c0_123 = arith.constant 0 : index
    %c0_124 = arith.constant 0 : index
    %215 = vector.load %arg13[%c3_122, %c0_123, %c0_124] : memref<4x1x8xf32, #tpu.memory_space<vmem>>, vector<1x1x8xf32>
    %216 = vector.shape_cast %215 : vector<1x1x8xf32> to vector<1x8xf32>
    %217 = vector.broadcast %216 : vector<1x8xf32> to vector<16x8xf32>
    %218 = arith.addf %214, %217 : vector<16x8xf32>
    %219 = vector.shape_cast %218 : vector<16x8xf32> to vector<2x8x8xf32>
    %c3_125 = arith.constant 3 : index
    %c0_126 = arith.constant 0 : index
    %c0_127 = arith.constant 0 : index
    %220 = vector.load %arg14[%c3_125, %c0_126, %c0_127] : memref<4x32x8xf32, #tpu.memory_space<vmem>>, vector<1x32x8xf32>
    %221 = vector.shape_cast %220 : vector<1x32x8xf32> to vector<32x8xf32>
    %222 = arith.truncf %30 : vector<16x32xf32> to vector<16x32xbf16>
    %223 = arith.truncf %221 : vector<32x8xf32> to vector<32x8xbf16>
    %cst_128 = arith.constant dense<0.000000e+00> : vector<16x8xf32>
    %224 = tpu.matmul %222, %223, %cst_128 {dimension_numbers = #tpu.dot_dimension_numbers<[1], [0], [0], [1], [0, 0, 1, 1], [], []>} : vector<16x32xbf16>, vector<32x8xbf16>, vector<16x8xf32> -> vector<16x8xf32>
    %c3_129 = arith.constant 3 : index
    %c0_130 = arith.constant 0 : index
    %c0_131 = arith.constant 0 : index
    %225 = vector.load %arg15[%c3_129, %c0_130, %c0_131] : memref<4x1x8xf32, #tpu.memory_space<vmem>>, vector<1x1x8xf32>
    %226 = vector.shape_cast %225 : vector<1x1x8xf32> to vector<1x8xf32>
    %227 = vector.broadcast %226 : vector<1x8xf32> to vector<16x8xf32>
    %228 = arith.addf %224, %227 : vector<16x8xf32>
    %229 = vector.shape_cast %228 : vector<16x8xf32> to vector<2x8x8xf32>
    %230 = arith.truncf %209 : vector<2x8x8xf32> to vector<2x8x8xbf16>
    %231 = arith.truncf %219 : vector<2x8x8xf32> to vector<2x8x8xbf16>
    "tpu.trace_start"() <{level = 10 : i32, message = "bqd,bkd->bqk"}> : () -> ()
    %cst_132 = arith.constant dense<0.000000e+00> : vector<2x8x8xf32>
    %232 = tpu.matmul %230, %231, %cst_132 {dimension_numbers = #tpu.dot_dimension_numbers<[2], [2], [1], [1], [0, 0, 0, 1, 1, 1], [0], [0]>} : vector<2x8x8xbf16>, vector<2x8x8xbf16>, vector<2x8x8xf32> -> vector<2x8x8xf32>
    "tpu.trace_stop"() : () -> ()
    %cst_133 = arith.constant 0.353553385 : f32
    %233 = vector.broadcast %cst_133 : f32 to vector<2x8x8xf32>
    %234 = arith.mulf %232, %233 : vector<2x8x8xf32>
    %235 = arith.addf %234, %28 : vector<2x8x8xf32>
    %cst_134 = arith.constant dense<0xFF800000> : vector<2x8xf32>
    %236 = vector.multi_reduction <maximumf>, %235, %cst_134 [2] : vector<2x8x8xf32> to vector<2x8xf32>
    %237 = vector.shape_cast %236 : vector<2x8xf32> to vector<2x8x1xf32>
    %238 = vector.broadcast %237 : vector<2x8x1xf32> to vector<2x8x8xf32>
    %239 = arith.subf %235, %238 : vector<2x8x8xf32>
    %240 = math.exp %239 : vector<2x8x8xf32>
    %cst_135 = arith.constant dense<0.000000e+00> : vector<2x8xf32>
    %241 = vector.multi_reduction <add>, %240, %cst_135 [2] : vector<2x8x8xf32> to vector<2x8xf32>
    %242 = vector.shape_cast %241 : vector<2x8xf32> to vector<2x8x1xf32>
    %243 = tpu.reciprocal %242 {approx = true} : vector<2x8x1xf32> -> vector<2x8x1xf32>
    %244 = vector.broadcast %243 : vector<2x8x1xf32> to vector<2x8x8xf32>
    %245 = arith.mulf %240, %244 : vector<2x8x8xf32>
    %246 = arith.truncf %245 : vector<2x8x8xf32> to vector<2x8x8xbf16>
    %247 = arith.truncf %229 : vector<2x8x8xf32> to vector<2x8x8xbf16>
    "tpu.trace_start"() <{level = 10 : i32, message = "bqk,bkd->bqd"}> : () -> ()
    %cst_136 = arith.constant dense<0.000000e+00> : vector<2x8x8xf32>
    %248 = tpu.matmul %246, %247, %cst_136 {dimension_numbers = #tpu.dot_dimension_numbers<[2], [1], [1], [2], [0, 0, 0, 1, 1, 2], [0], [0]>} : vector<2x8x8xbf16>, vector<2x8x8xbf16>, vector<2x8x8xf32> -> vector<2x8x8xf32>
    "tpu.trace_stop"() : () -> ()
    %249 = vector.shape_cast %248 : vector<2x8x8xf32> to vector<16x8xf32>
    %c3_137 = arith.constant 3 : index
    %c0_138 = arith.constant 0 : index
    %c0_139 = arith.constant 0 : index
    %250 = vector.load %arg16[%c3_137, %c0_138, %c0_139] : memref<4x8x32xf32, #tpu.memory_space<vmem>>, vector<1x8x32xf32>
    %251 = vector.shape_cast %250 : vector<1x8x32xf32> to vector<8x32xf32>
    %252 = arith.truncf %249 : vector<16x8xf32> to vector<16x8xbf16>
    %253 = arith.truncf %251 : vector<8x32xf32> to vector<8x32xbf16>
    %cst_140 = arith.constant dense<0.000000e+00> : vector<16x32xf32>
    %254 = tpu.matmul %252, %253, %cst_140 {dimension_numbers = #tpu.dot_dimension_numbers<[1], [0], [0], [1], [0, 0, 1, 1], [], []>} : vector<16x8xbf16>, vector<8x32xbf16>, vector<16x32xf32> -> vector<16x32xf32>
    %255 = arith.addf %199, %254 : vector<16x32xf32>
    %c0_141 = arith.constant 0 : index
    %c0_142 = arith.constant 0 : index
    %256 = vector.load %arg17[%c0_141, %c0_142] : memref<1x32xf32, #tpu.memory_space<vmem>>, vector<1x32xf32>
    %257 = vector.broadcast %256 : vector<1x32xf32> to vector<16x32xf32>
    %258 = arith.addf %255, %257 : vector<16x32xf32>
    %259 = arith.addf %30, %258 : vector<16x32xf32>
    %cst_143 = arith.constant dense<0.000000e+00> : vector<16xf32>
    %260 = vector.multi_reduction <add>, %259, %cst_143 [1] : vector<16x32xf32> to vector<16xf32>
    %261 = vector.shape_cast %260 : vector<16xf32> to vector<16x1xf32>
    %cst_144 = arith.constant 3.200000e+01 : f32
    %262 = vector.broadcast %cst_144 : f32 to vector<16x1xf32>
    %263 = arith.divf %261, %262 : vector<16x1xf32>
    %264 = vector.broadcast %263 : vector<16x1xf32> to vector<16x32xf32>
    %265 = arith.subf %259, %264 : vector<16x32xf32>
    %266 = arith.mulf %265, %265 : vector<16x32xf32>
    %cst_145 = arith.constant dense<0.000000e+00> : vector<16xf32>
    %267 = vector.multi_reduction <add>, %266, %cst_145 [1] : vector<16x32xf32> to vector<16xf32>
    %268 = vector.shape_cast %267 : vector<16xf32> to vector<16x1xf32>
    %cst_146 = arith.constant 3.200000e+01 : f32
    %269 = vector.broadcast %cst_146 : f32 to vector<16x1xf32>
    %270 = arith.divf %268, %269 : vector<16x1xf32>
    %271 = vector.broadcast %263 : vector<16x1xf32> to vector<16x32xf32>
    %272 = arith.subf %259, %271 : vector<16x32xf32>
    %cst_147 = arith.constant 9.99999974E-6 : f32
    %273 = vector.broadcast %cst_147 : f32 to vector<16x1xf32>
    %274 = arith.addf %270, %273 : vector<16x1xf32>
    %275 = math.rsqrt %274 : vector<16x1xf32>
    %276 = vector.broadcast %275 : vector<16x1xf32> to vector<16x32xf32>
    %277 = arith.mulf %272, %276 : vector<16x32xf32>
    %c0_148 = arith.constant 0 : index
    %c0_149 = arith.constant 0 : index
    %278 = vector.load %arg18[%c0_148, %c0_149] : memref<1x32xf32, #tpu.memory_space<vmem>>, vector<1x32xf32>
    %279 = vector.broadcast %278 : vector<1x32xf32> to vector<16x32xf32>
    %280 = arith.mulf %277, %279 : vector<16x32xf32>
    %c0_150 = arith.constant 0 : index
    %c0_151 = arith.constant 0 : index
    %281 = vector.load %arg19[%c0_150, %c0_151] : memref<1x32xf32, #tpu.memory_space<vmem>>, vector<1x32xf32>
    %282 = vector.broadcast %281 : vector<1x32xf32> to vector<16x32xf32>
    %283 = arith.addf %280, %282 : vector<16x32xf32>
    %c0_152 = arith.constant 0 : index
    %c0_153 = arith.constant 0 : index
    %284 = vector.load %arg20[%c0_152, %c0_153] : memref<32x64xf32, #tpu.memory_space<vmem>>, vector<32x64xf32>
    %285 = arith.truncf %283 : vector<16x32xf32> to vector<16x32xbf16>
    %286 = arith.truncf %284 : vector<32x64xf32> to vector<32x64xbf16>
    %cst_154 = arith.constant dense<0.000000e+00> : vector<16x64xf32>
    %287 = tpu.matmul %285, %286, %cst_154 {dimension_numbers = #tpu.dot_dimension_numbers<[1], [0], [0], [1], [0, 0, 1, 1], [], []>} : vector<16x32xbf16>, vector<32x64xbf16>, vector<16x64xf32> -> vector<16x64xf32>
    %c0_155 = arith.constant 0 : index
    %c0_156 = arith.constant 0 : index
    %288 = vector.load %arg21[%c0_155, %c0_156] : memref<1x64xf32, #tpu.memory_space<vmem>>, vector<1x64xf32>
    %289 = vector.broadcast %288 : vector<1x64xf32> to vector<16x64xf32>
    %290 = arith.addf %287, %289 : vector<16x64xf32>
    %cst_157 = arith.constant 0.000000e+00 : f32
    %291 = vector.broadcast %cst_157 : f32 to vector<16x64xf32>
    %292 = arith.maximumf %290, %291 : vector<16x64xf32>
    %c0_158 = arith.constant 0 : index
    %c0_159 = arith.constant 0 : index
    %293 = vector.load %arg22[%c0_158, %c0_159] : memref<64x32xf32, #tpu.memory_space<vmem>>, vector<64x32xf32>
    %294 = arith.truncf %292 : vector<16x64xf32> to vector<16x64xbf16>
    %295 = arith.truncf %293 : vector<64x32xf32> to vector<64x32xbf16>
    %cst_160 = arith.constant dense<0.000000e+00> : vector<16x32xf32>
    %296 = tpu.matmul %294, %295, %cst_160 {dimension_numbers = #tpu.dot_dimension_numbers<[1], [0], [0], [1], [0, 0, 1, 1], [], []>} : vector<16x64xbf16>, vector<64x32xbf16>, vector<16x32xf32> -> vector<16x32xf32>
    %c0_161 = arith.constant 0 : index
    %c0_162 = arith.constant 0 : index
    %297 = vector.load %arg23[%c0_161, %c0_162] : memref<1x32xf32, #tpu.memory_space<vmem>>, vector<1x32xf32>
    %298 = vector.broadcast %297 : vector<1x32xf32> to vector<16x32xf32>
    %299 = arith.addf %296, %298 : vector<16x32xf32>
    %300 = arith.addf %283, %299 : vector<16x32xf32>
    %cst_163 = arith.constant dense<0.000000e+00> : vector<16xf32>
    %301 = vector.multi_reduction <add>, %300, %cst_163 [1] : vector<16x32xf32> to vector<16xf32>
    %302 = vector.shape_cast %301 : vector<16xf32> to vector<16x1xf32>
    %cst_164 = arith.constant 3.200000e+01 : f32
    %303 = vector.broadcast %cst_164 : f32 to vector<16x1xf32>
    %304 = arith.divf %302, %303 : vector<16x1xf32>
    %305 = vector.broadcast %304 : vector<16x1xf32> to vector<16x32xf32>
    %306 = arith.subf %300, %305 : vector<16x32xf32>
    %307 = arith.mulf %306, %306 : vector<16x32xf32>
    %cst_165 = arith.constant dense<0.000000e+00> : vector<16xf32>
    %308 = vector.multi_reduction <add>, %307, %cst_165 [1] : vector<16x32xf32> to vector<16xf32>
    %309 = vector.shape_cast %308 : vector<16xf32> to vector<16x1xf32>
    %cst_166 = arith.constant 3.200000e+01 : f32
    %310 = vector.broadcast %cst_166 : f32 to vector<16x1xf32>
    %311 = arith.divf %309, %310 : vector<16x1xf32>
    %312 = vector.broadcast %304 : vector<16x1xf32> to vector<16x32xf32>
    %313 = arith.subf %300, %312 : vector<16x32xf32>
    %cst_167 = arith.constant 9.99999974E-6 : f32
    %314 = vector.broadcast %cst_167 : f32 to vector<16x1xf32>
    %315 = arith.addf %311, %314 : vector<16x1xf32>
    %316 = math.rsqrt %315 : vector<16x1xf32>
    %317 = vector.broadcast %316 : vector<16x1xf32> to vector<16x32xf32>
    %318 = arith.mulf %313, %317 : vector<16x32xf32>
    %c0_168 = arith.constant 0 : index
    %c0_169 = arith.constant 0 : index
    %319 = vector.load %arg24[%c0_168, %c0_169] : memref<1x32xf32, #tpu.memory_space<vmem>>, vector<1x32xf32>
    %320 = vector.broadcast %319 : vector<1x32xf32> to vector<16x32xf32>
    %321 = arith.mulf %318, %320 : vector<16x32xf32>
    %c0_170 = arith.constant 0 : index
    %c0_171 = arith.constant 0 : index
    %322 = vector.load %arg25[%c0_170, %c0_171] : memref<1x32xf32, #tpu.memory_space<vmem>>, vector<1x32xf32>
    %323 = vector.broadcast %322 : vector<1x32xf32> to vector<16x32xf32>
    %324 = arith.addf %321, %323 : vector<16x32xf32>
    %c0_172 = arith.constant 0 : index
    %c0_173 = arith.constant 0 : index
    %325 = vector.load %arg26[%c0_172, %c0_173] : memref<1x32xf32, #tpu.memory_space<vmem>>, vector<1x32xf32>
    %c0_174 = arith.constant 0 : index
    %c0_175 = arith.constant 0 : index
    %326 = vector.load %arg28[%c0_174, %c0_175] : memref<1x32xf32, #tpu.memory_space<vmem>>, vector<1x32xf32>
    %327 = vector.broadcast %326 : vector<1x32xf32> to vector<16x32xf32>
    %328 = arith.subf %324, %327 : vector<16x32xf32>
    %329 = vector.broadcast %325 : vector<1x32xf32> to vector<16x32xf32>
    %330 = arith.mulf %329, %328 : vector<16x32xf32>
    %c0_176 = arith.constant 0 : index
    %c0_177 = arith.constant 0 : index
    %331 = vector.load %arg29[%c0_176, %c0_177] : memref<1x32xf32, #tpu.memory_space<vmem>>, vector<1x32xf32>
    %cst_178 = arith.constant 9.99999974E-6 : f32
    %332 = vector.broadcast %cst_178 : f32 to vector<1x32xf32>
    %333 = arith.addf %331, %332 : vector<1x32xf32>
    %334 = math.rsqrt %333 : vector<1x32xf32>
    %335 = vector.broadcast %334 : vector<1x32xf32> to vector<16x32xf32>
    %336 = arith.mulf %330, %335 : vector<16x32xf32>
    %c0_179 = arith.constant 0 : index
    %c0_180 = arith.constant 0 : index
    %337 = vector.load %arg27[%c0_179, %c0_180] : memref<1x32xf32, #tpu.memory_space<vmem>>, vector<1x32xf32>
    %338 = vector.broadcast %337 : vector<1x32xf32> to vector<16x32xf32>
    %339 = arith.addf %336, %338 : vector<16x32xf32>
    %340 = vector.shape_cast %25 : vector<2x32xf32> to vector<2x1x32xf32>
    %341 = vector.shape_cast %340 : vector<2x1x32xf32> to vector<2x1x32xf32>
    %342 = vector.broadcast %341 : vector<2x1x32xf32> to vector<2x8x32xf32>
    %343 = vector.shape_cast %342 : vector<2x8x32xf32> to vector<16x32xf32>
    %344 = tpu.concatenate %343, %339 in 1 : vector<16x32xf32>, vector<16x32xf32> -> vector<16x64xf32>
    %c0_181 = arith.constant 0 : index
    %c0_182 = arith.constant 0 : index
    %c0_183 = arith.constant 0 : index
    %345 = vector.load %arg3[%c0_181, %c0_182, %c0_183] : memref<2x8x64xf32, #tpu.memory_space<vmem>>, vector<2x8x64xf32>
    %346 = vector.shape_cast %345 : vector<2x8x64xf32> to vector<16x64xf32>
    %cst_184 = arith.constant 0.000000e+00 : f32
    %347 = vector.broadcast %cst_184 : f32 to vector<16x64xf32>
    %c0_185 = arith.constant 0 : index
    %c0_186 = arith.constant 0 : index
    %c0_187 = arith.constant 0 : index
    %348 = vector.load %arg30[%c0_185, %c0_186, %c0_187] : memref<4x64x16xf32, #tpu.memory_space<vmem>>, vector<1x64x16xf32>
    %349 = vector.shape_cast %348 : vector<1x64x16xf32> to vector<64x16xf32>
    %350 = arith.truncf %346 : vector<16x64xf32> to vector<16x64xbf16>
    %351 = arith.truncf %349 : vector<64x16xf32> to vector<64x16xbf16>
    %cst_188 = arith.constant dense<0.000000e+00> : vector<16x16xf32>
    %352 = tpu.matmul %350, %351, %cst_188 {dimension_numbers = #tpu.dot_dimension_numbers<[1], [0], [0], [1], [0, 0, 1, 1], [], []>} : vector<16x64xbf16>, vector<64x16xbf16>, vector<16x16xf32> -> vector<16x16xf32>
    %c0_189 = arith.constant 0 : index
    %c0_190 = arith.constant 0 : index
    %c0_191 = arith.constant 0 : index
    %353 = vector.load %arg31[%c0_189, %c0_190, %c0_191] : memref<4x1x16xf32, #tpu.memory_space<vmem>>, vector<1x1x16xf32>
    %354 = vector.shape_cast %353 : vector<1x1x16xf32> to vector<1x16xf32>
    %355 = vector.broadcast %354 : vector<1x16xf32> to vector<16x16xf32>
    %356 = arith.addf %352, %355 : vector<16x16xf32>
    %357 = vector.shape_cast %356 : vector<16x16xf32> to vector<2x8x16xf32>
    %c0_192 = arith.constant 0 : index
    %c0_193 = arith.constant 0 : index
    %c0_194 = arith.constant 0 : index
    %358 = vector.load %arg32[%c0_192, %c0_193, %c0_194] : memref<4x64x16xf32, #tpu.memory_space<vmem>>, vector<1x64x16xf32>
    %359 = vector.shape_cast %358 : vector<1x64x16xf32> to vector<64x16xf32>
    %360 = arith.truncf %346 : vector<16x64xf32> to vector<16x64xbf16>
    %361 = arith.truncf %359 : vector<64x16xf32> to vector<64x16xbf16>
    %cst_195 = arith.constant dense<0.000000e+00> : vector<16x16xf32>
    %362 = tpu.matmul %360, %361, %cst_195 {dimension_numbers = #tpu.dot_dimension_numbers<[1], [0], [0], [1], [0, 0, 1, 1], [], []>} : vector<16x64xbf16>, vector<64x16xbf16>, vector<16x16xf32> -> vector<16x16xf32>
    %c0_196 = arith.constant 0 : index
    %c0_197 = arith.constant 0 : index
    %c0_198 = arith.constant 0 : index
    %363 = vector.load %arg33[%c0_196, %c0_197, %c0_198] : memref<4x1x16xf32, #tpu.memory_space<vmem>>, vector<1x1x16xf32>
    %364 = vector.shape_cast %363 : vector<1x1x16xf32> to vector<1x16xf32>
    %365 = vector.broadcast %364 : vector<1x16xf32> to vector<16x16xf32>
    %366 = arith.addf %362, %365 : vector<16x16xf32>
    %367 = vector.shape_cast %366 : vector<16x16xf32> to vector<2x8x16xf32>
    %c0_199 = arith.constant 0 : index
    %c0_200 = arith.constant 0 : index
    %c0_201 = arith.constant 0 : index
    %368 = vector.load %arg34[%c0_199, %c0_200, %c0_201] : memref<4x64x16xf32, #tpu.memory_space<vmem>>, vector<1x64x16xf32>
    %369 = vector.shape_cast %368 : vector<1x64x16xf32> to vector<64x16xf32>
    %370 = arith.truncf %346 : vector<16x64xf32> to vector<16x64xbf16>
    %371 = arith.truncf %369 : vector<64x16xf32> to vector<64x16xbf16>
    %cst_202 = arith.constant dense<0.000000e+00> : vector<16x16xf32>
    %372 = tpu.matmul %370, %371, %cst_202 {dimension_numbers = #tpu.dot_dimension_numbers<[1], [0], [0], [1], [0, 0, 1, 1], [], []>} : vector<16x64xbf16>, vector<64x16xbf16>, vector<16x16xf32> -> vector<16x16xf32>
    %c0_203 = arith.constant 0 : index
    %c0_204 = arith.constant 0 : index
    %c0_205 = arith.constant 0 : index
    %373 = vector.load %arg35[%c0_203, %c0_204, %c0_205] : memref<4x1x16xf32, #tpu.memory_space<vmem>>, vector<1x1x16xf32>
    %374 = vector.shape_cast %373 : vector<1x1x16xf32> to vector<1x16xf32>
    %375 = vector.broadcast %374 : vector<1x16xf32> to vector<16x16xf32>
    %376 = arith.addf %372, %375 : vector<16x16xf32>
    %377 = vector.shape_cast %376 : vector<16x16xf32> to vector<2x8x16xf32>
    %378 = arith.truncf %357 : vector<2x8x16xf32> to vector<2x8x16xbf16>
    %379 = arith.truncf %367 : vector<2x8x16xf32> to vector<2x8x16xbf16>
    "tpu.trace_start"() <{level = 10 : i32, message = "bqd,bkd->bqk"}> : () -> ()
    %cst_206 = arith.constant dense<0.000000e+00> : vector<2x8x8xf32>
    %380 = tpu.matmul %378, %379, %cst_206 {dimension_numbers = #tpu.dot_dimension_numbers<[2], [2], [1], [1], [0, 0, 0, 1, 1, 1], [0], [0]>} : vector<2x8x16xbf16>, vector<2x8x16xbf16>, vector<2x8x8xf32> -> vector<2x8x8xf32>
    "tpu.trace_stop"() : () -> ()
    %cst_207 = arith.constant 2.500000e-01 : f32
    %381 = vector.broadcast %cst_207 : f32 to vector<2x8x8xf32>
    %382 = arith.mulf %380, %381 : vector<2x8x8xf32>
    %cst_208 = arith.constant dense<0xFF800000> : vector<2x8xf32>
    %383 = vector.multi_reduction <maximumf>, %382, %cst_208 [2] : vector<2x8x8xf32> to vector<2x8xf32>
    %384 = vector.shape_cast %383 : vector<2x8xf32> to vector<2x8x1xf32>
    %385 = vector.broadcast %384 : vector<2x8x1xf32> to vector<2x8x8xf32>
    %386 = arith.subf %382, %385 : vector<2x8x8xf32>
    %387 = math.exp %386 : vector<2x8x8xf32>
    %cst_209 = arith.constant dense<0.000000e+00> : vector<2x8xf32>
    %388 = vector.multi_reduction <add>, %387, %cst_209 [2] : vector<2x8x8xf32> to vector<2x8xf32>
    %389 = vector.shape_cast %388 : vector<2x8xf32> to vector<2x8x1xf32>
    %390 = tpu.reciprocal %389 {approx = true} : vector<2x8x1xf32> -> vector<2x8x1xf32>
    %391 = vector.broadcast %390 : vector<2x8x1xf32> to vector<2x8x8xf32>
    %392 = arith.mulf %387, %391 : vector<2x8x8xf32>
    %393 = arith.truncf %392 : vector<2x8x8xf32> to vector<2x8x8xbf16>
    %394 = arith.truncf %377 : vector<2x8x16xf32> to vector<2x8x16xbf16>
    "tpu.trace_start"() <{level = 10 : i32, message = "bqk,bkd->bqd"}> : () -> ()
    %cst_210 = arith.constant dense<0.000000e+00> : vector<2x8x16xf32>
    %395 = tpu.matmul %393, %394, %cst_210 {dimension_numbers = #tpu.dot_dimension_numbers<[2], [1], [1], [2], [0, 0, 0, 1, 1, 2], [0], [0]>} : vector<2x8x8xbf16>, vector<2x8x16xbf16>, vector<2x8x16xf32> -> vector<2x8x16xf32>
    "tpu.trace_stop"() : () -> ()
    %396 = vector.shape_cast %395 : vector<2x8x16xf32> to vector<16x16xf32>
    %c0_211 = arith.constant 0 : index
    %c0_212 = arith.constant 0 : index
    %c0_213 = arith.constant 0 : index
    %397 = vector.load %arg36[%c0_211, %c0_212, %c0_213] : memref<4x16x64xf32, #tpu.memory_space<vmem>>, vector<1x16x64xf32>
    %398 = vector.shape_cast %397 : vector<1x16x64xf32> to vector<16x64xf32>
    %399 = arith.truncf %396 : vector<16x16xf32> to vector<16x16xbf16>
    %400 = arith.truncf %398 : vector<16x64xf32> to vector<16x64xbf16>
    %cst_214 = arith.constant dense<0.000000e+00> : vector<16x64xf32>
    %401 = tpu.matmul %399, %400, %cst_214 {dimension_numbers = #tpu.dot_dimension_numbers<[1], [0], [0], [1], [0, 0, 1, 1], [], []>} : vector<16x16xbf16>, vector<16x64xbf16>, vector<16x64xf32> -> vector<16x64xf32>
    %402 = arith.addf %347, %401 : vector<16x64xf32>
    %c1_215 = arith.constant 1 : index
    %c0_216 = arith.constant 0 : index
    %c0_217 = arith.constant 0 : index
    %403 = vector.load %arg30[%c1_215, %c0_216, %c0_217] : memref<4x64x16xf32, #tpu.memory_space<vmem>>, vector<1x64x16xf32>
    %404 = vector.shape_cast %403 : vector<1x64x16xf32> to vector<64x16xf32>
    %405 = arith.truncf %346 : vector<16x64xf32> to vector<16x64xbf16>
    %406 = arith.truncf %404 : vector<64x16xf32> to vector<64x16xbf16>
    %cst_218 = arith.constant dense<0.000000e+00> : vector<16x16xf32>
    %407 = tpu.matmul %405, %406, %cst_218 {dimension_numbers = #tpu.dot_dimension_numbers<[1], [0], [0], [1], [0, 0, 1, 1], [], []>} : vector<16x64xbf16>, vector<64x16xbf16>, vector<16x16xf32> -> vector<16x16xf32>
    %c1_219 = arith.constant 1 : index
    %c0_220 = arith.constant 0 : index
    %c0_221 = arith.constant 0 : index
    %408 = vector.load %arg31[%c1_219, %c0_220, %c0_221] : memref<4x1x16xf32, #tpu.memory_space<vmem>>, vector<1x1x16xf32>
    %409 = vector.shape_cast %408 : vector<1x1x16xf32> to vector<1x16xf32>
    %410 = vector.broadcast %409 : vector<1x16xf32> to vector<16x16xf32>
    %411 = arith.addf %407, %410 : vector<16x16xf32>
    %412 = vector.shape_cast %411 : vector<16x16xf32> to vector<2x8x16xf32>
    %c1_222 = arith.constant 1 : index
    %c0_223 = arith.constant 0 : index
    %c0_224 = arith.constant 0 : index
    %413 = vector.load %arg32[%c1_222, %c0_223, %c0_224] : memref<4x64x16xf32, #tpu.memory_space<vmem>>, vector<1x64x16xf32>
    %414 = vector.shape_cast %413 : vector<1x64x16xf32> to vector<64x16xf32>
    %415 = arith.truncf %346 : vector<16x64xf32> to vector<16x64xbf16>
    %416 = arith.truncf %414 : vector<64x16xf32> to vector<64x16xbf16>
    %cst_225 = arith.constant dense<0.000000e+00> : vector<16x16xf32>
    %417 = tpu.matmul %415, %416, %cst_225 {dimension_numbers = #tpu.dot_dimension_numbers<[1], [0], [0], [1], [0, 0, 1, 1], [], []>} : vector<16x64xbf16>, vector<64x16xbf16>, vector<16x16xf32> -> vector<16x16xf32>
    %c1_226 = arith.constant 1 : index
    %c0_227 = arith.constant 0 : index
    %c0_228 = arith.constant 0 : index
    %418 = vector.load %arg33[%c1_226, %c0_227, %c0_228] : memref<4x1x16xf32, #tpu.memory_space<vmem>>, vector<1x1x16xf32>
    %419 = vector.shape_cast %418 : vector<1x1x16xf32> to vector<1x16xf32>
    %420 = vector.broadcast %419 : vector<1x16xf32> to vector<16x16xf32>
    %421 = arith.addf %417, %420 : vector<16x16xf32>
    %422 = vector.shape_cast %421 : vector<16x16xf32> to vector<2x8x16xf32>
    %c1_229 = arith.constant 1 : index
    %c0_230 = arith.constant 0 : index
    %c0_231 = arith.constant 0 : index
    %423 = vector.load %arg34[%c1_229, %c0_230, %c0_231] : memref<4x64x16xf32, #tpu.memory_space<vmem>>, vector<1x64x16xf32>
    %424 = vector.shape_cast %423 : vector<1x64x16xf32> to vector<64x16xf32>
    %425 = arith.truncf %346 : vector<16x64xf32> to vector<16x64xbf16>
    %426 = arith.truncf %424 : vector<64x16xf32> to vector<64x16xbf16>
    %cst_232 = arith.constant dense<0.000000e+00> : vector<16x16xf32>
    %427 = tpu.matmul %425, %426, %cst_232 {dimension_numbers = #tpu.dot_dimension_numbers<[1], [0], [0], [1], [0, 0, 1, 1], [], []>} : vector<16x64xbf16>, vector<64x16xbf16>, vector<16x16xf32> -> vector<16x16xf32>
    %c1_233 = arith.constant 1 : index
    %c0_234 = arith.constant 0 : index
    %c0_235 = arith.constant 0 : index
    %428 = vector.load %arg35[%c1_233, %c0_234, %c0_235] : memref<4x1x16xf32, #tpu.memory_space<vmem>>, vector<1x1x16xf32>
    %429 = vector.shape_cast %428 : vector<1x1x16xf32> to vector<1x16xf32>
    %430 = vector.broadcast %429 : vector<1x16xf32> to vector<16x16xf32>
    %431 = arith.addf %427, %430 : vector<16x16xf32>
    %432 = vector.shape_cast %431 : vector<16x16xf32> to vector<2x8x16xf32>
    %433 = arith.truncf %412 : vector<2x8x16xf32> to vector<2x8x16xbf16>
    %434 = arith.truncf %422 : vector<2x8x16xf32> to vector<2x8x16xbf16>
    "tpu.trace_start"() <{level = 10 : i32, message = "bqd,bkd->bqk"}> : () -> ()
    %cst_236 = arith.constant dense<0.000000e+00> : vector<2x8x8xf32>
    %435 = tpu.matmul %433, %434, %cst_236 {dimension_numbers = #tpu.dot_dimension_numbers<[2], [2], [1], [1], [0, 0, 0, 1, 1, 1], [0], [0]>} : vector<2x8x16xbf16>, vector<2x8x16xbf16>, vector<2x8x8xf32> -> vector<2x8x8xf32>
    "tpu.trace_stop"() : () -> ()
    %cst_237 = arith.constant 2.500000e-01 : f32
    %436 = vector.broadcast %cst_237 : f32 to vector<2x8x8xf32>
    %437 = arith.mulf %435, %436 : vector<2x8x8xf32>
    %cst_238 = arith.constant dense<0xFF800000> : vector<2x8xf32>
    %438 = vector.multi_reduction <maximumf>, %437, %cst_238 [2] : vector<2x8x8xf32> to vector<2x8xf32>
    %439 = vector.shape_cast %438 : vector<2x8xf32> to vector<2x8x1xf32>
    %440 = vector.broadcast %439 : vector<2x8x1xf32> to vector<2x8x8xf32>
    %441 = arith.subf %437, %440 : vector<2x8x8xf32>
    %442 = math.exp %441 : vector<2x8x8xf32>
    %cst_239 = arith.constant dense<0.000000e+00> : vector<2x8xf32>
    %443 = vector.multi_reduction <add>, %442, %cst_239 [2] : vector<2x8x8xf32> to vector<2x8xf32>
    %444 = vector.shape_cast %443 : vector<2x8xf32> to vector<2x8x1xf32>
    %445 = tpu.reciprocal %444 {approx = true} : vector<2x8x1xf32> -> vector<2x8x1xf32>
    %446 = vector.broadcast %445 : vector<2x8x1xf32> to vector<2x8x8xf32>
    %447 = arith.mulf %442, %446 : vector<2x8x8xf32>
    %448 = arith.truncf %447 : vector<2x8x8xf32> to vector<2x8x8xbf16>
    %449 = arith.truncf %432 : vector<2x8x16xf32> to vector<2x8x16xbf16>
    "tpu.trace_start"() <{level = 10 : i32, message = "bqk,bkd->bqd"}> : () -> ()
    %cst_240 = arith.constant dense<0.000000e+00> : vector<2x8x16xf32>
    %450 = tpu.matmul %448, %449, %cst_240 {dimension_numbers = #tpu.dot_dimension_numbers<[2], [1], [1], [2], [0, 0, 0, 1, 1, 2], [0], [0]>} : vector<2x8x8xbf16>, vector<2x8x16xbf16>, vector<2x8x16xf32> -> vector<2x8x16xf32>
    "tpu.trace_stop"() : () -> ()
    %451 = vector.shape_cast %450 : vector<2x8x16xf32> to vector<16x16xf32>
    %c1_241 = arith.constant 1 : index
    %c0_242 = arith.constant 0 : index
    %c0_243 = arith.constant 0 : index
    %452 = vector.load %arg36[%c1_241, %c0_242, %c0_243] : memref<4x16x64xf32, #tpu.memory_space<vmem>>, vector<1x16x64xf32>
    %453 = vector.shape_cast %452 : vector<1x16x64xf32> to vector<16x64xf32>
    %454 = arith.truncf %451 : vector<16x16xf32> to vector<16x16xbf16>
    %455 = arith.truncf %453 : vector<16x64xf32> to vector<16x64xbf16>
    %cst_244 = arith.constant dense<0.000000e+00> : vector<16x64xf32>
    %456 = tpu.matmul %454, %455, %cst_244 {dimension_numbers = #tpu.dot_dimension_numbers<[1], [0], [0], [1], [0, 0, 1, 1], [], []>} : vector<16x16xbf16>, vector<16x64xbf16>, vector<16x64xf32> -> vector<16x64xf32>
    %457 = arith.addf %402, %456 : vector<16x64xf32>
    %c2_245 = arith.constant 2 : index
    %c0_246 = arith.constant 0 : index
    %c0_247 = arith.constant 0 : index
    %458 = vector.load %arg30[%c2_245, %c0_246, %c0_247] : memref<4x64x16xf32, #tpu.memory_space<vmem>>, vector<1x64x16xf32>
    %459 = vector.shape_cast %458 : vector<1x64x16xf32> to vector<64x16xf32>
    %460 = arith.truncf %346 : vector<16x64xf32> to vector<16x64xbf16>
    %461 = arith.truncf %459 : vector<64x16xf32> to vector<64x16xbf16>
    %cst_248 = arith.constant dense<0.000000e+00> : vector<16x16xf32>
    %462 = tpu.matmul %460, %461, %cst_248 {dimension_numbers = #tpu.dot_dimension_numbers<[1], [0], [0], [1], [0, 0, 1, 1], [], []>} : vector<16x64xbf16>, vector<64x16xbf16>, vector<16x16xf32> -> vector<16x16xf32>
    %c2_249 = arith.constant 2 : index
    %c0_250 = arith.constant 0 : index
    %c0_251 = arith.constant 0 : index
    %463 = vector.load %arg31[%c2_249, %c0_250, %c0_251] : memref<4x1x16xf32, #tpu.memory_space<vmem>>, vector<1x1x16xf32>
    %464 = vector.shape_cast %463 : vector<1x1x16xf32> to vector<1x16xf32>
    %465 = vector.broadcast %464 : vector<1x16xf32> to vector<16x16xf32>
    %466 = arith.addf %462, %465 : vector<16x16xf32>
    %467 = vector.shape_cast %466 : vector<16x16xf32> to vector<2x8x16xf32>
    %c2_252 = arith.constant 2 : index
    %c0_253 = arith.constant 0 : index
    %c0_254 = arith.constant 0 : index
    %468 = vector.load %arg32[%c2_252, %c0_253, %c0_254] : memref<4x64x16xf32, #tpu.memory_space<vmem>>, vector<1x64x16xf32>
    %469 = vector.shape_cast %468 : vector<1x64x16xf32> to vector<64x16xf32>
    %470 = arith.truncf %346 : vector<16x64xf32> to vector<16x64xbf16>
    %471 = arith.truncf %469 : vector<64x16xf32> to vector<64x16xbf16>
    %cst_255 = arith.constant dense<0.000000e+00> : vector<16x16xf32>
    %472 = tpu.matmul %470, %471, %cst_255 {dimension_numbers = #tpu.dot_dimension_numbers<[1], [0], [0], [1], [0, 0, 1, 1], [], []>} : vector<16x64xbf16>, vector<64x16xbf16>, vector<16x16xf32> -> vector<16x16xf32>
    %c2_256 = arith.constant 2 : index
    %c0_257 = arith.constant 0 : index
    %c0_258 = arith.constant 0 : index
    %473 = vector.load %arg33[%c2_256, %c0_257, %c0_258] : memref<4x1x16xf32, #tpu.memory_space<vmem>>, vector<1x1x16xf32>
    %474 = vector.shape_cast %473 : vector<1x1x16xf32> to vector<1x16xf32>
    %475 = vector.broadcast %474 : vector<1x16xf32> to vector<16x16xf32>
    %476 = arith.addf %472, %475 : vector<16x16xf32>
    %477 = vector.shape_cast %476 : vector<16x16xf32> to vector<2x8x16xf32>
    %c2_259 = arith.constant 2 : index
    %c0_260 = arith.constant 0 : index
    %c0_261 = arith.constant 0 : index
    %478 = vector.load %arg34[%c2_259, %c0_260, %c0_261] : memref<4x64x16xf32, #tpu.memory_space<vmem>>, vector<1x64x16xf32>
    %479 = vector.shape_cast %478 : vector<1x64x16xf32> to vector<64x16xf32>
    %480 = arith.truncf %346 : vector<16x64xf32> to vector<16x64xbf16>
    %481 = arith.truncf %479 : vector<64x16xf32> to vector<64x16xbf16>
    %cst_262 = arith.constant dense<0.000000e+00> : vector<16x16xf32>
    %482 = tpu.matmul %480, %481, %cst_262 {dimension_numbers = #tpu.dot_dimension_numbers<[1], [0], [0], [1], [0, 0, 1, 1], [], []>} : vector<16x64xbf16>, vector<64x16xbf16>, vector<16x16xf32> -> vector<16x16xf32>
    %c2_263 = arith.constant 2 : index
    %c0_264 = arith.constant 0 : index
    %c0_265 = arith.constant 0 : index
    %483 = vector.load %arg35[%c2_263, %c0_264, %c0_265] : memref<4x1x16xf32, #tpu.memory_space<vmem>>, vector<1x1x16xf32>
    %484 = vector.shape_cast %483 : vector<1x1x16xf32> to vector<1x16xf32>
    %485 = vector.broadcast %484 : vector<1x16xf32> to vector<16x16xf32>
    %486 = arith.addf %482, %485 : vector<16x16xf32>
    %487 = vector.shape_cast %486 : vector<16x16xf32> to vector<2x8x16xf32>
    %488 = arith.truncf %467 : vector<2x8x16xf32> to vector<2x8x16xbf16>
    %489 = arith.truncf %477 : vector<2x8x16xf32> to vector<2x8x16xbf16>
    "tpu.trace_start"() <{level = 10 : i32, message = "bqd,bkd->bqk"}> : () -> ()
    %cst_266 = arith.constant dense<0.000000e+00> : vector<2x8x8xf32>
    %490 = tpu.matmul %488, %489, %cst_266 {dimension_numbers = #tpu.dot_dimension_numbers<[2], [2], [1], [1], [0, 0, 0, 1, 1, 1], [0], [0]>} : vector<2x8x16xbf16>, vector<2x8x16xbf16>, vector<2x8x8xf32> -> vector<2x8x8xf32>
    "tpu.trace_stop"() : () -> ()
    %cst_267 = arith.constant 2.500000e-01 : f32
    %491 = vector.broadcast %cst_267 : f32 to vector<2x8x8xf32>
    %492 = arith.mulf %490, %491 : vector<2x8x8xf32>
    %cst_268 = arith.constant dense<0xFF800000> : vector<2x8xf32>
    %493 = vector.multi_reduction <maximumf>, %492, %cst_268 [2] : vector<2x8x8xf32> to vector<2x8xf32>
    %494 = vector.shape_cast %493 : vector<2x8xf32> to vector<2x8x1xf32>
    %495 = vector.broadcast %494 : vector<2x8x1xf32> to vector<2x8x8xf32>
    %496 = arith.subf %492, %495 : vector<2x8x8xf32>
    %497 = math.exp %496 : vector<2x8x8xf32>
    %cst_269 = arith.constant dense<0.000000e+00> : vector<2x8xf32>
    %498 = vector.multi_reduction <add>, %497, %cst_269 [2] : vector<2x8x8xf32> to vector<2x8xf32>
    %499 = vector.shape_cast %498 : vector<2x8xf32> to vector<2x8x1xf32>
    %500 = tpu.reciprocal %499 {approx = true} : vector<2x8x1xf32> -> vector<2x8x1xf32>
    %501 = vector.broadcast %500 : vector<2x8x1xf32> to vector<2x8x8xf32>
    %502 = arith.mulf %497, %501 : vector<2x8x8xf32>
    %503 = arith.truncf %502 : vector<2x8x8xf32> to vector<2x8x8xbf16>
    %504 = arith.truncf %487 : vector<2x8x16xf32> to vector<2x8x16xbf16>
    "tpu.trace_start"() <{level = 10 : i32, message = "bqk,bkd->bqd"}> : () -> ()
    %cst_270 = arith.constant dense<0.000000e+00> : vector<2x8x16xf32>
    %505 = tpu.matmul %503, %504, %cst_270 {dimension_numbers = #tpu.dot_dimension_numbers<[2], [1], [1], [2], [0, 0, 0, 1, 1, 2], [0], [0]>} : vector<2x8x8xbf16>, vector<2x8x16xbf16>, vector<2x8x16xf32> -> vector<2x8x16xf32>
    "tpu.trace_stop"() : () -> ()
    %506 = vector.shape_cast %505 : vector<2x8x16xf32> to vector<16x16xf32>
    %c2_271 = arith.constant 2 : index
    %c0_272 = arith.constant 0 : index
    %c0_273 = arith.constant 0 : index
    %507 = vector.load %arg36[%c2_271, %c0_272, %c0_273] : memref<4x16x64xf32, #tpu.memory_space<vmem>>, vector<1x16x64xf32>
    %508 = vector.shape_cast %507 : vector<1x16x64xf32> to vector<16x64xf32>
    %509 = arith.truncf %506 : vector<16x16xf32> to vector<16x16xbf16>
    %510 = arith.truncf %508 : vector<16x64xf32> to vector<16x64xbf16>
    %cst_274 = arith.constant dense<0.000000e+00> : vector<16x64xf32>
    %511 = tpu.matmul %509, %510, %cst_274 {dimension_numbers = #tpu.dot_dimension_numbers<[1], [0], [0], [1], [0, 0, 1, 1], [], []>} : vector<16x16xbf16>, vector<16x64xbf16>, vector<16x64xf32> -> vector<16x64xf32>
    %512 = arith.addf %457, %511 : vector<16x64xf32>
    %c3_275 = arith.constant 3 : index
    %c0_276 = arith.constant 0 : index
    %c0_277 = arith.constant 0 : index
    %513 = vector.load %arg30[%c3_275, %c0_276, %c0_277] : memref<4x64x16xf32, #tpu.memory_space<vmem>>, vector<1x64x16xf32>
    %514 = vector.shape_cast %513 : vector<1x64x16xf32> to vector<64x16xf32>
    %515 = arith.truncf %346 : vector<16x64xf32> to vector<16x64xbf16>
    %516 = arith.truncf %514 : vector<64x16xf32> to vector<64x16xbf16>
    %cst_278 = arith.constant dense<0.000000e+00> : vector<16x16xf32>
    %517 = tpu.matmul %515, %516, %cst_278 {dimension_numbers = #tpu.dot_dimension_numbers<[1], [0], [0], [1], [0, 0, 1, 1], [], []>} : vector<16x64xbf16>, vector<64x16xbf16>, vector<16x16xf32> -> vector<16x16xf32>
    %c3_279 = arith.constant 3 : index
    %c0_280 = arith.constant 0 : index
    %c0_281 = arith.constant 0 : index
    %518 = vector.load %arg31[%c3_279, %c0_280, %c0_281] : memref<4x1x16xf32, #tpu.memory_space<vmem>>, vector<1x1x16xf32>
    %519 = vector.shape_cast %518 : vector<1x1x16xf32> to vector<1x16xf32>
    %520 = vector.broadcast %519 : vector<1x16xf32> to vector<16x16xf32>
    %521 = arith.addf %517, %520 : vector<16x16xf32>
    %522 = vector.shape_cast %521 : vector<16x16xf32> to vector<2x8x16xf32>
    %c3_282 = arith.constant 3 : index
    %c0_283 = arith.constant 0 : index
    %c0_284 = arith.constant 0 : index
    %523 = vector.load %arg32[%c3_282, %c0_283, %c0_284] : memref<4x64x16xf32, #tpu.memory_space<vmem>>, vector<1x64x16xf32>
    %524 = vector.shape_cast %523 : vector<1x64x16xf32> to vector<64x16xf32>
    %525 = arith.truncf %346 : vector<16x64xf32> to vector<16x64xbf16>
    %526 = arith.truncf %524 : vector<64x16xf32> to vector<64x16xbf16>
    %cst_285 = arith.constant dense<0.000000e+00> : vector<16x16xf32>
    %527 = tpu.matmul %525, %526, %cst_285 {dimension_numbers = #tpu.dot_dimension_numbers<[1], [0], [0], [1], [0, 0, 1, 1], [], []>} : vector<16x64xbf16>, vector<64x16xbf16>, vector<16x16xf32> -> vector<16x16xf32>
    %c3_286 = arith.constant 3 : index
    %c0_287 = arith.constant 0 : index
    %c0_288 = arith.constant 0 : index
    %528 = vector.load %arg33[%c3_286, %c0_287, %c0_288] : memref<4x1x16xf32, #tpu.memory_space<vmem>>, vector<1x1x16xf32>
    %529 = vector.shape_cast %528 : vector<1x1x16xf32> to vector<1x16xf32>
    %530 = vector.broadcast %529 : vector<1x16xf32> to vector<16x16xf32>
    %531 = arith.addf %527, %530 : vector<16x16xf32>
    %532 = vector.shape_cast %531 : vector<16x16xf32> to vector<2x8x16xf32>
    %c3_289 = arith.constant 3 : index
    %c0_290 = arith.constant 0 : index
    %c0_291 = arith.constant 0 : index
    %533 = vector.load %arg34[%c3_289, %c0_290, %c0_291] : memref<4x64x16xf32, #tpu.memory_space<vmem>>, vector<1x64x16xf32>
    %534 = vector.shape_cast %533 : vector<1x64x16xf32> to vector<64x16xf32>
    %535 = arith.truncf %346 : vector<16x64xf32> to vector<16x64xbf16>
    %536 = arith.truncf %534 : vector<64x16xf32> to vector<64x16xbf16>
    %cst_292 = arith.constant dense<0.000000e+00> : vector<16x16xf32>
    %537 = tpu.matmul %535, %536, %cst_292 {dimension_numbers = #tpu.dot_dimension_numbers<[1], [0], [0], [1], [0, 0, 1, 1], [], []>} : vector<16x64xbf16>, vector<64x16xbf16>, vector<16x16xf32> -> vector<16x16xf32>
    %c3_293 = arith.constant 3 : index
    %c0_294 = arith.constant 0 : index
    %c0_295 = arith.constant 0 : index
    %538 = vector.load %arg35[%c3_293, %c0_294, %c0_295] : memref<4x1x16xf32, #tpu.memory_space<vmem>>, vector<1x1x16xf32>
    %539 = vector.shape_cast %538 : vector<1x1x16xf32> to vector<1x16xf32>
    %540 = vector.broadcast %539 : vector<1x16xf32> to vector<16x16xf32>
    %541 = arith.addf %537, %540 : vector<16x16xf32>
    %542 = vector.shape_cast %541 : vector<16x16xf32> to vector<2x8x16xf32>
    %543 = arith.truncf %522 : vector<2x8x16xf32> to vector<2x8x16xbf16>
    %544 = arith.truncf %532 : vector<2x8x16xf32> to vector<2x8x16xbf16>
    "tpu.trace_start"() <{level = 10 : i32, message = "bqd,bkd->bqk"}> : () -> ()
    %cst_296 = arith.constant dense<0.000000e+00> : vector<2x8x8xf32>
    %545 = tpu.matmul %543, %544, %cst_296 {dimension_numbers = #tpu.dot_dimension_numbers<[2], [2], [1], [1], [0, 0, 0, 1, 1, 1], [0], [0]>} : vector<2x8x16xbf16>, vector<2x8x16xbf16>, vector<2x8x8xf32> -> vector<2x8x8xf32>
    "tpu.trace_stop"() : () -> ()
    %cst_297 = arith.constant 2.500000e-01 : f32
    %546 = vector.broadcast %cst_297 : f32 to vector<2x8x8xf32>
    %547 = arith.mulf %545, %546 : vector<2x8x8xf32>
    %cst_298 = arith.constant dense<0xFF800000> : vector<2x8xf32>
    %548 = vector.multi_reduction <maximumf>, %547, %cst_298 [2] : vector<2x8x8xf32> to vector<2x8xf32>
    %549 = vector.shape_cast %548 : vector<2x8xf32> to vector<2x8x1xf32>
    %550 = vector.broadcast %549 : vector<2x8x1xf32> to vector<2x8x8xf32>
    %551 = arith.subf %547, %550 : vector<2x8x8xf32>
    %552 = math.exp %551 : vector<2x8x8xf32>
    %cst_299 = arith.constant dense<0.000000e+00> : vector<2x8xf32>
    %553 = vector.multi_reduction <add>, %552, %cst_299 [2] : vector<2x8x8xf32> to vector<2x8xf32>
    %554 = vector.shape_cast %553 : vector<2x8xf32> to vector<2x8x1xf32>
    %555 = tpu.reciprocal %554 {approx = true} : vector<2x8x1xf32> -> vector<2x8x1xf32>
    %556 = vector.broadcast %555 : vector<2x8x1xf32> to vector<2x8x8xf32>
    %557 = arith.mulf %552, %556 : vector<2x8x8xf32>
    %558 = arith.truncf %557 : vector<2x8x8xf32> to vector<2x8x8xbf16>
    %559 = arith.truncf %542 : vector<2x8x16xf32> to vector<2x8x16xbf16>
    "tpu.trace_start"() <{level = 10 : i32, message = "bqk,bkd->bqd"}> : () -> ()
    %cst_300 = arith.constant dense<0.000000e+00> : vector<2x8x16xf32>
    %560 = tpu.matmul %558, %559, %cst_300 {dimension_numbers = #tpu.dot_dimension_numbers<[2], [1], [1], [2], [0, 0, 0, 1, 1, 2], [0], [0]>} : vector<2x8x8xbf16>, vector<2x8x16xbf16>, vector<2x8x16xf32> -> vector<2x8x16xf32>
    "tpu.trace_stop"() : () -> ()
    %561 = vector.shape_cast %560 : vector<2x8x16xf32> to vector<16x16xf32>
    %c3_301 = arith.constant 3 : index
    %c0_302 = arith.constant 0 : index
    %c0_303 = arith.constant 0 : index
    %562 = vector.load %arg36[%c3_301, %c0_302, %c0_303] : memref<4x16x64xf32, #tpu.memory_space<vmem>>, vector<1x16x64xf32>
    %563 = vector.shape_cast %562 : vector<1x16x64xf32> to vector<16x64xf32>
    %564 = arith.truncf %561 : vector<16x16xf32> to vector<16x16xbf16>
    %565 = arith.truncf %563 : vector<16x64xf32> to vector<16x64xbf16>
    %cst_304 = arith.constant dense<0.000000e+00> : vector<16x64xf32>
    %566 = tpu.matmul %564, %565, %cst_304 {dimension_numbers = #tpu.dot_dimension_numbers<[1], [0], [0], [1], [0, 0, 1, 1], [], []>} : vector<16x16xbf16>, vector<16x64xbf16>, vector<16x64xf32> -> vector<16x64xf32>
    %567 = arith.addf %512, %566 : vector<16x64xf32>
    %c0_305 = arith.constant 0 : index
    %c0_306 = arith.constant 0 : index
    %568 = vector.load %arg37[%c0_305, %c0_306] : memref<1x64xf32, #tpu.memory_space<vmem>>, vector<1x64xf32>
    %569 = vector.broadcast %568 : vector<1x64xf32> to vector<16x64xf32>
    %570 = arith.addf %567, %569 : vector<16x64xf32>
    %571 = arith.addf %346, %570 : vector<16x64xf32>
    %cst_307 = arith.constant dense<0.000000e+00> : vector<16xf32>
    %572 = vector.multi_reduction <add>, %571, %cst_307 [1] : vector<16x64xf32> to vector<16xf32>
    %573 = vector.shape_cast %572 : vector<16xf32> to vector<16x1xf32>
    %cst_308 = arith.constant 6.400000e+01 : f32
    %574 = vector.broadcast %cst_308 : f32 to vector<16x1xf32>
    %575 = arith.divf %573, %574 : vector<16x1xf32>
    %576 = vector.broadcast %575 : vector<16x1xf32> to vector<16x64xf32>
    %577 = arith.subf %571, %576 : vector<16x64xf32>
    %578 = arith.mulf %577, %577 : vector<16x64xf32>
    %cst_309 = arith.constant dense<0.000000e+00> : vector<16xf32>
    %579 = vector.multi_reduction <add>, %578, %cst_309 [1] : vector<16x64xf32> to vector<16xf32>
    %580 = vector.shape_cast %579 : vector<16xf32> to vector<16x1xf32>
    %cst_310 = arith.constant 6.400000e+01 : f32
    %581 = vector.broadcast %cst_310 : f32 to vector<16x1xf32>
    %582 = arith.divf %580, %581 : vector<16x1xf32>
    %583 = vector.broadcast %575 : vector<16x1xf32> to vector<16x64xf32>
    %584 = arith.subf %571, %583 : vector<16x64xf32>
    %cst_311 = arith.constant 9.99999974E-6 : f32
    %585 = vector.broadcast %cst_311 : f32 to vector<16x1xf32>
    %586 = arith.addf %582, %585 : vector<16x1xf32>
    %587 = math.rsqrt %586 : vector<16x1xf32>
    %588 = vector.broadcast %587 : vector<16x1xf32> to vector<16x64xf32>
    %589 = arith.mulf %584, %588 : vector<16x64xf32>
    %c0_312 = arith.constant 0 : index
    %c0_313 = arith.constant 0 : index
    %590 = vector.load %arg38[%c0_312, %c0_313] : memref<1x64xf32, #tpu.memory_space<vmem>>, vector<1x64xf32>
    %591 = vector.broadcast %590 : vector<1x64xf32> to vector<16x64xf32>
    %592 = arith.mulf %589, %591 : vector<16x64xf32>
    %c0_314 = arith.constant 0 : index
    %c0_315 = arith.constant 0 : index
    %593 = vector.load %arg39[%c0_314, %c0_315] : memref<1x64xf32, #tpu.memory_space<vmem>>, vector<1x64xf32>
    %594 = vector.broadcast %593 : vector<1x64xf32> to vector<16x64xf32>
    %595 = arith.addf %592, %594 : vector<16x64xf32>
    %cst_316 = arith.constant 0.000000e+00 : f32
    %596 = vector.broadcast %cst_316 : f32 to vector<16x64xf32>
    %c0_317 = arith.constant 0 : index
    %c0_318 = arith.constant 0 : index
    %c0_319 = arith.constant 0 : index
    %597 = vector.load %arg40[%c0_317, %c0_318, %c0_319] : memref<4x64x16xf32, #tpu.memory_space<vmem>>, vector<1x64x16xf32>
    %598 = vector.shape_cast %597 : vector<1x64x16xf32> to vector<64x16xf32>
    %599 = arith.truncf %595 : vector<16x64xf32> to vector<16x64xbf16>
    %600 = arith.truncf %598 : vector<64x16xf32> to vector<64x16xbf16>
    %cst_320 = arith.constant dense<0.000000e+00> : vector<16x16xf32>
    %601 = tpu.matmul %599, %600, %cst_320 {dimension_numbers = #tpu.dot_dimension_numbers<[1], [0], [0], [1], [0, 0, 1, 1], [], []>} : vector<16x64xbf16>, vector<64x16xbf16>, vector<16x16xf32> -> vector<16x16xf32>
    %c0_321 = arith.constant 0 : index
    %c0_322 = arith.constant 0 : index
    %c0_323 = arith.constant 0 : index
    %602 = vector.load %arg41[%c0_321, %c0_322, %c0_323] : memref<4x1x16xf32, #tpu.memory_space<vmem>>, vector<1x1x16xf32>
    %603 = vector.shape_cast %602 : vector<1x1x16xf32> to vector<1x16xf32>
    %604 = vector.broadcast %603 : vector<1x16xf32> to vector<16x16xf32>
    %605 = arith.addf %601, %604 : vector<16x16xf32>
    %606 = vector.shape_cast %605 : vector<16x16xf32> to vector<2x8x16xf32>
    %c0_324 = arith.constant 0 : index
    %c0_325 = arith.constant 0 : index
    %c0_326 = arith.constant 0 : index
    %607 = vector.load %arg42[%c0_324, %c0_325, %c0_326] : memref<4x64x16xf32, #tpu.memory_space<vmem>>, vector<1x64x16xf32>
    %608 = vector.shape_cast %607 : vector<1x64x16xf32> to vector<64x16xf32>
    %609 = arith.truncf %344 : vector<16x64xf32> to vector<16x64xbf16>
    %610 = arith.truncf %608 : vector<64x16xf32> to vector<64x16xbf16>
    %cst_327 = arith.constant dense<0.000000e+00> : vector<16x16xf32>
    %611 = tpu.matmul %609, %610, %cst_327 {dimension_numbers = #tpu.dot_dimension_numbers<[1], [0], [0], [1], [0, 0, 1, 1], [], []>} : vector<16x64xbf16>, vector<64x16xbf16>, vector<16x16xf32> -> vector<16x16xf32>
    %c0_328 = arith.constant 0 : index
    %c0_329 = arith.constant 0 : index
    %c0_330 = arith.constant 0 : index
    %612 = vector.load %arg43[%c0_328, %c0_329, %c0_330] : memref<4x1x16xf32, #tpu.memory_space<vmem>>, vector<1x1x16xf32>
    %613 = vector.shape_cast %612 : vector<1x1x16xf32> to vector<1x16xf32>
    %614 = vector.broadcast %613 : vector<1x16xf32> to vector<16x16xf32>
    %615 = arith.addf %611, %614 : vector<16x16xf32>
    %616 = vector.shape_cast %615 : vector<16x16xf32> to vector<2x8x16xf32>
    %c0_331 = arith.constant 0 : index
    %c0_332 = arith.constant 0 : index
    %c0_333 = arith.constant 0 : index
    %617 = vector.load %arg44[%c0_331, %c0_332, %c0_333] : memref<4x64x16xf32, #tpu.memory_space<vmem>>, vector<1x64x16xf32>
    %618 = vector.shape_cast %617 : vector<1x64x16xf32> to vector<64x16xf32>
    %619 = arith.truncf %344 : vector<16x64xf32> to vector<16x64xbf16>
    %620 = arith.truncf %618 : vector<64x16xf32> to vector<64x16xbf16>
    %cst_334 = arith.constant dense<0.000000e+00> : vector<16x16xf32>
    %621 = tpu.matmul %619, %620, %cst_334 {dimension_numbers = #tpu.dot_dimension_numbers<[1], [0], [0], [1], [0, 0, 1, 1], [], []>} : vector<16x64xbf16>, vector<64x16xbf16>, vector<16x16xf32> -> vector<16x16xf32>
    %c0_335 = arith.constant 0 : index
    %c0_336 = arith.constant 0 : index
    %c0_337 = arith.constant 0 : index
    %622 = vector.load %arg45[%c0_335, %c0_336, %c0_337] : memref<4x1x16xf32, #tpu.memory_space<vmem>>, vector<1x1x16xf32>
    %623 = vector.shape_cast %622 : vector<1x1x16xf32> to vector<1x16xf32>
    %624 = vector.broadcast %623 : vector<1x16xf32> to vector<16x16xf32>
    %625 = arith.addf %621, %624 : vector<16x16xf32>
    %626 = vector.shape_cast %625 : vector<16x16xf32> to vector<2x8x16xf32>
    %627 = arith.truncf %606 : vector<2x8x16xf32> to vector<2x8x16xbf16>
    %628 = arith.truncf %616 : vector<2x8x16xf32> to vector<2x8x16xbf16>
    "tpu.trace_start"() <{level = 10 : i32, message = "bqd,bkd->bqk"}> : () -> ()
    %cst_338 = arith.constant dense<0.000000e+00> : vector<2x8x8xf32>
    %629 = tpu.matmul %627, %628, %cst_338 {dimension_numbers = #tpu.dot_dimension_numbers<[2], [2], [1], [1], [0, 0, 0, 1, 1, 1], [0], [0]>} : vector<2x8x16xbf16>, vector<2x8x16xbf16>, vector<2x8x8xf32> -> vector<2x8x8xf32>
    "tpu.trace_stop"() : () -> ()
    %cst_339 = arith.constant 2.500000e-01 : f32
    %630 = vector.broadcast %cst_339 : f32 to vector<2x8x8xf32>
    %631 = arith.mulf %629, %630 : vector<2x8x8xf32>
    %cst_340 = arith.constant dense<0xFF800000> : vector<2x8xf32>
    %632 = vector.multi_reduction <maximumf>, %631, %cst_340 [2] : vector<2x8x8xf32> to vector<2x8xf32>
    %633 = vector.shape_cast %632 : vector<2x8xf32> to vector<2x8x1xf32>
    %634 = vector.broadcast %633 : vector<2x8x1xf32> to vector<2x8x8xf32>
    %635 = arith.subf %631, %634 : vector<2x8x8xf32>
    %636 = math.exp %635 : vector<2x8x8xf32>
    %cst_341 = arith.constant dense<0.000000e+00> : vector<2x8xf32>
    %637 = vector.multi_reduction <add>, %636, %cst_341 [2] : vector<2x8x8xf32> to vector<2x8xf32>
    %638 = vector.shape_cast %637 : vector<2x8xf32> to vector<2x8x1xf32>
    %639 = tpu.reciprocal %638 {approx = true} : vector<2x8x1xf32> -> vector<2x8x1xf32>
    %640 = vector.broadcast %639 : vector<2x8x1xf32> to vector<2x8x8xf32>
    %641 = arith.mulf %636, %640 : vector<2x8x8xf32>
    %642 = arith.truncf %641 : vector<2x8x8xf32> to vector<2x8x8xbf16>
    %643 = arith.truncf %626 : vector<2x8x16xf32> to vector<2x8x16xbf16>
    "tpu.trace_start"() <{level = 10 : i32, message = "bqk,bkd->bqd"}> : () -> ()
    %cst_342 = arith.constant dense<0.000000e+00> : vector<2x8x16xf32>
    %644 = tpu.matmul %642, %643, %cst_342 {dimension_numbers = #tpu.dot_dimension_numbers<[2], [1], [1], [2], [0, 0, 0, 1, 1, 2], [0], [0]>} : vector<2x8x8xbf16>, vector<2x8x16xbf16>, vector<2x8x16xf32> -> vector<2x8x16xf32>
    "tpu.trace_stop"() : () -> ()
    %645 = vector.shape_cast %644 : vector<2x8x16xf32> to vector<16x16xf32>
    %c0_343 = arith.constant 0 : index
    %c0_344 = arith.constant 0 : index
    %c0_345 = arith.constant 0 : index
    %646 = vector.load %arg46[%c0_343, %c0_344, %c0_345] : memref<4x16x64xf32, #tpu.memory_space<vmem>>, vector<1x16x64xf32>
    %647 = vector.shape_cast %646 : vector<1x16x64xf32> to vector<16x64xf32>
    %648 = arith.truncf %645 : vector<16x16xf32> to vector<16x16xbf16>
    %649 = arith.truncf %647 : vector<16x64xf32> to vector<16x64xbf16>
    %cst_346 = arith.constant dense<0.000000e+00> : vector<16x64xf32>
    %650 = tpu.matmul %648, %649, %cst_346 {dimension_numbers = #tpu.dot_dimension_numbers<[1], [0], [0], [1], [0, 0, 1, 1], [], []>} : vector<16x16xbf16>, vector<16x64xbf16>, vector<16x64xf32> -> vector<16x64xf32>
    %651 = arith.addf %596, %650 : vector<16x64xf32>
    %c1_347 = arith.constant 1 : index
    %c0_348 = arith.constant 0 : index
    %c0_349 = arith.constant 0 : index
    %652 = vector.load %arg40[%c1_347, %c0_348, %c0_349] : memref<4x64x16xf32, #tpu.memory_space<vmem>>, vector<1x64x16xf32>
    %653 = vector.shape_cast %652 : vector<1x64x16xf32> to vector<64x16xf32>
    %654 = arith.truncf %595 : vector<16x64xf32> to vector<16x64xbf16>
    %655 = arith.truncf %653 : vector<64x16xf32> to vector<64x16xbf16>
    %cst_350 = arith.constant dense<0.000000e+00> : vector<16x16xf32>
    %656 = tpu.matmul %654, %655, %cst_350 {dimension_numbers = #tpu.dot_dimension_numbers<[1], [0], [0], [1], [0, 0, 1, 1], [], []>} : vector<16x64xbf16>, vector<64x16xbf16>, vector<16x16xf32> -> vector<16x16xf32>
    %c1_351 = arith.constant 1 : index
    %c0_352 = arith.constant 0 : index
    %c0_353 = arith.constant 0 : index
    %657 = vector.load %arg41[%c1_351, %c0_352, %c0_353] : memref<4x1x16xf32, #tpu.memory_space<vmem>>, vector<1x1x16xf32>
    %658 = vector.shape_cast %657 : vector<1x1x16xf32> to vector<1x16xf32>
    %659 = vector.broadcast %658 : vector<1x16xf32> to vector<16x16xf32>
    %660 = arith.addf %656, %659 : vector<16x16xf32>
    %661 = vector.shape_cast %660 : vector<16x16xf32> to vector<2x8x16xf32>
    %c1_354 = arith.constant 1 : index
    %c0_355 = arith.constant 0 : index
    %c0_356 = arith.constant 0 : index
    %662 = vector.load %arg42[%c1_354, %c0_355, %c0_356] : memref<4x64x16xf32, #tpu.memory_space<vmem>>, vector<1x64x16xf32>
    %663 = vector.shape_cast %662 : vector<1x64x16xf32> to vector<64x16xf32>
    %664 = arith.truncf %344 : vector<16x64xf32> to vector<16x64xbf16>
    %665 = arith.truncf %663 : vector<64x16xf32> to vector<64x16xbf16>
    %cst_357 = arith.constant dense<0.000000e+00> : vector<16x16xf32>
    %666 = tpu.matmul %664, %665, %cst_357 {dimension_numbers = #tpu.dot_dimension_numbers<[1], [0], [0], [1], [0, 0, 1, 1], [], []>} : vector<16x64xbf16>, vector<64x16xbf16>, vector<16x16xf32> -> vector<16x16xf32>
    %c1_358 = arith.constant 1 : index
    %c0_359 = arith.constant 0 : index
    %c0_360 = arith.constant 0 : index
    %667 = vector.load %arg43[%c1_358, %c0_359, %c0_360] : memref<4x1x16xf32, #tpu.memory_space<vmem>>, vector<1x1x16xf32>
    %668 = vector.shape_cast %667 : vector<1x1x16xf32> to vector<1x16xf32>
    %669 = vector.broadcast %668 : vector<1x16xf32> to vector<16x16xf32>
    %670 = arith.addf %666, %669 : vector<16x16xf32>
    %671 = vector.shape_cast %670 : vector<16x16xf32> to vector<2x8x16xf32>
    %c1_361 = arith.constant 1 : index
    %c0_362 = arith.constant 0 : index
    %c0_363 = arith.constant 0 : index
    %672 = vector.load %arg44[%c1_361, %c0_362, %c0_363] : memref<4x64x16xf32, #tpu.memory_space<vmem>>, vector<1x64x16xf32>
    %673 = vector.shape_cast %672 : vector<1x64x16xf32> to vector<64x16xf32>
    %674 = arith.truncf %344 : vector<16x64xf32> to vector<16x64xbf16>
    %675 = arith.truncf %673 : vector<64x16xf32> to vector<64x16xbf16>
    %cst_364 = arith.constant dense<0.000000e+00> : vector<16x16xf32>
    %676 = tpu.matmul %674, %675, %cst_364 {dimension_numbers = #tpu.dot_dimension_numbers<[1], [0], [0], [1], [0, 0, 1, 1], [], []>} : vector<16x64xbf16>, vector<64x16xbf16>, vector<16x16xf32> -> vector<16x16xf32>
    %c1_365 = arith.constant 1 : index
    %c0_366 = arith.constant 0 : index
    %c0_367 = arith.constant 0 : index
    %677 = vector.load %arg45[%c1_365, %c0_366, %c0_367] : memref<4x1x16xf32, #tpu.memory_space<vmem>>, vector<1x1x16xf32>
    %678 = vector.shape_cast %677 : vector<1x1x16xf32> to vector<1x16xf32>
    %679 = vector.broadcast %678 : vector<1x16xf32> to vector<16x16xf32>
    %680 = arith.addf %676, %679 : vector<16x16xf32>
    %681 = vector.shape_cast %680 : vector<16x16xf32> to vector<2x8x16xf32>
    %682 = arith.truncf %661 : vector<2x8x16xf32> to vector<2x8x16xbf16>
    %683 = arith.truncf %671 : vector<2x8x16xf32> to vector<2x8x16xbf16>
    "tpu.trace_start"() <{level = 10 : i32, message = "bqd,bkd->bqk"}> : () -> ()
    %cst_368 = arith.constant dense<0.000000e+00> : vector<2x8x8xf32>
    %684 = tpu.matmul %682, %683, %cst_368 {dimension_numbers = #tpu.dot_dimension_numbers<[2], [2], [1], [1], [0, 0, 0, 1, 1, 1], [0], [0]>} : vector<2x8x16xbf16>, vector<2x8x16xbf16>, vector<2x8x8xf32> -> vector<2x8x8xf32>
    "tpu.trace_stop"() : () -> ()
    %cst_369 = arith.constant 2.500000e-01 : f32
    %685 = vector.broadcast %cst_369 : f32 to vector<2x8x8xf32>
    %686 = arith.mulf %684, %685 : vector<2x8x8xf32>
    %cst_370 = arith.constant dense<0xFF800000> : vector<2x8xf32>
    %687 = vector.multi_reduction <maximumf>, %686, %cst_370 [2] : vector<2x8x8xf32> to vector<2x8xf32>
    %688 = vector.shape_cast %687 : vector<2x8xf32> to vector<2x8x1xf32>
    %689 = vector.broadcast %688 : vector<2x8x1xf32> to vector<2x8x8xf32>
    %690 = arith.subf %686, %689 : vector<2x8x8xf32>
    %691 = math.exp %690 : vector<2x8x8xf32>
    %cst_371 = arith.constant dense<0.000000e+00> : vector<2x8xf32>
    %692 = vector.multi_reduction <add>, %691, %cst_371 [2] : vector<2x8x8xf32> to vector<2x8xf32>
    %693 = vector.shape_cast %692 : vector<2x8xf32> to vector<2x8x1xf32>
    %694 = tpu.reciprocal %693 {approx = true} : vector<2x8x1xf32> -> vector<2x8x1xf32>
    %695 = vector.broadcast %694 : vector<2x8x1xf32> to vector<2x8x8xf32>
    %696 = arith.mulf %691, %695 : vector<2x8x8xf32>
    %697 = arith.truncf %696 : vector<2x8x8xf32> to vector<2x8x8xbf16>
    %698 = arith.truncf %681 : vector<2x8x16xf32> to vector<2x8x16xbf16>
    "tpu.trace_start"() <{level = 10 : i32, message = "bqk,bkd->bqd"}> : () -> ()
    %cst_372 = arith.constant dense<0.000000e+00> : vector<2x8x16xf32>
    %699 = tpu.matmul %697, %698, %cst_372 {dimension_numbers = #tpu.dot_dimension_numbers<[2], [1], [1], [2], [0, 0, 0, 1, 1, 2], [0], [0]>} : vector<2x8x8xbf16>, vector<2x8x16xbf16>, vector<2x8x16xf32> -> vector<2x8x16xf32>
    "tpu.trace_stop"() : () -> ()
    %700 = vector.shape_cast %699 : vector<2x8x16xf32> to vector<16x16xf32>
    %c1_373 = arith.constant 1 : index
    %c0_374 = arith.constant 0 : index
    %c0_375 = arith.constant 0 : index
    %701 = vector.load %arg46[%c1_373, %c0_374, %c0_375] : memref<4x16x64xf32, #tpu.memory_space<vmem>>, vector<1x16x64xf32>
    %702 = vector.shape_cast %701 : vector<1x16x64xf32> to vector<16x64xf32>
    %703 = arith.truncf %700 : vector<16x16xf32> to vector<16x16xbf16>
    %704 = arith.truncf %702 : vector<16x64xf32> to vector<16x64xbf16>
    %cst_376 = arith.constant dense<0.000000e+00> : vector<16x64xf32>
    %705 = tpu.matmul %703, %704, %cst_376 {dimension_numbers = #tpu.dot_dimension_numbers<[1], [0], [0], [1], [0, 0, 1, 1], [], []>} : vector<16x16xbf16>, vector<16x64xbf16>, vector<16x64xf32> -> vector<16x64xf32>
    %706 = arith.addf %651, %705 : vector<16x64xf32>
    %c2_377 = arith.constant 2 : index
    %c0_378 = arith.constant 0 : index
    %c0_379 = arith.constant 0 : index
    %707 = vector.load %arg40[%c2_377, %c0_378, %c0_379] : memref<4x64x16xf32, #tpu.memory_space<vmem>>, vector<1x64x16xf32>
    %708 = vector.shape_cast %707 : vector<1x64x16xf32> to vector<64x16xf32>
    %709 = arith.truncf %595 : vector<16x64xf32> to vector<16x64xbf16>
    %710 = arith.truncf %708 : vector<64x16xf32> to vector<64x16xbf16>
    %cst_380 = arith.constant dense<0.000000e+00> : vector<16x16xf32>
    %711 = tpu.matmul %709, %710, %cst_380 {dimension_numbers = #tpu.dot_dimension_numbers<[1], [0], [0], [1], [0, 0, 1, 1], [], []>} : vector<16x64xbf16>, vector<64x16xbf16>, vector<16x16xf32> -> vector<16x16xf32>
    %c2_381 = arith.constant 2 : index
    %c0_382 = arith.constant 0 : index
    %c0_383 = arith.constant 0 : index
    %712 = vector.load %arg41[%c2_381, %c0_382, %c0_383] : memref<4x1x16xf32, #tpu.memory_space<vmem>>, vector<1x1x16xf32>
    %713 = vector.shape_cast %712 : vector<1x1x16xf32> to vector<1x16xf32>
    %714 = vector.broadcast %713 : vector<1x16xf32> to vector<16x16xf32>
    %715 = arith.addf %711, %714 : vector<16x16xf32>
    %716 = vector.shape_cast %715 : vector<16x16xf32> to vector<2x8x16xf32>
    %c2_384 = arith.constant 2 : index
    %c0_385 = arith.constant 0 : index
    %c0_386 = arith.constant 0 : index
    %717 = vector.load %arg42[%c2_384, %c0_385, %c0_386] : memref<4x64x16xf32, #tpu.memory_space<vmem>>, vector<1x64x16xf32>
    %718 = vector.shape_cast %717 : vector<1x64x16xf32> to vector<64x16xf32>
    %719 = arith.truncf %344 : vector<16x64xf32> to vector<16x64xbf16>
    %720 = arith.truncf %718 : vector<64x16xf32> to vector<64x16xbf16>
    %cst_387 = arith.constant dense<0.000000e+00> : vector<16x16xf32>
    %721 = tpu.matmul %719, %720, %cst_387 {dimension_numbers = #tpu.dot_dimension_numbers<[1], [0], [0], [1], [0, 0, 1, 1], [], []>} : vector<16x64xbf16>, vector<64x16xbf16>, vector<16x16xf32> -> vector<16x16xf32>
    %c2_388 = arith.constant 2 : index
    %c0_389 = arith.constant 0 : index
    %c0_390 = arith.constant 0 : index
    %722 = vector.load %arg43[%c2_388, %c0_389, %c0_390] : memref<4x1x16xf32, #tpu.memory_space<vmem>>, vector<1x1x16xf32>
    %723 = vector.shape_cast %722 : vector<1x1x16xf32> to vector<1x16xf32>
    %724 = vector.broadcast %723 : vector<1x16xf32> to vector<16x16xf32>
    %725 = arith.addf %721, %724 : vector<16x16xf32>
    %726 = vector.shape_cast %725 : vector<16x16xf32> to vector<2x8x16xf32>
    %c2_391 = arith.constant 2 : index
    %c0_392 = arith.constant 0 : index
    %c0_393 = arith.constant 0 : index
    %727 = vector.load %arg44[%c2_391, %c0_392, %c0_393] : memref<4x64x16xf32, #tpu.memory_space<vmem>>, vector<1x64x16xf32>
    %728 = vector.shape_cast %727 : vector<1x64x16xf32> to vector<64x16xf32>
    %729 = arith.truncf %344 : vector<16x64xf32> to vector<16x64xbf16>
    %730 = arith.truncf %728 : vector<64x16xf32> to vector<64x16xbf16>
    %cst_394 = arith.constant dense<0.000000e+00> : vector<16x16xf32>
    %731 = tpu.matmul %729, %730, %cst_394 {dimension_numbers = #tpu.dot_dimension_numbers<[1], [0], [0], [1], [0, 0, 1, 1], [], []>} : vector<16x64xbf16>, vector<64x16xbf16>, vector<16x16xf32> -> vector<16x16xf32>
    %c2_395 = arith.constant 2 : index
    %c0_396 = arith.constant 0 : index
    %c0_397 = arith.constant 0 : index
    %732 = vector.load %arg45[%c2_395, %c0_396, %c0_397] : memref<4x1x16xf32, #tpu.memory_space<vmem>>, vector<1x1x16xf32>
    %733 = vector.shape_cast %732 : vector<1x1x16xf32> to vector<1x16xf32>
    %734 = vector.broadcast %733 : vector<1x16xf32> to vector<16x16xf32>
    %735 = arith.addf %731, %734 : vector<16x16xf32>
    %736 = vector.shape_cast %735 : vector<16x16xf32> to vector<2x8x16xf32>
    %737 = arith.truncf %716 : vector<2x8x16xf32> to vector<2x8x16xbf16>
    %738 = arith.truncf %726 : vector<2x8x16xf32> to vector<2x8x16xbf16>
    "tpu.trace_start"() <{level = 10 : i32, message = "bqd,bkd->bqk"}> : () -> ()
    %cst_398 = arith.constant dense<0.000000e+00> : vector<2x8x8xf32>
    %739 = tpu.matmul %737, %738, %cst_398 {dimension_numbers = #tpu.dot_dimension_numbers<[2], [2], [1], [1], [0, 0, 0, 1, 1, 1], [0], [0]>} : vector<2x8x16xbf16>, vector<2x8x16xbf16>, vector<2x8x8xf32> -> vector<2x8x8xf32>
    "tpu.trace_stop"() : () -> ()
    %cst_399 = arith.constant 2.500000e-01 : f32
    %740 = vector.broadcast %cst_399 : f32 to vector<2x8x8xf32>
    %741 = arith.mulf %739, %740 : vector<2x8x8xf32>
    %cst_400 = arith.constant dense<0xFF800000> : vector<2x8xf32>
    %742 = vector.multi_reduction <maximumf>, %741, %cst_400 [2] : vector<2x8x8xf32> to vector<2x8xf32>
    %743 = vector.shape_cast %742 : vector<2x8xf32> to vector<2x8x1xf32>
    %744 = vector.broadcast %743 : vector<2x8x1xf32> to vector<2x8x8xf32>
    %745 = arith.subf %741, %744 : vector<2x8x8xf32>
    %746 = math.exp %745 : vector<2x8x8xf32>
    %cst_401 = arith.constant dense<0.000000e+00> : vector<2x8xf32>
    %747 = vector.multi_reduction <add>, %746, %cst_401 [2] : vector<2x8x8xf32> to vector<2x8xf32>
    %748 = vector.shape_cast %747 : vector<2x8xf32> to vector<2x8x1xf32>
    %749 = tpu.reciprocal %748 {approx = true} : vector<2x8x1xf32> -> vector<2x8x1xf32>
    %750 = vector.broadcast %749 : vector<2x8x1xf32> to vector<2x8x8xf32>
    %751 = arith.mulf %746, %750 : vector<2x8x8xf32>
    %752 = arith.truncf %751 : vector<2x8x8xf32> to vector<2x8x8xbf16>
    %753 = arith.truncf %736 : vector<2x8x16xf32> to vector<2x8x16xbf16>
    "tpu.trace_start"() <{level = 10 : i32, message = "bqk,bkd->bqd"}> : () -> ()
    %cst_402 = arith.constant dense<0.000000e+00> : vector<2x8x16xf32>
    %754 = tpu.matmul %752, %753, %cst_402 {dimension_numbers = #tpu.dot_dimension_numbers<[2], [1], [1], [2], [0, 0, 0, 1, 1, 2], [0], [0]>} : vector<2x8x8xbf16>, vector<2x8x16xbf16>, vector<2x8x16xf32> -> vector<2x8x16xf32>
    "tpu.trace_stop"() : () -> ()
    %755 = vector.shape_cast %754 : vector<2x8x16xf32> to vector<16x16xf32>
    %c2_403 = arith.constant 2 : index
    %c0_404 = arith.constant 0 : index
    %c0_405 = arith.constant 0 : index
    %756 = vector.load %arg46[%c2_403, %c0_404, %c0_405] : memref<4x16x64xf32, #tpu.memory_space<vmem>>, vector<1x16x64xf32>
    %757 = vector.shape_cast %756 : vector<1x16x64xf32> to vector<16x64xf32>
    %758 = arith.truncf %755 : vector<16x16xf32> to vector<16x16xbf16>
    %759 = arith.truncf %757 : vector<16x64xf32> to vector<16x64xbf16>
    %cst_406 = arith.constant dense<0.000000e+00> : vector<16x64xf32>
    %760 = tpu.matmul %758, %759, %cst_406 {dimension_numbers = #tpu.dot_dimension_numbers<[1], [0], [0], [1], [0, 0, 1, 1], [], []>} : vector<16x16xbf16>, vector<16x64xbf16>, vector<16x64xf32> -> vector<16x64xf32>
    %761 = arith.addf %706, %760 : vector<16x64xf32>
    %c3_407 = arith.constant 3 : index
    %c0_408 = arith.constant 0 : index
    %c0_409 = arith.constant 0 : index
    %762 = vector.load %arg40[%c3_407, %c0_408, %c0_409] : memref<4x64x16xf32, #tpu.memory_space<vmem>>, vector<1x64x16xf32>
    %763 = vector.shape_cast %762 : vector<1x64x16xf32> to vector<64x16xf32>
    %764 = arith.truncf %595 : vector<16x64xf32> to vector<16x64xbf16>
    %765 = arith.truncf %763 : vector<64x16xf32> to vector<64x16xbf16>
    %cst_410 = arith.constant dense<0.000000e+00> : vector<16x16xf32>
    %766 = tpu.matmul %764, %765, %cst_410 {dimension_numbers = #tpu.dot_dimension_numbers<[1], [0], [0], [1], [0, 0, 1, 1], [], []>} : vector<16x64xbf16>, vector<64x16xbf16>, vector<16x16xf32> -> vector<16x16xf32>
    %c3_411 = arith.constant 3 : index
    %c0_412 = arith.constant 0 : index
    %c0_413 = arith.constant 0 : index
    %767 = vector.load %arg41[%c3_411, %c0_412, %c0_413] : memref<4x1x16xf32, #tpu.memory_space<vmem>>, vector<1x1x16xf32>
    %768 = vector.shape_cast %767 : vector<1x1x16xf32> to vector<1x16xf32>
    %769 = vector.broadcast %768 : vector<1x16xf32> to vector<16x16xf32>
    %770 = arith.addf %766, %769 : vector<16x16xf32>
    %771 = vector.shape_cast %770 : vector<16x16xf32> to vector<2x8x16xf32>
    %c3_414 = arith.constant 3 : index
    %c0_415 = arith.constant 0 : index
    %c0_416 = arith.constant 0 : index
    %772 = vector.load %arg42[%c3_414, %c0_415, %c0_416] : memref<4x64x16xf32, #tpu.memory_space<vmem>>, vector<1x64x16xf32>
    %773 = vector.shape_cast %772 : vector<1x64x16xf32> to vector<64x16xf32>
    %774 = arith.truncf %344 : vector<16x64xf32> to vector<16x64xbf16>
    %775 = arith.truncf %773 : vector<64x16xf32> to vector<64x16xbf16>
    %cst_417 = arith.constant dense<0.000000e+00> : vector<16x16xf32>
    %776 = tpu.matmul %774, %775, %cst_417 {dimension_numbers = #tpu.dot_dimension_numbers<[1], [0], [0], [1], [0, 0, 1, 1], [], []>} : vector<16x64xbf16>, vector<64x16xbf16>, vector<16x16xf32> -> vector<16x16xf32>
    %c3_418 = arith.constant 3 : index
    %c0_419 = arith.constant 0 : index
    %c0_420 = arith.constant 0 : index
    %777 = vector.load %arg43[%c3_418, %c0_419, %c0_420] : memref<4x1x16xf32, #tpu.memory_space<vmem>>, vector<1x1x16xf32>
    %778 = vector.shape_cast %777 : vector<1x1x16xf32> to vector<1x16xf32>
    %779 = vector.broadcast %778 : vector<1x16xf32> to vector<16x16xf32>
    %780 = arith.addf %776, %779 : vector<16x16xf32>
    %781 = vector.shape_cast %780 : vector<16x16xf32> to vector<2x8x16xf32>
    %c3_421 = arith.constant 3 : index
    %c0_422 = arith.constant 0 : index
    %c0_423 = arith.constant 0 : index
    %782 = vector.load %arg44[%c3_421, %c0_422, %c0_423] : memref<4x64x16xf32, #tpu.memory_space<vmem>>, vector<1x64x16xf32>
    %783 = vector.shape_cast %782 : vector<1x64x16xf32> to vector<64x16xf32>
    %784 = arith.truncf %344 : vector<16x64xf32> to vector<16x64xbf16>
    %785 = arith.truncf %783 : vector<64x16xf32> to vector<64x16xbf16>
    %cst_424 = arith.constant dense<0.000000e+00> : vector<16x16xf32>
    %786 = tpu.matmul %784, %785, %cst_424 {dimension_numbers = #tpu.dot_dimension_numbers<[1], [0], [0], [1], [0, 0, 1, 1], [], []>} : vector<16x64xbf16>, vector<64x16xbf16>, vector<16x16xf32> -> vector<16x16xf32>
    %c3_425 = arith.constant 3 : index
    %c0_426 = arith.constant 0 : index
    %c0_427 = arith.constant 0 : index
    %787 = vector.load %arg45[%c3_425, %c0_426, %c0_427] : memref<4x1x16xf32, #tpu.memory_space<vmem>>, vector<1x1x16xf32>
    %788 = vector.shape_cast %787 : vector<1x1x16xf32> to vector<1x16xf32>
    %789 = vector.broadcast %788 : vector<1x16xf32> to vector<16x16xf32>
    %790 = arith.addf %786, %789 : vector<16x16xf32>
    %791 = vector.shape_cast %790 : vector<16x16xf32> to vector<2x8x16xf32>
    %792 = arith.truncf %771 : vector<2x8x16xf32> to vector<2x8x16xbf16>
    %793 = arith.truncf %781 : vector<2x8x16xf32> to vector<2x8x16xbf16>
    "tpu.trace_start"() <{level = 10 : i32, message = "bqd,bkd->bqk"}> : () -> ()
    %cst_428 = arith.constant dense<0.000000e+00> : vector<2x8x8xf32>
    %794 = tpu.matmul %792, %793, %cst_428 {dimension_numbers = #tpu.dot_dimension_numbers<[2], [2], [1], [1], [0, 0, 0, 1, 1, 1], [0], [0]>} : vector<2x8x16xbf16>, vector<2x8x16xbf16>, vector<2x8x8xf32> -> vector<2x8x8xf32>
    "tpu.trace_stop"() : () -> ()
    %cst_429 = arith.constant 2.500000e-01 : f32
    %795 = vector.broadcast %cst_429 : f32 to vector<2x8x8xf32>
    %796 = arith.mulf %794, %795 : vector<2x8x8xf32>
    %cst_430 = arith.constant dense<0xFF800000> : vector<2x8xf32>
    %797 = vector.multi_reduction <maximumf>, %796, %cst_430 [2] : vector<2x8x8xf32> to vector<2x8xf32>
    %798 = vector.shape_cast %797 : vector<2x8xf32> to vector<2x8x1xf32>
    %799 = vector.broadcast %798 : vector<2x8x1xf32> to vector<2x8x8xf32>
    %800 = arith.subf %796, %799 : vector<2x8x8xf32>
    %801 = math.exp %800 : vector<2x8x8xf32>
    %cst_431 = arith.constant dense<0.000000e+00> : vector<2x8xf32>
    %802 = vector.multi_reduction <add>, %801, %cst_431 [2] : vector<2x8x8xf32> to vector<2x8xf32>
    %803 = vector.shape_cast %802 : vector<2x8xf32> to vector<2x8x1xf32>
    %804 = tpu.reciprocal %803 {approx = true} : vector<2x8x1xf32> -> vector<2x8x1xf32>
    %805 = vector.broadcast %804 : vector<2x8x1xf32> to vector<2x8x8xf32>
    %806 = arith.mulf %801, %805 : vector<2x8x8xf32>
    %807 = arith.truncf %806 : vector<2x8x8xf32> to vector<2x8x8xbf16>
    %808 = arith.truncf %791 : vector<2x8x16xf32> to vector<2x8x16xbf16>
    "tpu.trace_start"() <{level = 10 : i32, message = "bqk,bkd->bqd"}> : () -> ()
    %cst_432 = arith.constant dense<0.000000e+00> : vector<2x8x16xf32>
    %809 = tpu.matmul %807, %808, %cst_432 {dimension_numbers = #tpu.dot_dimension_numbers<[2], [1], [1], [2], [0, 0, 0, 1, 1, 2], [0], [0]>} : vector<2x8x8xbf16>, vector<2x8x16xbf16>, vector<2x8x16xf32> -> vector<2x8x16xf32>
    "tpu.trace_stop"() : () -> ()
    %810 = vector.shape_cast %809 : vector<2x8x16xf32> to vector<16x16xf32>
    %c3_433 = arith.constant 3 : index
    %c0_434 = arith.constant 0 : index
    %c0_435 = arith.constant 0 : index
    %811 = vector.load %arg46[%c3_433, %c0_434, %c0_435] : memref<4x16x64xf32, #tpu.memory_space<vmem>>, vector<1x16x64xf32>
    %812 = vector.shape_cast %811 : vector<1x16x64xf32> to vector<16x64xf32>
    %813 = arith.truncf %810 : vector<16x16xf32> to vector<16x16xbf16>
    %814 = arith.truncf %812 : vector<16x64xf32> to vector<16x64xbf16>
    %cst_436 = arith.constant dense<0.000000e+00> : vector<16x64xf32>
    %815 = tpu.matmul %813, %814, %cst_436 {dimension_numbers = #tpu.dot_dimension_numbers<[1], [0], [0], [1], [0, 0, 1, 1], [], []>} : vector<16x16xbf16>, vector<16x64xbf16>, vector<16x64xf32> -> vector<16x64xf32>
    %816 = arith.addf %761, %815 : vector<16x64xf32>
    %c0_437 = arith.constant 0 : index
    %c0_438 = arith.constant 0 : index
    %817 = vector.load %arg47[%c0_437, %c0_438] : memref<1x64xf32, #tpu.memory_space<vmem>>, vector<1x64xf32>
    %818 = vector.broadcast %817 : vector<1x64xf32> to vector<16x64xf32>
    %819 = arith.addf %816, %818 : vector<16x64xf32>
    %820 = arith.addf %595, %819 : vector<16x64xf32>
    %cst_439 = arith.constant dense<0.000000e+00> : vector<16xf32>
    %821 = vector.multi_reduction <add>, %820, %cst_439 [1] : vector<16x64xf32> to vector<16xf32>
    %822 = vector.shape_cast %821 : vector<16xf32> to vector<16x1xf32>
    %cst_440 = arith.constant 6.400000e+01 : f32
    %823 = vector.broadcast %cst_440 : f32 to vector<16x1xf32>
    %824 = arith.divf %822, %823 : vector<16x1xf32>
    %825 = vector.broadcast %824 : vector<16x1xf32> to vector<16x64xf32>
    %826 = arith.subf %820, %825 : vector<16x64xf32>
    %827 = arith.mulf %826, %826 : vector<16x64xf32>
    %cst_441 = arith.constant dense<0.000000e+00> : vector<16xf32>
    %828 = vector.multi_reduction <add>, %827, %cst_441 [1] : vector<16x64xf32> to vector<16xf32>
    %829 = vector.shape_cast %828 : vector<16xf32> to vector<16x1xf32>
    %cst_442 = arith.constant 6.400000e+01 : f32
    %830 = vector.broadcast %cst_442 : f32 to vector<16x1xf32>
    %831 = arith.divf %829, %830 : vector<16x1xf32>
    %832 = vector.broadcast %824 : vector<16x1xf32> to vector<16x64xf32>
    %833 = arith.subf %820, %832 : vector<16x64xf32>
    %cst_443 = arith.constant 9.99999974E-6 : f32
    %834 = vector.broadcast %cst_443 : f32 to vector<16x1xf32>
    %835 = arith.addf %831, %834 : vector<16x1xf32>
    %836 = math.rsqrt %835 : vector<16x1xf32>
    %837 = vector.broadcast %836 : vector<16x1xf32> to vector<16x64xf32>
    %838 = arith.mulf %833, %837 : vector<16x64xf32>
    %c0_444 = arith.constant 0 : index
    %c0_445 = arith.constant 0 : index
    %839 = vector.load %arg48[%c0_444, %c0_445] : memref<1x64xf32, #tpu.memory_space<vmem>>, vector<1x64xf32>
    %840 = vector.broadcast %839 : vector<1x64xf32> to vector<16x64xf32>
    %841 = arith.mulf %838, %840 : vector<16x64xf32>
    %c0_446 = arith.constant 0 : index
    %c0_447 = arith.constant 0 : index
    %842 = vector.load %arg49[%c0_446, %c0_447] : memref<1x64xf32, #tpu.memory_space<vmem>>, vector<1x64xf32>
    %843 = vector.broadcast %842 : vector<1x64xf32> to vector<16x64xf32>
    %844 = arith.addf %841, %843 : vector<16x64xf32>
    %c0_448 = arith.constant 0 : index
    %c0_449 = arith.constant 0 : index
    %845 = vector.load %arg50[%c0_448, %c0_449] : memref<64x128xf32, #tpu.memory_space<vmem>>, vector<64x128xf32>
    %846 = arith.truncf %844 : vector<16x64xf32> to vector<16x64xbf16>
    %847 = arith.truncf %845 : vector<64x128xf32> to vector<64x128xbf16>
    %cst_450 = arith.constant dense<0.000000e+00> : vector<16x128xf32>
    %848 = tpu.matmul %846, %847, %cst_450 {dimension_numbers = #tpu.dot_dimension_numbers<[1], [0], [0], [1], [0, 0, 1, 1], [], []>} : vector<16x64xbf16>, vector<64x128xbf16>, vector<16x128xf32> -> vector<16x128xf32>
    %c0_451 = arith.constant 0 : index
    %c0_452 = arith.constant 0 : index
    %849 = vector.load %arg51[%c0_451, %c0_452] : memref<1x128xf32, #tpu.memory_space<vmem>>, vector<1x128xf32>
    %850 = vector.broadcast %849 : vector<1x128xf32> to vector<16x128xf32>
    %851 = arith.addf %848, %850 : vector<16x128xf32>
    %cst_453 = arith.constant 0.000000e+00 : f32
    %852 = vector.broadcast %cst_453 : f32 to vector<16x128xf32>
    %853 = arith.maximumf %851, %852 : vector<16x128xf32>
    %c0_454 = arith.constant 0 : index
    %c0_455 = arith.constant 0 : index
    %854 = vector.load %arg52[%c0_454, %c0_455] : memref<128x64xf32, #tpu.memory_space<vmem>>, vector<128x64xf32>
    %855 = arith.truncf %853 : vector<16x128xf32> to vector<16x128xbf16>
    %856 = arith.truncf %854 : vector<128x64xf32> to vector<128x64xbf16>
    %cst_456 = arith.constant dense<0.000000e+00> : vector<16x64xf32>
    %857 = tpu.matmul %855, %856, %cst_456 {dimension_numbers = #tpu.dot_dimension_numbers<[1], [0], [0], [1], [0, 0, 1, 1], [], []>} : vector<16x128xbf16>, vector<128x64xbf16>, vector<16x64xf32> -> vector<16x64xf32>
    %c0_457 = arith.constant 0 : index
    %c0_458 = arith.constant 0 : index
    %858 = vector.load %arg53[%c0_457, %c0_458] : memref<1x64xf32, #tpu.memory_space<vmem>>, vector<1x64xf32>
    %859 = vector.broadcast %858 : vector<1x64xf32> to vector<16x64xf32>
    %860 = arith.addf %857, %859 : vector<16x64xf32>
    %861 = arith.addf %844, %860 : vector<16x64xf32>
    %cst_459 = arith.constant dense<0.000000e+00> : vector<16xf32>
    %862 = vector.multi_reduction <add>, %861, %cst_459 [1] : vector<16x64xf32> to vector<16xf32>
    %863 = vector.shape_cast %862 : vector<16xf32> to vector<16x1xf32>
    %cst_460 = arith.constant 6.400000e+01 : f32
    %864 = vector.broadcast %cst_460 : f32 to vector<16x1xf32>
    %865 = arith.divf %863, %864 : vector<16x1xf32>
    %866 = vector.broadcast %865 : vector<16x1xf32> to vector<16x64xf32>
    %867 = arith.subf %861, %866 : vector<16x64xf32>
    %868 = arith.mulf %867, %867 : vector<16x64xf32>
    %cst_461 = arith.constant dense<0.000000e+00> : vector<16xf32>
    %869 = vector.multi_reduction <add>, %868, %cst_461 [1] : vector<16x64xf32> to vector<16xf32>
    %870 = vector.shape_cast %869 : vector<16xf32> to vector<16x1xf32>
    %cst_462 = arith.constant 6.400000e+01 : f32
    %871 = vector.broadcast %cst_462 : f32 to vector<16x1xf32>
    %872 = arith.divf %870, %871 : vector<16x1xf32>
    %873 = vector.broadcast %865 : vector<16x1xf32> to vector<16x64xf32>
    %874 = arith.subf %861, %873 : vector<16x64xf32>
    %cst_463 = arith.constant 9.99999974E-6 : f32
    %875 = vector.broadcast %cst_463 : f32 to vector<16x1xf32>
    %876 = arith.addf %872, %875 : vector<16x1xf32>
    %877 = math.rsqrt %876 : vector<16x1xf32>
    %878 = vector.broadcast %877 : vector<16x1xf32> to vector<16x64xf32>
    %879 = arith.mulf %874, %878 : vector<16x64xf32>
    %c0_464 = arith.constant 0 : index
    %c0_465 = arith.constant 0 : index
    %880 = vector.load %arg54[%c0_464, %c0_465] : memref<1x64xf32, #tpu.memory_space<vmem>>, vector<1x64xf32>
    %881 = vector.broadcast %880 : vector<1x64xf32> to vector<16x64xf32>
    %882 = arith.mulf %879, %881 : vector<16x64xf32>
    %c0_466 = arith.constant 0 : index
    %c0_467 = arith.constant 0 : index
    %883 = vector.load %arg55[%c0_466, %c0_467] : memref<1x64xf32, #tpu.memory_space<vmem>>, vector<1x64xf32>
    %884 = vector.broadcast %883 : vector<1x64xf32> to vector<16x64xf32>
    %885 = arith.addf %882, %884 : vector<16x64xf32>
    %cst_468 = arith.constant 0.000000e+00 : f32
    %886 = vector.broadcast %cst_468 : f32 to vector<16x64xf32>
    %c0_469 = arith.constant 0 : index
    %c0_470 = arith.constant 0 : index
    %c0_471 = arith.constant 0 : index
    %887 = vector.load %arg56[%c0_469, %c0_470, %c0_471] : memref<4x64x16xf32, #tpu.memory_space<vmem>>, vector<1x64x16xf32>
    %888 = vector.shape_cast %887 : vector<1x64x16xf32> to vector<64x16xf32>
    %889 = arith.truncf %885 : vector<16x64xf32> to vector<16x64xbf16>
    %890 = arith.truncf %888 : vector<64x16xf32> to vector<64x16xbf16>
    %cst_472 = arith.constant dense<0.000000e+00> : vector<16x16xf32>
    %891 = tpu.matmul %889, %890, %cst_472 {dimension_numbers = #tpu.dot_dimension_numbers<[1], [0], [0], [1], [0, 0, 1, 1], [], []>} : vector<16x64xbf16>, vector<64x16xbf16>, vector<16x16xf32> -> vector<16x16xf32>
    %c0_473 = arith.constant 0 : index
    %c0_474 = arith.constant 0 : index
    %c0_475 = arith.constant 0 : index
    %892 = vector.load %arg57[%c0_473, %c0_474, %c0_475] : memref<4x1x16xf32, #tpu.memory_space<vmem>>, vector<1x1x16xf32>
    %893 = vector.shape_cast %892 : vector<1x1x16xf32> to vector<1x16xf32>
    %894 = vector.broadcast %893 : vector<1x16xf32> to vector<16x16xf32>
    %895 = arith.addf %891, %894 : vector<16x16xf32>
    %896 = vector.shape_cast %895 : vector<16x16xf32> to vector<2x8x16xf32>
    %c0_476 = arith.constant 0 : index
    %c0_477 = arith.constant 0 : index
    %c0_478 = arith.constant 0 : index
    %897 = vector.load %arg58[%c0_476, %c0_477, %c0_478] : memref<4x64x16xf32, #tpu.memory_space<vmem>>, vector<1x64x16xf32>
    %898 = vector.shape_cast %897 : vector<1x64x16xf32> to vector<64x16xf32>
    %899 = arith.truncf %885 : vector<16x64xf32> to vector<16x64xbf16>
    %900 = arith.truncf %898 : vector<64x16xf32> to vector<64x16xbf16>
    %cst_479 = arith.constant dense<0.000000e+00> : vector<16x16xf32>
    %901 = tpu.matmul %899, %900, %cst_479 {dimension_numbers = #tpu.dot_dimension_numbers<[1], [0], [0], [1], [0, 0, 1, 1], [], []>} : vector<16x64xbf16>, vector<64x16xbf16>, vector<16x16xf32> -> vector<16x16xf32>
    %c0_480 = arith.constant 0 : index
    %c0_481 = arith.constant 0 : index
    %c0_482 = arith.constant 0 : index
    %902 = vector.load %arg59[%c0_480, %c0_481, %c0_482] : memref<4x1x16xf32, #tpu.memory_space<vmem>>, vector<1x1x16xf32>
    %903 = vector.shape_cast %902 : vector<1x1x16xf32> to vector<1x16xf32>
    %904 = vector.broadcast %903 : vector<1x16xf32> to vector<16x16xf32>
    %905 = arith.addf %901, %904 : vector<16x16xf32>
    %906 = vector.shape_cast %905 : vector<16x16xf32> to vector<2x8x16xf32>
    %c0_483 = arith.constant 0 : index
    %c0_484 = arith.constant 0 : index
    %c0_485 = arith.constant 0 : index
    %907 = vector.load %arg60[%c0_483, %c0_484, %c0_485] : memref<4x64x16xf32, #tpu.memory_space<vmem>>, vector<1x64x16xf32>
    %908 = vector.shape_cast %907 : vector<1x64x16xf32> to vector<64x16xf32>
    %909 = arith.truncf %885 : vector<16x64xf32> to vector<16x64xbf16>
    %910 = arith.truncf %908 : vector<64x16xf32> to vector<64x16xbf16>
    %cst_486 = arith.constant dense<0.000000e+00> : vector<16x16xf32>
    %911 = tpu.matmul %909, %910, %cst_486 {dimension_numbers = #tpu.dot_dimension_numbers<[1], [0], [0], [1], [0, 0, 1, 1], [], []>} : vector<16x64xbf16>, vector<64x16xbf16>, vector<16x16xf32> -> vector<16x16xf32>
    %c0_487 = arith.constant 0 : index
    %c0_488 = arith.constant 0 : index
    %c0_489 = arith.constant 0 : index
    %912 = vector.load %arg61[%c0_487, %c0_488, %c0_489] : memref<4x1x16xf32, #tpu.memory_space<vmem>>, vector<1x1x16xf32>
    %913 = vector.shape_cast %912 : vector<1x1x16xf32> to vector<1x16xf32>
    %914 = vector.broadcast %913 : vector<1x16xf32> to vector<16x16xf32>
    %915 = arith.addf %911, %914 : vector<16x16xf32>
    %916 = vector.shape_cast %915 : vector<16x16xf32> to vector<2x8x16xf32>
    %917 = arith.truncf %896 : vector<2x8x16xf32> to vector<2x8x16xbf16>
    %918 = arith.truncf %906 : vector<2x8x16xf32> to vector<2x8x16xbf16>
    "tpu.trace_start"() <{level = 10 : i32, message = "bqd,bkd->bqk"}> : () -> ()
    %cst_490 = arith.constant dense<0.000000e+00> : vector<2x8x8xf32>
    %919 = tpu.matmul %917, %918, %cst_490 {dimension_numbers = #tpu.dot_dimension_numbers<[2], [2], [1], [1], [0, 0, 0, 1, 1, 1], [0], [0]>} : vector<2x8x16xbf16>, vector<2x8x16xbf16>, vector<2x8x8xf32> -> vector<2x8x8xf32>
    "tpu.trace_stop"() : () -> ()
    %cst_491 = arith.constant 2.500000e-01 : f32
    %920 = vector.broadcast %cst_491 : f32 to vector<2x8x8xf32>
    %921 = arith.mulf %919, %920 : vector<2x8x8xf32>
    %cst_492 = arith.constant dense<0xFF800000> : vector<2x8xf32>
    %922 = vector.multi_reduction <maximumf>, %921, %cst_492 [2] : vector<2x8x8xf32> to vector<2x8xf32>
    %923 = vector.shape_cast %922 : vector<2x8xf32> to vector<2x8x1xf32>
    %924 = vector.broadcast %923 : vector<2x8x1xf32> to vector<2x8x8xf32>
    %925 = arith.subf %921, %924 : vector<2x8x8xf32>
    %926 = math.exp %925 : vector<2x8x8xf32>
    %cst_493 = arith.constant dense<0.000000e+00> : vector<2x8xf32>
    %927 = vector.multi_reduction <add>, %926, %cst_493 [2] : vector<2x8x8xf32> to vector<2x8xf32>
    %928 = vector.shape_cast %927 : vector<2x8xf32> to vector<2x8x1xf32>
    %929 = tpu.reciprocal %928 {approx = true} : vector<2x8x1xf32> -> vector<2x8x1xf32>
    %930 = vector.broadcast %929 : vector<2x8x1xf32> to vector<2x8x8xf32>
    %931 = arith.mulf %926, %930 : vector<2x8x8xf32>
    %932 = arith.truncf %931 : vector<2x8x8xf32> to vector<2x8x8xbf16>
    %933 = arith.truncf %916 : vector<2x8x16xf32> to vector<2x8x16xbf16>
    "tpu.trace_start"() <{level = 10 : i32, message = "bqk,bkd->bqd"}> : () -> ()
    %cst_494 = arith.constant dense<0.000000e+00> : vector<2x8x16xf32>
    %934 = tpu.matmul %932, %933, %cst_494 {dimension_numbers = #tpu.dot_dimension_numbers<[2], [1], [1], [2], [0, 0, 0, 1, 1, 2], [0], [0]>} : vector<2x8x8xbf16>, vector<2x8x16xbf16>, vector<2x8x16xf32> -> vector<2x8x16xf32>
    "tpu.trace_stop"() : () -> ()
    %935 = vector.shape_cast %934 : vector<2x8x16xf32> to vector<16x16xf32>
    %c0_495 = arith.constant 0 : index
    %c0_496 = arith.constant 0 : index
    %c0_497 = arith.constant 0 : index
    %936 = vector.load %arg62[%c0_495, %c0_496, %c0_497] : memref<4x16x64xf32, #tpu.memory_space<vmem>>, vector<1x16x64xf32>
    %937 = vector.shape_cast %936 : vector<1x16x64xf32> to vector<16x64xf32>
    %938 = arith.truncf %935 : vector<16x16xf32> to vector<16x16xbf16>
    %939 = arith.truncf %937 : vector<16x64xf32> to vector<16x64xbf16>
    %cst_498 = arith.constant dense<0.000000e+00> : vector<16x64xf32>
    %940 = tpu.matmul %938, %939, %cst_498 {dimension_numbers = #tpu.dot_dimension_numbers<[1], [0], [0], [1], [0, 0, 1, 1], [], []>} : vector<16x16xbf16>, vector<16x64xbf16>, vector<16x64xf32> -> vector<16x64xf32>
    %941 = arith.addf %886, %940 : vector<16x64xf32>
    %c1_499 = arith.constant 1 : index
    %c0_500 = arith.constant 0 : index
    %c0_501 = arith.constant 0 : index
    %942 = vector.load %arg56[%c1_499, %c0_500, %c0_501] : memref<4x64x16xf32, #tpu.memory_space<vmem>>, vector<1x64x16xf32>
    %943 = vector.shape_cast %942 : vector<1x64x16xf32> to vector<64x16xf32>
    %944 = arith.truncf %885 : vector<16x64xf32> to vector<16x64xbf16>
    %945 = arith.truncf %943 : vector<64x16xf32> to vector<64x16xbf16>
    %cst_502 = arith.constant dense<0.000000e+00> : vector<16x16xf32>
    %946 = tpu.matmul %944, %945, %cst_502 {dimension_numbers = #tpu.dot_dimension_numbers<[1], [0], [0], [1], [0, 0, 1, 1], [], []>} : vector<16x64xbf16>, vector<64x16xbf16>, vector<16x16xf32> -> vector<16x16xf32>
    %c1_503 = arith.constant 1 : index
    %c0_504 = arith.constant 0 : index
    %c0_505 = arith.constant 0 : index
    %947 = vector.load %arg57[%c1_503, %c0_504, %c0_505] : memref<4x1x16xf32, #tpu.memory_space<vmem>>, vector<1x1x16xf32>
    %948 = vector.shape_cast %947 : vector<1x1x16xf32> to vector<1x16xf32>
    %949 = vector.broadcast %948 : vector<1x16xf32> to vector<16x16xf32>
    %950 = arith.addf %946, %949 : vector<16x16xf32>
    %951 = vector.shape_cast %950 : vector<16x16xf32> to vector<2x8x16xf32>
    %c1_506 = arith.constant 1 : index
    %c0_507 = arith.constant 0 : index
    %c0_508 = arith.constant 0 : index
    %952 = vector.load %arg58[%c1_506, %c0_507, %c0_508] : memref<4x64x16xf32, #tpu.memory_space<vmem>>, vector<1x64x16xf32>
    %953 = vector.shape_cast %952 : vector<1x64x16xf32> to vector<64x16xf32>
    %954 = arith.truncf %885 : vector<16x64xf32> to vector<16x64xbf16>
    %955 = arith.truncf %953 : vector<64x16xf32> to vector<64x16xbf16>
    %cst_509 = arith.constant dense<0.000000e+00> : vector<16x16xf32>
    %956 = tpu.matmul %954, %955, %cst_509 {dimension_numbers = #tpu.dot_dimension_numbers<[1], [0], [0], [1], [0, 0, 1, 1], [], []>} : vector<16x64xbf16>, vector<64x16xbf16>, vector<16x16xf32> -> vector<16x16xf32>
    %c1_510 = arith.constant 1 : index
    %c0_511 = arith.constant 0 : index
    %c0_512 = arith.constant 0 : index
    %957 = vector.load %arg59[%c1_510, %c0_511, %c0_512] : memref<4x1x16xf32, #tpu.memory_space<vmem>>, vector<1x1x16xf32>
    %958 = vector.shape_cast %957 : vector<1x1x16xf32> to vector<1x16xf32>
    %959 = vector.broadcast %958 : vector<1x16xf32> to vector<16x16xf32>
    %960 = arith.addf %956, %959 : vector<16x16xf32>
    %961 = vector.shape_cast %960 : vector<16x16xf32> to vector<2x8x16xf32>
    %c1_513 = arith.constant 1 : index
    %c0_514 = arith.constant 0 : index
    %c0_515 = arith.constant 0 : index
    %962 = vector.load %arg60[%c1_513, %c0_514, %c0_515] : memref<4x64x16xf32, #tpu.memory_space<vmem>>, vector<1x64x16xf32>
    %963 = vector.shape_cast %962 : vector<1x64x16xf32> to vector<64x16xf32>
    %964 = arith.truncf %885 : vector<16x64xf32> to vector<16x64xbf16>
    %965 = arith.truncf %963 : vector<64x16xf32> to vector<64x16xbf16>
    %cst_516 = arith.constant dense<0.000000e+00> : vector<16x16xf32>
    %966 = tpu.matmul %964, %965, %cst_516 {dimension_numbers = #tpu.dot_dimension_numbers<[1], [0], [0], [1], [0, 0, 1, 1], [], []>} : vector<16x64xbf16>, vector<64x16xbf16>, vector<16x16xf32> -> vector<16x16xf32>
    %c1_517 = arith.constant 1 : index
    %c0_518 = arith.constant 0 : index
    %c0_519 = arith.constant 0 : index
    %967 = vector.load %arg61[%c1_517, %c0_518, %c0_519] : memref<4x1x16xf32, #tpu.memory_space<vmem>>, vector<1x1x16xf32>
    %968 = vector.shape_cast %967 : vector<1x1x16xf32> to vector<1x16xf32>
    %969 = vector.broadcast %968 : vector<1x16xf32> to vector<16x16xf32>
    %970 = arith.addf %966, %969 : vector<16x16xf32>
    %971 = vector.shape_cast %970 : vector<16x16xf32> to vector<2x8x16xf32>
    %972 = arith.truncf %951 : vector<2x8x16xf32> to vector<2x8x16xbf16>
    %973 = arith.truncf %961 : vector<2x8x16xf32> to vector<2x8x16xbf16>
    "tpu.trace_start"() <{level = 10 : i32, message = "bqd,bkd->bqk"}> : () -> ()
    %cst_520 = arith.constant dense<0.000000e+00> : vector<2x8x8xf32>
    %974 = tpu.matmul %972, %973, %cst_520 {dimension_numbers = #tpu.dot_dimension_numbers<[2], [2], [1], [1], [0, 0, 0, 1, 1, 1], [0], [0]>} : vector<2x8x16xbf16>, vector<2x8x16xbf16>, vector<2x8x8xf32> -> vector<2x8x8xf32>
    "tpu.trace_stop"() : () -> ()
    %cst_521 = arith.constant 2.500000e-01 : f32
    %975 = vector.broadcast %cst_521 : f32 to vector<2x8x8xf32>
    %976 = arith.mulf %974, %975 : vector<2x8x8xf32>
    %cst_522 = arith.constant dense<0xFF800000> : vector<2x8xf32>
    %977 = vector.multi_reduction <maximumf>, %976, %cst_522 [2] : vector<2x8x8xf32> to vector<2x8xf32>
    %978 = vector.shape_cast %977 : vector<2x8xf32> to vector<2x8x1xf32>
    %979 = vector.broadcast %978 : vector<2x8x1xf32> to vector<2x8x8xf32>
    %980 = arith.subf %976, %979 : vector<2x8x8xf32>
    %981 = math.exp %980 : vector<2x8x8xf32>
    %cst_523 = arith.constant dense<0.000000e+00> : vector<2x8xf32>
    %982 = vector.multi_reduction <add>, %981, %cst_523 [2] : vector<2x8x8xf32> to vector<2x8xf32>
    %983 = vector.shape_cast %982 : vector<2x8xf32> to vector<2x8x1xf32>
    %984 = tpu.reciprocal %983 {approx = true} : vector<2x8x1xf32> -> vector<2x8x1xf32>
    %985 = vector.broadcast %984 : vector<2x8x1xf32> to vector<2x8x8xf32>
    %986 = arith.mulf %981, %985 : vector<2x8x8xf32>
    %987 = arith.truncf %986 : vector<2x8x8xf32> to vector<2x8x8xbf16>
    %988 = arith.truncf %971 : vector<2x8x16xf32> to vector<2x8x16xbf16>
    "tpu.trace_start"() <{level = 10 : i32, message = "bqk,bkd->bqd"}> : () -> ()
    %cst_524 = arith.constant dense<0.000000e+00> : vector<2x8x16xf32>
    %989 = tpu.matmul %987, %988, %cst_524 {dimension_numbers = #tpu.dot_dimension_numbers<[2], [1], [1], [2], [0, 0, 0, 1, 1, 2], [0], [0]>} : vector<2x8x8xbf16>, vector<2x8x16xbf16>, vector<2x8x16xf32> -> vector<2x8x16xf32>
    "tpu.trace_stop"() : () -> ()
    %990 = vector.shape_cast %989 : vector<2x8x16xf32> to vector<16x16xf32>
    %c1_525 = arith.constant 1 : index
    %c0_526 = arith.constant 0 : index
    %c0_527 = arith.constant 0 : index
    %991 = vector.load %arg62[%c1_525, %c0_526, %c0_527] : memref<4x16x64xf32, #tpu.memory_space<vmem>>, vector<1x16x64xf32>
    %992 = vector.shape_cast %991 : vector<1x16x64xf32> to vector<16x64xf32>
    %993 = arith.truncf %990 : vector<16x16xf32> to vector<16x16xbf16>
    %994 = arith.truncf %992 : vector<16x64xf32> to vector<16x64xbf16>
    %cst_528 = arith.constant dense<0.000000e+00> : vector<16x64xf32>
    %995 = tpu.matmul %993, %994, %cst_528 {dimension_numbers = #tpu.dot_dimension_numbers<[1], [0], [0], [1], [0, 0, 1, 1], [], []>} : vector<16x16xbf16>, vector<16x64xbf16>, vector<16x64xf32> -> vector<16x64xf32>
    %996 = arith.addf %941, %995 : vector<16x64xf32>
    %c2_529 = arith.constant 2 : index
    %c0_530 = arith.constant 0 : index
    %c0_531 = arith.constant 0 : index
    %997 = vector.load %arg56[%c2_529, %c0_530, %c0_531] : memref<4x64x16xf32, #tpu.memory_space<vmem>>, vector<1x64x16xf32>
    %998 = vector.shape_cast %997 : vector<1x64x16xf32> to vector<64x16xf32>
    %999 = arith.truncf %885 : vector<16x64xf32> to vector<16x64xbf16>
    %1000 = arith.truncf %998 : vector<64x16xf32> to vector<64x16xbf16>
    %cst_532 = arith.constant dense<0.000000e+00> : vector<16x16xf32>
    %1001 = tpu.matmul %999, %1000, %cst_532 {dimension_numbers = #tpu.dot_dimension_numbers<[1], [0], [0], [1], [0, 0, 1, 1], [], []>} : vector<16x64xbf16>, vector<64x16xbf16>, vector<16x16xf32> -> vector<16x16xf32>
    %c2_533 = arith.constant 2 : index
    %c0_534 = arith.constant 0 : index
    %c0_535 = arith.constant 0 : index
    %1002 = vector.load %arg57[%c2_533, %c0_534, %c0_535] : memref<4x1x16xf32, #tpu.memory_space<vmem>>, vector<1x1x16xf32>
    %1003 = vector.shape_cast %1002 : vector<1x1x16xf32> to vector<1x16xf32>
    %1004 = vector.broadcast %1003 : vector<1x16xf32> to vector<16x16xf32>
    %1005 = arith.addf %1001, %1004 : vector<16x16xf32>
    %1006 = vector.shape_cast %1005 : vector<16x16xf32> to vector<2x8x16xf32>
    %c2_536 = arith.constant 2 : index
    %c0_537 = arith.constant 0 : index
    %c0_538 = arith.constant 0 : index
    %1007 = vector.load %arg58[%c2_536, %c0_537, %c0_538] : memref<4x64x16xf32, #tpu.memory_space<vmem>>, vector<1x64x16xf32>
    %1008 = vector.shape_cast %1007 : vector<1x64x16xf32> to vector<64x16xf32>
    %1009 = arith.truncf %885 : vector<16x64xf32> to vector<16x64xbf16>
    %1010 = arith.truncf %1008 : vector<64x16xf32> to vector<64x16xbf16>
    %cst_539 = arith.constant dense<0.000000e+00> : vector<16x16xf32>
    %1011 = tpu.matmul %1009, %1010, %cst_539 {dimension_numbers = #tpu.dot_dimension_numbers<[1], [0], [0], [1], [0, 0, 1, 1], [], []>} : vector<16x64xbf16>, vector<64x16xbf16>, vector<16x16xf32> -> vector<16x16xf32>
    %c2_540 = arith.constant 2 : index
    %c0_541 = arith.constant 0 : index
    %c0_542 = arith.constant 0 : index
    %1012 = vector.load %arg59[%c2_540, %c0_541, %c0_542] : memref<4x1x16xf32, #tpu.memory_space<vmem>>, vector<1x1x16xf32>
    %1013 = vector.shape_cast %1012 : vector<1x1x16xf32> to vector<1x16xf32>
    %1014 = vector.broadcast %1013 : vector<1x16xf32> to vector<16x16xf32>
    %1015 = arith.addf %1011, %1014 : vector<16x16xf32>
    %1016 = vector.shape_cast %1015 : vector<16x16xf32> to vector<2x8x16xf32>
    %c2_543 = arith.constant 2 : index
    %c0_544 = arith.constant 0 : index
    %c0_545 = arith.constant 0 : index
    %1017 = vector.load %arg60[%c2_543, %c0_544, %c0_545] : memref<4x64x16xf32, #tpu.memory_space<vmem>>, vector<1x64x16xf32>
    %1018 = vector.shape_cast %1017 : vector<1x64x16xf32> to vector<64x16xf32>
    %1019 = arith.truncf %885 : vector<16x64xf32> to vector<16x64xbf16>
    %1020 = arith.truncf %1018 : vector<64x16xf32> to vector<64x16xbf16>
    %cst_546 = arith.constant dense<0.000000e+00> : vector<16x16xf32>
    %1021 = tpu.matmul %1019, %1020, %cst_546 {dimension_numbers = #tpu.dot_dimension_numbers<[1], [0], [0], [1], [0, 0, 1, 1], [], []>} : vector<16x64xbf16>, vector<64x16xbf16>, vector<16x16xf32> -> vector<16x16xf32>
    %c2_547 = arith.constant 2 : index
    %c0_548 = arith.constant 0 : index
    %c0_549 = arith.constant 0 : index
    %1022 = vector.load %arg61[%c2_547, %c0_548, %c0_549] : memref<4x1x16xf32, #tpu.memory_space<vmem>>, vector<1x1x16xf32>
    %1023 = vector.shape_cast %1022 : vector<1x1x16xf32> to vector<1x16xf32>
    %1024 = vector.broadcast %1023 : vector<1x16xf32> to vector<16x16xf32>
    %1025 = arith.addf %1021, %1024 : vector<16x16xf32>
    %1026 = vector.shape_cast %1025 : vector<16x16xf32> to vector<2x8x16xf32>
    %1027 = arith.truncf %1006 : vector<2x8x16xf32> to vector<2x8x16xbf16>
    %1028 = arith.truncf %1016 : vector<2x8x16xf32> to vector<2x8x16xbf16>
    "tpu.trace_start"() <{level = 10 : i32, message = "bqd,bkd->bqk"}> : () -> ()
    %cst_550 = arith.constant dense<0.000000e+00> : vector<2x8x8xf32>
    %1029 = tpu.matmul %1027, %1028, %cst_550 {dimension_numbers = #tpu.dot_dimension_numbers<[2], [2], [1], [1], [0, 0, 0, 1, 1, 1], [0], [0]>} : vector<2x8x16xbf16>, vector<2x8x16xbf16>, vector<2x8x8xf32> -> vector<2x8x8xf32>
    "tpu.trace_stop"() : () -> ()
    %cst_551 = arith.constant 2.500000e-01 : f32
    %1030 = vector.broadcast %cst_551 : f32 to vector<2x8x8xf32>
    %1031 = arith.mulf %1029, %1030 : vector<2x8x8xf32>
    %cst_552 = arith.constant dense<0xFF800000> : vector<2x8xf32>
    %1032 = vector.multi_reduction <maximumf>, %1031, %cst_552 [2] : vector<2x8x8xf32> to vector<2x8xf32>
    %1033 = vector.shape_cast %1032 : vector<2x8xf32> to vector<2x8x1xf32>
    %1034 = vector.broadcast %1033 : vector<2x8x1xf32> to vector<2x8x8xf32>
    %1035 = arith.subf %1031, %1034 : vector<2x8x8xf32>
    %1036 = math.exp %1035 : vector<2x8x8xf32>
    %cst_553 = arith.constant dense<0.000000e+00> : vector<2x8xf32>
    %1037 = vector.multi_reduction <add>, %1036, %cst_553 [2] : vector<2x8x8xf32> to vector<2x8xf32>
    %1038 = vector.shape_cast %1037 : vector<2x8xf32> to vector<2x8x1xf32>
    %1039 = tpu.reciprocal %1038 {approx = true} : vector<2x8x1xf32> -> vector<2x8x1xf32>
    %1040 = vector.broadcast %1039 : vector<2x8x1xf32> to vector<2x8x8xf32>
    %1041 = arith.mulf %1036, %1040 : vector<2x8x8xf32>
    %1042 = arith.truncf %1041 : vector<2x8x8xf32> to vector<2x8x8xbf16>
    %1043 = arith.truncf %1026 : vector<2x8x16xf32> to vector<2x8x16xbf16>
    "tpu.trace_start"() <{level = 10 : i32, message = "bqk,bkd->bqd"}> : () -> ()
    %cst_554 = arith.constant dense<0.000000e+00> : vector<2x8x16xf32>
    %1044 = tpu.matmul %1042, %1043, %cst_554 {dimension_numbers = #tpu.dot_dimension_numbers<[2], [1], [1], [2], [0, 0, 0, 1, 1, 2], [0], [0]>} : vector<2x8x8xbf16>, vector<2x8x16xbf16>, vector<2x8x16xf32> -> vector<2x8x16xf32>
    "tpu.trace_stop"() : () -> ()
    %1045 = vector.shape_cast %1044 : vector<2x8x16xf32> to vector<16x16xf32>
    %c2_555 = arith.constant 2 : index
    %c0_556 = arith.constant 0 : index
    %c0_557 = arith.constant 0 : index
    %1046 = vector.load %arg62[%c2_555, %c0_556, %c0_557] : memref<4x16x64xf32, #tpu.memory_space<vmem>>, vector<1x16x64xf32>
    %1047 = vector.shape_cast %1046 : vector<1x16x64xf32> to vector<16x64xf32>
    %1048 = arith.truncf %1045 : vector<16x16xf32> to vector<16x16xbf16>
    %1049 = arith.truncf %1047 : vector<16x64xf32> to vector<16x64xbf16>
    %cst_558 = arith.constant dense<0.000000e+00> : vector<16x64xf32>
    %1050 = tpu.matmul %1048, %1049, %cst_558 {dimension_numbers = #tpu.dot_dimension_numbers<[1], [0], [0], [1], [0, 0, 1, 1], [], []>} : vector<16x16xbf16>, vector<16x64xbf16>, vector<16x64xf32> -> vector<16x64xf32>
    %1051 = arith.addf %996, %1050 : vector<16x64xf32>
    %c3_559 = arith.constant 3 : index
    %c0_560 = arith.constant 0 : index
    %c0_561 = arith.constant 0 : index
    %1052 = vector.load %arg56[%c3_559, %c0_560, %c0_561] : memref<4x64x16xf32, #tpu.memory_space<vmem>>, vector<1x64x16xf32>
    %1053 = vector.shape_cast %1052 : vector<1x64x16xf32> to vector<64x16xf32>
    %1054 = arith.truncf %885 : vector<16x64xf32> to vector<16x64xbf16>
    %1055 = arith.truncf %1053 : vector<64x16xf32> to vector<64x16xbf16>
    %cst_562 = arith.constant dense<0.000000e+00> : vector<16x16xf32>
    %1056 = tpu.matmul %1054, %1055, %cst_562 {dimension_numbers = #tpu.dot_dimension_numbers<[1], [0], [0], [1], [0, 0, 1, 1], [], []>} : vector<16x64xbf16>, vector<64x16xbf16>, vector<16x16xf32> -> vector<16x16xf32>
    %c3_563 = arith.constant 3 : index
    %c0_564 = arith.constant 0 : index
    %c0_565 = arith.constant 0 : index
    %1057 = vector.load %arg57[%c3_563, %c0_564, %c0_565] : memref<4x1x16xf32, #tpu.memory_space<vmem>>, vector<1x1x16xf32>
    %1058 = vector.shape_cast %1057 : vector<1x1x16xf32> to vector<1x16xf32>
    %1059 = vector.broadcast %1058 : vector<1x16xf32> to vector<16x16xf32>
    %1060 = arith.addf %1056, %1059 : vector<16x16xf32>
    %1061 = vector.shape_cast %1060 : vector<16x16xf32> to vector<2x8x16xf32>
    %c3_566 = arith.constant 3 : index
    %c0_567 = arith.constant 0 : index
    %c0_568 = arith.constant 0 : index
    %1062 = vector.load %arg58[%c3_566, %c0_567, %c0_568] : memref<4x64x16xf32, #tpu.memory_space<vmem>>, vector<1x64x16xf32>
    %1063 = vector.shape_cast %1062 : vector<1x64x16xf32> to vector<64x16xf32>
    %1064 = arith.truncf %885 : vector<16x64xf32> to vector<16x64xbf16>
    %1065 = arith.truncf %1063 : vector<64x16xf32> to vector<64x16xbf16>
    %cst_569 = arith.constant dense<0.000000e+00> : vector<16x16xf32>
    %1066 = tpu.matmul %1064, %1065, %cst_569 {dimension_numbers = #tpu.dot_dimension_numbers<[1], [0], [0], [1], [0, 0, 1, 1], [], []>} : vector<16x64xbf16>, vector<64x16xbf16>, vector<16x16xf32> -> vector<16x16xf32>
    %c3_570 = arith.constant 3 : index
    %c0_571 = arith.constant 0 : index
    %c0_572 = arith.constant 0 : index
    %1067 = vector.load %arg59[%c3_570, %c0_571, %c0_572] : memref<4x1x16xf32, #tpu.memory_space<vmem>>, vector<1x1x16xf32>
    %1068 = vector.shape_cast %1067 : vector<1x1x16xf32> to vector<1x16xf32>
    %1069 = vector.broadcast %1068 : vector<1x16xf32> to vector<16x16xf32>
    %1070 = arith.addf %1066, %1069 : vector<16x16xf32>
    %1071 = vector.shape_cast %1070 : vector<16x16xf32> to vector<2x8x16xf32>
    %c3_573 = arith.constant 3 : index
    %c0_574 = arith.constant 0 : index
    %c0_575 = arith.constant 0 : index
    %1072 = vector.load %arg60[%c3_573, %c0_574, %c0_575] : memref<4x64x16xf32, #tpu.memory_space<vmem>>, vector<1x64x16xf32>
    %1073 = vector.shape_cast %1072 : vector<1x64x16xf32> to vector<64x16xf32>
    %1074 = arith.truncf %885 : vector<16x64xf32> to vector<16x64xbf16>
    %1075 = arith.truncf %1073 : vector<64x16xf32> to vector<64x16xbf16>
    %cst_576 = arith.constant dense<0.000000e+00> : vector<16x16xf32>
    %1076 = tpu.matmul %1074, %1075, %cst_576 {dimension_numbers = #tpu.dot_dimension_numbers<[1], [0], [0], [1], [0, 0, 1, 1], [], []>} : vector<16x64xbf16>, vector<64x16xbf16>, vector<16x16xf32> -> vector<16x16xf32>
    %c3_577 = arith.constant 3 : index
    %c0_578 = arith.constant 0 : index
    %c0_579 = arith.constant 0 : index
    %1077 = vector.load %arg61[%c3_577, %c0_578, %c0_579] : memref<4x1x16xf32, #tpu.memory_space<vmem>>, vector<1x1x16xf32>
    %1078 = vector.shape_cast %1077 : vector<1x1x16xf32> to vector<1x16xf32>
    %1079 = vector.broadcast %1078 : vector<1x16xf32> to vector<16x16xf32>
    %1080 = arith.addf %1076, %1079 : vector<16x16xf32>
    %1081 = vector.shape_cast %1080 : vector<16x16xf32> to vector<2x8x16xf32>
    %1082 = arith.truncf %1061 : vector<2x8x16xf32> to vector<2x8x16xbf16>
    %1083 = arith.truncf %1071 : vector<2x8x16xf32> to vector<2x8x16xbf16>
    "tpu.trace_start"() <{level = 10 : i32, message = "bqd,bkd->bqk"}> : () -> ()
    %cst_580 = arith.constant dense<0.000000e+00> : vector<2x8x8xf32>
    %1084 = tpu.matmul %1082, %1083, %cst_580 {dimension_numbers = #tpu.dot_dimension_numbers<[2], [2], [1], [1], [0, 0, 0, 1, 1, 1], [0], [0]>} : vector<2x8x16xbf16>, vector<2x8x16xbf16>, vector<2x8x8xf32> -> vector<2x8x8xf32>
    "tpu.trace_stop"() : () -> ()
    %cst_581 = arith.constant 2.500000e-01 : f32
    %1085 = vector.broadcast %cst_581 : f32 to vector<2x8x8xf32>
    %1086 = arith.mulf %1084, %1085 : vector<2x8x8xf32>
    %cst_582 = arith.constant dense<0xFF800000> : vector<2x8xf32>
    %1087 = vector.multi_reduction <maximumf>, %1086, %cst_582 [2] : vector<2x8x8xf32> to vector<2x8xf32>
    %1088 = vector.shape_cast %1087 : vector<2x8xf32> to vector<2x8x1xf32>
    %1089 = vector.broadcast %1088 : vector<2x8x1xf32> to vector<2x8x8xf32>
    %1090 = arith.subf %1086, %1089 : vector<2x8x8xf32>
    %1091 = math.exp %1090 : vector<2x8x8xf32>
    %cst_583 = arith.constant dense<0.000000e+00> : vector<2x8xf32>
    %1092 = vector.multi_reduction <add>, %1091, %cst_583 [2] : vector<2x8x8xf32> to vector<2x8xf32>
    %1093 = vector.shape_cast %1092 : vector<2x8xf32> to vector<2x8x1xf32>
    %1094 = tpu.reciprocal %1093 {approx = true} : vector<2x8x1xf32> -> vector<2x8x1xf32>
    %1095 = vector.broadcast %1094 : vector<2x8x1xf32> to vector<2x8x8xf32>
    %1096 = arith.mulf %1091, %1095 : vector<2x8x8xf32>
    %1097 = arith.truncf %1096 : vector<2x8x8xf32> to vector<2x8x8xbf16>
    %1098 = arith.truncf %1081 : vector<2x8x16xf32> to vector<2x8x16xbf16>
    "tpu.trace_start"() <{level = 10 : i32, message = "bqk,bkd->bqd"}> : () -> ()
    %cst_584 = arith.constant dense<0.000000e+00> : vector<2x8x16xf32>
    %1099 = tpu.matmul %1097, %1098, %cst_584 {dimension_numbers = #tpu.dot_dimension_numbers<[2], [1], [1], [2], [0, 0, 0, 1, 1, 2], [0], [0]>} : vector<2x8x8xbf16>, vector<2x8x16xbf16>, vector<2x8x16xf32> -> vector<2x8x16xf32>
    "tpu.trace_stop"() : () -> ()
    %1100 = vector.shape_cast %1099 : vector<2x8x16xf32> to vector<16x16xf32>
    %c3_585 = arith.constant 3 : index
    %c0_586 = arith.constant 0 : index
    %c0_587 = arith.constant 0 : index
    %1101 = vector.load %arg62[%c3_585, %c0_586, %c0_587] : memref<4x16x64xf32, #tpu.memory_space<vmem>>, vector<1x16x64xf32>
    %1102 = vector.shape_cast %1101 : vector<1x16x64xf32> to vector<16x64xf32>
    %1103 = arith.truncf %1100 : vector<16x16xf32> to vector<16x16xbf16>
    %1104 = arith.truncf %1102 : vector<16x64xf32> to vector<16x64xbf16>
    %cst_588 = arith.constant dense<0.000000e+00> : vector<16x64xf32>
    %1105 = tpu.matmul %1103, %1104, %cst_588 {dimension_numbers = #tpu.dot_dimension_numbers<[1], [0], [0], [1], [0, 0, 1, 1], [], []>} : vector<16x16xbf16>, vector<16x64xbf16>, vector<16x64xf32> -> vector<16x64xf32>
    %1106 = arith.addf %1051, %1105 : vector<16x64xf32>
    %c0_589 = arith.constant 0 : index
    %c0_590 = arith.constant 0 : index
    %1107 = vector.load %arg63[%c0_589, %c0_590] : memref<1x64xf32, #tpu.memory_space<vmem>>, vector<1x64xf32>
    %1108 = vector.broadcast %1107 : vector<1x64xf32> to vector<16x64xf32>
    %1109 = arith.addf %1106, %1108 : vector<16x64xf32>
    %1110 = arith.addf %885, %1109 : vector<16x64xf32>
    %cst_591 = arith.constant dense<0.000000e+00> : vector<16xf32>
    %1111 = vector.multi_reduction <add>, %1110, %cst_591 [1] : vector<16x64xf32> to vector<16xf32>
    %1112 = vector.shape_cast %1111 : vector<16xf32> to vector<16x1xf32>
    %cst_592 = arith.constant 6.400000e+01 : f32
    %1113 = vector.broadcast %cst_592 : f32 to vector<16x1xf32>
    %1114 = arith.divf %1112, %1113 : vector<16x1xf32>
    %1115 = vector.broadcast %1114 : vector<16x1xf32> to vector<16x64xf32>
    %1116 = arith.subf %1110, %1115 : vector<16x64xf32>
    %1117 = arith.mulf %1116, %1116 : vector<16x64xf32>
    %cst_593 = arith.constant dense<0.000000e+00> : vector<16xf32>
    %1118 = vector.multi_reduction <add>, %1117, %cst_593 [1] : vector<16x64xf32> to vector<16xf32>
    %1119 = vector.shape_cast %1118 : vector<16xf32> to vector<16x1xf32>
    %cst_594 = arith.constant 6.400000e+01 : f32
    %1120 = vector.broadcast %cst_594 : f32 to vector<16x1xf32>
    %1121 = arith.divf %1119, %1120 : vector<16x1xf32>
    %1122 = vector.broadcast %1114 : vector<16x1xf32> to vector<16x64xf32>
    %1123 = arith.subf %1110, %1122 : vector<16x64xf32>
    %cst_595 = arith.constant 9.99999974E-6 : f32
    %1124 = vector.broadcast %cst_595 : f32 to vector<16x1xf32>
    %1125 = arith.addf %1121, %1124 : vector<16x1xf32>
    %1126 = math.rsqrt %1125 : vector<16x1xf32>
    %1127 = vector.broadcast %1126 : vector<16x1xf32> to vector<16x64xf32>
    %1128 = arith.mulf %1123, %1127 : vector<16x64xf32>
    %c0_596 = arith.constant 0 : index
    %c0_597 = arith.constant 0 : index
    %1129 = vector.load %arg64[%c0_596, %c0_597] : memref<1x64xf32, #tpu.memory_space<vmem>>, vector<1x64xf32>
    %1130 = vector.broadcast %1129 : vector<1x64xf32> to vector<16x64xf32>
    %1131 = arith.mulf %1128, %1130 : vector<16x64xf32>
    %c0_598 = arith.constant 0 : index
    %c0_599 = arith.constant 0 : index
    %1132 = vector.load %arg65[%c0_598, %c0_599] : memref<1x64xf32, #tpu.memory_space<vmem>>, vector<1x64xf32>
    %1133 = vector.broadcast %1132 : vector<1x64xf32> to vector<16x64xf32>
    %1134 = arith.addf %1131, %1133 : vector<16x64xf32>
    %cst_600 = arith.constant 0.000000e+00 : f32
    %1135 = vector.broadcast %cst_600 : f32 to vector<16x64xf32>
    %c0_601 = arith.constant 0 : index
    %c0_602 = arith.constant 0 : index
    %c0_603 = arith.constant 0 : index
    %1136 = vector.load %arg66[%c0_601, %c0_602, %c0_603] : memref<4x64x16xf32, #tpu.memory_space<vmem>>, vector<1x64x16xf32>
    %1137 = vector.shape_cast %1136 : vector<1x64x16xf32> to vector<64x16xf32>
    %1138 = arith.truncf %1134 : vector<16x64xf32> to vector<16x64xbf16>
    %1139 = arith.truncf %1137 : vector<64x16xf32> to vector<64x16xbf16>
    %cst_604 = arith.constant dense<0.000000e+00> : vector<16x16xf32>
    %1140 = tpu.matmul %1138, %1139, %cst_604 {dimension_numbers = #tpu.dot_dimension_numbers<[1], [0], [0], [1], [0, 0, 1, 1], [], []>} : vector<16x64xbf16>, vector<64x16xbf16>, vector<16x16xf32> -> vector<16x16xf32>
    %c0_605 = arith.constant 0 : index
    %c0_606 = arith.constant 0 : index
    %c0_607 = arith.constant 0 : index
    %1141 = vector.load %arg67[%c0_605, %c0_606, %c0_607] : memref<4x1x16xf32, #tpu.memory_space<vmem>>, vector<1x1x16xf32>
    %1142 = vector.shape_cast %1141 : vector<1x1x16xf32> to vector<1x16xf32>
    %1143 = vector.broadcast %1142 : vector<1x16xf32> to vector<16x16xf32>
    %1144 = arith.addf %1140, %1143 : vector<16x16xf32>
    %1145 = vector.shape_cast %1144 : vector<16x16xf32> to vector<2x8x16xf32>
    %c0_608 = arith.constant 0 : index
    %c0_609 = arith.constant 0 : index
    %c0_610 = arith.constant 0 : index
    %1146 = vector.load %arg68[%c0_608, %c0_609, %c0_610] : memref<4x64x16xf32, #tpu.memory_space<vmem>>, vector<1x64x16xf32>
    %1147 = vector.shape_cast %1146 : vector<1x64x16xf32> to vector<64x16xf32>
    %1148 = arith.truncf %344 : vector<16x64xf32> to vector<16x64xbf16>
    %1149 = arith.truncf %1147 : vector<64x16xf32> to vector<64x16xbf16>
    %cst_611 = arith.constant dense<0.000000e+00> : vector<16x16xf32>
    %1150 = tpu.matmul %1148, %1149, %cst_611 {dimension_numbers = #tpu.dot_dimension_numbers<[1], [0], [0], [1], [0, 0, 1, 1], [], []>} : vector<16x64xbf16>, vector<64x16xbf16>, vector<16x16xf32> -> vector<16x16xf32>
    %c0_612 = arith.constant 0 : index
    %c0_613 = arith.constant 0 : index
    %c0_614 = arith.constant 0 : index
    %1151 = vector.load %arg69[%c0_612, %c0_613, %c0_614] : memref<4x1x16xf32, #tpu.memory_space<vmem>>, vector<1x1x16xf32>
    %1152 = vector.shape_cast %1151 : vector<1x1x16xf32> to vector<1x16xf32>
    %1153 = vector.broadcast %1152 : vector<1x16xf32> to vector<16x16xf32>
    %1154 = arith.addf %1150, %1153 : vector<16x16xf32>
    %1155 = vector.shape_cast %1154 : vector<16x16xf32> to vector<2x8x16xf32>
    %c0_615 = arith.constant 0 : index
    %c0_616 = arith.constant 0 : index
    %c0_617 = arith.constant 0 : index
    %1156 = vector.load %arg70[%c0_615, %c0_616, %c0_617] : memref<4x64x16xf32, #tpu.memory_space<vmem>>, vector<1x64x16xf32>
    %1157 = vector.shape_cast %1156 : vector<1x64x16xf32> to vector<64x16xf32>
    %1158 = arith.truncf %344 : vector<16x64xf32> to vector<16x64xbf16>
    %1159 = arith.truncf %1157 : vector<64x16xf32> to vector<64x16xbf16>
    %cst_618 = arith.constant dense<0.000000e+00> : vector<16x16xf32>
    %1160 = tpu.matmul %1158, %1159, %cst_618 {dimension_numbers = #tpu.dot_dimension_numbers<[1], [0], [0], [1], [0, 0, 1, 1], [], []>} : vector<16x64xbf16>, vector<64x16xbf16>, vector<16x16xf32> -> vector<16x16xf32>
    %c0_619 = arith.constant 0 : index
    %c0_620 = arith.constant 0 : index
    %c0_621 = arith.constant 0 : index
    %1161 = vector.load %arg71[%c0_619, %c0_620, %c0_621] : memref<4x1x16xf32, #tpu.memory_space<vmem>>, vector<1x1x16xf32>
    %1162 = vector.shape_cast %1161 : vector<1x1x16xf32> to vector<1x16xf32>
    %1163 = vector.broadcast %1162 : vector<1x16xf32> to vector<16x16xf32>
    %1164 = arith.addf %1160, %1163 : vector<16x16xf32>
    %1165 = vector.shape_cast %1164 : vector<16x16xf32> to vector<2x8x16xf32>
    %1166 = arith.truncf %1145 : vector<2x8x16xf32> to vector<2x8x16xbf16>
    %1167 = arith.truncf %1155 : vector<2x8x16xf32> to vector<2x8x16xbf16>
    "tpu.trace_start"() <{level = 10 : i32, message = "bqd,bkd->bqk"}> : () -> ()
    %cst_622 = arith.constant dense<0.000000e+00> : vector<2x8x8xf32>
    %1168 = tpu.matmul %1166, %1167, %cst_622 {dimension_numbers = #tpu.dot_dimension_numbers<[2], [2], [1], [1], [0, 0, 0, 1, 1, 1], [0], [0]>} : vector<2x8x16xbf16>, vector<2x8x16xbf16>, vector<2x8x8xf32> -> vector<2x8x8xf32>
    "tpu.trace_stop"() : () -> ()
    %cst_623 = arith.constant 2.500000e-01 : f32
    %1169 = vector.broadcast %cst_623 : f32 to vector<2x8x8xf32>
    %1170 = arith.mulf %1168, %1169 : vector<2x8x8xf32>
    %cst_624 = arith.constant dense<0xFF800000> : vector<2x8xf32>
    %1171 = vector.multi_reduction <maximumf>, %1170, %cst_624 [2] : vector<2x8x8xf32> to vector<2x8xf32>
    %1172 = vector.shape_cast %1171 : vector<2x8xf32> to vector<2x8x1xf32>
    %1173 = vector.broadcast %1172 : vector<2x8x1xf32> to vector<2x8x8xf32>
    %1174 = arith.subf %1170, %1173 : vector<2x8x8xf32>
    %1175 = math.exp %1174 : vector<2x8x8xf32>
    %cst_625 = arith.constant dense<0.000000e+00> : vector<2x8xf32>
    %1176 = vector.multi_reduction <add>, %1175, %cst_625 [2] : vector<2x8x8xf32> to vector<2x8xf32>
    %1177 = vector.shape_cast %1176 : vector<2x8xf32> to vector<2x8x1xf32>
    %1178 = tpu.reciprocal %1177 {approx = true} : vector<2x8x1xf32> -> vector<2x8x1xf32>
    %1179 = vector.broadcast %1178 : vector<2x8x1xf32> to vector<2x8x8xf32>
    %1180 = arith.mulf %1175, %1179 : vector<2x8x8xf32>
    %1181 = arith.truncf %1180 : vector<2x8x8xf32> to vector<2x8x8xbf16>
    %1182 = arith.truncf %1165 : vector<2x8x16xf32> to vector<2x8x16xbf16>
    "tpu.trace_start"() <{level = 10 : i32, message = "bqk,bkd->bqd"}> : () -> ()
    %cst_626 = arith.constant dense<0.000000e+00> : vector<2x8x16xf32>
    %1183 = tpu.matmul %1181, %1182, %cst_626 {dimension_numbers = #tpu.dot_dimension_numbers<[2], [1], [1], [2], [0, 0, 0, 1, 1, 2], [0], [0]>} : vector<2x8x8xbf16>, vector<2x8x16xbf16>, vector<2x8x16xf32> -> vector<2x8x16xf32>
    "tpu.trace_stop"() : () -> ()
    %1184 = vector.shape_cast %1183 : vector<2x8x16xf32> to vector<16x16xf32>
    %c0_627 = arith.constant 0 : index
    %c0_628 = arith.constant 0 : index
    %c0_629 = arith.constant 0 : index
    %1185 = vector.load %arg72[%c0_627, %c0_628, %c0_629] : memref<4x16x64xf32, #tpu.memory_space<vmem>>, vector<1x16x64xf32>
    %1186 = vector.shape_cast %1185 : vector<1x16x64xf32> to vector<16x64xf32>
    %1187 = arith.truncf %1184 : vector<16x16xf32> to vector<16x16xbf16>
    %1188 = arith.truncf %1186 : vector<16x64xf32> to vector<16x64xbf16>
    %cst_630 = arith.constant dense<0.000000e+00> : vector<16x64xf32>
    %1189 = tpu.matmul %1187, %1188, %cst_630 {dimension_numbers = #tpu.dot_dimension_numbers<[1], [0], [0], [1], [0, 0, 1, 1], [], []>} : vector<16x16xbf16>, vector<16x64xbf16>, vector<16x64xf32> -> vector<16x64xf32>
    %1190 = arith.addf %1135, %1189 : vector<16x64xf32>
    %c1_631 = arith.constant 1 : index
    %c0_632 = arith.constant 0 : index
    %c0_633 = arith.constant 0 : index
    %1191 = vector.load %arg66[%c1_631, %c0_632, %c0_633] : memref<4x64x16xf32, #tpu.memory_space<vmem>>, vector<1x64x16xf32>
    %1192 = vector.shape_cast %1191 : vector<1x64x16xf32> to vector<64x16xf32>
    %1193 = arith.truncf %1134 : vector<16x64xf32> to vector<16x64xbf16>
    %1194 = arith.truncf %1192 : vector<64x16xf32> to vector<64x16xbf16>
    %cst_634 = arith.constant dense<0.000000e+00> : vector<16x16xf32>
    %1195 = tpu.matmul %1193, %1194, %cst_634 {dimension_numbers = #tpu.dot_dimension_numbers<[1], [0], [0], [1], [0, 0, 1, 1], [], []>} : vector<16x64xbf16>, vector<64x16xbf16>, vector<16x16xf32> -> vector<16x16xf32>
    %c1_635 = arith.constant 1 : index
    %c0_636 = arith.constant 0 : index
    %c0_637 = arith.constant 0 : index
    %1196 = vector.load %arg67[%c1_635, %c0_636, %c0_637] : memref<4x1x16xf32, #tpu.memory_space<vmem>>, vector<1x1x16xf32>
    %1197 = vector.shape_cast %1196 : vector<1x1x16xf32> to vector<1x16xf32>
    %1198 = vector.broadcast %1197 : vector<1x16xf32> to vector<16x16xf32>
    %1199 = arith.addf %1195, %1198 : vector<16x16xf32>
    %1200 = vector.shape_cast %1199 : vector<16x16xf32> to vector<2x8x16xf32>
    %c1_638 = arith.constant 1 : index
    %c0_639 = arith.constant 0 : index
    %c0_640 = arith.constant 0 : index
    %1201 = vector.load %arg68[%c1_638, %c0_639, %c0_640] : memref<4x64x16xf32, #tpu.memory_space<vmem>>, vector<1x64x16xf32>
    %1202 = vector.shape_cast %1201 : vector<1x64x16xf32> to vector<64x16xf32>
    %1203 = arith.truncf %344 : vector<16x64xf32> to vector<16x64xbf16>
    %1204 = arith.truncf %1202 : vector<64x16xf32> to vector<64x16xbf16>
    %cst_641 = arith.constant dense<0.000000e+00> : vector<16x16xf32>
    %1205 = tpu.matmul %1203, %1204, %cst_641 {dimension_numbers = #tpu.dot_dimension_numbers<[1], [0], [0], [1], [0, 0, 1, 1], [], []>} : vector<16x64xbf16>, vector<64x16xbf16>, vector<16x16xf32> -> vector<16x16xf32>
    %c1_642 = arith.constant 1 : index
    %c0_643 = arith.constant 0 : index
    %c0_644 = arith.constant 0 : index
    %1206 = vector.load %arg69[%c1_642, %c0_643, %c0_644] : memref<4x1x16xf32, #tpu.memory_space<vmem>>, vector<1x1x16xf32>
    %1207 = vector.shape_cast %1206 : vector<1x1x16xf32> to vector<1x16xf32>
    %1208 = vector.broadcast %1207 : vector<1x16xf32> to vector<16x16xf32>
    %1209 = arith.addf %1205, %1208 : vector<16x16xf32>
    %1210 = vector.shape_cast %1209 : vector<16x16xf32> to vector<2x8x16xf32>
    %c1_645 = arith.constant 1 : index
    %c0_646 = arith.constant 0 : index
    %c0_647 = arith.constant 0 : index
    %1211 = vector.load %arg70[%c1_645, %c0_646, %c0_647] : memref<4x64x16xf32, #tpu.memory_space<vmem>>, vector<1x64x16xf32>
    %1212 = vector.shape_cast %1211 : vector<1x64x16xf32> to vector<64x16xf32>
    %1213 = arith.truncf %344 : vector<16x64xf32> to vector<16x64xbf16>
    %1214 = arith.truncf %1212 : vector<64x16xf32> to vector<64x16xbf16>
    %cst_648 = arith.constant dense<0.000000e+00> : vector<16x16xf32>
    %1215 = tpu.matmul %1213, %1214, %cst_648 {dimension_numbers = #tpu.dot_dimension_numbers<[1], [0], [0], [1], [0, 0, 1, 1], [], []>} : vector<16x64xbf16>, vector<64x16xbf16>, vector<16x16xf32> -> vector<16x16xf32>
    %c1_649 = arith.constant 1 : index
    %c0_650 = arith.constant 0 : index
    %c0_651 = arith.constant 0 : index
    %1216 = vector.load %arg71[%c1_649, %c0_650, %c0_651] : memref<4x1x16xf32, #tpu.memory_space<vmem>>, vector<1x1x16xf32>
    %1217 = vector.shape_cast %1216 : vector<1x1x16xf32> to vector<1x16xf32>
    %1218 = vector.broadcast %1217 : vector<1x16xf32> to vector<16x16xf32>
    %1219 = arith.addf %1215, %1218 : vector<16x16xf32>
    %1220 = vector.shape_cast %1219 : vector<16x16xf32> to vector<2x8x16xf32>
    %1221 = arith.truncf %1200 : vector<2x8x16xf32> to vector<2x8x16xbf16>
    %1222 = arith.truncf %1210 : vector<2x8x16xf32> to vector<2x8x16xbf16>
    "tpu.trace_start"() <{level = 10 : i32, message = "bqd,bkd->bqk"}> : () -> ()
    %cst_652 = arith.constant dense<0.000000e+00> : vector<2x8x8xf32>
    %1223 = tpu.matmul %1221, %1222, %cst_652 {dimension_numbers = #tpu.dot_dimension_numbers<[2], [2], [1], [1], [0, 0, 0, 1, 1, 1], [0], [0]>} : vector<2x8x16xbf16>, vector<2x8x16xbf16>, vector<2x8x8xf32> -> vector<2x8x8xf32>
    "tpu.trace_stop"() : () -> ()
    %cst_653 = arith.constant 2.500000e-01 : f32
    %1224 = vector.broadcast %cst_653 : f32 to vector<2x8x8xf32>
    %1225 = arith.mulf %1223, %1224 : vector<2x8x8xf32>
    %cst_654 = arith.constant dense<0xFF800000> : vector<2x8xf32>
    %1226 = vector.multi_reduction <maximumf>, %1225, %cst_654 [2] : vector<2x8x8xf32> to vector<2x8xf32>
    %1227 = vector.shape_cast %1226 : vector<2x8xf32> to vector<2x8x1xf32>
    %1228 = vector.broadcast %1227 : vector<2x8x1xf32> to vector<2x8x8xf32>
    %1229 = arith.subf %1225, %1228 : vector<2x8x8xf32>
    %1230 = math.exp %1229 : vector<2x8x8xf32>
    %cst_655 = arith.constant dense<0.000000e+00> : vector<2x8xf32>
    %1231 = vector.multi_reduction <add>, %1230, %cst_655 [2] : vector<2x8x8xf32> to vector<2x8xf32>
    %1232 = vector.shape_cast %1231 : vector<2x8xf32> to vector<2x8x1xf32>
    %1233 = tpu.reciprocal %1232 {approx = true} : vector<2x8x1xf32> -> vector<2x8x1xf32>
    %1234 = vector.broadcast %1233 : vector<2x8x1xf32> to vector<2x8x8xf32>
    %1235 = arith.mulf %1230, %1234 : vector<2x8x8xf32>
    %1236 = arith.truncf %1235 : vector<2x8x8xf32> to vector<2x8x8xbf16>
    %1237 = arith.truncf %1220 : vector<2x8x16xf32> to vector<2x8x16xbf16>
    "tpu.trace_start"() <{level = 10 : i32, message = "bqk,bkd->bqd"}> : () -> ()
    %cst_656 = arith.constant dense<0.000000e+00> : vector<2x8x16xf32>
    %1238 = tpu.matmul %1236, %1237, %cst_656 {dimension_numbers = #tpu.dot_dimension_numbers<[2], [1], [1], [2], [0, 0, 0, 1, 1, 2], [0], [0]>} : vector<2x8x8xbf16>, vector<2x8x16xbf16>, vector<2x8x16xf32> -> vector<2x8x16xf32>
    "tpu.trace_stop"() : () -> ()
    %1239 = vector.shape_cast %1238 : vector<2x8x16xf32> to vector<16x16xf32>
    %c1_657 = arith.constant 1 : index
    %c0_658 = arith.constant 0 : index
    %c0_659 = arith.constant 0 : index
    %1240 = vector.load %arg72[%c1_657, %c0_658, %c0_659] : memref<4x16x64xf32, #tpu.memory_space<vmem>>, vector<1x16x64xf32>
    %1241 = vector.shape_cast %1240 : vector<1x16x64xf32> to vector<16x64xf32>
    %1242 = arith.truncf %1239 : vector<16x16xf32> to vector<16x16xbf16>
    %1243 = arith.truncf %1241 : vector<16x64xf32> to vector<16x64xbf16>
    %cst_660 = arith.constant dense<0.000000e+00> : vector<16x64xf32>
    %1244 = tpu.matmul %1242, %1243, %cst_660 {dimension_numbers = #tpu.dot_dimension_numbers<[1], [0], [0], [1], [0, 0, 1, 1], [], []>} : vector<16x16xbf16>, vector<16x64xbf16>, vector<16x64xf32> -> vector<16x64xf32>
    %1245 = arith.addf %1190, %1244 : vector<16x64xf32>
    %c2_661 = arith.constant 2 : index
    %c0_662 = arith.constant 0 : index
    %c0_663 = arith.constant 0 : index
    %1246 = vector.load %arg66[%c2_661, %c0_662, %c0_663] : memref<4x64x16xf32, #tpu.memory_space<vmem>>, vector<1x64x16xf32>
    %1247 = vector.shape_cast %1246 : vector<1x64x16xf32> to vector<64x16xf32>
    %1248 = arith.truncf %1134 : vector<16x64xf32> to vector<16x64xbf16>
    %1249 = arith.truncf %1247 : vector<64x16xf32> to vector<64x16xbf16>
    %cst_664 = arith.constant dense<0.000000e+00> : vector<16x16xf32>
    %1250 = tpu.matmul %1248, %1249, %cst_664 {dimension_numbers = #tpu.dot_dimension_numbers<[1], [0], [0], [1], [0, 0, 1, 1], [], []>} : vector<16x64xbf16>, vector<64x16xbf16>, vector<16x16xf32> -> vector<16x16xf32>
    %c2_665 = arith.constant 2 : index
    %c0_666 = arith.constant 0 : index
    %c0_667 = arith.constant 0 : index
    %1251 = vector.load %arg67[%c2_665, %c0_666, %c0_667] : memref<4x1x16xf32, #tpu.memory_space<vmem>>, vector<1x1x16xf32>
    %1252 = vector.shape_cast %1251 : vector<1x1x16xf32> to vector<1x16xf32>
    %1253 = vector.broadcast %1252 : vector<1x16xf32> to vector<16x16xf32>
    %1254 = arith.addf %1250, %1253 : vector<16x16xf32>
    %1255 = vector.shape_cast %1254 : vector<16x16xf32> to vector<2x8x16xf32>
    %c2_668 = arith.constant 2 : index
    %c0_669 = arith.constant 0 : index
    %c0_670 = arith.constant 0 : index
    %1256 = vector.load %arg68[%c2_668, %c0_669, %c0_670] : memref<4x64x16xf32, #tpu.memory_space<vmem>>, vector<1x64x16xf32>
    %1257 = vector.shape_cast %1256 : vector<1x64x16xf32> to vector<64x16xf32>
    %1258 = arith.truncf %344 : vector<16x64xf32> to vector<16x64xbf16>
    %1259 = arith.truncf %1257 : vector<64x16xf32> to vector<64x16xbf16>
    %cst_671 = arith.constant dense<0.000000e+00> : vector<16x16xf32>
    %1260 = tpu.matmul %1258, %1259, %cst_671 {dimension_numbers = #tpu.dot_dimension_numbers<[1], [0], [0], [1], [0, 0, 1, 1], [], []>} : vector<16x64xbf16>, vector<64x16xbf16>, vector<16x16xf32> -> vector<16x16xf32>
    %c2_672 = arith.constant 2 : index
    %c0_673 = arith.constant 0 : index
    %c0_674 = arith.constant 0 : index
    %1261 = vector.load %arg69[%c2_672, %c0_673, %c0_674] : memref<4x1x16xf32, #tpu.memory_space<vmem>>, vector<1x1x16xf32>
    %1262 = vector.shape_cast %1261 : vector<1x1x16xf32> to vector<1x16xf32>
    %1263 = vector.broadcast %1262 : vector<1x16xf32> to vector<16x16xf32>
    %1264 = arith.addf %1260, %1263 : vector<16x16xf32>
    %1265 = vector.shape_cast %1264 : vector<16x16xf32> to vector<2x8x16xf32>
    %c2_675 = arith.constant 2 : index
    %c0_676 = arith.constant 0 : index
    %c0_677 = arith.constant 0 : index
    %1266 = vector.load %arg70[%c2_675, %c0_676, %c0_677] : memref<4x64x16xf32, #tpu.memory_space<vmem>>, vector<1x64x16xf32>
    %1267 = vector.shape_cast %1266 : vector<1x64x16xf32> to vector<64x16xf32>
    %1268 = arith.truncf %344 : vector<16x64xf32> to vector<16x64xbf16>
    %1269 = arith.truncf %1267 : vector<64x16xf32> to vector<64x16xbf16>
    %cst_678 = arith.constant dense<0.000000e+00> : vector<16x16xf32>
    %1270 = tpu.matmul %1268, %1269, %cst_678 {dimension_numbers = #tpu.dot_dimension_numbers<[1], [0], [0], [1], [0, 0, 1, 1], [], []>} : vector<16x64xbf16>, vector<64x16xbf16>, vector<16x16xf32> -> vector<16x16xf32>
    %c2_679 = arith.constant 2 : index
    %c0_680 = arith.constant 0 : index
    %c0_681 = arith.constant 0 : index
    %1271 = vector.load %arg71[%c2_679, %c0_680, %c0_681] : memref<4x1x16xf32, #tpu.memory_space<vmem>>, vector<1x1x16xf32>
    %1272 = vector.shape_cast %1271 : vector<1x1x16xf32> to vector<1x16xf32>
    %1273 = vector.broadcast %1272 : vector<1x16xf32> to vector<16x16xf32>
    %1274 = arith.addf %1270, %1273 : vector<16x16xf32>
    %1275 = vector.shape_cast %1274 : vector<16x16xf32> to vector<2x8x16xf32>
    %1276 = arith.truncf %1255 : vector<2x8x16xf32> to vector<2x8x16xbf16>
    %1277 = arith.truncf %1265 : vector<2x8x16xf32> to vector<2x8x16xbf16>
    "tpu.trace_start"() <{level = 10 : i32, message = "bqd,bkd->bqk"}> : () -> ()
    %cst_682 = arith.constant dense<0.000000e+00> : vector<2x8x8xf32>
    %1278 = tpu.matmul %1276, %1277, %cst_682 {dimension_numbers = #tpu.dot_dimension_numbers<[2], [2], [1], [1], [0, 0, 0, 1, 1, 1], [0], [0]>} : vector<2x8x16xbf16>, vector<2x8x16xbf16>, vector<2x8x8xf32> -> vector<2x8x8xf32>
    "tpu.trace_stop"() : () -> ()
    %cst_683 = arith.constant 2.500000e-01 : f32
    %1279 = vector.broadcast %cst_683 : f32 to vector<2x8x8xf32>
    %1280 = arith.mulf %1278, %1279 : vector<2x8x8xf32>
    %cst_684 = arith.constant dense<0xFF800000> : vector<2x8xf32>
    %1281 = vector.multi_reduction <maximumf>, %1280, %cst_684 [2] : vector<2x8x8xf32> to vector<2x8xf32>
    %1282 = vector.shape_cast %1281 : vector<2x8xf32> to vector<2x8x1xf32>
    %1283 = vector.broadcast %1282 : vector<2x8x1xf32> to vector<2x8x8xf32>
    %1284 = arith.subf %1280, %1283 : vector<2x8x8xf32>
    %1285 = math.exp %1284 : vector<2x8x8xf32>
    %cst_685 = arith.constant dense<0.000000e+00> : vector<2x8xf32>
    %1286 = vector.multi_reduction <add>, %1285, %cst_685 [2] : vector<2x8x8xf32> to vector<2x8xf32>
    %1287 = vector.shape_cast %1286 : vector<2x8xf32> to vector<2x8x1xf32>
    %1288 = tpu.reciprocal %1287 {approx = true} : vector<2x8x1xf32> -> vector<2x8x1xf32>
    %1289 = vector.broadcast %1288 : vector<2x8x1xf32> to vector<2x8x8xf32>
    %1290 = arith.mulf %1285, %1289 : vector<2x8x8xf32>
    %1291 = arith.truncf %1290 : vector<2x8x8xf32> to vector<2x8x8xbf16>
    %1292 = arith.truncf %1275 : vector<2x8x16xf32> to vector<2x8x16xbf16>
    "tpu.trace_start"() <{level = 10 : i32, message = "bqk,bkd->bqd"}> : () -> ()
    %cst_686 = arith.constant dense<0.000000e+00> : vector<2x8x16xf32>
    %1293 = tpu.matmul %1291, %1292, %cst_686 {dimension_numbers = #tpu.dot_dimension_numbers<[2], [1], [1], [2], [0, 0, 0, 1, 1, 2], [0], [0]>} : vector<2x8x8xbf16>, vector<2x8x16xbf16>, vector<2x8x16xf32> -> vector<2x8x16xf32>
    "tpu.trace_stop"() : () -> ()
    %1294 = vector.shape_cast %1293 : vector<2x8x16xf32> to vector<16x16xf32>
    %c2_687 = arith.constant 2 : index
    %c0_688 = arith.constant 0 : index
    %c0_689 = arith.constant 0 : index
    %1295 = vector.load %arg72[%c2_687, %c0_688, %c0_689] : memref<4x16x64xf32, #tpu.memory_space<vmem>>, vector<1x16x64xf32>
    %1296 = vector.shape_cast %1295 : vector<1x16x64xf32> to vector<16x64xf32>
    %1297 = arith.truncf %1294 : vector<16x16xf32> to vector<16x16xbf16>
    %1298 = arith.truncf %1296 : vector<16x64xf32> to vector<16x64xbf16>
    %cst_690 = arith.constant dense<0.000000e+00> : vector<16x64xf32>
    %1299 = tpu.matmul %1297, %1298, %cst_690 {dimension_numbers = #tpu.dot_dimension_numbers<[1], [0], [0], [1], [0, 0, 1, 1], [], []>} : vector<16x16xbf16>, vector<16x64xbf16>, vector<16x64xf32> -> vector<16x64xf32>
    %1300 = arith.addf %1245, %1299 : vector<16x64xf32>
    %c3_691 = arith.constant 3 : index
    %c0_692 = arith.constant 0 : index
    %c0_693 = arith.constant 0 : index
    %1301 = vector.load %arg66[%c3_691, %c0_692, %c0_693] : memref<4x64x16xf32, #tpu.memory_space<vmem>>, vector<1x64x16xf32>
    %1302 = vector.shape_cast %1301 : vector<1x64x16xf32> to vector<64x16xf32>
    %1303 = arith.truncf %1134 : vector<16x64xf32> to vector<16x64xbf16>
    %1304 = arith.truncf %1302 : vector<64x16xf32> to vector<64x16xbf16>
    %cst_694 = arith.constant dense<0.000000e+00> : vector<16x16xf32>
    %1305 = tpu.matmul %1303, %1304, %cst_694 {dimension_numbers = #tpu.dot_dimension_numbers<[1], [0], [0], [1], [0, 0, 1, 1], [], []>} : vector<16x64xbf16>, vector<64x16xbf16>, vector<16x16xf32> -> vector<16x16xf32>
    %c3_695 = arith.constant 3 : index
    %c0_696 = arith.constant 0 : index
    %c0_697 = arith.constant 0 : index
    %1306 = vector.load %arg67[%c3_695, %c0_696, %c0_697] : memref<4x1x16xf32, #tpu.memory_space<vmem>>, vector<1x1x16xf32>
    %1307 = vector.shape_cast %1306 : vector<1x1x16xf32> to vector<1x16xf32>
    %1308 = vector.broadcast %1307 : vector<1x16xf32> to vector<16x16xf32>
    %1309 = arith.addf %1305, %1308 : vector<16x16xf32>
    %1310 = vector.shape_cast %1309 : vector<16x16xf32> to vector<2x8x16xf32>
    %c3_698 = arith.constant 3 : index
    %c0_699 = arith.constant 0 : index
    %c0_700 = arith.constant 0 : index
    %1311 = vector.load %arg68[%c3_698, %c0_699, %c0_700] : memref<4x64x16xf32, #tpu.memory_space<vmem>>, vector<1x64x16xf32>
    %1312 = vector.shape_cast %1311 : vector<1x64x16xf32> to vector<64x16xf32>
    %1313 = arith.truncf %344 : vector<16x64xf32> to vector<16x64xbf16>
    %1314 = arith.truncf %1312 : vector<64x16xf32> to vector<64x16xbf16>
    %cst_701 = arith.constant dense<0.000000e+00> : vector<16x16xf32>
    %1315 = tpu.matmul %1313, %1314, %cst_701 {dimension_numbers = #tpu.dot_dimension_numbers<[1], [0], [0], [1], [0, 0, 1, 1], [], []>} : vector<16x64xbf16>, vector<64x16xbf16>, vector<16x16xf32> -> vector<16x16xf32>
    %c3_702 = arith.constant 3 : index
    %c0_703 = arith.constant 0 : index
    %c0_704 = arith.constant 0 : index
    %1316 = vector.load %arg69[%c3_702, %c0_703, %c0_704] : memref<4x1x16xf32, #tpu.memory_space<vmem>>, vector<1x1x16xf32>
    %1317 = vector.shape_cast %1316 : vector<1x1x16xf32> to vector<1x16xf32>
    %1318 = vector.broadcast %1317 : vector<1x16xf32> to vector<16x16xf32>
    %1319 = arith.addf %1315, %1318 : vector<16x16xf32>
    %1320 = vector.shape_cast %1319 : vector<16x16xf32> to vector<2x8x16xf32>
    %c3_705 = arith.constant 3 : index
    %c0_706 = arith.constant 0 : index
    %c0_707 = arith.constant 0 : index
    %1321 = vector.load %arg70[%c3_705, %c0_706, %c0_707] : memref<4x64x16xf32, #tpu.memory_space<vmem>>, vector<1x64x16xf32>
    %1322 = vector.shape_cast %1321 : vector<1x64x16xf32> to vector<64x16xf32>
    %1323 = arith.truncf %344 : vector<16x64xf32> to vector<16x64xbf16>
    %1324 = arith.truncf %1322 : vector<64x16xf32> to vector<64x16xbf16>
    %cst_708 = arith.constant dense<0.000000e+00> : vector<16x16xf32>
    %1325 = tpu.matmul %1323, %1324, %cst_708 {dimension_numbers = #tpu.dot_dimension_numbers<[1], [0], [0], [1], [0, 0, 1, 1], [], []>} : vector<16x64xbf16>, vector<64x16xbf16>, vector<16x16xf32> -> vector<16x16xf32>
    %c3_709 = arith.constant 3 : index
    %c0_710 = arith.constant 0 : index
    %c0_711 = arith.constant 0 : index
    %1326 = vector.load %arg71[%c3_709, %c0_710, %c0_711] : memref<4x1x16xf32, #tpu.memory_space<vmem>>, vector<1x1x16xf32>
    %1327 = vector.shape_cast %1326 : vector<1x1x16xf32> to vector<1x16xf32>
    %1328 = vector.broadcast %1327 : vector<1x16xf32> to vector<16x16xf32>
    %1329 = arith.addf %1325, %1328 : vector<16x16xf32>
    %1330 = vector.shape_cast %1329 : vector<16x16xf32> to vector<2x8x16xf32>
    %1331 = arith.truncf %1310 : vector<2x8x16xf32> to vector<2x8x16xbf16>
    %1332 = arith.truncf %1320 : vector<2x8x16xf32> to vector<2x8x16xbf16>
    "tpu.trace_start"() <{level = 10 : i32, message = "bqd,bkd->bqk"}> : () -> ()
    %cst_712 = arith.constant dense<0.000000e+00> : vector<2x8x8xf32>
    %1333 = tpu.matmul %1331, %1332, %cst_712 {dimension_numbers = #tpu.dot_dimension_numbers<[2], [2], [1], [1], [0, 0, 0, 1, 1, 1], [0], [0]>} : vector<2x8x16xbf16>, vector<2x8x16xbf16>, vector<2x8x8xf32> -> vector<2x8x8xf32>
    "tpu.trace_stop"() : () -> ()
    %cst_713 = arith.constant 2.500000e-01 : f32
    %1334 = vector.broadcast %cst_713 : f32 to vector<2x8x8xf32>
    %1335 = arith.mulf %1333, %1334 : vector<2x8x8xf32>
    %cst_714 = arith.constant dense<0xFF800000> : vector<2x8xf32>
    %1336 = vector.multi_reduction <maximumf>, %1335, %cst_714 [2] : vector<2x8x8xf32> to vector<2x8xf32>
    %1337 = vector.shape_cast %1336 : vector<2x8xf32> to vector<2x8x1xf32>
    %1338 = vector.broadcast %1337 : vector<2x8x1xf32> to vector<2x8x8xf32>
    %1339 = arith.subf %1335, %1338 : vector<2x8x8xf32>
    %1340 = math.exp %1339 : vector<2x8x8xf32>
    %cst_715 = arith.constant dense<0.000000e+00> : vector<2x8xf32>
    %1341 = vector.multi_reduction <add>, %1340, %cst_715 [2] : vector<2x8x8xf32> to vector<2x8xf32>
    %1342 = vector.shape_cast %1341 : vector<2x8xf32> to vector<2x8x1xf32>
    %1343 = tpu.reciprocal %1342 {approx = true} : vector<2x8x1xf32> -> vector<2x8x1xf32>
    %1344 = vector.broadcast %1343 : vector<2x8x1xf32> to vector<2x8x8xf32>
    %1345 = arith.mulf %1340, %1344 : vector<2x8x8xf32>
    %1346 = arith.truncf %1345 : vector<2x8x8xf32> to vector<2x8x8xbf16>
    %1347 = arith.truncf %1330 : vector<2x8x16xf32> to vector<2x8x16xbf16>
    "tpu.trace_start"() <{level = 10 : i32, message = "bqk,bkd->bqd"}> : () -> ()
    %cst_716 = arith.constant dense<0.000000e+00> : vector<2x8x16xf32>
    %1348 = tpu.matmul %1346, %1347, %cst_716 {dimension_numbers = #tpu.dot_dimension_numbers<[2], [1], [1], [2], [0, 0, 0, 1, 1, 2], [0], [0]>} : vector<2x8x8xbf16>, vector<2x8x16xbf16>, vector<2x8x16xf32> -> vector<2x8x16xf32>
    "tpu.trace_stop"() : () -> ()
    %1349 = vector.shape_cast %1348 : vector<2x8x16xf32> to vector<16x16xf32>
    %c3_717 = arith.constant 3 : index
    %c0_718 = arith.constant 0 : index
    %c0_719 = arith.constant 0 : index
    %1350 = vector.load %arg72[%c3_717, %c0_718, %c0_719] : memref<4x16x64xf32, #tpu.memory_space<vmem>>, vector<1x16x64xf32>
    %1351 = vector.shape_cast %1350 : vector<1x16x64xf32> to vector<16x64xf32>
    %1352 = arith.truncf %1349 : vector<16x16xf32> to vector<16x16xbf16>
    %1353 = arith.truncf %1351 : vector<16x64xf32> to vector<16x64xbf16>
    %cst_720 = arith.constant dense<0.000000e+00> : vector<16x64xf32>
    %1354 = tpu.matmul %1352, %1353, %cst_720 {dimension_numbers = #tpu.dot_dimension_numbers<[1], [0], [0], [1], [0, 0, 1, 1], [], []>} : vector<16x16xbf16>, vector<16x64xbf16>, vector<16x64xf32> -> vector<16x64xf32>
    %1355 = arith.addf %1300, %1354 : vector<16x64xf32>
    %c0_721 = arith.constant 0 : index
    %c0_722 = arith.constant 0 : index
    %1356 = vector.load %arg73[%c0_721, %c0_722] : memref<1x64xf32, #tpu.memory_space<vmem>>, vector<1x64xf32>
    %1357 = vector.broadcast %1356 : vector<1x64xf32> to vector<16x64xf32>
    %1358 = arith.addf %1355, %1357 : vector<16x64xf32>
    %1359 = arith.addf %1134, %1358 : vector<16x64xf32>
    %cst_723 = arith.constant dense<0.000000e+00> : vector<16xf32>
    %1360 = vector.multi_reduction <add>, %1359, %cst_723 [1] : vector<16x64xf32> to vector<16xf32>
    %1361 = vector.shape_cast %1360 : vector<16xf32> to vector<16x1xf32>
    %cst_724 = arith.constant 6.400000e+01 : f32
    %1362 = vector.broadcast %cst_724 : f32 to vector<16x1xf32>
    %1363 = arith.divf %1361, %1362 : vector<16x1xf32>
    %1364 = vector.broadcast %1363 : vector<16x1xf32> to vector<16x64xf32>
    %1365 = arith.subf %1359, %1364 : vector<16x64xf32>
    %1366 = arith.mulf %1365, %1365 : vector<16x64xf32>
    %cst_725 = arith.constant dense<0.000000e+00> : vector<16xf32>
    %1367 = vector.multi_reduction <add>, %1366, %cst_725 [1] : vector<16x64xf32> to vector<16xf32>
    %1368 = vector.shape_cast %1367 : vector<16xf32> to vector<16x1xf32>
    %cst_726 = arith.constant 6.400000e+01 : f32
    %1369 = vector.broadcast %cst_726 : f32 to vector<16x1xf32>
    %1370 = arith.divf %1368, %1369 : vector<16x1xf32>
    %1371 = vector.broadcast %1363 : vector<16x1xf32> to vector<16x64xf32>
    %1372 = arith.subf %1359, %1371 : vector<16x64xf32>
    %cst_727 = arith.constant 9.99999974E-6 : f32
    %1373 = vector.broadcast %cst_727 : f32 to vector<16x1xf32>
    %1374 = arith.addf %1370, %1373 : vector<16x1xf32>
    %1375 = math.rsqrt %1374 : vector<16x1xf32>
    %1376 = vector.broadcast %1375 : vector<16x1xf32> to vector<16x64xf32>
    %1377 = arith.mulf %1372, %1376 : vector<16x64xf32>
    %c0_728 = arith.constant 0 : index
    %c0_729 = arith.constant 0 : index
    %1378 = vector.load %arg74[%c0_728, %c0_729] : memref<1x64xf32, #tpu.memory_space<vmem>>, vector<1x64xf32>
    %1379 = vector.broadcast %1378 : vector<1x64xf32> to vector<16x64xf32>
    %1380 = arith.mulf %1377, %1379 : vector<16x64xf32>
    %c0_730 = arith.constant 0 : index
    %c0_731 = arith.constant 0 : index
    %1381 = vector.load %arg75[%c0_730, %c0_731] : memref<1x64xf32, #tpu.memory_space<vmem>>, vector<1x64xf32>
    %1382 = vector.broadcast %1381 : vector<1x64xf32> to vector<16x64xf32>
    %1383 = arith.addf %1380, %1382 : vector<16x64xf32>
    %c0_732 = arith.constant 0 : index
    %c0_733 = arith.constant 0 : index
    %1384 = vector.load %arg76[%c0_732, %c0_733] : memref<64x128xf32, #tpu.memory_space<vmem>>, vector<64x128xf32>
    %1385 = arith.truncf %1383 : vector<16x64xf32> to vector<16x64xbf16>
    %1386 = arith.truncf %1384 : vector<64x128xf32> to vector<64x128xbf16>
    %cst_734 = arith.constant dense<0.000000e+00> : vector<16x128xf32>
    %1387 = tpu.matmul %1385, %1386, %cst_734 {dimension_numbers = #tpu.dot_dimension_numbers<[1], [0], [0], [1], [0, 0, 1, 1], [], []>} : vector<16x64xbf16>, vector<64x128xbf16>, vector<16x128xf32> -> vector<16x128xf32>
    %c0_735 = arith.constant 0 : index
    %c0_736 = arith.constant 0 : index
    %1388 = vector.load %arg77[%c0_735, %c0_736] : memref<1x128xf32, #tpu.memory_space<vmem>>, vector<1x128xf32>
    %1389 = vector.broadcast %1388 : vector<1x128xf32> to vector<16x128xf32>
    %1390 = arith.addf %1387, %1389 : vector<16x128xf32>
    %cst_737 = arith.constant 0.000000e+00 : f32
    %1391 = vector.broadcast %cst_737 : f32 to vector<16x128xf32>
    %1392 = arith.maximumf %1390, %1391 : vector<16x128xf32>
    %c0_738 = arith.constant 0 : index
    %c0_739 = arith.constant 0 : index
    %1393 = vector.load %arg78[%c0_738, %c0_739] : memref<128x64xf32, #tpu.memory_space<vmem>>, vector<128x64xf32>
    %1394 = arith.truncf %1392 : vector<16x128xf32> to vector<16x128xbf16>
    %1395 = arith.truncf %1393 : vector<128x64xf32> to vector<128x64xbf16>
    %cst_740 = arith.constant dense<0.000000e+00> : vector<16x64xf32>
    %1396 = tpu.matmul %1394, %1395, %cst_740 {dimension_numbers = #tpu.dot_dimension_numbers<[1], [0], [0], [1], [0, 0, 1, 1], [], []>} : vector<16x128xbf16>, vector<128x64xbf16>, vector<16x64xf32> -> vector<16x64xf32>
    %c0_741 = arith.constant 0 : index
    %c0_742 = arith.constant 0 : index
    %1397 = vector.load %arg79[%c0_741, %c0_742] : memref<1x64xf32, #tpu.memory_space<vmem>>, vector<1x64xf32>
    %1398 = vector.broadcast %1397 : vector<1x64xf32> to vector<16x64xf32>
    %1399 = arith.addf %1396, %1398 : vector<16x64xf32>
    %1400 = arith.addf %1383, %1399 : vector<16x64xf32>
    %cst_743 = arith.constant dense<0.000000e+00> : vector<16xf32>
    %1401 = vector.multi_reduction <add>, %1400, %cst_743 [1] : vector<16x64xf32> to vector<16xf32>
    %1402 = vector.shape_cast %1401 : vector<16xf32> to vector<16x1xf32>
    %cst_744 = arith.constant 6.400000e+01 : f32
    %1403 = vector.broadcast %cst_744 : f32 to vector<16x1xf32>
    %1404 = arith.divf %1402, %1403 : vector<16x1xf32>
    %1405 = vector.broadcast %1404 : vector<16x1xf32> to vector<16x64xf32>
    %1406 = arith.subf %1400, %1405 : vector<16x64xf32>
    %1407 = arith.mulf %1406, %1406 : vector<16x64xf32>
    %cst_745 = arith.constant dense<0.000000e+00> : vector<16xf32>
    %1408 = vector.multi_reduction <add>, %1407, %cst_745 [1] : vector<16x64xf32> to vector<16xf32>
    %1409 = vector.shape_cast %1408 : vector<16xf32> to vector<16x1xf32>
    %cst_746 = arith.constant 6.400000e+01 : f32
    %1410 = vector.broadcast %cst_746 : f32 to vector<16x1xf32>
    %1411 = arith.divf %1409, %1410 : vector<16x1xf32>
    %1412 = vector.broadcast %1404 : vector<16x1xf32> to vector<16x64xf32>
    %1413 = arith.subf %1400, %1412 : vector<16x64xf32>
    %cst_747 = arith.constant 9.99999974E-6 : f32
    %1414 = vector.broadcast %cst_747 : f32 to vector<16x1xf32>
    %1415 = arith.addf %1411, %1414 : vector<16x1xf32>
    %1416 = math.rsqrt %1415 : vector<16x1xf32>
    %1417 = vector.broadcast %1416 : vector<16x1xf32> to vector<16x64xf32>
    %1418 = arith.mulf %1413, %1417 : vector<16x64xf32>
    %c0_748 = arith.constant 0 : index
    %c0_749 = arith.constant 0 : index
    %1419 = vector.load %arg80[%c0_748, %c0_749] : memref<1x64xf32, #tpu.memory_space<vmem>>, vector<1x64xf32>
    %1420 = vector.broadcast %1419 : vector<1x64xf32> to vector<16x64xf32>
    %1421 = arith.mulf %1418, %1420 : vector<16x64xf32>
    %c0_750 = arith.constant 0 : index
    %c0_751 = arith.constant 0 : index
    %1422 = vector.load %arg81[%c0_750, %c0_751] : memref<1x64xf32, #tpu.memory_space<vmem>>, vector<1x64xf32>
    %1423 = vector.broadcast %1422 : vector<1x64xf32> to vector<16x64xf32>
    %1424 = arith.addf %1421, %1423 : vector<16x64xf32>
    %c0_752 = arith.constant 0 : index
    %c0_753 = arith.constant 0 : index
    %1425 = vector.load %arg82[%c0_752, %c0_753] : memref<64x128xf32, #tpu.memory_space<vmem>>, vector<64x128xf32>
    %1426 = arith.truncf %1424 : vector<16x64xf32> to vector<16x64xbf16>
    %1427 = arith.truncf %1425 : vector<64x128xf32> to vector<64x128xbf16>
    %cst_754 = arith.constant dense<0.000000e+00> : vector<16x128xf32>
    %1428 = tpu.matmul %1426, %1427, %cst_754 {dimension_numbers = #tpu.dot_dimension_numbers<[1], [0], [0], [1], [0, 0, 1, 1], [], []>} : vector<16x64xbf16>, vector<64x128xbf16>, vector<16x128xf32> -> vector<16x128xf32>
    %c0_755 = arith.constant 0 : index
    %c0_756 = arith.constant 0 : index
    %1429 = vector.load %arg83[%c0_755, %c0_756] : memref<1x128xf32, #tpu.memory_space<vmem>>, vector<1x128xf32>
    %1430 = vector.broadcast %1429 : vector<1x128xf32> to vector<16x128xf32>
    %1431 = arith.addf %1428, %1430 : vector<16x128xf32>
    %1432 = vector.shape_cast %1431 : vector<16x128xf32> to vector<2x8x128xf32>
    %c0_757 = arith.constant 0 : index
    %c0_758 = arith.constant 0 : index
    %c0_759 = arith.constant 0 : index
    %1433 = vector.load %arg84[%c0_757, %c0_758, %c0_759] : memref<2x8x128xf32, #tpu.memory_space<vmem>>, vector<2x8x128xf32>
    tpu.vector_store %arg84[%c0_757, %c0_758, %c0_759], %1432 {strides = array<i32>} : memref<2x8x128xf32, #tpu.memory_space<vmem>>, vector<2x8x128xf32>,
    return
  }
}

</mosaic_0001>

<llo_original>
// kernel: vqa_forward.1
$region0: #{vqa_forward.1}
  #allocation0 [shape = 'u32[]', space=smem, size = 0x4, offset = 0x4, fixed_abs, tag = 'smem constant byte address 0x4 - core index']
  #allocation1 [shape = 'u32[72,128]{1,0:T(1,128)}', space=vmem, size = 0x9000, scoped, tag = 'internal scratch']
  %s0 = inlined_call_operand.smem [shape: u32[85], index: -1, kind: input, shape index: {}]
  %s1 = sld [smem:[%s0]]
  %s2 = scalar_lea.smem %s0, 1
  %s3 = sld [smem:[%s2]]
  %s4 = scalar_lea.smem %s0, 2
  %s5 = sld [smem:[%s4]]
  %s6 = scalar_lea.smem %s0, 3
  %s7 = sld [smem:[%s6]]
  %s8 = scalar_lea.smem %s0, 4
  %s9 = sld [smem:[%s8]]
  %s10 = scalar_lea.smem %s0, 5
  %s11 = sld [smem:[%s10]]
  %s12 = scalar_lea.smem %s0, 6
  %s13 = sld [smem:[%s12]]
  %s14 = scalar_lea.smem %s0, 7
  %s15 = sld [smem:[%s14]]
  %s16 = scalar_lea.smem %s0, 8
  %s17 = sld [smem:[%s16]]
  %s18 = scalar_lea.smem %s0, 9
  %s19 = sld [smem:[%s18]]
  %s20 = scalar_lea.smem %s0, 10
  %s21 = sld [smem:[%s20]]
  %s22 = scalar_lea.smem %s0, 11
  %s23 = sld [smem:[%s22]]
  %s24 = scalar_lea.smem %s0, 12
  %s25 = sld [smem:[%s24]]
  %s26 = scalar_lea.smem %s0, 13
  %s27 = sld [smem:[%s26]]
  %s28 = scalar_lea.smem %s0, 14
  %s29 = sld [smem:[%s28]]
  %s30 = scalar_lea.smem %s0, 15
  %s31 = sld [smem:[%s30]]
  %s32 = scalar_lea.smem %s0, 16
  %s33 = sld [smem:[%s32]]
  %s34 = scalar_lea.smem %s0, 17
  %s35 = sld [smem:[%s34]]
  %s36 = scalar_lea.smem %s0, 18
  %s37 = sld [smem:[%s36]]
  %s38 = scalar_lea.smem %s0, 19
  %s39 = sld [smem:[%s38]]
  %s40 = scalar_lea.smem %s0, 20
  %s41 = sld [smem:[%s40]]
  %s42 = scalar_lea.smem %s0, 21
  %s43 = sld [smem:[%s42]]
  %s44 = scalar_lea.smem %s0, 22
  %s45 = sld [smem:[%s44]]
  %s46 = scalar_lea.smem %s0, 23
  %s47 = sld [smem:[%s46]]
  %s48 = scalar_lea.smem %s0, 24
  %s49 = sld [smem:[%s48]]
  %s50 = scalar_lea.smem %s0, 25
  %s51 = sld [smem:[%s50]]
  %s52 = scalar_lea.smem %s0, 26
  %s53 = sld [smem:[%s52]]
  %s54 = scalar_lea.smem %s0, 27
  %s55 = sld [smem:[%s54]]
  %s56 = scalar_lea.smem %s0, 28
  %s57 = sld [smem:[%s56]]
  %s58 = scalar_lea.smem %s0, 29
  %s59 = sld [smem:[%s58]]
  %s60 = scalar_lea.smem %s0, 30
  %s61 = sld [smem:[%s60]]
  %s62 = scalar_lea.smem %s0, 31
  %s63 = sld [smem:[%s62]]
  %s64 = scalar_lea.smem %s0, 32
  %s65 = sld [smem:[%s64]]
  %s66 = scalar_lea.smem %s0, 33
  %s67 = sld [smem:[%s66]]
  %s68 = scalar_lea.smem %s0, 34
  %s69 = sld [smem:[%s68]]
  %s70 = scalar_lea.smem %s0, 35
  %s71 = sld [smem:[%s70]]
  %s72 = scalar_lea.smem %s0, 36
  %s73 = sld [smem:[%s72]]
  %s74 = scalar_lea.smem %s0, 37
  %s75 = sld [smem:[%s74]]
  %s76 = scalar_lea.smem %s0, 38
  %s77 = sld [smem:[%s76]]
  %s78 = scalar_lea.smem %s0, 39
  %s79 = sld [smem:[%s78]]
  %s80 = scalar_lea.smem %s0, 40
  %s81 = sld [smem:[%s80]]
  %s82 = scalar_lea.smem %s0, 41
  %s83 = sld [smem:[%s82]]
  %s84 = scalar_lea.smem %s0, 42
  %s85 = sld [smem:[%s84]]
  %s86 = scalar_lea.smem %s0, 43
  %s87 = sld [smem:[%s86]]
  %s88 = scalar_lea.smem %s0, 44
  %s89 = sld [smem:[%s88]]
  %s90 = scalar_lea.smem %s0, 45
  %s91 = sld [smem:[%s90]]
  %s92 = scalar_lea.smem %s0, 46
  %s93 = sld [smem:[%s92]]
  %s94 = scalar_lea.smem %s0, 47
  %s95 = sld [smem:[%s94]]
  %s96 = scalar_lea.smem %s0, 48
  %s97 = sld [smem:[%s96]]
  %s98 = scalar_lea.smem %s0, 49
  %s99 = sld [smem:[%s98]]
  %s100 = scalar_lea.smem %s0, 50
  %s101 = sld [smem:[%s100]]
  %s102 = scalar_lea.smem %s0, 51
  %s103 = sld [smem:[%s102]]
  %s104 = scalar_lea.smem %s0, 52
  %s105 = sld [smem:[%s104]]
  %s106 = scalar_lea.smem %s0, 53
  %s107 = sld [smem:[%s106]]
  %s108 = scalar_lea.smem %s0, 54
  %s109 = sld [smem:[%s108]]
  %s110 = scalar_lea.smem %s0, 55
  %s111 = sld [smem:[%s110]]
  %s112 = scalar_lea.smem %s0, 56
  %s113 = sld [smem:[%s112]]
  %s114 = scalar_lea.smem %s0, 57
  %s115 = sld [smem:[%s114]]
  %s116 = scalar_lea.smem %s0, 58
  %s117 = sld [smem:[%s116]]
  %s118 = scalar_lea.smem %s0, 59
  %s119 = sld [smem:[%s118]]
  %s120 = scalar_lea.smem %s0, 60
  %s121 = sld [smem:[%s120]]
  %s122 = scalar_lea.smem %s0, 61
  %s123 = sld [smem:[%s122]]
  %s124 = scalar_lea.smem %s0, 62
  %s125 = sld [smem:[%s124]]
  %s126 = scalar_lea.smem %s0, 63
  %s127 = sld [smem:[%s126]]
  %s128 = scalar_lea.smem %s0, 64
  %s129 = sld [smem:[%s128]]
  %s130 = scalar_lea.smem %s0, 65
  %s131 = sld [smem:[%s130]]
  %s132 = scalar_lea.smem %s0, 66
  %s133 = sld [smem:[%s132]]
  %s134 = scalar_lea.smem %s0, 67
  %s135 = sld [smem:[%s134]]
  %s136 = scalar_lea.smem %s0, 68
  %s137 = sld [smem:[%s136]]
  %s138 = scalar_lea.smem %s0, 69
  %s139 = sld [smem:[%s138]]
  %s140 = scalar_lea.smem %s0, 70
  %s141 = sld [smem:[%s140]]
  %s142 = scalar_lea.smem %s0, 71
  %s143 = sld [smem:[%s142]]
  %s144 = scalar_lea.smem %s0, 72
  %s145 = sld [smem:[%s144]]
  %s146 = scalar_lea.smem %s0, 73
  %s147 = sld [smem:[%s146]]
  %s148 = scalar_lea.smem %s0, 74
  %s149 = sld [smem:[%s148]]
  %s150 = scalar_lea.smem %s0, 75
  %s151 = sld [smem:[%s150]]
  %s152 = scalar_lea.smem %s0, 76
  %s153 = sld [smem:[%s152]]
  %s154 = scalar_lea.smem %s0, 77
  %s155 = sld [smem:[%s154]]
  %s156 = scalar_lea.smem %s0, 78
  %s157 = sld [smem:[%s156]]
  %s158 = scalar_lea.smem %s0, 79
  %s159 = sld [smem:[%s158]]
  %s160 = scalar_lea.smem %s0, 80
  %s161 = sld [smem:[%s160]]
  %s162 = scalar_lea.smem %s0, 81
  %s163 = sld [smem:[%s162]]
  %s164 = scalar_lea.smem %s0, 82
  %s165 = sld [smem:[%s164]]
  %s166 = scalar_lea.smem %s0, 83
  %s167 = sld [smem:[%s166]]
  %s168 = scalar_lea.smem %s0, 84
  %s169 = sld [smem:[%s168]]
  %s170 = sld [smem:[#allocation0]]
  $region450: #{vqa_forward.1} parent=0
    _
  %s172 = ssub.s32 1, %s170
  %s173 = scalar_select 0, %s172, %s170
  $region1: #{vqa_forward.1} parent=0
    #allocation2 [shape = 'u8[512]{0}', space=vmem, size = 0x400, scoped, tag = 'input window, operand 25, single buffered']
    #allocation3 [shape = 's32[1]{0}', space=sflag, size = 0x4, scoped, tag = 'scoped memory for vqa_forward.1']
    #allocation4 [shape = 's32[1]{0}', space=sflag, size = 0x4, scoped, tag = 'scoped memory for vqa_forward.1']
    #allocation5 [shape = 'u8[512]{0}', space=vmem, size = 0x400, scoped, tag = 'input window, operand 26, single buffered']
    #allocation6 [shape = 's32[1]{0}', space=sflag, size = 0x4, scoped, tag = 'scoped memory for vqa_forward.1']
    #allocation7 [shape = 'u8[512]{0}', space=vmem, size = 0x400, scoped, tag = 'input window, operand 27, single buffered']
    #allocation8 [shape = 'u8[512]{0}', space=vmem, size = 0x400, scoped, tag = 'input window, operand 28, single buffered']
    #allocation9 [shape = 's32[1]{0}', space=sflag, size = 0x4, scoped, tag = 'scoped memory for vqa_forward.1']
    #allocation10 [shape = 'u8[512]{0}', space=vmem, size = 0x400, scoped, tag = 'input window, operand 29, single buffered']
    #allocation11 [shape = 'u8[512]{0}', space=vmem, size = 0x400, scoped, tag = 'input window, operand 37, single buffered']
    #allocation12 [shape = 's32[1]{0}', space=sflag, size = 0x4, scoped, tag = 'scoped memory for vqa_forward.1']
    #allocation13 [shape = 'u8[512]{0}', space=vmem, size = 0x400, scoped, tag = 'input window, operand 38, single buffered']
    #allocation14 [shape = 'u8[512]{0}', space=vmem, size = 0x400, scoped, tag = 'input window, operand 39, single buffered']
    #allocation15 [shape = 's32[1]{0}', space=sflag, size = 0x4, scoped, tag = 'scoped memory for vqa_forward.1']
    #allocation16 [shape = 'u8[512]{0}', space=vmem, size = 0x400, scoped, tag = 'input window, operand 47, single buffered']
    #allocation17 [shape = 'u8[512]{0}', space=vmem, size = 0x400, scoped, tag = 'input window, operand 48, single buffered']
    #allocation18 [shape = 's32[1]{0}', space=sflag, size = 0x4, scoped, tag = 'scoped memory for vqa_forward.1']
    #allocation19 [shape = 'u8[512]{0}', space=vmem, size = 0x400, scoped, tag = 'input window, operand 49, single buffered']
    #allocation20 [shape = 'u8[512]{0}', space=vmem, size = 0x400, scoped, tag = 'input window, operand 51, single buffered']
    #allocation21 [shape = 's32[1]{0}', space=sflag, size = 0x4, scoped, tag = 'scoped memory for vqa_forward.1']
    #allocation22 [shape = 'u8[512]{0}', space=vmem, size = 0x400, scoped, tag = 'input window, operand 53, single buffered']
    #allocation23 [shape = 'u8[512]{0}', space=vmem, size = 0x400, scoped, tag = 'input window, operand 54, single buffered']
    #allocation24 [shape = 's32[1]{0}', space=sflag, size = 0x4, scoped, tag = 'scoped memory for vqa_forward.1']
    #allocation25 [shape = 'u8[512]{0}', space=vmem, size = 0x400, scoped, tag = 'input window, operand 55, single buffered']
    #allocation26 [shape = 'u8[512]{0}', space=vmem, size = 0x400, scoped, tag = 'input window, operand 63, single buffered']
    #allocation27 [shape = 's32[1]{0}', space=sflag, size = 0x4, scoped, tag = 'scoped memory for vqa_forward.1']
    #allocation28 [shape = 'u8[512]{0}', space=vmem, size = 0x400, scoped, tag = 'input window, operand 64, single buffered']
    #allocation29 [shape = 'u8[512]{0}', space=vmem, size = 0x400, scoped, tag = 'input window, operand 65, single buffered']
    #allocation30 [shape = 's32[1]{0}', space=sflag, size = 0x4, scoped, tag = 'scoped memory for vqa_forward.1']
    #allocation31 [shape = 'u8[512]{0}', space=vmem, size = 0x400, scoped, tag = 'input window, operand 73, single buffered']
    #allocation32 [shape = 'u8[512]{0}', space=vmem, size = 0x400, scoped, tag = 'input window, operand 74, single buffered']
    #allocation33 [shape = 's32[1]{0}', space=sflag, size = 0x4, scoped, tag = 'scoped memory for vqa_forward.1']
    #allocation34 [shape = 'u8[512]{0}', space=vmem, size = 0x400, scoped, tag = 'input window, operand 75, single buffered']
    #allocation35 [shape = 'u8[512]{0}', space=vmem, size = 0x400, scoped, tag = 'input window, operand 77, single buffered']
    #allocation36 [shape = 's32[1]{0}', space=sflag, size = 0x4, scoped, tag = 'scoped memory for vqa_forward.1']
    #allocation37 [shape = 'u8[512]{0}', space=vmem, size = 0x400, scoped, tag = 'input window, operand 79, single buffered']
    #allocation38 [shape = 'u8[512]{0}', space=vmem, size = 0x400, scoped, tag = 'input window, operand 80, single buffered']
    #allocation39 [shape = 's32[1]{0}', space=sflag, size = 0x4, scoped, tag = 'scoped memory for vqa_forward.1']
    #allocation40 [shape = 'u8[512]{0}', space=vmem, size = 0x400, scoped, tag = 'input window, operand 81, single buffered']
    #allocation41 [shape = 'u8[512]{0}', space=vmem, size = 0x400, scoped, tag = 'input window, operand 83, single buffered']
    #allocation42 [shape = 's32[1]{0}', space=sflag, size = 0x4, scoped, tag = 'scoped memory for vqa_forward.1']
    #allocation43 [shape = 'u8[8192]{0}', space=vmem, size = 0x2000, scoped, tag = 'output window, operand 0, single buffered']
    %174 = vsyncpa [#allocation3], 0
    %175 = vsyncpa [#allocation6], 0
    %176 = vsyncpa [#allocation9], 0
    %177 = vsyncpa [#allocation12], 0
    %178 = vsyncpa [#allocation15], 0
    %179 = vsyncpa [#allocation18], 0
    %180 = vsyncpa [#allocation21], 0
    %181 = vsyncpa [#allocation24], 0
    %182 = vsyncpa [#allocation27], 0
    %183 = vsyncpa [#allocation30], 0
    %184 = vsyncpa [#allocation33], 0
    %185 = vsyncpa [#allocation36], 0
    %186 = vsyncpa [#allocation39], 0
    %187 = vsyncpa [#allocation42], 0
    %188 = vsyncpa [#allocation4], 0
    // Predicated region
    $region2: #{vqa_forward.1} parent=1 // pred_check
      _
    $region3: #{vqa_forward.1} parent=1 // pred_check_branch
      %190 = sbr.rel (0) target = $region5
    $region4: #{vqa_forward.1} parent=1 // pred_region
      _
    $region5: #{vqa_forward.1} parent=1 // pred_fallthru
      _
    // Predicated region
    $region6: #{vqa_forward.1} parent=1 // pred_check
      _
    $region7: #{vqa_forward.1} parent=1 // pred_check_branch
      %192 = sbr.rel (0) target = $region9
    $region8: #{vqa_forward.1} parent=1 // pred_region
      _
    $region9: #{vqa_forward.1} parent=1 // pred_fallthru
      _
    // Predicated region
    $region10: #{vqa_forward.1} parent=1 // pred_check
      _
    $region11: #{vqa_forward.1} parent=1 // pred_check_branch
      %194 = sbr.rel (0) target = $region13
    $region12: #{vqa_forward.1} parent=1 // pred_region
      _
    $region13: #{vqa_forward.1} parent=1 // pred_fallthru
      _
    // Predicated region
    $region14: #{vqa_forward.1} parent=1 // pred_check
      _
    $region15: #{vqa_forward.1} parent=1 // pred_check_branch
      %196 = sbr.rel (0) target = $region17
    $region16: #{vqa_forward.1} parent=1 // pred_region
      _
    $region17: #{vqa_forward.1} parent=1 // pred_fallthru
      _
    // Predicated region
    $region18: #{vqa_forward.1} parent=1 // pred_check
      _
    $region19: #{vqa_forward.1} parent=1 // pred_check_branch
      %198 = sbr.rel (0) target = $region21
    $region20: #{vqa_forward.1} parent=1 // pred_region
      _
    $region21: #{vqa_forward.1} parent=1 // pred_fallthru
      _
    // Predicated region
    $region22: #{vqa_forward.1} parent=1 // pred_check
      _
    $region23: #{vqa_forward.1} parent=1 // pred_check_branch
      %200 = sbr.rel (0) target = $region25
    $region24: #{vqa_forward.1} parent=1 // pred_region
      _
    $region25: #{vqa_forward.1} parent=1 // pred_fallthru
      _
    // Predicated region
    $region26: #{vqa_forward.1} parent=1 // pred_check
      _
    $region27: #{vqa_forward.1} parent=1 // pred_check_branch
      %202 = sbr.rel (0) target = $region29
    $region28: #{vqa_forward.1} parent=1 // pred_region
      _
    $region29: #{vqa_forward.1} parent=1 // pred_fallthru
      _
    // Predicated region
    $region30: #{vqa_forward.1} parent=1 // pred_check
      _
    $region31: #{vqa_forward.1} parent=1 // pred_check_branch
      %204 = sbr.rel (0) target = $region33
    $region32: #{vqa_forward.1} parent=1 // pred_region
      _
    $region33: #{vqa_forward.1} parent=1 // pred_fallthru
      _
    // Predicated region
    $region34: #{vqa_forward.1} parent=1 // pred_check
      _
    $region35: #{vqa_forward.1} parent=1 // pred_check_branch
      %206 = sbr.rel (0) target = $region37
    $region36: #{vqa_forward.1} parent=1 // pred_region
      _
    $region37: #{vqa_forward.1} parent=1 // pred_fallthru
      _
    // Predicated region
    $region38: #{vqa_forward.1} parent=1 // pred_check
      _
    $region39: #{vqa_forward.1} parent=1 // pred_check_branch
      %208 = sbr.rel (0) target = $region41
    $region40: #{vqa_forward.1} parent=1 // pred_region
      _
    $region41: #{vqa_forward.1} parent=1 // pred_fallthru
      _
    // Predicated region
    $region42: #{vqa_forward.1} parent=1 // pred_check
      _
    $region43: #{vqa_forward.1} parent=1 // pred_check_branch
      %210 = sbr.rel (0) target = $region45
    $region44: #{vqa_forward.1} parent=1 // pred_region
      _
    $region45: #{vqa_forward.1} parent=1 // pred_fallthru
      _
    // Predicated region
    $region46: #{vqa_forward.1} parent=1 // pred_check
      _
    $region47: #{vqa_forward.1} parent=1 // pred_check_branch
      %212 = sbr.rel (0) target = $region49
    $region48: #{vqa_forward.1} parent=1 // pred_region
      _
    $region49: #{vqa_forward.1} parent=1 // pred_fallthru
      _
    // Predicated region
    $region50: #{vqa_forward.1} parent=1 // pred_check
      _
    $region51: #{vqa_forward.1} parent=1 // pred_check_branch
      %214 = sbr.rel (0) target = $region53
    $region52: #{vqa_forward.1} parent=1 // pred_region
      _
    $region53: #{vqa_forward.1} parent=1 // pred_fallthru
      _
    // Predicated region
    $region54: #{vqa_forward.1} parent=1 // pred_check
      _
    $region55: #{vqa_forward.1} parent=1 // pred_check_branch
      %216 = sbr.rel (0) target = $region57
    $region56: #{vqa_forward.1} parent=1 // pred_region
      _
    $region57: #{vqa_forward.1} parent=1 // pred_fallthru
      _
    // Predicated region
    $region58: #{vqa_forward.1} parent=1 // pred_check
      _
    $region59: #{vqa_forward.1} parent=1 // pred_check_branch
      %218 = sbr.rel (0) target = $region61
    $region60: #{vqa_forward.1} parent=1 // pred_region
      _
    $region61: #{vqa_forward.1} parent=1 // pred_fallthru
      _
    // Predicated region
    $region62: #{vqa_forward.1} parent=1 // pred_check
      _
    $region63: #{vqa_forward.1} parent=1 // pred_check_branch
      %220 = sbr.rel (0) target = $region65
    $region64: #{vqa_forward.1} parent=1 // pred_region
      _
    $region65: #{vqa_forward.1} parent=1 // pred_fallthru
      _
    // Predicated region
    $region66: #{vqa_forward.1} parent=1 // pred_check
      _
    $region67: #{vqa_forward.1} parent=1 // pred_check_branch
      %222 = sbr.rel (0) target = $region69
    $region68: #{vqa_forward.1} parent=1 // pred_region
      _
    $region69: #{vqa_forward.1} parent=1 // pred_fallthru
      _
    // Predicated region
    $region70: #{vqa_forward.1} parent=1 // pred_check
      _
    $region71: #{vqa_forward.1} parent=1 // pred_check_branch
      %224 = sbr.rel (0) target = $region73
    $region72: #{vqa_forward.1} parent=1 // pred_region
      _
    $region73: #{vqa_forward.1} parent=1 // pred_fallthru
      _
    // Predicated region
    $region74: #{vqa_forward.1} parent=1 // pred_check
      _
    $region75: #{vqa_forward.1} parent=1 // pred_check_branch
      %226 = sbr.rel (0) target = $region77
    $region76: #{vqa_forward.1} parent=1 // pred_region
      _
    $region77: #{vqa_forward.1} parent=1 // pred_fallthru
      _
    // Predicated region
    $region78: #{vqa_forward.1} parent=1 // pred_check
      _
    $region79: #{vqa_forward.1} parent=1 // pred_check_branch
      %228 = sbr.rel (0) target = $region81
    $region80: #{vqa_forward.1} parent=1 // pred_region
      _
    $region81: #{vqa_forward.1} parent=1 // pred_fallthru
      _
    // Predicated region
    $region82: #{vqa_forward.1} parent=1 // pred_check
      _
    $region83: #{vqa_forward.1} parent=1 // pred_check_branch
      %230 = sbr.rel (0) target = $region85
    $region84: #{vqa_forward.1} parent=1 // pred_region
      _
    $region85: #{vqa_forward.1} parent=1 // pred_fallthru
      _
    // Predicated region
    $region86: #{vqa_forward.1} parent=1 // pred_check
      _
    $region87: #{vqa_forward.1} parent=1 // pred_check_branch
      %232 = sbr.rel (0) target = $region89
    $region88: #{vqa_forward.1} parent=1 // pred_region
      _
    $region89: #{vqa_forward.1} parent=1 // pred_fallthru
      _
    // Predicated region
    $region90: #{vqa_forward.1} parent=1 // pred_check
      _
    $region91: #{vqa_forward.1} parent=1 // pred_check_branch
      %234 = sbr.rel (0) target = $region93
    $region92: #{vqa_forward.1} parent=1 // pred_region
      _
    $region93: #{vqa_forward.1} parent=1 // pred_fallthru
      _
    // Predicated region
    $region94: #{vqa_forward.1} parent=1 // pred_check
      _
    $region95: #{vqa_forward.1} parent=1 // pred_check_branch
      %236 = sbr.rel (0) target = $region97
    $region96: #{vqa_forward.1} parent=1 // pred_region
      _
    $region97: #{vqa_forward.1} parent=1 // pred_fallthru
      _
    // Predicated region
    $region98: #{vqa_forward.1} parent=1 // pred_check
      _
    $region99: #{vqa_forward.1} parent=1 // pred_check_branch
      %238 = sbr.rel (0) target = $region101
    $region100: #{vqa_forward.1} parent=1 // pred_region
      _
    $region101: #{vqa_forward.1} parent=1 // pred_fallthru
      _
    // Predicated region
    $region102: #{vqa_forward.1} parent=1 // pred_check
      _
    $region103: #{vqa_forward.1} parent=1 // pred_check_branch
      %240 = sbr.rel (0) target = $region105
    $region104: #{vqa_forward.1} parent=1 // pred_region
      %242 = vsyncadd [#allocation3], 0
      %s244 = sshll.u32 %s51, 4
      %s245 = int_to_ptr.hbm [resolvable:$true] %s244
      %s246 = sshll.u32 [#allocation2], 4
      %s247 = int_to_ptr.vmem [resolvable:$true] %s246
      %249 = dma.hbm_to_vmem [thread:$0]  %s245, 16, %s247, [#allocation3]
    $region105: #{vqa_forward.1} parent=1 // pred_fallthru
      _
    // Predicated region
    $region106: #{vqa_forward.1} parent=1 // pred_check
      _
    $region107: #{vqa_forward.1} parent=1 // pred_check_branch
      %251 = sbr.rel (0) target = $region109
    $region108: #{vqa_forward.1} parent=1 // pred_region
      %253 = vsyncadd [#allocation6], 0
      %s255 = sshll.u32 %s53, 4
      %s256 = int_to_ptr.hbm [resolvable:$true] %s255
      %s257 = sshll.u32 [#allocation5], 4
      %s258 = int_to_ptr.vmem [resolvable:$true] %s257
      %260 = dma.hbm_to_vmem [thread:$0]  %s256, 16, %s258, [#allocation6]
    $region109: #{vqa_forward.1} parent=1 // pred_fallthru
      _
    // Predicated region
    $region110: #{vqa_forward.1} parent=1 // pred_check
      _
    $region111: #{vqa_forward.1} parent=1 // pred_check_branch
      %262 = sbr.rel (0) target = $region113
    $region112: #{vqa_forward.1} parent=1 // pred_region
      %264 = vsyncadd [#allocation6], 0
      %s266 = sshll.u32 %s55, 4
      %s267 = int_to_ptr.hbm [resolvable:$true] %s266
      %s268 = sshll.u32 [#allocation7], 4
      %s269 = int_to_ptr.vmem [resolvable:$true] %s268
      %271 = dma.hbm_to_vmem [thread:$0]  %s267, 16, %s269, [#allocation6]
    $region113: #{vqa_forward.1} parent=1 // pred_fallthru
      _
    // Predicated region
    $region114: #{vqa_forward.1} parent=1 // pred_check
      _
    $region115: #{vqa_forward.1} parent=1 // pred_check_branch
      %273 = sbr.rel (0) target = $region117
    $region116: #{vqa_forward.1} parent=1 // pred_region
      %275 = vsyncadd [#allocation9], 0
      %s277 = sshll.u32 %s57, 4
      %s278 = int_to_ptr.hbm [resolvable:$true] %s277
      %s279 = sshll.u32 [#allocation8], 4
      %s280 = int_to_ptr.vmem [resolvable:$true] %s279
      %282 = dma.hbm_to_vmem [thread:$0]  %s278, 16, %s280, [#allocation9]
    $region117: #{vqa_forward.1} parent=1 // pred_fallthru
      _
    // Predicated region
    $region118: #{vqa_forward.1} parent=1 // pred_check
      _
    $region119: #{vqa_forward.1} parent=1 // pred_check_branch
      %284 = sbr.rel (0) target = $region121
    $region120: #{vqa_forward.1} parent=1 // pred_region
      %286 = vsyncadd [#allocation9], 0
      %s288 = sshll.u32 %s59, 4
      %s289 = int_to_ptr.hbm [resolvable:$true] %s288
      %s290 = sshll.u32 [#allocation10], 4
      %s291 = int_to_ptr.vmem [resolvable:$true] %s290
      %293 = dma.hbm_to_vmem [thread:$0]  %s289, 16, %s291, [#allocation9]
    $region121: #{vqa_forward.1} parent=1 // pred_fallthru
      _
    // Predicated region
    $region122: #{vqa_forward.1} parent=1 // pred_check
      _
    $region123: #{vqa_forward.1} parent=1 // pred_check_branch
      %295 = sbr.rel (0) target = $region125
    $region124: #{vqa_forward.1} parent=1 // pred_region
      _
    $region125: #{vqa_forward.1} parent=1 // pred_fallthru
      _
    // Predicated region
    $region126: #{vqa_forward.1} parent=1 // pred_check
      _
    $region127: #{vqa_forward.1} parent=1 // pred_check_branch
      %297 = sbr.rel (0) target = $region129
    $region128: #{vqa_forward.1} parent=1 // pred_region
      _
    $region129: #{vqa_forward.1} parent=1 // pred_fallthru
      _
    // Predicated region
    $region130: #{vqa_forward.1} parent=1 // pred_check
      _
    $region131: #{vqa_forward.1} parent=1 // pred_check_branch
      %299 = sbr.rel (0) target = $region133
    $region132: #{vqa_forward.1} parent=1 // pred_region
      _
    $region133: #{vqa_forward.1} parent=1 // pred_fallthru
      _
    // Predicated region
    $region134: #{vqa_forward.1} parent=1 // pred_check
      _
    $region135: #{vqa_forward.1} parent=1 // pred_check_branch
      %301 = sbr.rel (0) target = $region137
    $region136: #{vqa_forward.1} parent=1 // pred_region
      _
    $region137: #{vqa_forward.1} parent=1 // pred_fallthru
      _
    // Predicated region
    $region138: #{vqa_forward.1} parent=1 // pred_check
      _
    $region139: #{vqa_forward.1} parent=1 // pred_check_branch
      %303 = sbr.rel (0) target = $region141
    $region140: #{vqa_forward.1} parent=1 // pred_region
      _
    $region141: #{vqa_forward.1} parent=1 // pred_fallthru
      _
    // Predicated region
    $region142: #{vqa_forward.1} parent=1 // pred_check
      _
    $region143: #{vqa_forward.1} parent=1 // pred_check_branch
      %305 = sbr.rel (0) target = $region145
    $region144: #{vqa_forward.1} parent=1 // pred_region
      _
    $region145: #{vqa_forward.1} parent=1 // pred_fallthru
      _
    // Predicated region
    $region146: #{vqa_forward.1} parent=1 // pred_check
      _
    $region147: #{vqa_forward.1} parent=1 // pred_check_branch
      %307 = sbr.rel (0) target = $region149
    $region148: #{vqa_forward.1} parent=1 // pred_region
      _
    $region149: #{vqa_forward.1} parent=1 // pred_fallthru
      _
    // Predicated region
    $region150: #{vqa_forward.1} parent=1 // pred_check
      _
    $region151: #{vqa_forward.1} parent=1 // pred_check_branch
      %309 = sbr.rel (0) target = $region153
    $region152: #{vqa_forward.1} parent=1 // pred_region
      %311 = vsyncadd [#allocation12], 0
      %s313 = sshll.u32 %s75, 4
      %s314 = int_to_ptr.hbm [resolvable:$true] %s313
      %s315 = sshll.u32 [#allocation11], 4
      %s316 = int_to_ptr.vmem [resolvable:$true] %s315
      %318 = dma.hbm_to_vmem [thread:$0]  %s314, 16, %s316, [#allocation12]
    $region153: #{vqa_forward.1} parent=1 // pred_fallthru
      _
    // Predicated region
    $region154: #{vqa_forward.1} parent=1 // pred_check
      _
    $region155: #{vqa_forward.1} parent=1 // pred_check_branch
      %320 = sbr.rel (0) target = $region157
    $region156: #{vqa_forward.1} parent=1 // pred_region
      %322 = vsyncadd [#allocation12], 0
      %s324 = sshll.u32 %s77, 4
      %s325 = int_to_ptr.hbm [resolvable:$true] %s324
      %s326 = sshll.u32 [#allocation13], 4
      %s327 = int_to_ptr.vmem [resolvable:$true] %s326
      %329 = dma.hbm_to_vmem [thread:$0]  %s325, 16, %s327, [#allocation12]
    $region157: #{vqa_forward.1} parent=1 // pred_fallthru
      _
    // Predicated region
    $region158: #{vqa_forward.1} parent=1 // pred_check
      _
    $region159: #{vqa_forward.1} parent=1 // pred_check_branch
      %331 = sbr.rel (0) target = $region161
    $region160: #{vqa_forward.1} parent=1 // pred_region
      %333 = vsyncadd [#allocation15], 0
      %s335 = sshll.u32 %s79, 4
      %s336 = int_to_ptr.hbm [resolvable:$true] %s335
      %s337 = sshll.u32 [#allocation14], 4
      %s338 = int_to_ptr.vmem [resolvable:$true] %s337
      %340 = dma.hbm_to_vmem [thread:$0]  %s336, 16, %s338, [#allocation15]
    $region161: #{vqa_forward.1} parent=1 // pred_fallthru
      _
    // Predicated region
    $region162: #{vqa_forward.1} parent=1 // pred_check
      _
    $region163: #{vqa_forward.1} parent=1 // pred_check_branch
      %342 = sbr.rel (0) target = $region165
    $region164: #{vqa_forward.1} parent=1 // pred_region
      _
    $region165: #{vqa_forward.1} parent=1 // pred_fallthru
      _
    // Predicated region
    $region166: #{vqa_forward.1} parent=1 // pred_check
      _
    $region167: #{vqa_forward.1} parent=1 // pred_check_branch
      %344 = sbr.rel (0) target = $region169
    $region168: #{vqa_forward.1} parent=1 // pred_region
      _
    $region169: #{vqa_forward.1} parent=1 // pred_fallthru
      _
    // Predicated region
    $region170: #{vqa_forward.1} parent=1 // pred_check
      _
    $region171: #{vqa_forward.1} parent=1 // pred_check_branch
      %346 = sbr.rel (0) target = $region173
    $region172: #{vqa_forward.1} parent=1 // pred_region
      _
    $region173: #{vqa_forward.1} parent=1 // pred_fallthru
      _
    // Predicated region
    $region174: #{vqa_forward.1} parent=1 // pred_check
      _
    $region175: #{vqa_forward.1} parent=1 // pred_check_branch
      %348 = sbr.rel (0) target = $region177
    $region176: #{vqa_forward.1} parent=1 // pred_region
      _
    $region177: #{vqa_forward.1} parent=1 // pred_fallthru
      _
    // Predicated region
    $region178: #{vqa_forward.1} parent=1 // pred_check
      _
    $region179: #{vqa_forward.1} parent=1 // pred_check_branch
      %350 = sbr.rel (0) target = $region181
    $region180: #{vqa_forward.1} parent=1 // pred_region
      _
    $region181: #{vqa_forward.1} parent=1 // pred_fallthru
      _
    // Predicated region
    $region182: #{vqa_forward.1} parent=1 // pred_check
      _
    $region183: #{vqa_forward.1} parent=1 // pred_check_branch
      %352 = sbr.rel (0) target = $region185
    $region184: #{vqa_forward.1} parent=1 // pred_region
      _
    $region185: #{vqa_forward.1} parent=1 // pred_fallthru
      _
    // Predicated region
    $region186: #{vqa_forward.1} parent=1 // pred_check
      _
    $region187: #{vqa_forward.1} parent=1 // pred_check_branch
      %354 = sbr.rel (0) target = $region189
    $region188: #{vqa_forward.1} parent=1 // pred_region
      _
    $region189: #{vqa_forward.1} parent=1 // pred_fallthru
      _
    // Predicated region
    $region190: #{vqa_forward.1} parent=1 // pred_check
      _
    $region191: #{vqa_forward.1} parent=1 // pred_check_branch
      %356 = sbr.rel (0) target = $region193
    $region192: #{vqa_forward.1} parent=1 // pred_region
      %358 = vsyncadd [#allocation15], 0
      %s360 = sshll.u32 %s95, 4
      %s361 = int_to_ptr.hbm [resolvable:$true] %s360
      %s362 = sshll.u32 [#allocation16], 4
      %s363 = int_to_ptr.vmem [resolvable:$true] %s362
      %365 = dma.hbm_to_vmem [thread:$0]  %s361, 16, %s363, [#allocation15]
    $region193: #{vqa_forward.1} parent=1 // pred_fallthru
      _
    // Predicated region
    $region194: #{vqa_forward.1} parent=1 // pred_check
      _
    $region195: #{vqa_forward.1} parent=1 // pred_check_branch
      %367 = sbr.rel (0) target = $region197
    $region196: #{vqa_forward.1} parent=1 // pred_region
      %369 = vsyncadd [#allocation18], 0
      %s371 = sshll.u32 %s97, 4
      %s372 = int_to_ptr.hbm [resolvable:$true] %s371
      %s373 = sshll.u32 [#allocation17], 4
      %s374 = int_to_ptr.vmem [resolvable:$true] %s373
      %376 = dma.hbm_to_vmem [thread:$0]  %s372, 16, %s374, [#allocation18]
    $region197: #{vqa_forward.1} parent=1 // pred_fallthru
      _
    // Predicated region
    $region198: #{vqa_forward.1} parent=1 // pred_check
      _
    $region199: #{vqa_forward.1} parent=1 // pred_check_branch
      %378 = sbr.rel (0) target = $region201
    $region200: #{vqa_forward.1} parent=1 // pred_region
      %380 = vsyncadd [#allocation18], 0
      %s382 = sshll.u32 %s99, 4
      %s383 = int_to_ptr.hbm [resolvable:$true] %s382
      %s384 = sshll.u32 [#allocation19], 4
      %s385 = int_to_ptr.vmem [resolvable:$true] %s384
      %387 = dma.hbm_to_vmem [thread:$0]  %s383, 16, %s385, [#allocation18]
    $region201: #{vqa_forward.1} parent=1 // pred_fallthru
      _
    // Predicated region
    $region202: #{vqa_forward.1} parent=1 // pred_check
      _
    $region203: #{vqa_forward.1} parent=1 // pred_check_branch
      %389 = sbr.rel (0) target = $region205
    $region204: #{vqa_forward.1} parent=1 // pred_region
      _
    $region205: #{vqa_forward.1} parent=1 // pred_fallthru
      _
    // Predicated region
    $region206: #{vqa_forward.1} parent=1 // pred_check
      _
    $region207: #{vqa_forward.1} parent=1 // pred_check_branch
      %391 = sbr.rel (0) target = $region209
    $region208: #{vqa_forward.1} parent=1 // pred_region
      %393 = vsyncadd [#allocation21], 0
      %s395 = sshll.u32 %s103, 4
      %s396 = int_to_ptr.hbm [resolvable:$true] %s395
      %s397 = sshll.u32 [#allocation20], 4
      %s398 = int_to_ptr.vmem [resolvable:$true] %s397
      %400 = dma.hbm_to_vmem [thread:$0]  %s396, 16, %s398, [#allocation21]
    $region209: #{vqa_forward.1} parent=1 // pred_fallthru
      _
    // Predicated region
    $region210: #{vqa_forward.1} parent=1 // pred_check
      _
    $region211: #{vqa_forward.1} parent=1 // pred_check_branch
      %402 = sbr.rel (0) target = $region213
    $region212: #{vqa_forward.1} parent=1 // pred_region
      _
    $region213: #{vqa_forward.1} parent=1 // pred_fallthru
      _
    // Predicated region
    $region214: #{vqa_forward.1} parent=1 // pred_check
      _
    $region215: #{vqa_forward.1} parent=1 // pred_check_branch
      %404 = sbr.rel (0) target = $region217
    $region216: #{vqa_forward.1} parent=1 // pred_region
      %406 = vsyncadd [#allocation21], 0
      %s408 = sshll.u32 %s107, 4
      %s409 = int_to_ptr.hbm [resolvable:$true] %s408
      %s410 = sshll.u32 [#allocation22], 4
      %s411 = int_to_ptr.vmem [resolvable:$true] %s410
      %413 = dma.hbm_to_vmem [thread:$0]  %s409, 16, %s411, [#allocation21]
    $region217: #{vqa_forward.1} parent=1 // pred_fallthru
      _
    // Predicated region
    $region218: #{vqa_forward.1} parent=1 // pred_check
      _
    $region219: #{vqa_forward.1} parent=1 // pred_check_branch
      %415 = sbr.rel (0) target = $region221
    $region220: #{vqa_forward.1} parent=1 // pred_region
      %417 = vsyncadd [#allocation24], 0
      %s419 = sshll.u32 %s109, 4
      %s420 = int_to_ptr.hbm [resolvable:$true] %s419
      %s421 = sshll.u32 [#allocation23], 4
      %s422 = int_to_ptr.vmem [resolvable:$true] %s421
      %424 = dma.hbm_to_vmem [thread:$0]  %s420, 16, %s422, [#allocation24]
    $region221: #{vqa_forward.1} parent=1 // pred_fallthru
      _
    // Predicated region
    $region222: #{vqa_forward.1} parent=1 // pred_check
      _
    $region223: #{vqa_forward.1} parent=1 // pred_check_branch
      %426 = sbr.rel (0) target = $region225
    $region224: #{vqa_forward.1} parent=1 // pred_region
      %428 = vsyncadd [#allocation24], 0
      %s430 = sshll.u32 %s111, 4
      %s431 = int_to_ptr.hbm [resolvable:$true] %s430
      %s432 = sshll.u32 [#allocation25], 4
      %s433 = int_to_ptr.vmem [resolvable:$true] %s432
      %435 = dma.hbm_to_vmem [thread:$0]  %s431, 16, %s433, [#allocation24]
    $region225: #{vqa_forward.1} parent=1 // pred_fallthru
      _
    // Predicated region
    $region226: #{vqa_forward.1} parent=1 // pred_check
      _
    $region227: #{vqa_forward.1} parent=1 // pred_check_branch
      %437 = sbr.rel (0) target = $region229
    $region228: #{vqa_forward.1} parent=1 // pred_region
      _
    $region229: #{vqa_forward.1} parent=1 // pred_fallthru
      _
    // Predicated region
    $region230: #{vqa_forward.1} parent=1 // pred_check
      _
    $region231: #{vqa_forward.1} parent=1 // pred_check_branch
      %439 = sbr.rel (0) target = $region233
    $region232: #{vqa_forward.1} parent=1 // pred_region
      _
    $region233: #{vqa_forward.1} parent=1 // pred_fallthru
      _
    // Predicated region
    $region234: #{vqa_forward.1} parent=1 // pred_check
      _
    $region235: #{vqa_forward.1} parent=1 // pred_check_branch
      %441 = sbr.rel (0) target = $region237
    $region236: #{vqa_forward.1} parent=1 // pred_region
      _
    $region237: #{vqa_forward.1} parent=1 // pred_fallthru
      _
    // Predicated region
    $region238: #{vqa_forward.1} parent=1 // pred_check
      _
    $region239: #{vqa_forward.1} parent=1 // pred_check_branch
      %443 = sbr.rel (0) target = $region241
    $region240: #{vqa_forward.1} parent=1 // pred_region
      _
    $region241: #{vqa_forward.1} parent=1 // pred_fallthru
      _
    // Predicated region
    $region242: #{vqa_forward.1} parent=1 // pred_check
      _
    $region243: #{vqa_forward.1} parent=1 // pred_check_branch
      %445 = sbr.rel (0) target = $region245
    $region244: #{vqa_forward.1} parent=1 // pred_region
      _
    $region245: #{vqa_forward.1} parent=1 // pred_fallthru
      _
    // Predicated region
    $region246: #{vqa_forward.1} parent=1 // pred_check
      _
    $region247: #{vqa_forward.1} parent=1 // pred_check_branch
      %447 = sbr.rel (0) target = $region249
    $region248: #{vqa_forward.1} parent=1 // pred_region
      _
    $region249: #{vqa_forward.1} parent=1 // pred_fallthru
      _
    // Predicated region
    $region250: #{vqa_forward.1} parent=1 // pred_check
      _
    $region251: #{vqa_forward.1} parent=1 // pred_check_branch
      %449 = sbr.rel (0) target = $region253
    $region252: #{vqa_forward.1} parent=1 // pred_region
      _
    $region253: #{vqa_forward.1} parent=1 // pred_fallthru
      _
    // Predicated region
    $region254: #{vqa_forward.1} parent=1 // pred_check
      _
    $region255: #{vqa_forward.1} parent=1 // pred_check_branch
      %451 = sbr.rel (0) target = $region257
    $region256: #{vqa_forward.1} parent=1 // pred_region
      %453 = vsyncadd [#allocation27], 0
      %s455 = sshll.u32 %s127, 4
      %s456 = int_to_ptr.hbm [resolvable:$true] %s455
      %s457 = sshll.u32 [#allocation26], 4
      %s458 = int_to_ptr.vmem [resolvable:$true] %s457
      %460 = dma.hbm_to_vmem [thread:$0]  %s456, 16, %s458, [#allocation27]
    $region257: #{vqa_forward.1} parent=1 // pred_fallthru
      _
    // Predicated region
    $region258: #{vqa_forward.1} parent=1 // pred_check
      _
    $region259: #{vqa_forward.1} parent=1 // pred_check_branch
      %462 = sbr.rel (0) target = $region261
    $region260: #{vqa_forward.1} parent=1 // pred_region
      %464 = vsyncadd [#allocation27], 0
      %s466 = sshll.u32 %s129, 4
      %s467 = int_to_ptr.hbm [resolvable:$true] %s466
      %s468 = sshll.u32 [#allocation28], 4
      %s469 = int_to_ptr.vmem [resolvable:$true] %s468
      %471 = dma.hbm_to_vmem [thread:$0]  %s467, 16, %s469, [#allocation27]
    $region261: #{vqa_forward.1} parent=1 // pred_fallthru
      _
    // Predicated region
    $region262: #{vqa_forward.1} parent=1 // pred_check
      _
    $region263: #{vqa_forward.1} parent=1 // pred_check_branch
      %473 = sbr.rel (0) target = $region265
    $region264: #{vqa_forward.1} parent=1 // pred_region
      %475 = vsyncadd [#allocation30], 0
      %s477 = sshll.u32 %s131, 4
      %s478 = int_to_ptr.hbm [resolvable:$true] %s477
      %s479 = sshll.u32 [#allocation29], 4
      %s480 = int_to_ptr.vmem [resolvable:$true] %s479
      %482 = dma.hbm_to_vmem [thread:$0]  %s478, 16, %s480, [#allocation30]
    $region265: #{vqa_forward.1} parent=1 // pred_fallthru
      _
    // Predicated region
    $region266: #{vqa_forward.1} parent=1 // pred_check
      _
    $region267: #{vqa_forward.1} parent=1 // pred_check_branch
      %484 = sbr.rel (0) target = $region269
    $region268: #{vqa_forward.1} parent=1 // pred_region
      _
    $region269: #{vqa_forward.1} parent=1 // pred_fallthru
      _
    // Predicated region
    $region270: #{vqa_forward.1} parent=1 // pred_check
      _
    $region271: #{vqa_forward.1} parent=1 // pred_check_branch
      %486 = sbr.rel (0) target = $region273
    $region272: #{vqa_forward.1} parent=1 // pred_region
      _
    $region273: #{vqa_forward.1} parent=1 // pred_fallthru
      _
    // Predicated region
    $region274: #{vqa_forward.1} parent=1 // pred_check
      _
    $region275: #{vqa_forward.1} parent=1 // pred_check_branch
      %488 = sbr.rel (0) target = $region277
    $region276: #{vqa_forward.1} parent=1 // pred_region
      _
    $region277: #{vqa_forward.1} parent=1 // pred_fallthru
      _
    // Predicated region
    $region278: #{vqa_forward.1} parent=1 // pred_check
      _
    $region279: #{vqa_forward.1} parent=1 // pred_check_branch
      %490 = sbr.rel (0) target = $region281
    $region280: #{vqa_forward.1} parent=1 // pred_region
      _
    $region281: #{vqa_forward.1} parent=1 // pred_fallthru
      _
    // Predicated region
    $region282: #{vqa_forward.1} parent=1 // pred_check
      _
    $region283: #{vqa_forward.1} parent=1 // pred_check_branch
      %492 = sbr.rel (0) target = $region285
    $region284: #{vqa_forward.1} parent=1 // pred_region
      _
    $region285: #{vqa_forward.1} parent=1 // pred_fallthru
      _
    // Predicated region
    $region286: #{vqa_forward.1} parent=1 // pred_check
      _
    $region287: #{vqa_forward.1} parent=1 // pred_check_branch
      %494 = sbr.rel (0) target = $region289
    $region288: #{vqa_forward.1} parent=1 // pred_region
      _
    $region289: #{vqa_forward.1} parent=1 // pred_fallthru
      _
    // Predicated region
    $region290: #{vqa_forward.1} parent=1 // pred_check
      _
    $region291: #{vqa_forward.1} parent=1 // pred_check_branch
      %496 = sbr.rel (0) target = $region293
    $region292: #{vqa_forward.1} parent=1 // pred_region
      _
    $region293: #{vqa_forward.1} parent=1 // pred_fallthru
      _
    // Predicated region
    $region294: #{vqa_forward.1} parent=1 // pred_check
      _
    $region295: #{vqa_forward.1} parent=1 // pred_check_branch
      %498 = sbr.rel (0) target = $region297
    $region296: #{vqa_forward.1} parent=1 // pred_region
      %500 = vsyncadd [#allocation30], 0
      %s502 = sshll.u32 %s147, 4
      %s503 = int_to_ptr.hbm [resolvable:$true] %s502
      %s504 = sshll.u32 [#allocation31], 4
      %s505 = int_to_ptr.vmem [resolvable:$true] %s504
      %507 = dma.hbm_to_vmem [thread:$0]  %s503, 16, %s505, [#allocation30]
    $region297: #{vqa_forward.1} parent=1 // pred_fallthru
      _
    // Predicated region
    $region298: #{vqa_forward.1} parent=1 // pred_check
      _
    $region299: #{vqa_forward.1} parent=1 // pred_check_branch
      %509 = sbr.rel (0) target = $region301
    $region300: #{vqa_forward.1} parent=1 // pred_region
      %511 = vsyncadd [#allocation33], 0
      %s513 = sshll.u32 %s149, 4
      %s514 = int_to_ptr.hbm [resolvable:$true] %s513
      %s515 = sshll.u32 [#allocation32], 4
      %s516 = int_to_ptr.vmem [resolvable:$true] %s515
      %518 = dma.hbm_to_vmem [thread:$0]  %s514, 16, %s516, [#allocation33]
    $region301: #{vqa_forward.1} parent=1 // pred_fallthru
      _
    // Predicated region
    $region302: #{vqa_forward.1} parent=1 // pred_check
      _
    $region303: #{vqa_forward.1} parent=1 // pred_check_branch
      %520 = sbr.rel (0) target = $region305
    $region304: #{vqa_forward.1} parent=1 // pred_region
      %522 = vsyncadd [#allocation33], 0
      %s524 = sshll.u32 %s151, 4
      %s525 = int_to_ptr.hbm [resolvable:$true] %s524
      %s526 = sshll.u32 [#allocation34], 4
      %s527 = int_to_ptr.vmem [resolvable:$true] %s526
      %529 = dma.hbm_to_vmem [thread:$0]  %s525, 16, %s527, [#allocation33]
    $region305: #{vqa_forward.1} parent=1 // pred_fallthru
      _
    // Predicated region
    $region306: #{vqa_forward.1} parent=1 // pred_check
      _
    $region307: #{vqa_forward.1} parent=1 // pred_check_branch
      %531 = sbr.rel (0) target = $region309
    $region308: #{vqa_forward.1} parent=1 // pred_region
      _
    $region309: #{vqa_forward.1} parent=1 // pred_fallthru
      _
    // Predicated region
    $region310: #{vqa_forward.1} parent=1 // pred_check
      _
    $region311: #{vqa_forward.1} parent=1 // pred_check_branch
      %533 = sbr.rel (0) target = $region313
    $region312: #{vqa_forward.1} parent=1 // pred_region
      %535 = vsyncadd [#allocation36], 0
      %s537 = sshll.u32 %s155, 4
      %s538 = int_to_ptr.hbm [resolvable:$true] %s537
      %s539 = sshll.u32 [#allocation35], 4
      %s540 = int_to_ptr.vmem [resolvable:$true] %s539
      %542 = dma.hbm_to_vmem [thread:$0]  %s538, 16, %s540, [#allocation36]
    $region313: #{vqa_forward.1} parent=1 // pred_fallthru
      _
    // Predicated region
    $region314: #{vqa_forward.1} parent=1 // pred_check
      _
    $region315: #{vqa_forward.1} parent=1 // pred_check_branch
      %544 = sbr.rel (0) target = $region317
    $region316: #{vqa_forward.1} parent=1 // pred_region
      _
    $region317: #{vqa_forward.1} parent=1 // pred_fallthru
      _
    // Predicated region
    $region318: #{vqa_forward.1} parent=1 // pred_check
      _
    $region319: #{vqa_forward.1} parent=1 // pred_check_branch
      %546 = sbr.rel (0) target = $region321
    $region320: #{vqa_forward.1} parent=1 // pred_region
      %548 = vsyncadd [#allocation36], 0
      %s550 = sshll.u32 %s159, 4
      %s551 = int_to_ptr.hbm [resolvable:$true] %s550
      %s552 = sshll.u32 [#allocation37], 4
      %s553 = int_to_ptr.vmem [resolvable:$true] %s552
      %555 = dma.hbm_to_vmem [thread:$0]  %s551, 16, %s553, [#allocation36]
    $region321: #{vqa_forward.1} parent=1 // pred_fallthru
      _
    // Predicated region
    $region322: #{vqa_forward.1} parent=1 // pred_check
      _
    $region323: #{vqa_forward.1} parent=1 // pred_check_branch
      %557 = sbr.rel (0) target = $region325
    $region324: #{vqa_forward.1} parent=1 // pred_region
      %559 = vsyncadd [#allocation39], 0
      %s561 = sshll.u32 %s161, 4
      %s562 = int_to_ptr.hbm [resolvable:$true] %s561
      %s563 = sshll.u32 [#allocation38], 4
      %s564 = int_to_ptr.vmem [resolvable:$true] %s563
      %566 = dma.hbm_to_vmem [thread:$0]  %s562, 16, %s564, [#allocation39]
    $region325: #{vqa_forward.1} parent=1 // pred_fallthru
      _
    // Predicated region
    $region326: #{vqa_forward.1} parent=1 // pred_check
      _
    $region327: #{vqa_forward.1} parent=1 // pred_check_branch
      %568 = sbr.rel (0) target = $region329
    $region328: #{vqa_forward.1} parent=1 // pred_region
      %570 = vsyncadd [#allocation39], 0
      %s572 = sshll.u32 %s163, 4
      %s573 = int_to_ptr.hbm [resolvable:$true] %s572
      %s574 = sshll.u32 [#allocation40], 4
      %s575 = int_to_ptr.vmem [resolvable:$true] %s574
      %577 = dma.hbm_to_vmem [thread:$0]  %s573, 16, %s575, [#allocation39]
    $region329: #{vqa_forward.1} parent=1 // pred_fallthru
      _
    // Predicated region
    $region330: #{vqa_forward.1} parent=1 // pred_check
      _
    $region331: #{vqa_forward.1} parent=1 // pred_check_branch
      %579 = sbr.rel (0) target = $region333
    $region332: #{vqa_forward.1} parent=1 // pred_region
      _
    $region333: #{vqa_forward.1} parent=1 // pred_fallthru
      _
    // Predicated region
    $region334: #{vqa_forward.1} parent=1 // pred_check
      _
    $region335: #{vqa_forward.1} parent=1 // pred_check_branch
      %581 = sbr.rel (0) target = $region337
    $region336: #{vqa_forward.1} parent=1 // pred_region
      %583 = vsyncadd [#allocation42], 0
      %s585 = sshll.u32 %s167, 4
      %s586 = int_to_ptr.hbm [resolvable:$true] %s585
      %s587 = sshll.u32 [#allocation41], 4
      %s588 = int_to_ptr.vmem [resolvable:$true] %s587
      %590 = dma.hbm_to_vmem [thread:$0]  %s586, 16, %s588, [#allocation42]
    $region337: #{vqa_forward.1} parent=1 // pred_fallthru
      _
    // Predicated region
    $region338: #{vqa_forward.1} parent=1 // pred_check
      _
    $region339: #{vqa_forward.1} parent=1 // pred_check_branch
      %592 = sbr.rel (0) target = $region341
    $region340: #{vqa_forward.1} parent=1 // pred_region
      %594 = dma.done [#allocation3], 16
    $region341: #{vqa_forward.1} parent=1 // pred_fallthru
      _
    // Predicated region
    $region342: #{vqa_forward.1} parent=1 // pred_check
      _
    $region343: #{vqa_forward.1} parent=1 // pred_check_branch
      %596 = sbr.rel (0) target = $region345
    $region344: #{vqa_forward.1} parent=1 // pred_region
      %598 = dma.done [#allocation6], 16
    $region345: #{vqa_forward.1} parent=1 // pred_fallthru
      _
    // Predicated region
    $region346: #{vqa_forward.1} parent=1 // pred_check
      _
    $region347: #{vqa_forward.1} parent=1 // pred_check_branch
      %600 = sbr.rel (0) target = $region349
    $region348: #{vqa_forward.1} parent=1 // pred_region
      %602 = dma.done [#allocation6], 16
    $region349: #{vqa_forward.1} parent=1 // pred_fallthru
      _
    // Predicated region
    $region350: #{vqa_forward.1} parent=1 // pred_check
      _
    $region351: #{vqa_forward.1} parent=1 // pred_check_branch
      %604 = sbr.rel (0) target = $region353
    $region352: #{vqa_forward.1} parent=1 // pred_region
      %606 = dma.done [#allocation9], 16
    $region353: #{vqa_forward.1} parent=1 // pred_fallthru
      _
    // Predicated region
    $region354: #{vqa_forward.1} parent=1 // pred_check
      _
    $region355: #{vqa_forward.1} parent=1 // pred_check_branch
      %608 = sbr.rel (0) target = $region357
    $region356: #{vqa_forward.1} parent=1 // pred_region
      %610 = dma.done [#allocation9], 16
    $region357: #{vqa_forward.1} parent=1 // pred_fallthru
      _
    // Predicated region
    $region358: #{vqa_forward.1} parent=1 // pred_check
      _
    $region359: #{vqa_forward.1} parent=1 // pred_check_branch
      %612 = sbr.rel (0) target = $region361
    $region360: #{vqa_forward.1} parent=1 // pred_region
      %614 = dma.done [#allocation12], 16
    $region361: #{vqa_forward.1} parent=1 // pred_fallthru
      _
    // Predicated region
    $region362: #{vqa_forward.1} parent=1 // pred_check
      _
    $region363: #{vqa_forward.1} parent=1 // pred_check_branch
      %616 = sbr.rel (0) target = $region365
    $region364: #{vqa_forward.1} parent=1 // pred_region
      %618 = dma.done [#allocation12], 16
    $region365: #{vqa_forward.1} parent=1 // pred_fallthru
      _
    // Predicated region
    $region366: #{vqa_forward.1} parent=1 // pred_check
      _
    $region367: #{vqa_forward.1} parent=1 // pred_check_branch
      %620 = sbr.rel (0) target = $region369
    $region368: #{vqa_forward.1} parent=1 // pred_region
      %622 = dma.done [#allocation15], 16
    $region369: #{vqa_forward.1} parent=1 // pred_fallthru
      _
    // Predicated region
    $region370: #{vqa_forward.1} parent=1 // pred_check
      _
    $region371: #{vqa_forward.1} parent=1 // pred_check_branch
      %624 = sbr.rel (0) target = $region373
    $region372: #{vqa_forward.1} parent=1 // pred_region
      %626 = dma.done [#allocation15], 16
    $region373: #{vqa_forward.1} parent=1 // pred_fallthru
      _
    // Predicated region
    $region374: #{vqa_forward.1} parent=1 // pred_check
      _
    $region375: #{vqa_forward.1} parent=1 // pred_check_branch
      %628 = sbr.rel (0) target = $region377
    $region376: #{vqa_forward.1} parent=1 // pred_region
      %630 = dma.done [#allocation18], 16
    $region377: #{vqa_forward.1} parent=1 // pred_fallthru
      _
    // Predicated region
    $region378: #{vqa_forward.1} parent=1 // pred_check
      _
    $region379: #{vqa_forward.1} parent=1 // pred_check_branch
      %632 = sbr.rel (0) target = $region381
    $region380: #{vqa_forward.1} parent=1 // pred_region
      %634 = dma.done [#allocation18], 16
    $region381: #{vqa_forward.1} parent=1 // pred_fallthru
      _
    // Predicated region
    $region382: #{vqa_forward.1} parent=1 // pred_check
      _
    $region383: #{vqa_forward.1} parent=1 // pred_check_branch
      %636 = sbr.rel (0) target = $region385
    $region384: #{vqa_forward.1} parent=1 // pred_region
      %638 = dma.done [#allocation21], 16
    $region385: #{vqa_forward.1} parent=1 // pred_fallthru
      _
    // Predicated region
    $region386: #{vqa_forward.1} parent=1 // pred_check
      _
    $region387: #{vqa_forward.1} parent=1 // pred_check_branch
      %640 = sbr.rel (0) target = $region389
    $region388: #{vqa_forward.1} parent=1 // pred_region
      %642 = dma.done [#allocation21], 16
    $region389: #{vqa_forward.1} parent=1 // pred_fallthru
      _
    // Predicated region
    $region390: #{vqa_forward.1} parent=1 // pred_check
      _
    $region391: #{vqa_forward.1} parent=1 // pred_check_branch
      %644 = sbr.rel (0) target = $region393
    $region392: #{vqa_forward.1} parent=1 // pred_region
      %646 = dma.done [#allocation24], 16
    $region393: #{vqa_forward.1} parent=1 // pred_fallthru
      _
    // Predicated region
    $region394: #{vqa_forward.1} parent=1 // pred_check
      _
    $region395: #{vqa_forward.1} parent=1 // pred_check_branch
      %648 = sbr.rel (0) target = $region397
    $region396: #{vqa_forward.1} parent=1 // pred_region
      %650 = dma.done [#allocation24], 16
    $region397: #{vqa_forward.1} parent=1 // pred_fallthru
      _
    // Predicated region
    $region398: #{vqa_forward.1} parent=1 // pred_check
      _
    $region399: #{vqa_forward.1} parent=1 // pred_check_branch
      %652 = sbr.rel (0) target = $region401
    $region400: #{vqa_forward.1} parent=1 // pred_region
      %654 = dma.done [#allocation27], 16
    $region401: #{vqa_forward.1} parent=1 // pred_fallthru
      _
    // Predicated region
    $region402: #{vqa_forward.1} parent=1 // pred_check
      _
    $region403: #{vqa_forward.1} parent=1 // pred_check_branch
      %656 = sbr.rel (0) target = $region405
    $region404: #{vqa_forward.1} parent=1 // pred_region
      %658 = dma.done [#allocation27], 16
    $region405: #{vqa_forward.1} parent=1 // pred_fallthru
      _
    // Predicated region
    $region406: #{vqa_forward.1} parent=1 // pred_check
      _
    $region407: #{vqa_forward.1} parent=1 // pred_check_branch
      %660 = sbr.rel (0) target = $region409
    $region408: #{vqa_forward.1} parent=1 // pred_region
      %662 = dma.done [#allocation30], 16
    $region409: #{vqa_forward.1} parent=1 // pred_fallthru
      _
    // Predicated region
    $region410: #{vqa_forward.1} parent=1 // pred_check
      _
    $region411: #{vqa_forward.1} parent=1 // pred_check_branch
      %664 = sbr.rel (0) target = $region413
    $region412: #{vqa_forward.1} parent=1 // pred_region
      %666 = dma.done [#allocation30], 16
    $region413: #{vqa_forward.1} parent=1 // pred_fallthru
      _
    // Predicated region
    $region414: #{vqa_forward.1} parent=1 // pred_check
      _
    $region415: #{vqa_forward.1} parent=1 // pred_check_branch
      %668 = sbr.rel (0) target = $region417
    $region416: #{vqa_forward.1} parent=1 // pred_region
      %670 = dma.done [#allocation33], 16
    $region417: #{vqa_forward.1} parent=1 // pred_fallthru
      _
    // Predicated region
    $region418: #{vqa_forward.1} parent=1 // pred_check
      _
    $region419: #{vqa_forward.1} parent=1 // pred_check_branch
      %672 = sbr.rel (0) target = $region421
    $region420: #{vqa_forward.1} parent=1 // pred_region
      %674 = dma.done [#allocation33], 16
    $region421: #{vqa_forward.1} parent=1 // pred_fallthru
      _
    // Predicated region
    $region422: #{vqa_forward.1} parent=1 // pred_check
      _
    $region423: #{vqa_forward.1} parent=1 // pred_check_branch
      %676 = sbr.rel (0) target = $region425
    $region424: #{vqa_forward.1} parent=1 // pred_region
      %678 = dma.done [#allocation36], 16
    $region425: #{vqa_forward.1} parent=1 // pred_fallthru
      _
    // Predicated region
    $region426: #{vqa_forward.1} parent=1 // pred_check
      _
    $region427: #{vqa_forward.1} parent=1 // pred_check_branch
      %680 = sbr.rel (0) target = $region429
    $region428: #{vqa_forward.1} parent=1 // pred_region
      %682 = dma.done [#allocation36], 16
    $region429: #{vqa_forward.1} parent=1 // pred_fallthru
      _
    // Predicated region
    $region430: #{vqa_forward.1} parent=1 // pred_check
      _
    $region431: #{vqa_forward.1} parent=1 // pred_check_branch
      %684 = sbr.rel (0) target = $region433
    $region432: #{vqa_forward.1} parent=1 // pred_region
      %686 = dma.done [#allocation39], 16
    $region433: #{vqa_forward.1} parent=1 // pred_fallthru
      _
    // Predicated region
    $region434: #{vqa_forward.1} parent=1 // pred_check
      _
    $region435: #{vqa_forward.1} parent=1 // pred_check_branch
      %688 = sbr.rel (0) target = $region437
    $region436: #{vqa_forward.1} parent=1 // pred_region
      %690 = dma.done [#allocation39], 16
    $region437: #{vqa_forward.1} parent=1 // pred_fallthru
      _
    // Predicated region
    $region438: #{vqa_forward.1} parent=1 // pred_check
      _
    $region439: #{vqa_forward.1} parent=1 // pred_check_branch
      %692 = sbr.rel (0) target = $region441
    $region440: #{vqa_forward.1} parent=1 // pred_region
      %694 = dma.done [#allocation42], 16
    $region441: #{vqa_forward.1} parent=1 // pred_fallthru
      _
    %v696 = vld [vmem:[%s1] sm:$0xff]
    %v697 = vld [vmem:[%s1 + $0x8] sm:$0xff]
    %700 = vst [vmem:[#allocation1] ss:$2 sm:$0xff] %v696
    %v701 = vld.sshfl [vmem:[#allocation1] sm:$0xff pattern:$0x75316420]
    %v702 = vld.sshfl [vmem:[#allocation1 + $0x8] sm:$0xff pattern:$0x75316420]
    %s703 = scalar_lea.vmem [#allocation1], 16
    %704 = vst [vmem:[%s703] ss:$2 sm:$0xff] %v697
    %v705 = vld.sshfl [vmem:[#allocation1 + $0x10] sm:$0xff pattern:$0x75316420]
    %v706 = vld.sshfl [vmem:[#allocation1 + $0x18] sm:$0xff pattern:$0x75316420]
    %vm711 = vcmask 1043456
    %v712 = vsel %vm711, %v701, 0.0
    %v713 = vsel %vm711, %v702, 0.0
    %v714 = vadd.f32 %v712, %v713
    %715 = vadd.xlane.f32.xlu0 %v714
    %v716 = vpop.xlane.xlu0 %715
    %v717 = vsel %vm711, %v705, 0.0
    %v718 = vsel %vm711, %v706, 0.0
    %v719 = vadd.f32 %v717, %v718
    %720 = vadd.xlane.f32.xlu0 %v719
    %v721 = vpop.xlane.xlu0 %720
    %v722 = vrcp.pop 256.0
    %v723 = vmul.f32 256.0, %v722
    %v724 = vsub.f32 1.0, %v723
    %v725 = vmul.f32 %v722, %v724
    %v726 = vadd.f32 %v722, %v725
    %vm727 = vweird.f32 %v722
    %v728 = vsel %vm727, %v722, %v726
    %v729 = vmul.f32 %v716, %v728
    %v730 = vmul.f32 %v721, %v728
    %v731 = vld [vmem:[%s9] sm:$0xf]
    %v732 = vpack.c.bf16 %v729, %v729
    %v733 = vpack.c.bf16 %v730, %v730
    %v734 = vpack.c.bf16 %v731, %v731
    %v735 = vld [vmem:[%s11] sm:$0x1]
    %v737 = vperm.slane %v735, 0
    %v741 = vunpack.c.l.b16 %v732
    %v742 = vunpack.c.l.b16 %v733
    %v743 = vlaneseq
    %v744 = vand.u32 %v743, 127
    %v745 = vperm.slane %v741, %v744
    %v746 = vperm.slane %v742, %v744
    %vm747 = vcmask 1041409
    %v748 = vsel %vm747, %v746, %v745
    %v749 = vpack.c.b16 %v748, %v748
    %vm750 = vcmask 31744
    %v752 = vsel %vm750, %v749, 0
    %vm754 = vcmask 1041408
    %v756 = vsel %vm754, %v734, 0
    %758 = vmatpush.bf16.msra.mxu0 0
    %759 = vmatpush.bf16.msra.mxu0 0
    %760 = vmatpush.bf16.msra.mxu0 0
    %761 = vmatpush.bf16.msra.mxu0 0
    %762 = vmatpush.bf16.msra.mxu0 0
    %763 = vmatpush.bf16.msra.mxu0 0
    %764 = vmatpush.bf16.msra.mxu0 0
    %765 = vmatpush.bf16.msra.mxu0 %v756
    %766 = vmatmul.bf16.gmra.mxu0 %v752
    %v767 = vpop.f32.mrf.mxu0
    %v768 = vadd.f32 %v737, %v767
    %v769 = vpop.f32.mrf.mxu0
    %770 = vdwg.mxu0
    %v771 = vld [vmem:[%s13] sm:$0x1]
    %v772 = vld [vmem:[%s17] sm:$0x1]
    %v774 = vperm.slane %v772, 0
    %v776 = vsub.f32 %v768, %v774
    %v778 = vperm.slane %v771, 0
    %v780 = vmul.f32 %v778, %v776
    %v781 = vld [vmem:[%s19] sm:$0x1]
    %v782 = vadd.f32 %v781, 1e-05
    %v783 = vrsqrt.pop %v782
    %v784 = vmul.f32 %v783, %v782
    %v785 = vmul.f32 %v784, %v783
    %v786 = vmul.f32 0.5, %v785
    %v787 = vsub.f32 1.5, %v786
    %v788 = vmul.f32 %v783, %v787
    %vm789 = vweird.f32 %v782
    %vm790 = vweird.f32 %v783
    %vm791 = vmor %vm789, %vm790
    %v792 = vsel %vm791, %v783, %v788
    %v794 = vperm.slane %v792, 0
    %v796 = vmul.f32 %v780, %v794
    %v797 = vld [vmem:[%s15] sm:$0x1]
    %v799 = vperm.slane %v797, 0
    %v801 = vadd.f32 %v796, %v799
    %v802 = vld [vmem:[%s5] sm:$0x1]
    %v803 = vld [vmem:[%s5 + $0x1] sm:$0x1]
    %v806 = vperm.slane %v802, 0
    %v807 = vperm.slane %v803, 0
    %v810 = vld [vmem:[%s3] sm:$0xff]
    %v811 = vld [vmem:[%s3 + $0x8] sm:$0xff]
    %v812 = vld [vmem:[%s21] sm:$0xff]
    %v813 = vld [vmem:[%s21 + $0x8] sm:$0xff]
    %v814 = vld [vmem:[%s21 + $0x10] sm:$0xff]
    %v815 = vld [vmem:[%s21 + $0x18] sm:$0xff]
    %v816 = vpack.c.bf16 %v811, %v810
    %v817 = vpack.c.bf16 %v813, %v812
    %v818 = vpack.c.bf16 %v815, %v814
    %v819 = vld [vmem:[%s23] sm:$0x1]
    %v821 = vperm.slane %v819, 0
    %vm823 = vcmask 261120
    %v825 = vsel %vm823, %v816, 0
    %827 = vmatpush.bf16.msra.mxu0 0
    %828 = vmatpush.bf16.msra.mxu0 0
    %829 = vmatpush.bf16.msra.mxu0 0
    %830 = vmatpush.bf16.msra.mxu0 0
    %831 = vmatpush.bf16.msra.mxu0 0
    %832 = vmatpush.bf16.msra.mxu0 0
    %833 = vmatpush.bf16.msra.mxu0 %v818
    %834 = vmatpush.bf16.msra.mxu0 %v817
    %835 = vmatmul.bf16.gmra.mxu0 %v825
    %v836 = vpop.f32.mrf.mxu0
    %v837 = vadd.f32 %v821, %v836
    %v838 = vpop.f32.mrf.mxu0
    %v839 = vadd.f32 %v821, %v838
    %840 = vdwg.mxu0
    %v841 = vld [vmem:[%s25] sm:$0xff]
    %v842 = vld [vmem:[%s25 + $0x8] sm:$0xff]
    %v843 = vld [vmem:[%s25 + $0x10] sm:$0xff]
    %v844 = vld [vmem:[%s25 + $0x18] sm:$0xff]
    %v845 = vpack.c.bf16 %v842, %v841
    %v846 = vpack.c.bf16 %v844, %v843
    %v847 = vld [vmem:[%s27] sm:$0x1]
    %v849 = vperm.slane %v847, 0
    %851 = vmatpush.bf16.msra.mxu0 0
    %852 = vmatpush.bf16.msra.mxu0 0
    %853 = vmatpush.bf16.msra.mxu0 0
    %854 = vmatpush.bf16.msra.mxu0 0
    %855 = vmatpush.bf16.msra.mxu0 0
    %856 = vmatpush.bf16.msra.mxu0 0
    %857 = vmatpush.bf16.msra.mxu0 %v846
    %858 = vmatpush.bf16.msra.mxu0 %v845
    %859 = vmatmul.bf16.gmra.mxu0 %v825
    %v860 = vpop.f32.mrf.mxu0
    %v861 = vadd.f32 %v849, %v860
    %v862 = vpop.f32.mrf.mxu0
    %v863 = vadd.f32 %v849, %v862
    %864 = vdwg.mxu0
    %v865 = vld [vmem:[%s29] sm:$0xff]
    %v866 = vld [vmem:[%s29 + $0x8] sm:$0xff]
    %v867 = vld [vmem:[%s29 + $0x10] sm:$0xff]
    %v868 = vld [vmem:[%s29 + $0x18] sm:$0xff]
    %v869 = vpack.c.bf16 %v866, %v865
    %v870 = vpack.c.bf16 %v868, %v867
    %v871 = vld [vmem:[%s31] sm:$0x1]
    %v873 = vperm.slane %v871, 0
    %875 = vmatpush.bf16.msra.mxu0 0
    %876 = vmatpush.bf16.msra.mxu0 0
    %877 = vmatpush.bf16.msra.mxu0 0
    %878 = vmatpush.bf16.msra.mxu0 0
    %879 = vmatpush.bf16.msra.mxu0 0
    %880 = vmatpush.bf16.msra.mxu0 0
    %881 = vmatpush.bf16.msra.mxu0 %v870
    %882 = vmatpush.bf16.msra.mxu0 %v869
    %883 = vmatmul.bf16.gmra.mxu0 %v825
    %v884 = vpop.f32.mrf.mxu0
    %v885 = vadd.f32 %v873, %v884
    %v886 = vpop.f32.mrf.mxu0
    %v887 = vadd.f32 %v873, %v886
    %888 = vdwg.mxu0
    %v889 = vpack.c.bf16 %v837, %v837
    %v890 = vpack.c.bf16 %v839, %v839
    %v891 = vpack.c.bf16 %v861, %v861
    %v892 = vpack.c.bf16 %v863, %v863
    %vm893 = vcmask 64512
    %v895 = vsel %vm893, %v889, 0
    %v898 = vsel %vm893, %v891, 0
    %900 = vmatpush.bf16.xpose.msra.mxu0 0
    %901 = vmatpush.bf16.xpose.msra.mxu0 0
    %902 = vmatpush.bf16.xpose.msra.mxu0 0
    %903 = vmatpush.bf16.xpose.msra.mxu0 0
    %904 = vmatpush.bf16.xpose.msra.mxu0 0
    %905 = vmatpush.bf16.xpose.msra.mxu0 0
    %906 = vmatpush.bf16.xpose.msra.mxu0 0
    %907 = vmatpush.bf16.xpose.msra.mxu0 %v898
    %908 = vmatmul.bf16.gmra.mxu0 %v895
    %v909 = vpop.f32.mrf.mxu0
    %v910 = vadd.f32 0.0, %v909
    %v911 = vpop.f32.mrf.mxu0
    %912 = vdwg.mxu0
    %v914 = vsel %vm893, %v890, 0
    %v917 = vsel %vm893, %v892, 0
    %919 = vmatpush.bf16.xpose.msra.mxu0 0
    %920 = vmatpush.bf16.xpose.msra.mxu0 0
    %921 = vmatpush.bf16.xpose.msra.mxu0 0
    %922 = vmatpush.bf16.xpose.msra.mxu0 0
    %923 = vmatpush.bf16.xpose.msra.mxu0 0
    %924 = vmatpush.bf16.xpose.msra.mxu0 0
    %925 = vmatpush.bf16.xpose.msra.mxu0 0
    %926 = vmatpush.bf16.xpose.msra.mxu0 %v917
    %927 = vmatmul.bf16.gmra.mxu0 %v914
    %v928 = vpop.f32.mrf.mxu0
    %v929 = vadd.f32 0.0, %v928
    %v930 = vpop.f32.mrf.mxu0
    %931 = vdwg.mxu0
    %v932 = vmul.f32 %v910, 0.35355338
    %v933 = vmul.f32 %v929, 0.35355338
    %v934 = vadd.f32 %v932, %v806
    %v935 = vadd.f32 %v933, %v807
    %v936 = vsel %vm893, %v934, -inf
    %937 = vmax.xlane.f32.xlu0 %v936
    %v938 = vpop.xlane.xlu0 %937
    %v939 = vsel %vm893, %v935, -inf
    %940 = vmax.xlane.f32.xlu0 %v939
    %v941 = vpop.xlane.xlu0 %940
    %v942 = vsub.f32 %v934, %v938
    %v943 = vsub.f32 %v935, %v941
    %v944 = vmul.f32 %v942, 1.442695
    %v945 = vpow.pop %v944
    %v946 = vmul.f32 %v943, 1.442695
    %v947 = vpow.pop %v946
    %v948 = vsel %vm893, %v945, 0.0
    %949 = vadd.xlane.f32.xlu0 %v948
    %v950 = vpop.xlane.xlu0 %949
    %v951 = vsel %vm893, %v947, 0.0
    %952 = vadd.xlane.f32.xlu0 %v951
    %v953 = vpop.xlane.xlu0 %952
    %v954 = vrcp.pop %v950
    %v955 = vrcp.pop %v953
    %v956 = vmul.f32 %v945, %v954
    %v957 = vmul.f32 %v947, %v955
    %v958 = vpack.c.bf16 %v956, %v956
    %v959 = vpack.c.bf16 %v957, %v957
    %v960 = vpack.c.bf16 %v885, %v885
    %v961 = vpack.c.bf16 %v887, %v887
    %v963 = vsel %vm893, %v958, 0
    %v966 = vsel %vm711, %v960, 0
    %968 = vmatpush.bf16.msra.mxu0 0
    %969 = vmatpush.bf16.msra.mxu0 0
    %970 = vmatpush.bf16.msra.mxu0 0
    %971 = vmatpush.bf16.msra.mxu0 0
    %972 = vmatpush.bf16.msra.mxu0 0
    %973 = vmatpush.bf16.msra.mxu0 0
    %974 = vmatpush.bf16.msra.mxu0 0
    %975 = vmatpush.bf16.msra.mxu0 %v966
    %976 = vmatmul.bf16.gmra.mxu0 %v963
    %v977 = vpop.f32.mrf.mxu0
    %v978 = vadd.f32 0.0, %v977
    %v979 = vpop.f32.mrf.mxu0
    %980 = vdwg.mxu0
    %v982 = vsel %vm893, %v959, 0
    %v985 = vsel %vm711, %v961, 0
    %987 = vmatpush.bf16.msra.mxu0 0
    %988 = vmatpush.bf16.msra.mxu0 0
    %989 = vmatpush.bf16.msra.mxu0 0
    %990 = vmatpush.bf16.msra.mxu0 0
    %991 = vmatpush.bf16.msra.mxu0 0
    %992 = vmatpush.bf16.msra.mxu0 0
    %993 = vmatpush.bf16.msra.mxu0 0
    %994 = vmatpush.bf16.msra.mxu0 %v985
    %995 = vmatmul.bf16.gmra.mxu0 %v982
    %v996 = vpop.f32.mrf.mxu0
    %v997 = vadd.f32 0.0, %v996
    %v998 = vpop.f32.mrf.mxu0
    %999 = vdwg.mxu0
    %v1000 = vld [vmem:[%s33] sm:$0xff]
    %v1001 = vpack.c.bf16 %v997, %v978
    %v1002 = vpack.c.bf16 %v1000, %v1000
    %s1003 = scalar_lea.vmem %s21, 32
    %v1004 = vld [vmem:[%s1003] sm:$0xff]
    %v1005 = vld [vmem:[%s1003 + $0x8] sm:$0xff]
    %v1006 = vld [vmem:[%s1003 + $0x10] sm:$0xff]
    %v1007 = vld [vmem:[%s1003 + $0x18] sm:$0xff]
    %v1008 = vpack.c.bf16 %v1005, %v1004
    %v1009 = vpack.c.bf16 %v1007, %v1006
    %s1010 = scalar_lea.vmem %s23, 1
    %v1011 = vld [vmem:[%s1010] sm:$0x1]
    %v1013 = vperm.slane %v1011, 0
    %1015 = vmatpush.bf16.msra.mxu0 0
    %1016 = vmatpush.bf16.msra.mxu0 0
    %1017 = vmatpush.bf16.msra.mxu0 0
    %1018 = vmatpush.bf16.msra.mxu0 0
    %1019 = vmatpush.bf16.msra.mxu0 0
    %1020 = vmatpush.bf16.msra.mxu0 0
    %1021 = vmatpush.bf16.msra.mxu0 %v1009
    %1022 = vmatpush.bf16.msra.mxu0 %v1008
    %1023 = vmatmul.bf16.gmra.mxu0 %v825
    %v1024 = vpop.f32.mrf.mxu0
    %v1025 = vadd.f32 %v1013, %v1024
    %v1026 = vpop.f32.mrf.mxu0
    %v1027 = vadd.f32 %v1013, %v1026
    %1028 = vdwg.mxu0
    %s1029 = scalar_lea.vmem %s25, 32
    %v1030 = vld [vmem:[%s1029] sm:$0xff]
    %v1031 = vld [vmem:[%s1029 + $0x8] sm:$0xff]
    %v1032 = vld [vmem:[%s1029 + $0x10] sm:$0xff]
    %v1033 = vld [vmem:[%s1029 + $0x18] sm:$0xff]
    %v1034 = vpack.c.bf16 %v1031, %v1030
    %v1035 = vpack.c.bf16 %v1033, %v1032
    %s1036 = scalar_lea.vmem %s27, 1
    %v1037 = vld [vmem:[%s1036] sm:$0x1]
    %v1039 = vperm.slane %v1037, 0
    %1041 = vmatpush.bf16.msra.mxu0 0
    %1042 = vmatpush.bf16.msra.mxu0 0
    %1043 = vmatpush.bf16.msra.mxu0 0
    %1044 = vmatpush.bf16.msra.mxu0 0
    %1045 = vmatpush.bf16.msra.mxu0 0
    %1046 = vmatpush.bf16.msra.mxu0 0
    %1047 = vmatpush.bf16.msra.mxu0 %v1035
    %1048 = vmatpush.bf16.msra.mxu0 %v1034
    %1049 = vmatmul.bf16.gmra.mxu0 %v825
    %v1050 = vpop.f32.mrf.mxu0
    %v1051 = vadd.f32 %v1039, %v1050
    %v1052 = vpop.f32.mrf.mxu0
    %v1053 = vadd.f32 %v1039, %v1052
    %1054 = vdwg.mxu0
    %s1055 = scalar_lea.vmem %s29, 32
    %v1056 = vld [vmem:[%s1055] sm:$0xff]
    %v1057 = vld [vmem:[%s1055 + $0x8] sm:$0xff]
    %v1058 = vld [vmem:[%s1055 + $0x10] sm:$0xff]
    %v1059 = vld [vmem:[%s1055 + $0x18] sm:$0xff]
    %v1060 = vpack.c.bf16 %v1057, %v1056
    %v1061 = vpack.c.bf16 %v1059, %v1058
    %s1062 = scalar_lea.vmem %s31, 1
    %v1063 = vld [vmem:[%s1062] sm:$0x1]
    %v1065 = vperm.slane %v1063, 0
    %1067 = vmatpush.bf16.msra.mxu0 0
    %1068 = vmatpush.bf16.msra.mxu0 0
    %1069 = vmatpush.bf16.msra.mxu0 0
    %1070 = vmatpush.bf16.msra.mxu0 0
    %1071 = vmatpush.bf16.msra.mxu0 0
    %1072 = vmatpush.bf16.msra.mxu0 0
    %1073 = vmatpush.bf16.msra.mxu0 %v1061
    %1074 = vmatpush.bf16.msra.mxu0 %v1060
    %1075 = vmatmul.bf16.gmra.mxu0 %v825
    %v1076 = vpop.f32.mrf.mxu0
    %v1077 = vadd.f32 %v1065, %v1076
    %v1078 = vpop.f32.mrf.mxu0
    %v1079 = vadd.f32 %v1065, %v1078
    %1080 = vdwg.mxu0
    %v1081 = vpack.c.bf16 %v1025, %v1025
    %v1082 = vpack.c.bf16 %v1027, %v1027
    %v1083 = vpack.c.bf16 %v1051, %v1051
    %v1084 = vpack.c.bf16 %v1053, %v1053
    %v1086 = vsel %vm893, %v1081, 0
    %v1089 = vsel %vm893, %v1083, 0
    %1091 = vmatpush.bf16.xpose.msra.mxu0 0
    %1092 = vmatpush.bf16.xpose.msra.mxu0 0
    %1093 = vmatpush.bf16.xpose.msra.mxu0 0
    %1094 = vmatpush.bf16.xpose.msra.mxu0 0
    %1095 = vmatpush.bf16.xpose.msra.mxu0 0
    %1096 = vmatpush.bf16.xpose.msra.mxu0 0
    %1097 = vmatpush.bf16.xpose.msra.mxu0 0
    %1098 = vmatpush.bf16.xpose.msra.mxu0 %v1089
    %1099 = vmatmul.bf16.gmra.mxu0 %v1086
    %v1100 = vpop.f32.mrf.mxu0
    %v1101 = vadd.f32 0.0, %v1100
    %v1102 = vpop.f32.mrf.mxu0
    %1103 = vdwg.mxu0
    %v1105 = vsel %vm893, %v1082, 0
    %v1108 = vsel %vm893, %v1084, 0
    %1110 = vmatpush.bf16.xpose.msra.mxu0 0
    %1111 = vmatpush.bf16.xpose.msra.mxu0 0
    %1112 = vmatpush.bf16.xpose.msra.mxu0 0
    %1113 = vmatpush.bf16.xpose.msra.mxu0 0
    %1114 = vmatpush.bf16.xpose.msra.mxu0 0
    %1115 = vmatpush.bf16.xpose.msra.mxu0 0
    %1116 = vmatpush.bf16.xpose.msra.mxu0 0
    %1117 = vmatpush.bf16.xpose.msra.mxu0 %v1108
    %1118 = vmatmul.bf16.gmra.mxu0 %v1105
    %v1119 = vpop.f32.mrf.mxu0
    %v1120 = vadd.f32 0.0, %v1119
    %v1121 = vpop.f32.mrf.mxu0
    %1122 = vdwg.mxu0
    %v1123 = vmul.f32 %v1101, 0.35355338
    %v1124 = vmul.f32 %v1120, 0.35355338
    %v1125 = vadd.f32 %v1123, %v806
    %v1126 = vadd.f32 %v1124, %v807
    %v1127 = vsel %vm893, %v1125, -inf
    %1128 = vmax.xlane.f32.xlu0 %v1127
    %v1129 = vpop.xlane.xlu0 %1128
    %v1130 = vsel %vm893, %v1126, -inf
    %1131 = vmax.xlane.f32.xlu0 %v1130
    %v1132 = vpop.xlane.xlu0 %1131
    %v1133 = vsub.f32 %v1125, %v1129
    %v1134 = vsub.f32 %v1126, %v1132
    %v1135 = vmul.f32 %v1133, 1.442695
    %v1136 = vpow.pop %v1135
    %v1137 = vmul.f32 %v1134, 1.442695
    %v1138 = vpow.pop %v1137
    %v1139 = vsel %vm893, %v1136, 0.0
    %1140 = vadd.xlane.f32.xlu0 %v1139
    %v1141 = vpop.xlane.xlu0 %1140
    %v1142 = vsel %vm893, %v1138, 0.0
    %1143 = vadd.xlane.f32.xlu0 %v1142
    %v1144 = vpop.xlane.xlu0 %1143
    %v1145 = vrcp.pop %v1141
    %v1146 = vrcp.pop %v1144
    %v1147 = vmul.f32 %v1136, %v1145
    %v1148 = vmul.f32 %v1138, %v1146
    %v1149 = vpack.c.bf16 %v1147, %v1147
    %v1150 = vpack.c.bf16 %v1148, %v1148
    %v1151 = vpack.c.bf16 %v1077, %v1077
    %v1152 = vpack.c.bf16 %v1079, %v1079
    %v1154 = vsel %vm893, %v1149, 0
    %v1157 = vsel %vm711, %v1151, 0
    %1159 = vmatpush.bf16.msra.mxu0 0
    %1160 = vmatpush.bf16.msra.mxu0 0
    %1161 = vmatpush.bf16.msra.mxu0 0
    %1162 = vmatpush.bf16.msra.mxu0 0
    %1163 = vmatpush.bf16.msra.mxu0 0
    %1164 = vmatpush.bf16.msra.mxu0 0
    %1165 = vmatpush.bf16.msra.mxu0 0
    %1166 = vmatpush.bf16.msra.mxu0 %v1157
    %1167 = vmatmul.bf16.gmra.mxu0 %v1154
    %v1168 = vpop.f32.mrf.mxu0
    %v1169 = vadd.f32 0.0, %v1168
    %v1170 = vpop.f32.mrf.mxu0
    %1171 = vdwg.mxu0
    %v1173 = vsel %vm893, %v1150, 0
    %v1176 = vsel %vm711, %v1152, 0
    %1178 = vmatpush.bf16.msra.mxu0 0
    %1179 = vmatpush.bf16.msra.mxu0 0
    %1180 = vmatpush.bf16.msra.mxu0 0
    %1181 = vmatpush.bf16.msra.mxu0 0
    %1182 = vmatpush.bf16.msra.mxu0 0
    %1183 = vmatpush.bf16.msra.mxu0 0
    %1184 = vmatpush.bf16.msra.mxu0 0
    %1185 = vmatpush.bf16.msra.mxu0 %v1176
    %1186 = vmatmul.bf16.gmra.mxu0 %v1173
    %v1187 = vpop.f32.mrf.mxu0
    %v1188 = vadd.f32 0.0, %v1187
    %v1189 = vpop.f32.mrf.mxu0
    %1190 = vdwg.mxu0
    %s1191 = scalar_lea.vmem %s33, 8
    %v1192 = vld [vmem:[%s1191] sm:$0xff]
    %v1193 = vpack.c.bf16 %v1188, %v1169
    %v1194 = vpack.c.bf16 %v1192, %v1192
    %v1196 = vsel %vm893, %v1193, 0
    %v1199 = vsel %vm711, %v1194, 0
    %1201 = vmatpush.bf16.msra.mxu0 0
    %1202 = vmatpush.bf16.msra.mxu0 0
    %1203 = vmatpush.bf16.msra.mxu0 0
    %1204 = vmatpush.bf16.msra.mxu0 0
    %1205 = vmatpush.bf16.msra.mxu0 0
    %1206 = vmatpush.bf16.msra.mxu0 0
    %1207 = vmatpush.bf16.msra.mxu0 0
    %1208 = vmatpush.bf16.msra.mxu0 %v1199
    %1209 = vmatmul.bf16.gmra.mxu0 %v1196
    %v1210 = vpop.f32.mrf.mxu0
    %v1211 = vadd.f32 0.0, %v1210
    %v1212 = vpop.f32.mrf.mxu0
    %v1213 = vadd.f32 0.0, %v1212
    %1214 = vdwg.mxu0
    %v1216 = vsel %vm893, %v1001, 0
    %v1219 = vsel %vm711, %v1002, 0
    %1221 = vmatpush.bf16.msra.mxu0 0
    %1222 = vmatpush.bf16.msra.mxu0 0
    %1223 = vmatpush.bf16.msra.mxu0 0
    %1224 = vmatpush.bf16.msra.mxu0 0
    %1225 = vmatpush.bf16.msra.mxu0 0
    %1226 = vmatpush.bf16.msra.mxu0 0
    %1227 = vmatpush.bf16.msra.mxu0 0
    %1228 = vmatpush.bf16.msra.mxu0 %v1219
    %1229 = vmatmul.bf16.gmra.mxu0 %v1216
    %v1230 = vpop.f32.mrf.mxu0
    %v1231 = vadd.f32 %v1211, %v1230
    %v1232 = vpop.f32.mrf.mxu0
    %v1233 = vadd.f32 %v1213, %v1232
    %1234 = vdwg.mxu0
    %s1235 = scalar_lea.vmem %s21, 64
    %v1236 = vld [vmem:[%s1235] sm:$0xff]
    %v1237 = vld [vmem:[%s1235 + $0x8] sm:$0xff]
    %v1238 = vld [vmem:[%s1235 + $0x10] sm:$0xff]
    %v1239 = vld [vmem:[%s1235 + $0x18] sm:$0xff]
    %v1240 = vpack.c.bf16 %v1237, %v1236
    %v1241 = vpack.c.bf16 %v1239, %v1238
    %s1242 = scalar_lea.vmem %s23, 2
    %v1243 = vld [vmem:[%s1242] sm:$0x1]
    %v1245 = vperm.slane %v1243, 0
    %1247 = vmatpush.bf16.msra.mxu0 0
    %1248 = vmatpush.bf16.msra.mxu0 0
    %1249 = vmatpush.bf16.msra.mxu0 0
    %1250 = vmatpush.bf16.msra.mxu0 0
    %1251 = vmatpush.bf16.msra.mxu0 0
    %1252 = vmatpush.bf16.msra.mxu0 0
    %1253 = vmatpush.bf16.msra.mxu0 %v1241
    %1254 = vmatpush.bf16.msra.mxu0 %v1240
    %1255 = vmatmul.bf16.gmra.mxu0 %v825
    %v1256 = vpop.f32.mrf.mxu0
    %v1257 = vadd.f32 %v1245, %v1256
    %v1258 = vpop.f32.mrf.mxu0
    %v1259 = vadd.f32 %v1245, %v1258
    %1260 = vdwg.mxu0
    %s1261 = scalar_lea.vmem %s25, 64
    %v1262 = vld [vmem:[%s1261] sm:$0xff]
    %v1263 = vld [vmem:[%s1261 + $0x8] sm:$0xff]
    %v1264 = vld [vmem:[%s1261 + $0x10] sm:$0xff]
    %v1265 = vld [vmem:[%s1261 + $0x18] sm:$0xff]
    %v1266 = vpack.c.bf16 %v1263, %v1262
    %v1267 = vpack.c.bf16 %v1265, %v1264
    %s1268 = scalar_lea.vmem %s27, 2
    %v1269 = vld [vmem:[%s1268] sm:$0x1]
    %v1271 = vperm.slane %v1269, 0
    %1273 = vmatpush.bf16.msra.mxu0 0
    %1274 = vmatpush.bf16.msra.mxu0 0
    %1275 = vmatpush.bf16.msra.mxu0 0
    %1276 = vmatpush.bf16.msra.mxu0 0
    %1277 = vmatpush.bf16.msra.mxu0 0
    %1278 = vmatpush.bf16.msra.mxu0 0
    %1279 = vmatpush.bf16.msra.mxu0 %v1267
    %1280 = vmatpush.bf16.msra.mxu0 %v1266
    %1281 = vmatmul.bf16.gmra.mxu0 %v825
    %v1282 = vpop.f32.mrf.mxu0
    %v1283 = vadd.f32 %v1271, %v1282
    %v1284 = vpop.f32.mrf.mxu0
    %v1285 = vadd.f32 %v1271, %v1284
    %1286 = vdwg.mxu0
    %s1287 = scalar_lea.vmem %s29, 64
    %v1288 = vld [vmem:[%s1287] sm:$0xff]
    %v1289 = vld [vmem:[%s1287 + $0x8] sm:$0xff]
    %v1290 = vld [vmem:[%s1287 + $0x10] sm:$0xff]
    %v1291 = vld [vmem:[%s1287 + $0x18] sm:$0xff]
    %v1292 = vpack.c.bf16 %v1289, %v1288
    %v1293 = vpack.c.bf16 %v1291, %v1290
    %s1294 = scalar_lea.vmem %s31, 2
    %v1295 = vld [vmem:[%s1294] sm:$0x1]
    %v1297 = vperm.slane %v1295, 0
    %1299 = vmatpush.bf16.msra.mxu0 0
    %1300 = vmatpush.bf16.msra.mxu0 0
    %1301 = vmatpush.bf16.msra.mxu0 0
    %1302 = vmatpush.bf16.msra.mxu0 0
    %1303 = vmatpush.bf16.msra.mxu0 0
    %1304 = vmatpush.bf16.msra.mxu0 0
    %1305 = vmatpush.bf16.msra.mxu0 %v1293
    %1306 = vmatpush.bf16.msra.mxu0 %v1292
    %1307 = vmatmul.bf16.gmra.mxu0 %v825
    %v1308 = vpop.f32.mrf.mxu0
    %v1309 = vadd.f32 %v1297, %v1308
    %v1310 = vpop.f32.mrf.mxu0
    %v1311 = vadd.f32 %v1297, %v1310
    %1312 = vdwg.mxu0
    %v1313 = vpack.c.bf16 %v1257, %v1257
    %v1314 = vpack.c.bf16 %v1259, %v1259
    %v1315 = vpack.c.bf16 %v1283, %v1283
    %v1316 = vpack.c.bf16 %v1285, %v1285
    %v1318 = vsel %vm893, %v1313, 0
    %v1321 = vsel %vm893, %v1315, 0
    %1323 = vmatpush.bf16.xpose.msra.mxu0 0
    %1324 = vmatpush.bf16.xpose.msra.mxu0 0
    %1325 = vmatpush.bf16.xpose.msra.mxu0 0
    %1326 = vmatpush.bf16.xpose.msra.mxu0 0
    %1327 = vmatpush.bf16.xpose.msra.mxu0 0
    %1328 = vmatpush.bf16.xpose.msra.mxu0 0
    %1329 = vmatpush.bf16.xpose.msra.mxu0 0
    %1330 = vmatpush.bf16.xpose.msra.mxu0 %v1321
    %1331 = vmatmul.bf16.gmra.mxu0 %v1318
    %v1332 = vpop.f32.mrf.mxu0
    %v1333 = vadd.f32 0.0, %v1332
    %v1334 = vpop.f32.mrf.mxu0
    %1335 = vdwg.mxu0
    %v1337 = vsel %vm893, %v1314, 0
    %v1340 = vsel %vm893, %v1316, 0
    %1342 = vmatpush.bf16.xpose.msra.mxu0 0
    %1343 = vmatpush.bf16.xpose.msra.mxu0 0
    %1344 = vmatpush.bf16.xpose.msra.mxu0 0
    %1345 = vmatpush.bf16.xpose.msra.mxu0 0
    %1346 = vmatpush.bf16.xpose.msra.mxu0 0
    %1347 = vmatpush.bf16.xpose.msra.mxu0 0
    %1348 = vmatpush.bf16.xpose.msra.mxu0 0
    %1349 = vmatpush.bf16.xpose.msra.mxu0 %v1340
    %1350 = vmatmul.bf16.gmra.mxu0 %v1337
    %v1351 = vpop.f32.mrf.mxu0
    %v1352 = vadd.f32 0.0, %v1351
    %v1353 = vpop.f32.mrf.mxu0
    %1354 = vdwg.mxu0
    %v1355 = vmul.f32 %v1333, 0.35355338
    %v1356 = vmul.f32 %v1352, 0.35355338
    %v1357 = vadd.f32 %v1355, %v806
    %v1358 = vadd.f32 %v1356, %v807
    %v1359 = vsel %vm893, %v1357, -inf
    %1360 = vmax.xlane.f32.xlu0 %v1359
    %v1361 = vpop.xlane.xlu0 %1360
    %v1362 = vsel %vm893, %v1358, -inf
    %1363 = vmax.xlane.f32.xlu0 %v1362
    %v1364 = vpop.xlane.xlu0 %1363
    %v1365 = vsub.f32 %v1357, %v1361
    %v1366 = vsub.f32 %v1358, %v1364
    %v1367 = vmul.f32 %v1365, 1.442695
    %v1368 = vpow.pop %v1367
    %v1369 = vmul.f32 %v1366, 1.442695
    %v1370 = vpow.pop %v1369
    %v1371 = vsel %vm893, %v1368, 0.0
    %1372 = vadd.xlane.f32.xlu0 %v1371
    %v1373 = vpop.xlane.xlu0 %1372
    %v1374 = vsel %vm893, %v1370, 0.0
    %1375 = vadd.xlane.f32.xlu0 %v1374
    %v1376 = vpop.xlane.xlu0 %1375
    %v1377 = vrcp.pop %v1373
    %v1378 = vrcp.pop %v1376
    %v1379 = vmul.f32 %v1368, %v1377
    %v1380 = vmul.f32 %v1370, %v1378
    %v1381 = vpack.c.bf16 %v1379, %v1379
    %v1382 = vpack.c.bf16 %v1380, %v1380
    %v1383 = vpack.c.bf16 %v1309, %v1309
    %v1384 = vpack.c.bf16 %v1311, %v1311
    %v1386 = vsel %vm893, %v1381, 0
    %v1389 = vsel %vm711, %v1383, 0
    %1391 = vmatpush.bf16.msra.mxu0 0
    %1392 = vmatpush.bf16.msra.mxu0 0
    %1393 = vmatpush.bf16.msra.mxu0 0
    %1394 = vmatpush.bf16.msra.mxu0 0
    %1395 = vmatpush.bf16.msra.mxu0 0
    %1396 = vmatpush.bf16.msra.mxu0 0
    %1397 = vmatpush.bf16.msra.mxu0 0
    %1398 = vmatpush.bf16.msra.mxu0 %v1389
    %1399 = vmatmul.bf16.gmra.mxu0 %v1386
    %v1400 = vpop.f32.mrf.mxu0
    %v1401 = vadd.f32 0.0, %v1400
    %v1402 = vpop.f32.mrf.mxu0
    %1403 = vdwg.mxu0
    %v1405 = vsel %vm893, %v1382, 0
    %v1408 = vsel %vm711, %v1384, 0
    %1410 = vmatpush.bf16.msra.mxu0 0
    %1411 = vmatpush.bf16.msra.mxu0 0
    %1412 = vmatpush.bf16.msra.mxu0 0
    %1413 = vmatpush.bf16.msra.mxu0 0
    %1414 = vmatpush.bf16.msra.mxu0 0
    %1415 = vmatpush.bf16.msra.mxu0 0
    %1416 = vmatpush.bf16.msra.mxu0 0
    %1417 = vmatpush.bf16.msra.mxu0 %v1408
    %1418 = vmatmul.bf16.gmra.mxu0 %v1405
    %v1419 = vpop.f32.mrf.mxu0
    %v1420 = vadd.f32 0.0, %v1419
    %v1421 = vpop.f32.mrf.mxu0
    %1422 = vdwg.mxu0
    %s1423 = scalar_lea.vmem %s33, 16
    %v1424 = vld [vmem:[%s1423] sm:$0xff]
    %v1425 = vpack.c.bf16 %v1420, %v1401
    %v1426 = vpack.c.bf16 %v1424, %v1424
    %v1428 = vsel %vm893, %v1425, 0
    %v1431 = vsel %vm711, %v1426, 0
    %1433 = vmatpush.bf16.msra.mxu0 0
    %1434 = vmatpush.bf16.msra.mxu0 0
    %1435 = vmatpush.bf16.msra.mxu0 0
    %1436 = vmatpush.bf16.msra.mxu0 0
    %1437 = vmatpush.bf16.msra.mxu0 0
    %1438 = vmatpush.bf16.msra.mxu0 0
    %1439 = vmatpush.bf16.msra.mxu0 0
    %1440 = vmatpush.bf16.msra.mxu0 %v1431
    %1441 = vmatmul.bf16.gmra.mxu0 %v1428
    %v1442 = vpop.f32.mrf.mxu0
    %v1443 = vadd.f32 0.0, %v1442
    %v1444 = vpop.f32.mrf.mxu0
    %v1445 = vadd.f32 0.0, %v1444
    %1446 = vdwg.mxu0
    %v1447 = vadd.f32 %v1231, %v1443
    %v1448 = vadd.f32 %v1233, %v1445
    %s1449 = scalar_lea.vmem %s21, 96
    %v1450 = vld [vmem:[%s1449] sm:$0xff]
    %v1451 = vld [vmem:[%s1449 + $0x8] sm:$0xff]
    %v1452 = vld [vmem:[%s1449 + $0x10] sm:$0xff]
    %v1453 = vld [vmem:[%s1449 + $0x18] sm:$0xff]
    %v1454 = vpack.c.bf16 %v1451, %v1450
    %v1455 = vpack.c.bf16 %v1453, %v1452
    %s1456 = scalar_lea.vmem %s23, 3
    %v1457 = vld [vmem:[%s1456] sm:$0x1]
    %v1459 = vperm.slane %v1457, 0
    %1461 = vmatpush.bf16.msra.mxu0 0
    %1462 = vmatpush.bf16.msra.mxu0 0
    %1463 = vmatpush.bf16.msra.mxu0 0
    %1464 = vmatpush.bf16.msra.mxu0 0
    %1465 = vmatpush.bf16.msra.mxu0 0
    %1466 = vmatpush.bf16.msra.mxu0 0
    %1467 = vmatpush.bf16.msra.mxu0 %v1455
    %1468 = vmatpush.bf16.msra.mxu0 %v1454
    %1469 = vmatmul.bf16.gmra.mxu0 %v825
    %v1470 = vpop.f32.mrf.mxu0
    %v1471 = vadd.f32 %v1459, %v1470
    %v1472 = vpop.f32.mrf.mxu0
    %v1473 = vadd.f32 %v1459, %v1472
    %1474 = vdwg.mxu0
    %s1475 = scalar_lea.vmem %s25, 96
    %v1476 = vld [vmem:[%s1475] sm:$0xff]
    %v1477 = vld [vmem:[%s1475 + $0x8] sm:$0xff]
    %v1478 = vld [vmem:[%s1475 + $0x10] sm:$0xff]
    %v1479 = vld [vmem:[%s1475 + $0x18] sm:$0xff]
    %v1480 = vpack.c.bf16 %v1477, %v1476
    %v1481 = vpack.c.bf16 %v1479, %v1478
    %s1482 = scalar_lea.vmem %s27, 3
    %v1483 = vld [vmem:[%s1482] sm:$0x1]
    %v1485 = vperm.slane %v1483, 0
    %1487 = vmatpush.bf16.msra.mxu0 0
    %1488 = vmatpush.bf16.msra.mxu0 0
    %1489 = vmatpush.bf16.msra.mxu0 0
    %1490 = vmatpush.bf16.msra.mxu0 0
    %1491 = vmatpush.bf16.msra.mxu0 0
    %1492 = vmatpush.bf16.msra.mxu0 0
    %1493 = vmatpush.bf16.msra.mxu0 %v1481
    %1494 = vmatpush.bf16.msra.mxu0 %v1480
    %1495 = vmatmul.bf16.gmra.mxu0 %v825
    %v1496 = vpop.f32.mrf.mxu0
    %v1497 = vadd.f32 %v1485, %v1496
    %v1498 = vpop.f32.mrf.mxu0
    %v1499 = vadd.f32 %v1485, %v1498
    %1500 = vdwg.mxu0
    %s1501 = scalar_lea.vmem %s29, 96
    %v1502 = vld [vmem:[%s1501] sm:$0xff]
    %v1503 = vld [vmem:[%s1501 + $0x8] sm:$0xff]
    %v1504 = vld [vmem:[%s1501 + $0x10] sm:$0xff]
    %v1505 = vld [vmem:[%s1501 + $0x18] sm:$0xff]
    %v1506 = vpack.c.bf16 %v1503, %v1502
    %v1507 = vpack.c.bf16 %v1505, %v1504
    %s1508 = scalar_lea.vmem %s31, 3
    %v1509 = vld [vmem:[%s1508] sm:$0x1]
    %v1511 = vperm.slane %v1509, 0
    %1513 = vmatpush.bf16.msra.mxu0 0
    %1514 = vmatpush.bf16.msra.mxu0 0
    %1515 = vmatpush.bf16.msra.mxu0 0
    %1516 = vmatpush.bf16.msra.mxu0 0
    %1517 = vmatpush.bf16.msra.mxu0 0
    %1518 = vmatpush.bf16.msra.mxu0 0
    %1519 = vmatpush.bf16.msra.mxu0 %v1507
    %1520 = vmatpush.bf16.msra.mxu0 %v1506
    %1521 = vmatmul.bf16.gmra.mxu0 %v825
    %v1522 = vpop.f32.mrf.mxu0
    %v1523 = vadd.f32 %v1511, %v1522
    %v1524 = vpop.f32.mrf.mxu0
    %v1525 = vadd.f32 %v1511, %v1524
    %1526 = vdwg.mxu0
    %v1527 = vpack.c.bf16 %v1471, %v1471
    %v1528 = vpack.c.bf16 %v1473, %v1473
    %v1529 = vpack.c.bf16 %v1497, %v1497
    %v1530 = vpack.c.bf16 %v1499, %v1499
    %v1532 = vsel %vm893, %v1527, 0
    %v1535 = vsel %vm893, %v1529, 0
    %1537 = vmatpush.bf16.xpose.msra.mxu0 0
    %1538 = vmatpush.bf16.xpose.msra.mxu0 0
    %1539 = vmatpush.bf16.xpose.msra.mxu0 0
    %1540 = vmatpush.bf16.xpose.msra.mxu0 0
    %1541 = vmatpush.bf16.xpose.msra.mxu0 0
    %1542 = vmatpush.bf16.xpose.msra.mxu0 0
    %1543 = vmatpush.bf16.xpose.msra.mxu0 0
    %1544 = vmatpush.bf16.xpose.msra.mxu0 %v1535
    %1545 = vmatmul.bf16.gmra.mxu0 %v1532
    %v1546 = vpop.f32.mrf.mxu0
    %v1547 = vadd.f32 0.0, %v1546
    %v1548 = vpop.f32.mrf.mxu0
    %1549 = vdwg.mxu0
    %v1551 = vsel %vm893, %v1528, 0
    %v1554 = vsel %vm893, %v1530, 0
    %1556 = vmatpush.bf16.xpose.msra.mxu0 0
    %1557 = vmatpush.bf16.xpose.msra.mxu0 0
    %1558 = vmatpush.bf16.xpose.msra.mxu0 0
    %1559 = vmatpush.bf16.xpose.msra.mxu0 0
    %1560 = vmatpush.bf16.xpose.msra.mxu0 0
    %1561 = vmatpush.bf16.xpose.msra.mxu0 0
    %1562 = vmatpush.bf16.xpose.msra.mxu0 0
    %1563 = vmatpush.bf16.xpose.msra.mxu0 %v1554
    %1564 = vmatmul.bf16.gmra.mxu0 %v1551
    %v1565 = vpop.f32.mrf.mxu0
    %v1566 = vadd.f32 0.0, %v1565
    %v1567 = vpop.f32.mrf.mxu0
    %1568 = vdwg.mxu0
    %v1569 = vmul.f32 %v1547, 0.35355338
    %v1570 = vmul.f32 %v1566, 0.35355338
    %v1571 = vadd.f32 %v1569, %v806
    %v1572 = vadd.f32 %v1570, %v807
    %v1573 = vsel %vm893, %v1571, -inf
    %1574 = vmax.xlane.f32.xlu0 %v1573
    %v1575 = vpop.xlane.xlu0 %1574
    %v1576 = vsel %vm893, %v1572, -inf
    %1577 = vmax.xlane.f32.xlu0 %v1576
    %v1578 = vpop.xlane.xlu0 %1577
    %v1579 = vsub.f32 %v1571, %v1575
    %v1580 = vsub.f32 %v1572, %v1578
    %v1581 = vmul.f32 %v1579, 1.442695
    %v1582 = vpow.pop %v1581
    %v1583 = vmul.f32 %v1580, 1.442695
    %v1584 = vpow.pop %v1583
    %v1585 = vsel %vm893, %v1582, 0.0
    %1586 = vadd.xlane.f32.xlu0 %v1585
    %v1587 = vpop.xlane.xlu0 %1586
    %v1588 = vsel %vm893, %v1584, 0.0
    %1589 = vadd.xlane.f32.xlu0 %v1588
    %v1590 = vpop.xlane.xlu0 %1589
    %v1591 = vrcp.pop %v1587
    %v1592 = vrcp.pop %v1590
    %v1593 = vmul.f32 %v1582, %v1591
    %v1594 = vmul.f32 %v1584, %v1592
    %v1595 = vpack.c.bf16 %v1593, %v1593
    %v1596 = vpack.c.bf16 %v1594, %v1594
    %v1597 = vpack.c.bf16 %v1523, %v1523
    %v1598 = vpack.c.bf16 %v1525, %v1525
    %v1600 = vsel %vm893, %v1595, 0
    %v1603 = vsel %vm711, %v1597, 0
    %1605 = vmatpush.bf16.msra.mxu0 0
    %1606 = vmatpush.bf16.msra.mxu0 0
    %1607 = vmatpush.bf16.msra.mxu0 0
    %1608 = vmatpush.bf16.msra.mxu0 0
    %1609 = vmatpush.bf16.msra.mxu0 0
    %1610 = vmatpush.bf16.msra.mxu0 0
    %1611 = vmatpush.bf16.msra.mxu0 0
    %1612 = vmatpush.bf16.msra.mxu0 %v1603
    %1613 = vmatmul.bf16.gmra.mxu0 %v1600
    %v1614 = vpop.f32.mrf.mxu0
    %v1615 = vadd.f32 0.0, %v1614
    %v1616 = vpop.f32.mrf.mxu0
    %1617 = vdwg.mxu0
    %v1619 = vsel %vm893, %v1596, 0
    %v1622 = vsel %vm711, %v1598, 0
    %1624 = vmatpush.bf16.msra.mxu0 0
    %1625 = vmatpush.bf16.msra.mxu0 0
    %1626 = vmatpush.bf16.msra.mxu0 0
    %1627 = vmatpush.bf16.msra.mxu0 0
    %1628 = vmatpush.bf16.msra.mxu0 0
    %1629 = vmatpush.bf16.msra.mxu0 0
    %1630 = vmatpush.bf16.msra.mxu0 0
    %1631 = vmatpush.bf16.msra.mxu0 %v1622
    %1632 = vmatmul.bf16.gmra.mxu0 %v1619
    %v1633 = vpop.f32.mrf.mxu0
    %v1634 = vadd.f32 0.0, %v1633
    %v1635 = vpop.f32.mrf.mxu0
    %1636 = vdwg.mxu0
    %s1637 = scalar_lea.vmem %s33, 24
    %v1638 = vld [vmem:[%s1637] sm:$0xff]
    %v1639 = vpack.c.bf16 %v1634, %v1615
    %v1640 = vpack.c.bf16 %v1638, %v1638
    %v1642 = vsel %vm893, %v1639, 0
    %v1645 = vsel %vm711, %v1640, 0
    %1647 = vmatpush.bf16.msra.mxu0 0
    %1648 = vmatpush.bf16.msra.mxu0 0
    %1649 = vmatpush.bf16.msra.mxu0 0
    %1650 = vmatpush.bf16.msra.mxu0 0
    %1651 = vmatpush.bf16.msra.mxu0 0
    %1652 = vmatpush.bf16.msra.mxu0 0
    %1653 = vmatpush.bf16.msra.mxu0 0
    %1654 = vmatpush.bf16.msra.mxu0 %v1645
    %1655 = vmatmul.bf16.gmra.mxu0 %v1642
    %v1656 = vpop.f32.mrf.mxu0
    %v1657 = vadd.f32 0.0, %v1656
    %v1658 = vpop.f32.mrf.mxu0
    %v1659 = vadd.f32 0.0, %v1658
    %1660 = vdwg.mxu0
    %v1661 = vadd.f32 %v1447, %v1657
    %v1662 = vadd.f32 %v1448, %v1659
    %v1663 = vld [vmem:[%s35] sm:$0x1]
    %v1665 = vperm.slane %v1663, 0
    %v1667 = vadd.f32 %v1661, %v1665
    %v1668 = vadd.f32 %v1662, %v1665
    %v1669 = vadd.f32 %v810, %v1667
    %v1670 = vadd.f32 %v811, %v1668
    %v1671 = vsel %vm823, %v1669, 0.0
    %1672 = vadd.xlane.f32.xlu0 %v1671
    %v1673 = vpop.xlane.xlu0 %1672
    %v1674 = vsel %vm823, %v1670, 0.0
    %1675 = vadd.xlane.f32.xlu0 %v1674
    %v1676 = vpop.xlane.xlu0 %1675
    %v1677 = vrcp.pop 32.0
    %v1678 = vmul.f32 32.0, %v1677
    %v1679 = vsub.f32 1.0, %v1678
    %v1680 = vmul.f32 %v1677, %v1679
    %v1681 = vadd.f32 %v1677, %v1680
    %vm1682 = vweird.f32 %v1677
    %v1683 = vsel %vm1682, %v1677, %v1681
    %v1684 = vmul.f32 %v1673, %v1683
    %v1685 = vmul.f32 %v1676, %v1683
    %v1686 = vsub.f32 %v1669, %v1684
    %v1687 = vsub.f32 %v1670, %v1685
    %v1688 = vmul.f32 %v1686, %v1686
    %v1689 = vmul.f32 %v1687, %v1687
    %v1690 = vsel %vm823, %v1688, 0.0
    %1691 = vadd.xlane.f32.xlu0 %v1690
    %v1692 = vpop.xlane.xlu0 %1691
    %v1693 = vsel %vm823, %v1689, 0.0
    %1694 = vadd.xlane.f32.xlu0 %v1693
    %v1695 = vpop.xlane.xlu0 %1694
    %v1696 = vmul.f32 %v1692, %v1683
    %v1697 = vmul.f32 %v1695, %v1683
    %v1698 = vadd.f32 %v1696, 1e-05
    %v1699 = vadd.f32 %v1697, 1e-05
    %v1700 = vrsqrt.pop %v1698
    %v1701 = vmul.f32 %v1700, %v1698
    %v1702 = vmul.f32 %v1701, %v1700
    %v1703 = vmul.f32 0.5, %v1702
    %v1704 = vsub.f32 1.5, %v1703
    %v1705 = vmul.f32 %v1700, %v1704
    %vm1706 = vweird.f32 %v1698
    %vm1707 = vweird.f32 %v1700
    %vm1708 = vmor %vm1706, %vm1707
    %v1709 = vsel %vm1708, %v1700, %v1705
    %v1710 = vrsqrt.pop %v1699
    %v1711 = vmul.f32 %v1710, %v1699
    %v1712 = vmul.f32 %v1711, %v1710
    %v1713 = vmul.f32 0.5, %v1712
    %v1714 = vsub.f32 1.5, %v1713
    %v1715 = vmul.f32 %v1710, %v1714
    %vm1716 = vweird.f32 %v1699
    %vm1717 = vweird.f32 %v1710
    %vm1718 = vmor %vm1716, %vm1717
    %v1719 = vsel %vm1718, %v1710, %v1715
    %v1720 = vmul.f32 %v1686, %v1709
    %v1721 = vmul.f32 %v1687, %v1719
    %v1722 = vld [vmem:[%s37] sm:$0x1]
    %v1724 = vperm.slane %v1722, 0
    %v1726 = vmul.f32 %v1720, %v1724
    %v1727 = vmul.f32 %v1721, %v1724
    %v1728 = vld [vmem:[%s39] sm:$0x1]
    %v1730 = vperm.slane %v1728, 0
    %v1732 = vadd.f32 %v1726, %v1730
    %v1733 = vadd.f32 %v1727, %v1730
    %v1734 = vld [vmem:[%s41] sm:$0xff]
    %v1735 = vld [vmem:[%s41 + $0x8] sm:$0xff]
    %v1736 = vld [vmem:[%s41 + $0x10] sm:$0xff]
    %v1737 = vld [vmem:[%s41 + $0x18] sm:$0xff]
    %v1738 = vpack.c.bf16 %v1733, %v1732
    %v1739 = vpack.c.bf16 %v1735, %v1734
    %v1740 = vpack.c.bf16 %v1737, %v1736
    %v1741 = vld [vmem:[%s43] sm:$0x1]
    %v1743 = vperm.slane %v1741, 0
    %v1746 = vsel %vm823, %v1738, 0
    %1748 = vmatpush.bf16.msra.mxu0 0
    %1749 = vmatpush.bf16.msra.mxu0 0
    %1750 = vmatpush.bf16.msra.mxu0 0
    %1751 = vmatpush.bf16.msra.mxu0 0
    %1752 = vmatpush.bf16.msra.mxu0 0
    %1753 = vmatpush.bf16.msra.mxu0 0
    %1754 = vmatpush.bf16.msra.mxu0 %v1740
    %1755 = vmatpush.bf16.msra.mxu0 %v1739
    %1756 = vmatmul.bf16.gmra.mxu0 %v1746
    %v1757 = vpop.f32.mrf.mxu0
    %v1758 = vadd.f32 %v1743, %v1757
    %v1759 = vpop.f32.mrf.mxu0
    %v1760 = vadd.f32 %v1743, %v1759
    %1761 = vdwg.mxu0
    %v1762 = vmax.f32 %v1758, 0.0
    %v1763 = vmax.f32 %v1760, 0.0
    %v1764 = vld [vmem:[%s45] sm:$0xff]
    %v1765 = vld [vmem:[%s45 + $0x8] sm:$0xff]
    %v1766 = vld [vmem:[%s45 + $0x10] sm:$0xff]
    %v1767 = vld [vmem:[%s45 + $0x18] sm:$0xff]
    %v1768 = vld [vmem:[%s45 + $0x20] sm:$0xff]
    %v1769 = vld [vmem:[%s45 + $0x28] sm:$0xff]
    %v1770 = vld [vmem:[%s45 + $0x30] sm:$0xff]
    %v1771 = vld [vmem:[%s45 + $0x38] sm:$0xff]
    %v1772 = vpack.c.bf16 %v1763, %v1762
    %v1773 = vpack.c.bf16 %v1765, %v1764
    %v1774 = vpack.c.bf16 %v1767, %v1766
    %v1775 = vpack.c.bf16 %v1769, %v1768
    %v1776 = vpack.c.bf16 %v1771, %v1770
    %v1777 = vld [vmem:[%s47] sm:$0x1]
    %v1779 = vperm.slane %v1777, 0
    %vm1781 = vcmask 523264
    %v1783 = vsel %vm1781, %v1772, 0
    %1785 = vmatpush.bf16.msra.mxu0 0
    %1786 = vmatpush.bf16.msra.mxu0 0
    %1787 = vmatpush.bf16.msra.mxu0 0
    %1788 = vmatpush.bf16.msra.mxu0 0
    %1789 = vmatpush.bf16.msra.mxu0 %v1776
    %1790 = vmatpush.bf16.msra.mxu0 %v1775
    %1791 = vmatpush.bf16.msra.mxu0 %v1774
    %1792 = vmatpush.bf16.msra.mxu0 %v1773
    %1793 = vmatmul.bf16.gmra.mxu0 %v1783
    %v1794 = vpop.f32.mrf.mxu0
    %v1795 = vadd.f32 %v1779, %v1794
    %v1796 = vpop.f32.mrf.mxu0
    %v1797 = vadd.f32 %v1779, %v1796
    %1798 = vdwg.mxu0
    %v1799 = vadd.f32 %v1732, %v1795
    %v1800 = vadd.f32 %v1733, %v1797
    %v1801 = vsel %vm823, %v1799, 0.0
    %1802 = vadd.xlane.f32.xlu0 %v1801
    %v1803 = vpop.xlane.xlu0 %1802
    %v1804 = vsel %vm823, %v1800, 0.0
    %1805 = vadd.xlane.f32.xlu0 %v1804
    %v1806 = vpop.xlane.xlu0 %1805
    %v1807 = vmul.f32 %v1803, %v1683
    %v1808 = vmul.f32 %v1806, %v1683
    %v1809 = vsub.f32 %v1799, %v1807
    %v1810 = vsub.f32 %v1800, %v1808
    %v1811 = vmul.f32 %v1809, %v1809
    %v1812 = vmul.f32 %v1810, %v1810
    %v1813 = vsel %vm823, %v1811, 0.0
    %1814 = vadd.xlane.f32.xlu0 %v1813
    %v1815 = vpop.xlane.xlu0 %1814
    %v1816 = vsel %vm823, %v1812, 0.0
    %1817 = vadd.xlane.f32.xlu0 %v1816
    %v1818 = vpop.xlane.xlu0 %1817
    %v1819 = vmul.f32 %v1815, %v1683
    %v1820 = vmul.f32 %v1818, %v1683
    %v1821 = vadd.f32 %v1819, 1e-05
    %v1822 = vadd.f32 %v1820, 1e-05
    %v1823 = vrsqrt.pop %v1821
    %v1824 = vmul.f32 %v1823, %v1821
    %v1825 = vmul.f32 %v1824, %v1823
    %v1826 = vmul.f32 0.5, %v1825
    %v1827 = vsub.f32 1.5, %v1826
    %v1828 = vmul.f32 %v1823, %v1827
    %vm1829 = vweird.f32 %v1821
    %vm1830 = vweird.f32 %v1823
    %vm1831 = vmor %vm1829, %vm1830
    %v1832 = vsel %vm1831, %v1823, %v1828
    %v1833 = vrsqrt.pop %v1822
    %v1834 = vmul.f32 %v1833, %v1822
    %v1835 = vmul.f32 %v1834, %v1833
    %v1836 = vmul.f32 0.5, %v1835
    %v1837 = vsub.f32 1.5, %v1836
    %v1838 = vmul.f32 %v1833, %v1837
    %vm1839 = vweird.f32 %v1822
    %vm1840 = vweird.f32 %v1833
    %vm1841 = vmor %vm1839, %vm1840
    %v1842 = vsel %vm1841, %v1833, %v1838
    %v1843 = vmul.f32 %v1809, %v1832
    %v1844 = vmul.f32 %v1810, %v1842
    %v1845 = vld [vmem:[%s49] sm:$0x1]
    %v1847 = vperm.slane %v1845, 0
    %v1849 = vmul.f32 %v1843, %v1847
    %v1850 = vmul.f32 %v1844, %v1847
    %v1851 = vld [vmem:[#allocation2] sm:$0x1]
    %v1853 = vperm.slane %v1851, 0
    %v1855 = vadd.f32 %v1849, %v1853
    %v1856 = vadd.f32 %v1850, %v1853
    %v1857 = vld [vmem:[#allocation5] sm:$0x1]
    %v1858 = vld [vmem:[#allocation8] sm:$0x1]
    %v1860 = vperm.slane %v1858, 0
    %v1862 = vsub.f32 %v1855, %v1860
    %v1863 = vsub.f32 %v1856, %v1860
    %v1865 = vperm.slane %v1857, 0
    %v1867 = vmul.f32 %v1865, %v1862
    %v1868 = vmul.f32 %v1865, %v1863
    %v1869 = vld [vmem:[#allocation10] sm:$0x1]
    %v1870 = vadd.f32 %v1869, 1e-05
    %v1871 = vrsqrt.pop %v1870
    %v1872 = vmul.f32 %v1871, %v1870
    %v1873 = vmul.f32 %v1872, %v1871
    %v1874 = vmul.f32 0.5, %v1873
    %v1875 = vsub.f32 1.5, %v1874
    %v1876 = vmul.f32 %v1871, %v1875
    %vm1877 = vweird.f32 %v1870
    %vm1878 = vweird.f32 %v1871
    %vm1879 = vmor %vm1877, %vm1878
    %v1880 = vsel %vm1879, %v1871, %v1876
    %v1882 = vperm.slane %v1880, 0
    %v1884 = vmul.f32 %v1867, %v1882
    %v1885 = vmul.f32 %v1868, %v1882
    %v1886 = vld [vmem:[#allocation7] sm:$0x1]
    %v1888 = vperm.slane %v1886, 0
    %v1890 = vadd.f32 %v1884, %v1888
    %v1891 = vadd.f32 %v1885, %v1888
    %v1893 = vrot.slane %v801, 1
    %v1894 = vperm.slane %v801, 0
    %v1895 = vperm.slane %v1893, 0
    %1900 = vrot.lane.b32.xlu0 %v1890, 32
    %v1901 = vpop.permute.xlu0 %1900
    %1902 = vrot.lane.b32.xlu0 %v1891, 32
    %v1903 = vpop.permute.xlu0 %1902
    %v1906 = vsel %vm823, %v1894, %v1901
    %v1907 = vsel %vm823, %v1895, %v1903
    %v1908 = vld [vmem:[%s7] sm:$0xff]
    %v1909 = vld [vmem:[%s7 + $0x8] sm:$0xff]
    %v1910 = vld [vmem:[%s61] sm:$0xff]
    %v1911 = vld [vmem:[%s61 + $0x8] sm:$0xff]
    %v1912 = vld [vmem:[%s61 + $0x10] sm:$0xff]
    %v1913 = vld [vmem:[%s61 + $0x18] sm:$0xff]
    %v1914 = vld [vmem:[%s61 + $0x20] sm:$0xff]
    %v1915 = vld [vmem:[%s61 + $0x28] sm:$0xff]
    %v1916 = vld [vmem:[%s61 + $0x30] sm:$0xff]
    %v1917 = vld [vmem:[%s61 + $0x38] sm:$0xff]
    %v1918 = vpack.c.bf16 %v1909, %v1908
    %v1919 = vpack.c.bf16 %v1911, %v1910
    %v1920 = vpack.c.bf16 %v1913, %v1912
    %v1921 = vpack.c.bf16 %v1915, %v1914
    %v1922 = vpack.c.bf16 %v1917, %v1916
    %v1923 = vld [vmem:[%s63] sm:$0x1]
    %v1925 = vperm.slane %v1923, 0
    %v1928 = vsel %vm1781, %v1918, 0
    %1930 = vmatpush.bf16.msra.mxu0 0
    %1931 = vmatpush.bf16.msra.mxu0 0
    %1932 = vmatpush.bf16.msra.mxu0 0
    %1933 = vmatpush.bf16.msra.mxu0 0
    %1934 = vmatpush.bf16.msra.mxu0 %v1922
    %1935 = vmatpush.bf16.msra.mxu0 %v1921
    %1936 = vmatpush.bf16.msra.mxu0 %v1920
    %1937 = vmatpush.bf16.msra.mxu0 %v1919
    %1938 = vmatmul.bf16.gmra.mxu0 %v1928
    %v1939 = vpop.f32.mrf.mxu0
    %v1940 = vadd.f32 %v1925, %v1939
    %v1941 = vpop.f32.mrf.mxu0
    %v1942 = vadd.f32 %v1925, %v1941
    %1943 = vdwg.mxu0
    %v1944 = vld [vmem:[%s65] sm:$0xff]
    %v1945 = vld [vmem:[%s65 + $0x8] sm:$0xff]
    %v1946 = vld [vmem:[%s65 + $0x10] sm:$0xff]
    %v1947 = vld [vmem:[%s65 + $0x18] sm:$0xff]
    %v1948 = vld [vmem:[%s65 + $0x20] sm:$0xff]
    %v1949 = vld [vmem:[%s65 + $0x28] sm:$0xff]
    %v1950 = vld [vmem:[%s65 + $0x30] sm:$0xff]
    %v1951 = vld [vmem:[%s65 + $0x38] sm:$0xff]
    %v1952 = vpack.c.bf16 %v1945, %v1944
    %v1953 = vpack.c.bf16 %v1947, %v1946
    %v1954 = vpack.c.bf16 %v1949, %v1948
    %v1955 = vpack.c.bf16 %v1951, %v1950
    %v1956 = vld [vmem:[%s67] sm:$0x1]
    %v1958 = vperm.slane %v1956, 0
    %1960 = vmatpush.bf16.msra.mxu0 0
    %1961 = vmatpush.bf16.msra.mxu0 0
    %1962 = vmatpush.bf16.msra.mxu0 0
    %1963 = vmatpush.bf16.msra.mxu0 0
    %1964 = vmatpush.bf16.msra.mxu0 %v1955
    %1965 = vmatpush.bf16.msra.mxu0 %v1954
    %1966 = vmatpush.bf16.msra.mxu0 %v1953
    %1967 = vmatpush.bf16.msra.mxu0 %v1952
    %1968 = vmatmul.bf16.gmra.mxu0 %v1928
    %v1969 = vpop.f32.mrf.mxu0
    %v1970 = vadd.f32 %v1958, %v1969
    %v1971 = vpop.f32.mrf.mxu0
    %v1972 = vadd.f32 %v1958, %v1971
    %1973 = vdwg.mxu0
    %v1974 = vld [vmem:[%s69] sm:$0xff]
    %v1975 = vld [vmem:[%s69 + $0x8] sm:$0xff]
    %v1976 = vld [vmem:[%s69 + $0x10] sm:$0xff]
    %v1977 = vld [vmem:[%s69 + $0x18] sm:$0xff]
    %v1978 = vld [vmem:[%s69 + $0x20] sm:$0xff]
    %v1979 = vld [vmem:[%s69 + $0x28] sm:$0xff]
    %v1980 = vld [vmem:[%s69 + $0x30] sm:$0xff]
    %v1981 = vld [vmem:[%s69 + $0x38] sm:$0xff]
    %v1982 = vpack.c.bf16 %v1975, %v1974
    %v1983 = vpack.c.bf16 %v1977, %v1976
    %v1984 = vpack.c.bf16 %v1979, %v1978
    %v1985 = vpack.c.bf16 %v1981, %v1980
    %v1986 = vld [vmem:[%s71] sm:$0x1]
    %v1988 = vperm.slane %v1986, 0
    %1990 = vmatpush.bf16.msra.mxu0 0
    %1991 = vmatpush.bf16.msra.mxu0 0
    %1992 = vmatpush.bf16.msra.mxu0 0
    %1993 = vmatpush.bf16.msra.mxu0 0
    %1994 = vmatpush.bf16.msra.mxu0 %v1985
    %1995 = vmatpush.bf16.msra.mxu0 %v1984
    %1996 = vmatpush.bf16.msra.mxu0 %v1983
    %1997 = vmatpush.bf16.msra.mxu0 %v1982
    %1998 = vmatmul.bf16.gmra.mxu0 %v1928
    %v1999 = vpop.f32.mrf.mxu0
    %v2000 = vadd.f32 %v1988, %v1999
    %v2001 = vpop.f32.mrf.mxu0
    %v2002 = vadd.f32 %v1988, %v2001
    %2003 = vdwg.mxu0
    %v2004 = vpack.c.bf16 %v1940, %v1940
    %v2005 = vpack.c.bf16 %v1942, %v1942
    %v2006 = vpack.c.bf16 %v1970, %v1970
    %v2007 = vpack.c.bf16 %v1972, %v1972
    %vm2008 = vcmask 130048
    %v2010 = vsel %vm2008, %v2004, 0
    %v2013 = vsel %vm2008, %v2006, 0
    %2015 = vmatpush.bf16.xpose.msra.mxu0 0
    %2016 = vmatpush.bf16.xpose.msra.mxu0 0
    %2017 = vmatpush.bf16.xpose.msra.mxu0 0
    %2018 = vmatpush.bf16.xpose.msra.mxu0 0
    %2019 = vmatpush.bf16.xpose.msra.mxu0 0
    %2020 = vmatpush.bf16.xpose.msra.mxu0 0
    %2021 = vmatpush.bf16.xpose.msra.mxu0 0
    %2022 = vmatpush.bf16.xpose.msra.mxu0 %v2013
    %2023 = vmatmul.bf16.gmra.mxu0 %v2010
    %v2024 = vpop.f32.mrf.mxu0
    %v2025 = vadd.f32 0.0, %v2024
    %v2026 = vpop.f32.mrf.mxu0
    %2027 = vdwg.mxu0
    %v2029 = vsel %vm2008, %v2005, 0
    %v2032 = vsel %vm2008, %v2007, 0
    %2034 = vmatpush.bf16.xpose.msra.mxu0 0
    %2035 = vmatpush.bf16.xpose.msra.mxu0 0
    %2036 = vmatpush.bf16.xpose.msra.mxu0 0
    %2037 = vmatpush.bf16.xpose.msra.mxu0 0
    %2038 = vmatpush.bf16.xpose.msra.mxu0 0
    %2039 = vmatpush.bf16.xpose.msra.mxu0 0
    %2040 = vmatpush.bf16.xpose.msra.mxu0 0
    %2041 = vmatpush.bf16.xpose.msra.mxu0 %v2032
    %2042 = vmatmul.bf16.gmra.mxu0 %v2029
    %v2043 = vpop.f32.mrf.mxu0
    %v2044 = vadd.f32 0.0, %v2043
    %v2045 = vpop.f32.mrf.mxu0
    %2046 = vdwg.mxu0
    %v2047 = vmul.f32 %v2025, 0.25
    %v2048 = vmul.f32 %v2044, 0.25
    %v2049 = vsel %vm893, %v2047, -inf
    %2050 = vmax.xlane.f32.xlu0 %v2049
    %v2051 = vpop.xlane.xlu0 %2050
    %v2052 = vsel %vm893, %v2048, -inf
    %2053 = vmax.xlane.f32.xlu0 %v2052
    %v2054 = vpop.xlane.xlu0 %2053
    %v2055 = vsub.f32 %v2047, %v2051
    %v2056 = vsub.f32 %v2048, %v2054
    %v2057 = vmul.f32 %v2055, 1.442695
    %v2058 = vpow.pop %v2057
    %v2059 = vmul.f32 %v2056, 1.442695
    %v2060 = vpow.pop %v2059
    %v2061 = vsel %vm893, %v2058, 0.0
    %2062 = vadd.xlane.f32.xlu0 %v2061
    %v2063 = vpop.xlane.xlu0 %2062
    %v2064 = vsel %vm893, %v2060, 0.0
    %2065 = vadd.xlane.f32.xlu0 %v2064
    %v2066 = vpop.xlane.xlu0 %2065
    %v2067 = vrcp.pop %v2063
    %v2068 = vrcp.pop %v2066
    %v2069 = vmul.f32 %v2058, %v2067
    %v2070 = vmul.f32 %v2060, %v2068
    %v2071 = vpack.c.bf16 %v2069, %v2069
    %v2072 = vpack.c.bf16 %v2070, %v2070
    %v2073 = vpack.c.bf16 %v2000, %v2000
    %v2074 = vpack.c.bf16 %v2002, %v2002
    %v2076 = vsel %vm893, %v2071, 0
    %v2079 = vsel %vm711, %v2073, 0
    %2081 = vmatpush.bf16.msra.mxu0 0
    %2082 = vmatpush.bf16.msra.mxu0 0
    %2083 = vmatpush.bf16.msra.mxu0 0
    %2084 = vmatpush.bf16.msra.mxu0 0
    %2085 = vmatpush.bf16.msra.mxu0 0
    %2086 = vmatpush.bf16.msra.mxu0 0
    %2087 = vmatpush.bf16.msra.mxu0 0
    %2088 = vmatpush.bf16.msra.mxu0 %v2079
    %2089 = vmatmul.bf16.gmra.mxu0 %v2076
    %v2090 = vpop.f32.mrf.mxu0
    %v2091 = vadd.f32 0.0, %v2090
    %v2092 = vpop.f32.mrf.mxu0
    %2093 = vdwg.mxu0
    %v2095 = vsel %vm893, %v2072, 0
    %v2098 = vsel %vm711, %v2074, 0
    %2100 = vmatpush.bf16.msra.mxu0 0
    %2101 = vmatpush.bf16.msra.mxu0 0
    %2102 = vmatpush.bf16.msra.mxu0 0
    %2103 = vmatpush.bf16.msra.mxu0 0
    %2104 = vmatpush.bf16.msra.mxu0 0
    %2105 = vmatpush.bf16.msra.mxu0 0
    %2106 = vmatpush.bf16.msra.mxu0 0
    %2107 = vmatpush.bf16.msra.mxu0 %v2098
    %2108 = vmatmul.bf16.gmra.mxu0 %v2095
    %v2109 = vpop.f32.mrf.mxu0
    %v2110 = vadd.f32 0.0, %v2109
    %v2111 = vpop.f32.mrf.mxu0
    %2112 = vdwg.mxu0
    %v2113 = vld [vmem:[%s73] sm:$0xff]
    %v2114 = vld [vmem:[%s73 + $0x8] sm:$0xff]
    %v2115 = vpack.c.bf16 %v2110, %v2091
    %v2116 = vpack.c.bf16 %v2114, %v2113
    %s2117 = scalar_lea.vmem %s61, 64
    %v2118 = vld [vmem:[%s2117] sm:$0xff]
    %v2119 = vld [vmem:[%s2117 + $0x8] sm:$0xff]
    %v2120 = vld [vmem:[%s2117 + $0x10] sm:$0xff]
    %v2121 = vld [vmem:[%s2117 + $0x18] sm:$0xff]
    %v2122 = vld [vmem:[%s2117 + $0x20] sm:$0xff]
    %v2123 = vld [vmem:[%s2117 + $0x28] sm:$0xff]
    %v2124 = vld [vmem:[%s2117 + $0x30] sm:$0xff]
    %v2125 = vld [vmem:[%s2117 + $0x38] sm:$0xff]
    %v2126 = vpack.c.bf16 %v2119, %v2118
    %v2127 = vpack.c.bf16 %v2121, %v2120
    %v2128 = vpack.c.bf16 %v2123, %v2122
    %v2129 = vpack.c.bf16 %v2125, %v2124
    %s2130 = scalar_lea.vmem %s63, 1
    %v2131 = vld [vmem:[%s2130] sm:$0x1]
    %v2133 = vperm.slane %v2131, 0
    %2135 = vmatpush.bf16.msra.mxu0 0
    %2136 = vmatpush.bf16.msra.mxu0 0
    %2137 = vmatpush.bf16.msra.mxu0 0
    %2138 = vmatpush.bf16.msra.mxu0 0
    %2139 = vmatpush.bf16.msra.mxu0 %v2129
    %2140 = vmatpush.bf16.msra.mxu0 %v2128
    %2141 = vmatpush.bf16.msra.mxu0 %v2127
    %2142 = vmatpush.bf16.msra.mxu0 %v2126
    %2143 = vmatmul.bf16.gmra.mxu0 %v1928
    %v2144 = vpop.f32.mrf.mxu0
    %v2145 = vadd.f32 %v2133, %v2144
    %v2146 = vpop.f32.mrf.mxu0
    %v2147 = vadd.f32 %v2133, %v2146
    %2148 = vdwg.mxu0
    %s2149 = scalar_lea.vmem %s65, 64
    %v2150 = vld [vmem:[%s2149] sm:$0xff]
    %v2151 = vld [vmem:[%s2149 + $0x8] sm:$0xff]
    %v2152 = vld [vmem:[%s2149 + $0x10] sm:$0xff]
    %v2153 = vld [vmem:[%s2149 + $0x18] sm:$0xff]
    %v2154 = vld [vmem:[%s2149 + $0x20] sm:$0xff]
    %v2155 = vld [vmem:[%s2149 + $0x28] sm:$0xff]
    %v2156 = vld [vmem:[%s2149 + $0x30] sm:$0xff]
    %v2157 = vld [vmem:[%s2149 + $0x38] sm:$0xff]
    %v2158 = vpack.c.bf16 %v2151, %v2150
    %v2159 = vpack.c.bf16 %v2153, %v2152
    %v2160 = vpack.c.bf16 %v2155, %v2154
    %v2161 = vpack.c.bf16 %v2157, %v2156
    %s2162 = scalar_lea.vmem %s67, 1
    %v2163 = vld [vmem:[%s2162] sm:$0x1]
    %v2165 = vperm.slane %v2163, 0
    %2167 = vmatpush.bf16.msra.mxu0 0
    %2168 = vmatpush.bf16.msra.mxu0 0
    %2169 = vmatpush.bf16.msra.mxu0 0
    %2170 = vmatpush.bf16.msra.mxu0 0
    %2171 = vmatpush.bf16.msra.mxu0 %v2161
    %2172 = vmatpush.bf16.msra.mxu0 %v2160
    %2173 = vmatpush.bf16.msra.mxu0 %v2159
    %2174 = vmatpush.bf16.msra.mxu0 %v2158
    %2175 = vmatmul.bf16.gmra.mxu0 %v1928
    %v2176 = vpop.f32.mrf.mxu0
    %v2177 = vadd.f32 %v2165, %v2176
    %v2178 = vpop.f32.mrf.mxu0
    %v2179 = vadd.f32 %v2165, %v2178
    %2180 = vdwg.mxu0
    %s2181 = scalar_lea.vmem %s69, 64
    %v2182 = vld [vmem:[%s2181] sm:$0xff]
    %v2183 = vld [vmem:[%s2181 + $0x8] sm:$0xff]
    %v2184 = vld [vmem:[%s2181 + $0x10] sm:$0xff]
    %v2185 = vld [vmem:[%s2181 + $0x18] sm:$0xff]
    %v2186 = vld [vmem:[%s2181 + $0x20] sm:$0xff]
    %v2187 = vld [vmem:[%s2181 + $0x28] sm:$0xff]
    %v2188 = vld [vmem:[%s2181 + $0x30] sm:$0xff]
    %v2189 = vld [vmem:[%s2181 + $0x38] sm:$0xff]
    %v2190 = vpack.c.bf16 %v2183, %v2182
    %v2191 = vpack.c.bf16 %v2185, %v2184
    %v2192 = vpack.c.bf16 %v2187, %v2186
    %v2193 = vpack.c.bf16 %v2189, %v2188
    %s2194 = scalar_lea.vmem %s71, 1
    %v2195 = vld [vmem:[%s2194] sm:$0x1]
    %v2197 = vperm.slane %v2195, 0
    %2199 = vmatpush.bf16.msra.mxu0 0
    %2200 = vmatpush.bf16.msra.mxu0 0
    %2201 = vmatpush.bf16.msra.mxu0 0
    %2202 = vmatpush.bf16.msra.mxu0 0
    %2203 = vmatpush.bf16.msra.mxu0 %v2193
    %2204 = vmatpush.bf16.msra.mxu0 %v2192
    %2205 = vmatpush.bf16.msra.mxu0 %v2191
    %2206 = vmatpush.bf16.msra.mxu0 %v2190
    %2207 = vmatmul.bf16.gmra.mxu0 %v1928
    %v2208 = vpop.f32.mrf.mxu0
    %v2209 = vadd.f32 %v2197, %v2208
    %v2210 = vpop.f32.mrf.mxu0
    %v2211 = vadd.f32 %v2197, %v2210
    %2212 = vdwg.mxu0
    %v2213 = vpack.c.bf16 %v2145, %v2145
    %v2214 = vpack.c.bf16 %v2147, %v2147
    %v2215 = vpack.c.bf16 %v2177, %v2177
    %v2216 = vpack.c.bf16 %v2179, %v2179
    %v2218 = vsel %vm2008, %v2213, 0
    %v2221 = vsel %vm2008, %v2215, 0
    %2223 = vmatpush.bf16.xpose.msra.mxu0 0
    %2224 = vmatpush.bf16.xpose.msra.mxu0 0
    %2225 = vmatpush.bf16.xpose.msra.mxu0 0
    %2226 = vmatpush.bf16.xpose.msra.mxu0 0
    %2227 = vmatpush.bf16.xpose.msra.mxu0 0
    %2228 = vmatpush.bf16.xpose.msra.mxu0 0
    %2229 = vmatpush.bf16.xpose.msra.mxu0 0
    %2230 = vmatpush.bf16.xpose.msra.mxu0 %v2221
    %2231 = vmatmul.bf16.gmra.mxu0 %v2218
    %v2232 = vpop.f32.mrf.mxu0
    %v2233 = vadd.f32 0.0, %v2232
    %v2234 = vpop.f32.mrf.mxu0
    %2235 = vdwg.mxu0
    %v2237 = vsel %vm2008, %v2214, 0
    %v2240 = vsel %vm2008, %v2216, 0
    %2242 = vmatpush.bf16.xpose.msra.mxu0 0
    %2243 = vmatpush.bf16.xpose.msra.mxu0 0
    %2244 = vmatpush.bf16.xpose.msra.mxu0 0
    %2245 = vmatpush.bf16.xpose.msra.mxu0 0
    %2246 = vmatpush.bf16.xpose.msra.mxu0 0
    %2247 = vmatpush.bf16.xpose.msra.mxu0 0
    %2248 = vmatpush.bf16.xpose.msra.mxu0 0
    %2249 = vmatpush.bf16.xpose.msra.mxu0 %v2240
    %2250 = vmatmul.bf16.gmra.mxu0 %v2237
    %v2251 = vpop.f32.mrf.mxu0
    %v2252 = vadd.f32 0.0, %v2251
    %v2253 = vpop.f32.mrf.mxu0
    %2254 = vdwg.mxu0
    %v2255 = vmul.f32 %v2233, 0.25
    %v2256 = vmul.f32 %v2252, 0.25
    %v2257 = vsel %vm893, %v2255, -inf
    %2258 = vmax.xlane.f32.xlu0 %v2257
    %v2259 = vpop.xlane.xlu0 %2258
    %v2260 = vsel %vm893, %v2256, -inf
    %2261 = vmax.xlane.f32.xlu0 %v2260
    %v2262 = vpop.xlane.xlu0 %2261
    %v2263 = vsub.f32 %v2255, %v2259
    %v2264 = vsub.f32 %v2256, %v2262
    %v2265 = vmul.f32 %v2263, 1.442695
    %v2266 = vpow.pop %v2265
    %v2267 = vmul.f32 %v2264, 1.442695
    %v2268 = vpow.pop %v2267
    %v2269 = vsel %vm893, %v2266, 0.0
    %2270 = vadd.xlane.f32.xlu0 %v2269
    %v2271 = vpop.xlane.xlu0 %2270
    %v2272 = vsel %vm893, %v2268, 0.0
    %2273 = vadd.xlane.f32.xlu0 %v2272
    %v2274 = vpop.xlane.xlu0 %2273
    %v2275 = vrcp.pop %v2271
    %v2276 = vrcp.pop %v2274
    %v2277 = vmul.f32 %v2266, %v2275
    %v2278 = vmul.f32 %v2268, %v2276
    %v2279 = vpack.c.bf16 %v2277, %v2277
    %v2280 = vpack.c.bf16 %v2278, %v2278
    %v2281 = vpack.c.bf16 %v2209, %v2209
    %v2282 = vpack.c.bf16 %v2211, %v2211
    %v2284 = vsel %vm893, %v2279, 0
    %v2287 = vsel %vm711, %v2281, 0
    %2289 = vmatpush.bf16.msra.mxu0 0
    %2290 = vmatpush.bf16.msra.mxu0 0
    %2291 = vmatpush.bf16.msra.mxu0 0
    %2292 = vmatpush.bf16.msra.mxu0 0
    %2293 = vmatpush.bf16.msra.mxu0 0
    %2294 = vmatpush.bf16.msra.mxu0 0
    %2295 = vmatpush.bf16.msra.mxu0 0
    %2296 = vmatpush.bf16.msra.mxu0 %v2287
    %2297 = vmatmul.bf16.gmra.mxu0 %v2284
    %v2298 = vpop.f32.mrf.mxu0
    %v2299 = vadd.f32 0.0, %v2298
    %v2300 = vpop.f32.mrf.mxu0
    %2301 = vdwg.mxu0
    %v2303 = vsel %vm893, %v2280, 0
    %v2306 = vsel %vm711, %v2282, 0
    %2308 = vmatpush.bf16.msra.mxu0 0
    %2309 = vmatpush.bf16.msra.mxu0 0
    %2310 = vmatpush.bf16.msra.mxu0 0
    %2311 = vmatpush.bf16.msra.mxu0 0
    %2312 = vmatpush.bf16.msra.mxu0 0
    %2313 = vmatpush.bf16.msra.mxu0 0
    %2314 = vmatpush.bf16.msra.mxu0 0
    %2315 = vmatpush.bf16.msra.mxu0 %v2306
    %2316 = vmatmul.bf16.gmra.mxu0 %v2303
    %v2317 = vpop.f32.mrf.mxu0
    %v2318 = vadd.f32 0.0, %v2317
    %v2319 = vpop.f32.mrf.mxu0
    %2320 = vdwg.mxu0
    %s2321 = scalar_lea.vmem %s73, 16
    %v2322 = vld [vmem:[%s2321] sm:$0xff]
    %v2323 = vld [vmem:[%s2321 + $0x8] sm:$0xff]
    %v2324 = vpack.c.bf16 %v2318, %v2299
    %v2325 = vpack.c.bf16 %v2323, %v2322
    %v2327 = vsel %vm2008, %v2324, 0
    %2329 = vmatpush.bf16.msra.mxu0 0
    %2330 = vmatpush.bf16.msra.mxu0 0
    %2331 = vmatpush.bf16.msra.mxu0 0
    %2332 = vmatpush.bf16.msra.mxu0 0
    %2333 = vmatpush.bf16.msra.mxu0 0
    %2334 = vmatpush.bf16.msra.mxu0 0
    %2335 = vmatpush.bf16.msra.mxu0 0
    %2336 = vmatpush.bf16.msra.mxu0 %v2325
    %2337 = vmatmul.bf16.gmra.mxu0 %v2327
    %v2338 = vpop.f32.mrf.mxu0
    %v2339 = vadd.f32 0.0, %v2338
    %v2340 = vpop.f32.mrf.mxu0
    %v2341 = vadd.f32 0.0, %v2340
    %2342 = vdwg.mxu0
    %v2344 = vsel %vm2008, %v2115, 0
    %2346 = vmatpush.bf16.msra.mxu0 0
    %2347 = vmatpush.bf16.msra.mxu0 0
    %2348 = vmatpush.bf16.msra.mxu0 0
    %2349 = vmatpush.bf16.msra.mxu0 0
    %2350 = vmatpush.bf16.msra.mxu0 0
    %2351 = vmatpush.bf16.msra.mxu0 0
    %2352 = vmatpush.bf16.msra.mxu0 0
    %2353 = vmatpush.bf16.msra.mxu0 %v2116
    %2354 = vmatmul.bf16.gmra.mxu0 %v2344
    %v2355 = vpop.f32.mrf.mxu0
    %v2356 = vadd.f32 %v2339, %v2355
    %v2357 = vpop.f32.mrf.mxu0
    %v2358 = vadd.f32 %v2341, %v2357
    %2359 = vdwg.mxu0
    %s2360 = scalar_lea.vmem %s61, 128
    %v2361 = vld [vmem:[%s2360] sm:$0xff]
    %v2362 = vld [vmem:[%s2360 + $0x8] sm:$0xff]
    %v2363 = vld [vmem:[%s2360 + $0x10] sm:$0xff]
    %v2364 = vld [vmem:[%s2360 + $0x18] sm:$0xff]
    %v2365 = vld [vmem:[%s2360 + $0x20] sm:$0xff]
    %v2366 = vld [vmem:[%s2360 + $0x28] sm:$0xff]
    %v2367 = vld [vmem:[%s2360 + $0x30] sm:$0xff]
    %v2368 = vld [vmem:[%s2360 + $0x38] sm:$0xff]
    %v2369 = vpack.c.bf16 %v2362, %v2361
    %v2370 = vpack.c.bf16 %v2364, %v2363
    %v2371 = vpack.c.bf16 %v2366, %v2365
    %v2372 = vpack.c.bf16 %v2368, %v2367
    %s2373 = scalar_lea.vmem %s63, 2
    %v2374 = vld [vmem:[%s2373] sm:$0x1]
    %v2376 = vperm.slane %v2374, 0
    %2378 = vmatpush.bf16.msra.mxu0 0
    %2379 = vmatpush.bf16.msra.mxu0 0
    %2380 = vmatpush.bf16.msra.mxu0 0
    %2381 = vmatpush.bf16.msra.mxu0 0
    %2382 = vmatpush.bf16.msra.mxu0 %v2372
    %2383 = vmatpush.bf16.msra.mxu0 %v2371
    %2384 = vmatpush.bf16.msra.mxu0 %v2370
    %2385 = vmatpush.bf16.msra.mxu0 %v2369
    %2386 = vmatmul.bf16.gmra.mxu0 %v1928
    %v2387 = vpop.f32.mrf.mxu0
    %v2388 = vadd.f32 %v2376, %v2387
    %v2389 = vpop.f32.mrf.mxu0
    %v2390 = vadd.f32 %v2376, %v2389
    %2391 = vdwg.mxu0
    %s2392 = scalar_lea.vmem %s65, 128
    %v2393 = vld [vmem:[%s2392] sm:$0xff]
    %v2394 = vld [vmem:[%s2392 + $0x8] sm:$0xff]
    %v2395 = vld [vmem:[%s2392 + $0x10] sm:$0xff]
    %v2396 = vld [vmem:[%s2392 + $0x18] sm:$0xff]
    %v2397 = vld [vmem:[%s2392 + $0x20] sm:$0xff]
    %v2398 = vld [vmem:[%s2392 + $0x28] sm:$0xff]
    %v2399 = vld [vmem:[%s2392 + $0x30] sm:$0xff]
    %v2400 = vld [vmem:[%s2392 + $0x38] sm:$0xff]
    %v2401 = vpack.c.bf16 %v2394, %v2393
    %v2402 = vpack.c.bf16 %v2396, %v2395
    %v2403 = vpack.c.bf16 %v2398, %v2397
    %v2404 = vpack.c.bf16 %v2400, %v2399
    %s2405 = scalar_lea.vmem %s67, 2
    %v2406 = vld [vmem:[%s2405] sm:$0x1]
    %v2408 = vperm.slane %v2406, 0
    %2410 = vmatpush.bf16.msra.mxu0 0
    %2411 = vmatpush.bf16.msra.mxu0 0
    %2412 = vmatpush.bf16.msra.mxu0 0
    %2413 = vmatpush.bf16.msra.mxu0 0
    %2414 = vmatpush.bf16.msra.mxu0 %v2404
    %2415 = vmatpush.bf16.msra.mxu0 %v2403
    %2416 = vmatpush.bf16.msra.mxu0 %v2402
    %2417 = vmatpush.bf16.msra.mxu0 %v2401
    %2418 = vmatmul.bf16.gmra.mxu0 %v1928
    %v2419 = vpop.f32.mrf.mxu0
    %v2420 = vadd.f32 %v2408, %v2419
    %v2421 = vpop.f32.mrf.mxu0
    %v2422 = vadd.f32 %v2408, %v2421
    %2423 = vdwg.mxu0
    %s2424 = scalar_lea.vmem %s69, 128
    %v2425 = vld [vmem:[%s2424] sm:$0xff]
    %v2426 = vld [vmem:[%s2424 + $0x8] sm:$0xff]
    %v2427 = vld [vmem:[%s2424 + $0x10] sm:$0xff]
    %v2428 = vld [vmem:[%s2424 + $0x18] sm:$0xff]
    %v2429 = vld [vmem:[%s2424 + $0x20] sm:$0xff]
    %v2430 = vld [vmem:[%s2424 + $0x28] sm:$0xff]
    %v2431 = vld [vmem:[%s2424 + $0x30] sm:$0xff]
    %v2432 = vld [vmem:[%s2424 + $0x38] sm:$0xff]
    %v2433 = vpack.c.bf16 %v2426, %v2425
    %v2434 = vpack.c.bf16 %v2428, %v2427
    %v2435 = vpack.c.bf16 %v2430, %v2429
    %v2436 = vpack.c.bf16 %v2432, %v2431
    %s2437 = scalar_lea.vmem %s71, 2
    %v2438 = vld [vmem:[%s2437] sm:$0x1]
    %v2440 = vperm.slane %v2438, 0
    %2442 = vmatpush.bf16.msra.mxu0 0
    %2443 = vmatpush.bf16.msra.mxu0 0
    %2444 = vmatpush.bf16.msra.mxu0 0
    %2445 = vmatpush.bf16.msra.mxu0 0
    %2446 = vmatpush.bf16.msra.mxu0 %v2436
    %2447 = vmatpush.bf16.msra.mxu0 %v2435
    %2448 = vmatpush.bf16.msra.mxu0 %v2434
    %2449 = vmatpush.bf16.msra.mxu0 %v2433
    %2450 = vmatmul.bf16.gmra.mxu0 %v1928
    %v2451 = vpop.f32.mrf.mxu0
    %v2452 = vadd.f32 %v2440, %v2451
    %v2453 = vpop.f32.mrf.mxu0
    %v2454 = vadd.f32 %v2440, %v2453
    %2455 = vdwg.mxu0
    %v2456 = vpack.c.bf16 %v2388, %v2388
    %v2457 = vpack.c.bf16 %v2390, %v2390
    %v2458 = vpack.c.bf16 %v2420, %v2420
    %v2459 = vpack.c.bf16 %v2422, %v2422
    %v2461 = vsel %vm2008, %v2456, 0
    %v2464 = vsel %vm2008, %v2458, 0
    %2466 = vmatpush.bf16.xpose.msra.mxu0 0
    %2467 = vmatpush.bf16.xpose.msra.mxu0 0
    %2468 = vmatpush.bf16.xpose.msra.mxu0 0
    %2469 = vmatpush.bf16.xpose.msra.mxu0 0
    %2470 = vmatpush.bf16.xpose.msra.mxu0 0
    %2471 = vmatpush.bf16.xpose.msra.mxu0 0
    %2472 = vmatpush.bf16.xpose.msra.mxu0 0
    %2473 = vmatpush.bf16.xpose.msra.mxu0 %v2464
    %2474 = vmatmul.bf16.gmra.mxu0 %v2461
    %v2475 = vpop.f32.mrf.mxu0
    %v2476 = vadd.f32 0.0, %v2475
    %v2477 = vpop.f32.mrf.mxu0
    %2478 = vdwg.mxu0
    %v2480 = vsel %vm2008, %v2457, 0
    %v2483 = vsel %vm2008, %v2459, 0
    %2485 = vmatpush.bf16.xpose.msra.mxu0 0
    %2486 = vmatpush.bf16.xpose.msra.mxu0 0
    %2487 = vmatpush.bf16.xpose.msra.mxu0 0
    %2488 = vmatpush.bf16.xpose.msra.mxu0 0
    %2489 = vmatpush.bf16.xpose.msra.mxu0 0
    %2490 = vmatpush.bf16.xpose.msra.mxu0 0
    %2491 = vmatpush.bf16.xpose.msra.mxu0 0
    %2492 = vmatpush.bf16.xpose.msra.mxu0 %v2483
    %2493 = vmatmul.bf16.gmra.mxu0 %v2480
    %v2494 = vpop.f32.mrf.mxu0
    %v2495 = vadd.f32 0.0, %v2494
    %v2496 = vpop.f32.mrf.mxu0
    %2497 = vdwg.mxu0
    %v2498 = vmul.f32 %v2476, 0.25
    %v2499 = vmul.f32 %v2495, 0.25
    %v2500 = vsel %vm893, %v2498, -inf
    %2501 = vmax.xlane.f32.xlu0 %v2500
    %v2502 = vpop.xlane.xlu0 %2501
    %v2503 = vsel %vm893, %v2499, -inf
    %2504 = vmax.xlane.f32.xlu0 %v2503
    %v2505 = vpop.xlane.xlu0 %2504
    %v2506 = vsub.f32 %v2498, %v2502
    %v2507 = vsub.f32 %v2499, %v2505
    %v2508 = vmul.f32 %v2506, 1.442695
    %v2509 = vpow.pop %v2508
    %v2510 = vmul.f32 %v2507, 1.442695
    %v2511 = vpow.pop %v2510
    %v2512 = vsel %vm893, %v2509, 0.0
    %2513 = vadd.xlane.f32.xlu0 %v2512
    %v2514 = vpop.xlane.xlu0 %2513
    %v2515 = vsel %vm893, %v2511, 0.0
    %2516 = vadd.xlane.f32.xlu0 %v2515
    %v2517 = vpop.xlane.xlu0 %2516
    %v2518 = vrcp.pop %v2514
    %v2519 = vrcp.pop %v2517
    %v2520 = vmul.f32 %v2509, %v2518
    %v2521 = vmul.f32 %v2511, %v2519
    %v2522 = vpack.c.bf16 %v2520, %v2520
    %v2523 = vpack.c.bf16 %v2521, %v2521
    %v2524 = vpack.c.bf16 %v2452, %v2452
    %v2525 = vpack.c.bf16 %v2454, %v2454
    %v2527 = vsel %vm893, %v2522, 0
    %v2530 = vsel %vm711, %v2524, 0
    %2532 = vmatpush.bf16.msra.mxu0 0
    %2533 = vmatpush.bf16.msra.mxu0 0
    %2534 = vmatpush.bf16.msra.mxu0 0
    %2535 = vmatpush.bf16.msra.mxu0 0
    %2536 = vmatpush.bf16.msra.mxu0 0
    %2537 = vmatpush.bf16.msra.mxu0 0
    %2538 = vmatpush.bf16.msra.mxu0 0
    %2539 = vmatpush.bf16.msra.mxu0 %v2530
    %2540 = vmatmul.bf16.gmra.mxu0 %v2527
    %v2541 = vpop.f32.mrf.mxu0
    %v2542 = vadd.f32 0.0, %v2541
    %v2543 = vpop.f32.mrf.mxu0
    %2544 = vdwg.mxu0
    %v2546 = vsel %vm893, %v2523, 0
    %v2549 = vsel %vm711, %v2525, 0
    %2551 = vmatpush.bf16.msra.mxu0 0
    %2552 = vmatpush.bf16.msra.mxu0 0
    %2553 = vmatpush.bf16.msra.mxu0 0
    %2554 = vmatpush.bf16.msra.mxu0 0
    %2555 = vmatpush.bf16.msra.mxu0 0
    %2556 = vmatpush.bf16.msra.mxu0 0
    %2557 = vmatpush.bf16.msra.mxu0 0
    %2558 = vmatpush.bf16.msra.mxu0 %v2549
    %2559 = vmatmul.bf16.gmra.mxu0 %v2546
    %v2560 = vpop.f32.mrf.mxu0
    %v2561 = vadd.f32 0.0, %v2560
    %v2562 = vpop.f32.mrf.mxu0
    %2563 = vdwg.mxu0
    %s2564 = scalar_lea.vmem %s73, 32
    %v2565 = vld [vmem:[%s2564] sm:$0xff]
    %v2566 = vld [vmem:[%s2564 + $0x8] sm:$0xff]
    %v2567 = vpack.c.bf16 %v2561, %v2542
    %v2568 = vpack.c.bf16 %v2566, %v2565
    %v2570 = vsel %vm2008, %v2567, 0
    %2572 = vmatpush.bf16.msra.mxu0 0
    %2573 = vmatpush.bf16.msra.mxu0 0
    %2574 = vmatpush.bf16.msra.mxu0 0
    %2575 = vmatpush.bf16.msra.mxu0 0
    %2576 = vmatpush.bf16.msra.mxu0 0
    %2577 = vmatpush.bf16.msra.mxu0 0
    %2578 = vmatpush.bf16.msra.mxu0 0
    %2579 = vmatpush.bf16.msra.mxu0 %v2568
    %2580 = vmatmul.bf16.gmra.mxu0 %v2570
    %v2581 = vpop.f32.mrf.mxu0
    %v2582 = vadd.f32 0.0, %v2581
    %v2583 = vpop.f32.mrf.mxu0
    %v2584 = vadd.f32 0.0, %v2583
    %2585 = vdwg.mxu0
    %v2586 = vadd.f32 %v2356, %v2582
    %v2587 = vadd.f32 %v2358, %v2584
    %s2588 = scalar_lea.vmem %s61, 192
    %v2589 = vld [vmem:[%s2588] sm:$0xff]
    %v2590 = vld [vmem:[%s2588 + $0x8] sm:$0xff]
    %v2591 = vld [vmem:[%s2588 + $0x10] sm:$0xff]
    %v2592 = vld [vmem:[%s2588 + $0x18] sm:$0xff]
    %v2593 = vld [vmem:[%s2588 + $0x20] sm:$0xff]
    %v2594 = vld [vmem:[%s2588 + $0x28] sm:$0xff]
    %v2595 = vld [vmem:[%s2588 + $0x30] sm:$0xff]
    %v2596 = vld [vmem:[%s2588 + $0x38] sm:$0xff]
    %v2597 = vpack.c.bf16 %v2590, %v2589
    %v2598 = vpack.c.bf16 %v2592, %v2591
    %v2599 = vpack.c.bf16 %v2594, %v2593
    %v2600 = vpack.c.bf16 %v2596, %v2595
    %s2601 = scalar_lea.vmem %s63, 3
    %v2602 = vld [vmem:[%s2601] sm:$0x1]
    %v2604 = vperm.slane %v2602, 0
    %2606 = vmatpush.bf16.msra.mxu0 0
    %2607 = vmatpush.bf16.msra.mxu0 0
    %2608 = vmatpush.bf16.msra.mxu0 0
    %2609 = vmatpush.bf16.msra.mxu0 0
    %2610 = vmatpush.bf16.msra.mxu0 %v2600
    %2611 = vmatpush.bf16.msra.mxu0 %v2599
    %2612 = vmatpush.bf16.msra.mxu0 %v2598
    %2613 = vmatpush.bf16.msra.mxu0 %v2597
    %2614 = vmatmul.bf16.gmra.mxu0 %v1928
    %v2615 = vpop.f32.mrf.mxu0
    %v2616 = vadd.f32 %v2604, %v2615
    %v2617 = vpop.f32.mrf.mxu0
    %v2618 = vadd.f32 %v2604, %v2617
    %2619 = vdwg.mxu0
    %s2620 = scalar_lea.vmem %s65, 192
    %v2621 = vld [vmem:[%s2620] sm:$0xff]
    %v2622 = vld [vmem:[%s2620 + $0x8] sm:$0xff]
    %v2623 = vld [vmem:[%s2620 + $0x10] sm:$0xff]
    %v2624 = vld [vmem:[%s2620 + $0x18] sm:$0xff]
    %v2625 = vld [vmem:[%s2620 + $0x20] sm:$0xff]
    %v2626 = vld [vmem:[%s2620 + $0x28] sm:$0xff]
    %v2627 = vld [vmem:[%s2620 + $0x30] sm:$0xff]
    %v2628 = vld [vmem:[%s2620 + $0x38] sm:$0xff]
    %v2629 = vpack.c.bf16 %v2622, %v2621
    %v2630 = vpack.c.bf16 %v2624, %v2623
    %v2631 = vpack.c.bf16 %v2626, %v2625
    %v2632 = vpack.c.bf16 %v2628, %v2627
    %s2633 = scalar_lea.vmem %s67, 3
    %v2634 = vld [vmem:[%s2633] sm:$0x1]
    %v2636 = vperm.slane %v2634, 0
    %2638 = vmatpush.bf16.msra.mxu0 0
    %2639 = vmatpush.bf16.msra.mxu0 0
    %2640 = vmatpush.bf16.msra.mxu0 0
    %2641 = vmatpush.bf16.msra.mxu0 0
    %2642 = vmatpush.bf16.msra.mxu0 %v2632
    %2643 = vmatpush.bf16.msra.mxu0 %v2631
    %2644 = vmatpush.bf16.msra.mxu0 %v2630
    %2645 = vmatpush.bf16.msra.mxu0 %v2629
    %2646 = vmatmul.bf16.gmra.mxu0 %v1928
    %v2647 = vpop.f32.mrf.mxu0
    %v2648 = vadd.f32 %v2636, %v2647
    %v2649 = vpop.f32.mrf.mxu0
    %v2650 = vadd.f32 %v2636, %v2649
    %2651 = vdwg.mxu0
    %s2652 = scalar_lea.vmem %s69, 192
    %v2653 = vld [vmem:[%s2652] sm:$0xff]
    %v2654 = vld [vmem:[%s2652 + $0x8] sm:$0xff]
    %v2655 = vld [vmem:[%s2652 + $0x10] sm:$0xff]
    %v2656 = vld [vmem:[%s2652 + $0x18] sm:$0xff]
    %v2657 = vld [vmem:[%s2652 + $0x20] sm:$0xff]
    %v2658 = vld [vmem:[%s2652 + $0x28] sm:$0xff]
    %v2659 = vld [vmem:[%s2652 + $0x30] sm:$0xff]
    %v2660 = vld [vmem:[%s2652 + $0x38] sm:$0xff]
    %v2661 = vpack.c.bf16 %v2654, %v2653
    %v2662 = vpack.c.bf16 %v2656, %v2655
    %v2663 = vpack.c.bf16 %v2658, %v2657
    %v2664 = vpack.c.bf16 %v2660, %v2659
    %s2665 = scalar_lea.vmem %s71, 3
    %v2666 = vld [vmem:[%s2665] sm:$0x1]
    %v2668 = vperm.slane %v2666, 0
    %2670 = vmatpush.bf16.msra.mxu0 0
    %2671 = vmatpush.bf16.msra.mxu0 0
    %2672 = vmatpush.bf16.msra.mxu0 0
    %2673 = vmatpush.bf16.msra.mxu0 0
    %2674 = vmatpush.bf16.msra.mxu0 %v2664
    %2675 = vmatpush.bf16.msra.mxu0 %v2663
    %2676 = vmatpush.bf16.msra.mxu0 %v2662
    %2677 = vmatpush.bf16.msra.mxu0 %v2661
    %2678 = vmatmul.bf16.gmra.mxu0 %v1928
    %v2679 = vpop.f32.mrf.mxu0
    %v2680 = vadd.f32 %v2668, %v2679
    %v2681 = vpop.f32.mrf.mxu0
    %v2682 = vadd.f32 %v2668, %v2681
    %2683 = vdwg.mxu0
    %v2684 = vpack.c.bf16 %v2616, %v2616
    %v2685 = vpack.c.bf16 %v2618, %v2618
    %v2686 = vpack.c.bf16 %v2648, %v2648
    %v2687 = vpack.c.bf16 %v2650, %v2650
    %v2689 = vsel %vm2008, %v2684, 0
    %v2692 = vsel %vm2008, %v2686, 0
    %2694 = vmatpush.bf16.xpose.msra.mxu0 0
    %2695 = vmatpush.bf16.xpose.msra.mxu0 0
    %2696 = vmatpush.bf16.xpose.msra.mxu0 0
    %2697 = vmatpush.bf16.xpose.msra.mxu0 0
    %2698 = vmatpush.bf16.xpose.msra.mxu0 0
    %2699 = vmatpush.bf16.xpose.msra.mxu0 0
    %2700 = vmatpush.bf16.xpose.msra.mxu0 0
    %2701 = vmatpush.bf16.xpose.msra.mxu0 %v2692
    %2702 = vmatmul.bf16.gmra.mxu0 %v2689
    %v2703 = vpop.f32.mrf.mxu0
    %v2704 = vadd.f32 0.0, %v2703
    %v2705 = vpop.f32.mrf.mxu0
    %2706 = vdwg.mxu0
    %v2708 = vsel %vm2008, %v2685, 0
    %v2711 = vsel %vm2008, %v2687, 0
    %2713 = vmatpush.bf16.xpose.msra.mxu0 0
    %2714 = vmatpush.bf16.xpose.msra.mxu0 0
    %2715 = vmatpush.bf16.xpose.msra.mxu0 0
    %2716 = vmatpush.bf16.xpose.msra.mxu0 0
    %2717 = vmatpush.bf16.xpose.msra.mxu0 0
    %2718 = vmatpush.bf16.xpose.msra.mxu0 0
    %2719 = vmatpush.bf16.xpose.msra.mxu0 0
    %2720 = vmatpush.bf16.xpose.msra.mxu0 %v2711
    %2721 = vmatmul.bf16.gmra.mxu0 %v2708
    %v2722 = vpop.f32.mrf.mxu0
    %v2723 = vadd.f32 0.0, %v2722
    %v2724 = vpop.f32.mrf.mxu0
    %2725 = vdwg.mxu0
    %v2726 = vmul.f32 %v2704, 0.25
    %v2727 = vmul.f32 %v2723, 0.25
    %v2728 = vsel %vm893, %v2726, -inf
    %2729 = vmax.xlane.f32.xlu0 %v2728
    %v2730 = vpop.xlane.xlu0 %2729
    %v2731 = vsel %vm893, %v2727, -inf
    %2732 = vmax.xlane.f32.xlu0 %v2731
    %v2733 = vpop.xlane.xlu0 %2732
    %v2734 = vsub.f32 %v2726, %v2730
    %v2735 = vsub.f32 %v2727, %v2733
    %v2736 = vmul.f32 %v2734, 1.442695
    %v2737 = vpow.pop %v2736
    %v2738 = vmul.f32 %v2735, 1.442695
    %v2739 = vpow.pop %v2738
    %v2740 = vsel %vm893, %v2737, 0.0
    %2741 = vadd.xlane.f32.xlu0 %v2740
    %v2742 = vpop.xlane.xlu0 %2741
    %v2743 = vsel %vm893, %v2739, 0.0
    %2744 = vadd.xlane.f32.xlu0 %v2743
    %v2745 = vpop.xlane.xlu0 %2744
    %v2746 = vrcp.pop %v2742
    %v2747 = vrcp.pop %v2745
    %v2748 = vmul.f32 %v2737, %v2746
    %v2749 = vmul.f32 %v2739, %v2747
    %v2750 = vpack.c.bf16 %v2748, %v2748
    %v2751 = vpack.c.bf16 %v2749, %v2749
    %v2752 = vpack.c.bf16 %v2680, %v2680
    %v2753 = vpack.c.bf16 %v2682, %v2682
    %v2755 = vsel %vm893, %v2750, 0
    %v2758 = vsel %vm711, %v2752, 0
    %2760 = vmatpush.bf16.msra.mxu0 0
    %2761 = vmatpush.bf16.msra.mxu0 0
    %2762 = vmatpush.bf16.msra.mxu0 0
    %2763 = vmatpush.bf16.msra.mxu0 0
    %2764 = vmatpush.bf16.msra.mxu0 0
    %2765 = vmatpush.bf16.msra.mxu0 0
    %2766 = vmatpush.bf16.msra.mxu0 0
    %2767 = vmatpush.bf16.msra.mxu0 %v2758
    %2768 = vmatmul.bf16.gmra.mxu0 %v2755
    %v2769 = vpop.f32.mrf.mxu0
    %v2770 = vadd.f32 0.0, %v2769
    %v2771 = vpop.f32.mrf.mxu0
    %2772 = vdwg.mxu0
    %v2774 = vsel %vm893, %v2751, 0
    %v2777 = vsel %vm711, %v2753, 0
    %2779 = vmatpush.bf16.msra.mxu0 0
    %2780 = vmatpush.bf16.msra.mxu0 0
    %2781 = vmatpush.bf16.msra.mxu0 0
    %2782 = vmatpush.bf16.msra.mxu0 0
    %2783 = vmatpush.bf16.msra.mxu0 0
    %2784 = vmatpush.bf16.msra.mxu0 0
    %2785 = vmatpush.bf16.msra.mxu0 0
    %2786 = vmatpush.bf16.msra.mxu0 %v2777
    %2787 = vmatmul.bf16.gmra.mxu0 %v2774
    %v2788 = vpop.f32.mrf.mxu0
    %v2789 = vadd.f32 0.0, %v2788
    %v2790 = vpop.f32.mrf.mxu0
    %2791 = vdwg.mxu0
    %s2792 = scalar_lea.vmem %s73, 48
    %v2793 = vld [vmem:[%s2792] sm:$0xff]
    %v2794 = vld [vmem:[%s2792 + $0x8] sm:$0xff]
    %v2795 = vpack.c.bf16 %v2789, %v2770
    %v2796 = vpack.c.bf16 %v2794, %v2793
    %v2798 = vsel %vm2008, %v2795, 0
    %2800 = vmatpush.bf16.msra.mxu0 0
    %2801 = vmatpush.bf16.msra.mxu0 0
    %2802 = vmatpush.bf16.msra.mxu0 0
    %2803 = vmatpush.bf16.msra.mxu0 0
    %2804 = vmatpush.bf16.msra.mxu0 0
    %2805 = vmatpush.bf16.msra.mxu0 0
    %2806 = vmatpush.bf16.msra.mxu0 0
    %2807 = vmatpush.bf16.msra.mxu0 %v2796
    %2808 = vmatmul.bf16.gmra.mxu0 %v2798
    %v2809 = vpop.f32.mrf.mxu0
    %v2810 = vadd.f32 0.0, %v2809
    %v2811 = vpop.f32.mrf.mxu0
    %v2812 = vadd.f32 0.0, %v2811
    %2813 = vdwg.mxu0
    %v2814 = vadd.f32 %v2586, %v2810
    %v2815 = vadd.f32 %v2587, %v2812
    %v2816 = vld [vmem:[#allocation11] sm:$0x1]
    %v2818 = vperm.slane %v2816, 0
    %v2820 = vadd.f32 %v2814, %v2818
    %v2821 = vadd.f32 %v2815, %v2818
    %v2822 = vadd.f32 %v1908, %v2820
    %v2823 = vadd.f32 %v1909, %v2821
    %v2824 = vsel %vm1781, %v2822, 0.0
    %2825 = vadd.xlane.f32.xlu0 %v2824
    %v2826 = vpop.xlane.xlu0 %2825
    %v2827 = vsel %vm1781, %v2823, 0.0
    %2828 = vadd.xlane.f32.xlu0 %v2827
    %v2829 = vpop.xlane.xlu0 %2828
    %v2830 = vrcp.pop 64.0
    %v2831 = vmul.f32 64.0, %v2830
    %v2832 = vsub.f32 1.0, %v2831
    %v2833 = vmul.f32 %v2830, %v2832
    %v2834 = vadd.f32 %v2830, %v2833
    %vm2835 = vweird.f32 %v2830
    %v2836 = vsel %vm2835, %v2830, %v2834
    %v2837 = vmul.f32 %v2826, %v2836
    %v2838 = vmul.f32 %v2829, %v2836
    %v2839 = vsub.f32 %v2822, %v2837
    %v2840 = vsub.f32 %v2823, %v2838
    %v2841 = vmul.f32 %v2839, %v2839
    %v2842 = vmul.f32 %v2840, %v2840
    %v2843 = vsel %vm1781, %v2841, 0.0
    %2844 = vadd.xlane.f32.xlu0 %v2843
    %v2845 = vpop.xlane.xlu0 %2844
    %v2846 = vsel %vm1781, %v2842, 0.0
    %2847 = vadd.xlane.f32.xlu0 %v2846
    %v2848 = vpop.xlane.xlu0 %2847
    %v2849 = vmul.f32 %v2845, %v2836
    %v2850 = vmul.f32 %v2848, %v2836
    %v2851 = vadd.f32 %v2849, 1e-05
    %v2852 = vadd.f32 %v2850, 1e-05
    %v2853 = vrsqrt.pop %v2851
    %v2854 = vmul.f32 %v2853, %v2851
    %v2855 = vmul.f32 %v2854, %v2853
    %v2856 = vmul.f32 0.5, %v2855
    %v2857 = vsub.f32 1.5, %v2856
    %v2858 = vmul.f32 %v2853, %v2857
    %vm2859 = vweird.f32 %v2851
    %vm2860 = vweird.f32 %v2853
    %vm2861 = vmor %vm2859, %vm2860
    %v2862 = vsel %vm2861, %v2853, %v2858
    %v2863 = vrsqrt.pop %v2852
    %v2864 = vmul.f32 %v2863, %v2852
    %v2865 = vmul.f32 %v2864, %v2863
    %v2866 = vmul.f32 0.5, %v2865
    %v2867 = vsub.f32 1.5, %v2866
    %v2868 = vmul.f32 %v2863, %v2867
    %vm2869 = vweird.f32 %v2852
    %vm2870 = vweird.f32 %v2863
    %vm2871 = vmor %vm2869, %vm2870
    %v2872 = vsel %vm2871, %v2863, %v2868
    %v2873 = vmul.f32 %v2839, %v2862
    %v2874 = vmul.f32 %v2840, %v2872
    %v2875 = vld [vmem:[#allocation13] sm:$0x1]
    %v2877 = vperm.slane %v2875, 0
    %v2879 = vmul.f32 %v2873, %v2877
    %v2880 = vmul.f32 %v2874, %v2877
    %v2881 = vld [vmem:[#allocation14] sm:$0x1]
    %v2883 = vperm.slane %v2881, 0
    %v2885 = vadd.f32 %v2879, %v2883
    %v2886 = vadd.f32 %v2880, %v2883
    %v2887 = vld [vmem:[%s81] sm:$0xff]
    %v2888 = vld [vmem:[%s81 + $0x8] sm:$0xff]
    %v2889 = vld [vmem:[%s81 + $0x10] sm:$0xff]
    %v2890 = vld [vmem:[%s81 + $0x18] sm:$0xff]
    %v2891 = vld [vmem:[%s81 + $0x20] sm:$0xff]
    %v2892 = vld [vmem:[%s81 + $0x28] sm:$0xff]
    %v2893 = vld [vmem:[%s81 + $0x30] sm:$0xff]
    %v2894 = vld [vmem:[%s81 + $0x38] sm:$0xff]
    %v2895 = vpack.c.bf16 %v2886, %v2885
    %v2896 = vpack.c.bf16 %v2888, %v2887
    %v2897 = vpack.c.bf16 %v2890, %v2889
    %v2898 = vpack.c.bf16 %v2892, %v2891
    %v2899 = vpack.c.bf16 %v2894, %v2893
    %v2900 = vld [vmem:[%s83] sm:$0x1]
    %v2902 = vperm.slane %v2900, 0
    %v2905 = vsel %vm1781, %v2895, 0
    %2907 = vmatpush.bf16.msra.mxu0 0
    %2908 = vmatpush.bf16.msra.mxu0 0
    %2909 = vmatpush.bf16.msra.mxu0 0
    %2910 = vmatpush.bf16.msra.mxu0 0
    %2911 = vmatpush.bf16.msra.mxu0 %v2899
    %2912 = vmatpush.bf16.msra.mxu0 %v2898
    %2913 = vmatpush.bf16.msra.mxu0 %v2897
    %2914 = vmatpush.bf16.msra.mxu0 %v2896
    %2915 = vmatmul.bf16.gmra.mxu0 %v2905
    %v2916 = vpop.f32.mrf.mxu0
    %v2917 = vadd.f32 %v2902, %v2916
    %v2918 = vpop.f32.mrf.mxu0
    %v2919 = vadd.f32 %v2902, %v2918
    %2920 = vdwg.mxu0
    %v2921 = vld [vmem:[%s85] sm:$0xff]
    %v2922 = vld [vmem:[%s85 + $0x8] sm:$0xff]
    %v2923 = vld [vmem:[%s85 + $0x10] sm:$0xff]
    %v2924 = vld [vmem:[%s85 + $0x18] sm:$0xff]
    %v2925 = vld [vmem:[%s85 + $0x20] sm:$0xff]
    %v2926 = vld [vmem:[%s85 + $0x28] sm:$0xff]
    %v2927 = vld [vmem:[%s85 + $0x30] sm:$0xff]
    %v2928 = vld [vmem:[%s85 + $0x38] sm:$0xff]
    %v2929 = vpack.c.bf16 %v1907, %v1906
    %v2930 = vpack.c.bf16 %v2922, %v2921
    %v2931 = vpack.c.bf16 %v2924, %v2923
    %v2932 = vpack.c.bf16 %v2926, %v2925
    %v2933 = vpack.c.bf16 %v2928, %v2927
    %v2934 = vld [vmem:[%s87] sm:$0x1]
    %v2936 = vperm.slane %v2934, 0
    %v2939 = vsel %vm1781, %v2929, 0
    %2941 = vmatpush.bf16.msra.mxu0 0
    %2942 = vmatpush.bf16.msra.mxu0 0
    %2943 = vmatpush.bf16.msra.mxu0 0
    %2944 = vmatpush.bf16.msra.mxu0 0
    %2945 = vmatpush.bf16.msra.mxu0 %v2933
    %2946 = vmatpush.bf16.msra.mxu0 %v2932
    %2947 = vmatpush.bf16.msra.mxu0 %v2931
    %2948 = vmatpush.bf16.msra.mxu0 %v2930
    %2949 = vmatmul.bf16.gmra.mxu0 %v2939
    %v2950 = vpop.f32.mrf.mxu0
    %v2951 = vadd.f32 %v2936, %v2950
    %v2952 = vpop.f32.mrf.mxu0
    %v2953 = vadd.f32 %v2936, %v2952
    %2954 = vdwg.mxu0
    %v2955 = vld [vmem:[%s89] sm:$0xff]
    %v2956 = vld [vmem:[%s89 + $0x8] sm:$0xff]
    %v2957 = vld [vmem:[%s89 + $0x10] sm:$0xff]
    %v2958 = vld [vmem:[%s89 + $0x18] sm:$0xff]
    %v2959 = vld [vmem:[%s89 + $0x20] sm:$0xff]
    %v2960 = vld [vmem:[%s89 + $0x28] sm:$0xff]
    %v2961 = vld [vmem:[%s89 + $0x30] sm:$0xff]
    %v2962 = vld [vmem:[%s89 + $0x38] sm:$0xff]
    %v2963 = vpack.c.bf16 %v2956, %v2955
    %v2964 = vpack.c.bf16 %v2958, %v2957
    %v2965 = vpack.c.bf16 %v2960, %v2959
    %v2966 = vpack.c.bf16 %v2962, %v2961
    %v2967 = vld [vmem:[%s91] sm:$0x1]
    %v2969 = vperm.slane %v2967, 0
    %2971 = vmatpush.bf16.msra.mxu0 0
    %2972 = vmatpush.bf16.msra.mxu0 0
    %2973 = vmatpush.bf16.msra.mxu0 0
    %2974 = vmatpush.bf16.msra.mxu0 0
    %2975 = vmatpush.bf16.msra.mxu0 %v2966
    %2976 = vmatpush.bf16.msra.mxu0 %v2965
    %2977 = vmatpush.bf16.msra.mxu0 %v2964
    %2978 = vmatpush.bf16.msra.mxu0 %v2963
    %2979 = vmatmul.bf16.gmra.mxu0 %v2939
    %v2980 = vpop.f32.mrf.mxu0
    %v2981 = vadd.f32 %v2969, %v2980
    %v2982 = vpop.f32.mrf.mxu0
    %v2983 = vadd.f32 %v2969, %v2982
    %2984 = vdwg.mxu0
    %v2985 = vpack.c.bf16 %v2917, %v2917
    %v2986 = vpack.c.bf16 %v2919, %v2919
    %v2987 = vpack.c.bf16 %v2951, %v2951
    %v2988 = vpack.c.bf16 %v2953, %v2953
    %v2990 = vsel %vm2008, %v2985, 0
    %v2993 = vsel %vm2008, %v2987, 0
    %2995 = vmatpush.bf16.xpose.msra.mxu0 0
    %2996 = vmatpush.bf16.xpose.msra.mxu0 0
    %2997 = vmatpush.bf16.xpose.msra.mxu0 0
    %2998 = vmatpush.bf16.xpose.msra.mxu0 0
    %2999 = vmatpush.bf16.xpose.msra.mxu0 0
    %3000 = vmatpush.bf16.xpose.msra.mxu0 0
    %3001 = vmatpush.bf16.xpose.msra.mxu0 0
    %3002 = vmatpush.bf16.xpose.msra.mxu0 %v2993
    %3003 = vmatmul.bf16.gmra.mxu0 %v2990
    %v3004 = vpop.f32.mrf.mxu0
    %v3005 = vadd.f32 0.0, %v3004
    %v3006 = vpop.f32.mrf.mxu0
    %3007 = vdwg.mxu0
    %v3009 = vsel %vm2008, %v2986, 0
    %v3012 = vsel %vm2008, %v2988, 0
    %3014 = vmatpush.bf16.xpose.msra.mxu0 0
    %3015 = vmatpush.bf16.xpose.msra.mxu0 0
    %3016 = vmatpush.bf16.xpose.msra.mxu0 0
    %3017 = vmatpush.bf16.xpose.msra.mxu0 0
    %3018 = vmatpush.bf16.xpose.msra.mxu0 0
    %3019 = vmatpush.bf16.xpose.msra.mxu0 0
    %3020 = vmatpush.bf16.xpose.msra.mxu0 0
    %3021 = vmatpush.bf16.xpose.msra.mxu0 %v3012
    %3022 = vmatmul.bf16.gmra.mxu0 %v3009
    %v3023 = vpop.f32.mrf.mxu0
    %v3024 = vadd.f32 0.0, %v3023
    %v3025 = vpop.f32.mrf.mxu0
    %3026 = vdwg.mxu0
    %v3027 = vmul.f32 %v3005, 0.25
    %v3028 = vmul.f32 %v3024, 0.25
    %v3029 = vsel %vm893, %v3027, -inf
    %3030 = vmax.xlane.f32.xlu0 %v3029
    %v3031 = vpop.xlane.xlu0 %3030
    %v3032 = vsel %vm893, %v3028, -inf
    %3033 = vmax.xlane.f32.xlu0 %v3032
    %v3034 = vpop.xlane.xlu0 %3033
    %v3035 = vsub.f32 %v3027, %v3031
    %v3036 = vsub.f32 %v3028, %v3034
    %v3037 = vmul.f32 %v3035, 1.442695
    %v3038 = vpow.pop %v3037
    %v3039 = vmul.f32 %v3036, 1.442695
    %v3040 = vpow.pop %v3039
    %v3041 = vsel %vm893, %v3038, 0.0
    %3042 = vadd.xlane.f32.xlu0 %v3041
    %v3043 = vpop.xlane.xlu0 %3042
    %v3044 = vsel %vm893, %v3040, 0.0
    %3045 = vadd.xlane.f32.xlu0 %v3044
    %v3046 = vpop.xlane.xlu0 %3045
    %v3047 = vrcp.pop %v3043
    %v3048 = vrcp.pop %v3046
    %v3049 = vmul.f32 %v3038, %v3047
    %v3050 = vmul.f32 %v3040, %v3048
    %v3051 = vpack.c.bf16 %v3049, %v3049
    %v3052 = vpack.c.bf16 %v3050, %v3050
    %v3053 = vpack.c.bf16 %v2981, %v2981
    %v3054 = vpack.c.bf16 %v2983, %v2983
    %v3056 = vsel %vm893, %v3051, 0
    %v3059 = vsel %vm711, %v3053, 0
    %3061 = vmatpush.bf16.msra.mxu0 0
    %3062 = vmatpush.bf16.msra.mxu0 0
    %3063 = vmatpush.bf16.msra.mxu0 0
    %3064 = vmatpush.bf16.msra.mxu0 0
    %3065 = vmatpush.bf16.msra.mxu0 0
    %3066 = vmatpush.bf16.msra.mxu0 0
    %3067 = vmatpush.bf16.msra.mxu0 0
    %3068 = vmatpush.bf16.msra.mxu0 %v3059
    %3069 = vmatmul.bf16.gmra.mxu0 %v3056
    %v3070 = vpop.f32.mrf.mxu0
    %v3071 = vadd.f32 0.0, %v3070
    %v3072 = vpop.f32.mrf.mxu0
    %3073 = vdwg.mxu0
    %v3075 = vsel %vm893, %v3052, 0
    %v3078 = vsel %vm711, %v3054, 0
    %3080 = vmatpush.bf16.msra.mxu0 0
    %3081 = vmatpush.bf16.msra.mxu0 0
    %3082 = vmatpush.bf16.msra.mxu0 0
    %3083 = vmatpush.bf16.msra.mxu0 0
    %3084 = vmatpush.bf16.msra.mxu0 0
    %3085 = vmatpush.bf16.msra.mxu0 0
    %3086 = vmatpush.bf16.msra.mxu0 0
    %3087 = vmatpush.bf16.msra.mxu0 %v3078
    %3088 = vmatmul.bf16.gmra.mxu0 %v3075
    %v3089 = vpop.f32.mrf.mxu0
    %v3090 = vadd.f32 0.0, %v3089
    %v3091 = vpop.f32.mrf.mxu0
    %3092 = vdwg.mxu0
    %v3093 = vld [vmem:[%s93] sm:$0xff]
    %v3094 = vld [vmem:[%s93 + $0x8] sm:$0xff]
    %v3095 = vpack.c.bf16 %v3090, %v3071
    %v3096 = vpack.c.bf16 %v3094, %v3093
    %s3097 = scalar_lea.vmem %s81, 64
    %v3098 = vld [vmem:[%s3097] sm:$0xff]
    %v3099 = vld [vmem:[%s3097 + $0x8] sm:$0xff]
    %v3100 = vld [vmem:[%s3097 + $0x10] sm:$0xff]
    %v3101 = vld [vmem:[%s3097 + $0x18] sm:$0xff]
    %v3102 = vld [vmem:[%s3097 + $0x20] sm:$0xff]
    %v3103 = vld [vmem:[%s3097 + $0x28] sm:$0xff]
    %v3104 = vld [vmem:[%s3097 + $0x30] sm:$0xff]
    %v3105 = vld [vmem:[%s3097 + $0x38] sm:$0xff]
    %v3106 = vpack.c.bf16 %v3099, %v3098
    %v3107 = vpack.c.bf16 %v3101, %v3100
    %v3108 = vpack.c.bf16 %v3103, %v3102
    %v3109 = vpack.c.bf16 %v3105, %v3104
    %s3110 = scalar_lea.vmem %s83, 1
    %v3111 = vld [vmem:[%s3110] sm:$0x1]
    %v3113 = vperm.slane %v3111, 0
    %3115 = vmatpush.bf16.msra.mxu0 0
    %3116 = vmatpush.bf16.msra.mxu0 0
    %3117 = vmatpush.bf16.msra.mxu0 0
    %3118 = vmatpush.bf16.msra.mxu0 0
    %3119 = vmatpush.bf16.msra.mxu0 %v3109
    %3120 = vmatpush.bf16.msra.mxu0 %v3108
    %3121 = vmatpush.bf16.msra.mxu0 %v3107
    %3122 = vmatpush.bf16.msra.mxu0 %v3106
    %3123 = vmatmul.bf16.gmra.mxu0 %v2905
    %v3124 = vpop.f32.mrf.mxu0
    %v3125 = vadd.f32 %v3113, %v3124
    %v3126 = vpop.f32.mrf.mxu0
    %v3127 = vadd.f32 %v3113, %v3126
    %3128 = vdwg.mxu0
    %s3129 = scalar_lea.vmem %s85, 64
    %v3130 = vld [vmem:[%s3129] sm:$0xff]
    %v3131 = vld [vmem:[%s3129 + $0x8] sm:$0xff]
    %v3132 = vld [vmem:[%s3129 + $0x10] sm:$0xff]
    %v3133 = vld [vmem:[%s3129 + $0x18] sm:$0xff]
    %v3134 = vld [vmem:[%s3129 + $0x20] sm:$0xff]
    %v3135 = vld [vmem:[%s3129 + $0x28] sm:$0xff]
    %v3136 = vld [vmem:[%s3129 + $0x30] sm:$0xff]
    %v3137 = vld [vmem:[%s3129 + $0x38] sm:$0xff]
    %v3138 = vpack.c.bf16 %v3131, %v3130
    %v3139 = vpack.c.bf16 %v3133, %v3132
    %v3140 = vpack.c.bf16 %v3135, %v3134
    %v3141 = vpack.c.bf16 %v3137, %v3136
    %s3142 = scalar_lea.vmem %s87, 1
    %v3143 = vld [vmem:[%s3142] sm:$0x1]
    %v3145 = vperm.slane %v3143, 0
    %3147 = vmatpush.bf16.msra.mxu0 0
    %3148 = vmatpush.bf16.msra.mxu0 0
    %3149 = vmatpush.bf16.msra.mxu0 0
    %3150 = vmatpush.bf16.msra.mxu0 0
    %3151 = vmatpush.bf16.msra.mxu0 %v3141
    %3152 = vmatpush.bf16.msra.mxu0 %v3140
    %3153 = vmatpush.bf16.msra.mxu0 %v3139
    %3154 = vmatpush.bf16.msra.mxu0 %v3138
    %3155 = vmatmul.bf16.gmra.mxu0 %v2939
    %v3156 = vpop.f32.mrf.mxu0
    %v3157 = vadd.f32 %v3145, %v3156
    %v3158 = vpop.f32.mrf.mxu0
    %v3159 = vadd.f32 %v3145, %v3158
    %3160 = vdwg.mxu0
    %s3161 = scalar_lea.vmem %s89, 64
    %v3162 = vld [vmem:[%s3161] sm:$0xff]
    %v3163 = vld [vmem:[%s3161 + $0x8] sm:$0xff]
    %v3164 = vld [vmem:[%s3161 + $0x10] sm:$0xff]
    %v3165 = vld [vmem:[%s3161 + $0x18] sm:$0xff]
    %v3166 = vld [vmem:[%s3161 + $0x20] sm:$0xff]
    %v3167 = vld [vmem:[%s3161 + $0x28] sm:$0xff]
    %v3168 = vld [vmem:[%s3161 + $0x30] sm:$0xff]
    %v3169 = vld [vmem:[%s3161 + $0x38] sm:$0xff]
    %v3170 = vpack.c.bf16 %v3163, %v3162
    %v3171 = vpack.c.bf16 %v3165, %v3164
    %v3172 = vpack.c.bf16 %v3167, %v3166
    %v3173 = vpack.c.bf16 %v3169, %v3168
    %s3174 = scalar_lea.vmem %s91, 1
    %v3175 = vld [vmem:[%s3174] sm:$0x1]
    %v3177 = vperm.slane %v3175, 0
    %3179 = vmatpush.bf16.msra.mxu0 0
    %3180 = vmatpush.bf16.msra.mxu0 0
    %3181 = vmatpush.bf16.msra.mxu0 0
    %3182 = vmatpush.bf16.msra.mxu0 0
    %3183 = vmatpush.bf16.msra.mxu0 %v3173
    %3184 = vmatpush.bf16.msra.mxu0 %v3172
    %3185 = vmatpush.bf16.msra.mxu0 %v3171
    %3186 = vmatpush.bf16.msra.mxu0 %v3170
    %3187 = vmatmul.bf16.gmra.mxu0 %v2939
    %v3188 = vpop.f32.mrf.mxu0
    %v3189 = vadd.f32 %v3177, %v3188
    %v3190 = vpop.f32.mrf.mxu0
    %v3191 = vadd.f32 %v3177, %v3190
    %3192 = vdwg.mxu0
    %v3193 = vpack.c.bf16 %v3125, %v3125
    %v3194 = vpack.c.bf16 %v3127, %v3127
    %v3195 = vpack.c.bf16 %v3157, %v3157
    %v3196 = vpack.c.bf16 %v3159, %v3159
    %v3198 = vsel %vm2008, %v3193, 0
    %v3201 = vsel %vm2008, %v3195, 0
    %3203 = vmatpush.bf16.xpose.msra.mxu0 0
    %3204 = vmatpush.bf16.xpose.msra.mxu0 0
    %3205 = vmatpush.bf16.xpose.msra.mxu0 0
    %3206 = vmatpush.bf16.xpose.msra.mxu0 0
    %3207 = vmatpush.bf16.xpose.msra.mxu0 0
    %3208 = vmatpush.bf16.xpose.msra.mxu0 0
    %3209 = vmatpush.bf16.xpose.msra.mxu0 0
    %3210 = vmatpush.bf16.xpose.msra.mxu0 %v3201
    %3211 = vmatmul.bf16.gmra.mxu0 %v3198
    %v3212 = vpop.f32.mrf.mxu0
    %v3213 = vadd.f32 0.0, %v3212
    %v3214 = vpop.f32.mrf.mxu0
    %3215 = vdwg.mxu0
    %v3217 = vsel %vm2008, %v3194, 0
    %v3220 = vsel %vm2008, %v3196, 0
    %3222 = vmatpush.bf16.xpose.msra.mxu0 0
    %3223 = vmatpush.bf16.xpose.msra.mxu0 0
    %3224 = vmatpush.bf16.xpose.msra.mxu0 0
    %3225 = vmatpush.bf16.xpose.msra.mxu0 0
    %3226 = vmatpush.bf16.xpose.msra.mxu0 0
    %3227 = vmatpush.bf16.xpose.msra.mxu0 0
    %3228 = vmatpush.bf16.xpose.msra.mxu0 0
    %3229 = vmatpush.bf16.xpose.msra.mxu0 %v3220
    %3230 = vmatmul.bf16.gmra.mxu0 %v3217
    %v3231 = vpop.f32.mrf.mxu0
    %v3232 = vadd.f32 0.0, %v3231
    %v3233 = vpop.f32.mrf.mxu0
    %3234 = vdwg.mxu0
    %v3235 = vmul.f32 %v3213, 0.25
    %v3236 = vmul.f32 %v3232, 0.25
    %v3237 = vsel %vm893, %v3235, -inf
    %3238 = vmax.xlane.f32.xlu0 %v3237
    %v3239 = vpop.xlane.xlu0 %3238
    %v3240 = vsel %vm893, %v3236, -inf
    %3241 = vmax.xlane.f32.xlu0 %v3240
    %v3242 = vpop.xlane.xlu0 %3241
    %v3243 = vsub.f32 %v3235, %v3239
    %v3244 = vsub.f32 %v3236, %v3242
    %v3245 = vmul.f32 %v3243, 1.442695
    %v3246 = vpow.pop %v3245
    %v3247 = vmul.f32 %v3244, 1.442695
    %v3248 = vpow.pop %v3247
    %v3249 = vsel %vm893, %v3246, 0.0
    %3250 = vadd.xlane.f32.xlu0 %v3249
    %v3251 = vpop.xlane.xlu0 %3250
    %v3252 = vsel %vm893, %v3248, 0.0
    %3253 = vadd.xlane.f32.xlu0 %v3252
    %v3254 = vpop.xlane.xlu0 %3253
    %v3255 = vrcp.pop %v3251
    %v3256 = vrcp.pop %v3254
    %v3257 = vmul.f32 %v3246, %v3255
    %v3258 = vmul.f32 %v3248, %v3256
    %v3259 = vpack.c.bf16 %v3257, %v3257
    %v3260 = vpack.c.bf16 %v3258, %v3258
    %v3261 = vpack.c.bf16 %v3189, %v3189
    %v3262 = vpack.c.bf16 %v3191, %v3191
    %v3264 = vsel %vm893, %v3259, 0
    %v3267 = vsel %vm711, %v3261, 0
    %3269 = vmatpush.bf16.msra.mxu0 0
    %3270 = vmatpush.bf16.msra.mxu0 0
    %3271 = vmatpush.bf16.msra.mxu0 0
    %3272 = vmatpush.bf16.msra.mxu0 0
    %3273 = vmatpush.bf16.msra.mxu0 0
    %3274 = vmatpush.bf16.msra.mxu0 0
    %3275 = vmatpush.bf16.msra.mxu0 0
    %3276 = vmatpush.bf16.msra.mxu0 %v3267
    %3277 = vmatmul.bf16.gmra.mxu0 %v3264
    %v3278 = vpop.f32.mrf.mxu0
    %v3279 = vadd.f32 0.0, %v3278
    %v3280 = vpop.f32.mrf.mxu0
    %3281 = vdwg.mxu0
    %v3283 = vsel %vm893, %v3260, 0
    %v3286 = vsel %vm711, %v3262, 0
    %3288 = vmatpush.bf16.msra.mxu0 0
    %3289 = vmatpush.bf16.msra.mxu0 0
    %3290 = vmatpush.bf16.msra.mxu0 0
    %3291 = vmatpush.bf16.msra.mxu0 0
    %3292 = vmatpush.bf16.msra.mxu0 0
    %3293 = vmatpush.bf16.msra.mxu0 0
    %3294 = vmatpush.bf16.msra.mxu0 0
    %3295 = vmatpush.bf16.msra.mxu0 %v3286
    %3296 = vmatmul.bf16.gmra.mxu0 %v3283
    %v3297 = vpop.f32.mrf.mxu0
    %v3298 = vadd.f32 0.0, %v3297
    %v3299 = vpop.f32.mrf.mxu0
    %3300 = vdwg.mxu0
    %s3301 = scalar_lea.vmem %s93, 16
    %v3302 = vld [vmem:[%s3301] sm:$0xff]
    %v3303 = vld [vmem:[%s3301 + $0x8] sm:$0xff]
    %v3304 = vpack.c.bf16 %v3298, %v3279
    %v3305 = vpack.c.bf16 %v3303, %v3302
    %v3307 = vsel %vm2008, %v3304, 0
    %3309 = vmatpush.bf16.msra.mxu0 0
    %3310 = vmatpush.bf16.msra.mxu0 0
    %3311 = vmatpush.bf16.msra.mxu0 0
    %3312 = vmatpush.bf16.msra.mxu0 0
    %3313 = vmatpush.bf16.msra.mxu0 0
    %3314 = vmatpush.bf16.msra.mxu0 0
    %3315 = vmatpush.bf16.msra.mxu0 0
    %3316 = vmatpush.bf16.msra.mxu0 %v3305
    %3317 = vmatmul.bf16.gmra.mxu0 %v3307
    %v3318 = vpop.f32.mrf.mxu0
    %v3319 = vadd.f32 0.0, %v3318
    %v3320 = vpop.f32.mrf.mxu0
    %v3321 = vadd.f32 0.0, %v3320
    %3322 = vdwg.mxu0
    %v3324 = vsel %vm2008, %v3095, 0
    %3326 = vmatpush.bf16.msra.mxu0 0
    %3327 = vmatpush.bf16.msra.mxu0 0
    %3328 = vmatpush.bf16.msra.mxu0 0
    %3329 = vmatpush.bf16.msra.mxu0 0
    %3330 = vmatpush.bf16.msra.mxu0 0
    %3331 = vmatpush.bf16.msra.mxu0 0
    %3332 = vmatpush.bf16.msra.mxu0 0
    %3333 = vmatpush.bf16.msra.mxu0 %v3096
    %3334 = vmatmul.bf16.gmra.mxu0 %v3324
    %v3335 = vpop.f32.mrf.mxu0
    %v3336 = vadd.f32 %v3319, %v3335
    %v3337 = vpop.f32.mrf.mxu0
    %v3338 = vadd.f32 %v3321, %v3337
    %3339 = vdwg.mxu0
    %s3340 = scalar_lea.vmem %s81, 128
    %v3341 = vld [vmem:[%s3340] sm:$0xff]
    %v3342 = vld [vmem:[%s3340 + $0x8] sm:$0xff]
    %v3343 = vld [vmem:[%s3340 + $0x10] sm:$0xff]
    %v3344 = vld [vmem:[%s3340 + $0x18] sm:$0xff]
    %v3345 = vld [vmem:[%s3340 + $0x20] sm:$0xff]
    %v3346 = vld [vmem:[%s3340 + $0x28] sm:$0xff]
    %v3347 = vld [vmem:[%s3340 + $0x30] sm:$0xff]
    %v3348 = vld [vmem:[%s3340 + $0x38] sm:$0xff]
    %v3349 = vpack.c.bf16 %v3342, %v3341
    %v3350 = vpack.c.bf16 %v3344, %v3343
    %v3351 = vpack.c.bf16 %v3346, %v3345
    %v3352 = vpack.c.bf16 %v3348, %v3347
    %s3353 = scalar_lea.vmem %s83, 2
    %v3354 = vld [vmem:[%s3353] sm:$0x1]
    %v3356 = vperm.slane %v3354, 0
    %3358 = vmatpush.bf16.msra.mxu0 0
    %3359 = vmatpush.bf16.msra.mxu0 0
    %3360 = vmatpush.bf16.msra.mxu0 0
    %3361 = vmatpush.bf16.msra.mxu0 0
    %3362 = vmatpush.bf16.msra.mxu0 %v3352
    %3363 = vmatpush.bf16.msra.mxu0 %v3351
    %3364 = vmatpush.bf16.msra.mxu0 %v3350
    %3365 = vmatpush.bf16.msra.mxu0 %v3349
    %3366 = vmatmul.bf16.gmra.mxu0 %v2905
    %v3367 = vpop.f32.mrf.mxu0
    %v3368 = vadd.f32 %v3356, %v3367
    %v3369 = vpop.f32.mrf.mxu0
    %v3370 = vadd.f32 %v3356, %v3369
    %3371 = vdwg.mxu0
    %s3372 = scalar_lea.vmem %s85, 128
    %v3373 = vld [vmem:[%s3372] sm:$0xff]
    %v3374 = vld [vmem:[%s3372 + $0x8] sm:$0xff]
    %v3375 = vld [vmem:[%s3372 + $0x10] sm:$0xff]
    %v3376 = vld [vmem:[%s3372 + $0x18] sm:$0xff]
    %v3377 = vld [vmem:[%s3372 + $0x20] sm:$0xff]
    %v3378 = vld [vmem:[%s3372 + $0x28] sm:$0xff]
    %v3379 = vld [vmem:[%s3372 + $0x30] sm:$0xff]
    %v3380 = vld [vmem:[%s3372 + $0x38] sm:$0xff]
    %v3381 = vpack.c.bf16 %v3374, %v3373
    %v3382 = vpack.c.bf16 %v3376, %v3375
    %v3383 = vpack.c.bf16 %v3378, %v3377
    %v3384 = vpack.c.bf16 %v3380, %v3379
    %s3385 = scalar_lea.vmem %s87, 2
    %v3386 = vld [vmem:[%s3385] sm:$0x1]
    %v3388 = vperm.slane %v3386, 0
    %3390 = vmatpush.bf16.msra.mxu0 0
    %3391 = vmatpush.bf16.msra.mxu0 0
    %3392 = vmatpush.bf16.msra.mxu0 0
    %3393 = vmatpush.bf16.msra.mxu0 0
    %3394 = vmatpush.bf16.msra.mxu0 %v3384
    %3395 = vmatpush.bf16.msra.mxu0 %v3383
    %3396 = vmatpush.bf16.msra.mxu0 %v3382
    %3397 = vmatpush.bf16.msra.mxu0 %v3381
    %3398 = vmatmul.bf16.gmra.mxu0 %v2939
    %v3399 = vpop.f32.mrf.mxu0
    %v3400 = vadd.f32 %v3388, %v3399
    %v3401 = vpop.f32.mrf.mxu0
    %v3402 = vadd.f32 %v3388, %v3401
    %3403 = vdwg.mxu0
    %s3404 = scalar_lea.vmem %s89, 128
    %v3405 = vld [vmem:[%s3404] sm:$0xff]
    %v3406 = vld [vmem:[%s3404 + $0x8] sm:$0xff]
    %v3407 = vld [vmem:[%s3404 + $0x10] sm:$0xff]
    %v3408 = vld [vmem:[%s3404 + $0x18] sm:$0xff]
    %v3409 = vld [vmem:[%s3404 + $0x20] sm:$0xff]
    %v3410 = vld [vmem:[%s3404 + $0x28] sm:$0xff]
    %v3411 = vld [vmem:[%s3404 + $0x30] sm:$0xff]
    %v3412 = vld [vmem:[%s3404 + $0x38] sm:$0xff]
    %v3413 = vpack.c.bf16 %v3406, %v3405
    %v3414 = vpack.c.bf16 %v3408, %v3407
    %v3415 = vpack.c.bf16 %v3410, %v3409
    %v3416 = vpack.c.bf16 %v3412, %v3411
    %s3417 = scalar_lea.vmem %s91, 2
    %v3418 = vld [vmem:[%s3417] sm:$0x1]
    %v3420 = vperm.slane %v3418, 0
    %3422 = vmatpush.bf16.msra.mxu0 0
    %3423 = vmatpush.bf16.msra.mxu0 0
    %3424 = vmatpush.bf16.msra.mxu0 0
    %3425 = vmatpush.bf16.msra.mxu0 0
    %3426 = vmatpush.bf16.msra.mxu0 %v3416
    %3427 = vmatpush.bf16.msra.mxu0 %v3415
    %3428 = vmatpush.bf16.msra.mxu0 %v3414
    %3429 = vmatpush.bf16.msra.mxu0 %v3413
    %3430 = vmatmul.bf16.gmra.mxu0 %v2939
    %v3431 = vpop.f32.mrf.mxu0
    %v3432 = vadd.f32 %v3420, %v3431
    %v3433 = vpop.f32.mrf.mxu0
    %v3434 = vadd.f32 %v3420, %v3433
    %3435 = vdwg.mxu0
    %v3436 = vpack.c.bf16 %v3368, %v3368
    %v3437 = vpack.c.bf16 %v3370, %v3370
    %v3438 = vpack.c.bf16 %v3400, %v3400
    %v3439 = vpack.c.bf16 %v3402, %v3402
    %v3441 = vsel %vm2008, %v3436, 0
    %v3444 = vsel %vm2008, %v3438, 0
    %3446 = vmatpush.bf16.xpose.msra.mxu0 0
    %3447 = vmatpush.bf16.xpose.msra.mxu0 0
    %3448 = vmatpush.bf16.xpose.msra.mxu0 0
    %3449 = vmatpush.bf16.xpose.msra.mxu0 0
    %3450 = vmatpush.bf16.xpose.msra.mxu0 0
    %3451 = vmatpush.bf16.xpose.msra.mxu0 0
    %3452 = vmatpush.bf16.xpose.msra.mxu0 0
    %3453 = vmatpush.bf16.xpose.msra.mxu0 %v3444
    %3454 = vmatmul.bf16.gmra.mxu0 %v3441
    %v3455 = vpop.f32.mrf.mxu0
    %v3456 = vadd.f32 0.0, %v3455
    %v3457 = vpop.f32.mrf.mxu0
    %3458 = vdwg.mxu0
    %v3460 = vsel %vm2008, %v3437, 0
    %v3463 = vsel %vm2008, %v3439, 0
    %3465 = vmatpush.bf16.xpose.msra.mxu0 0
    %3466 = vmatpush.bf16.xpose.msra.mxu0 0
    %3467 = vmatpush.bf16.xpose.msra.mxu0 0
    %3468 = vmatpush.bf16.xpose.msra.mxu0 0
    %3469 = vmatpush.bf16.xpose.msra.mxu0 0
    %3470 = vmatpush.bf16.xpose.msra.mxu0 0
    %3471 = vmatpush.bf16.xpose.msra.mxu0 0
    %3472 = vmatpush.bf16.xpose.msra.mxu0 %v3463
    %3473 = vmatmul.bf16.gmra.mxu0 %v3460
    %v3474 = vpop.f32.mrf.mxu0
    %v3475 = vadd.f32 0.0, %v3474
    %v3476 = vpop.f32.mrf.mxu0
    %3477 = vdwg.mxu0
    %v3478 = vmul.f32 %v3456, 0.25
    %v3479 = vmul.f32 %v3475, 0.25
    %v3480 = vsel %vm893, %v3478, -inf
    %3481 = vmax.xlane.f32.xlu0 %v3480
    %v3482 = vpop.xlane.xlu0 %3481
    %v3483 = vsel %vm893, %v3479, -inf
    %3484 = vmax.xlane.f32.xlu0 %v3483
    %v3485 = vpop.xlane.xlu0 %3484
    %v3486 = vsub.f32 %v3478, %v3482
    %v3487 = vsub.f32 %v3479, %v3485
    %v3488 = vmul.f32 %v3486, 1.442695
    %v3489 = vpow.pop %v3488
    %v3490 = vmul.f32 %v3487, 1.442695
    %v3491 = vpow.pop %v3490
    %v3492 = vsel %vm893, %v3489, 0.0
    %3493 = vadd.xlane.f32.xlu0 %v3492
    %v3494 = vpop.xlane.xlu0 %3493
    %v3495 = vsel %vm893, %v3491, 0.0
    %3496 = vadd.xlane.f32.xlu0 %v3495
    %v3497 = vpop.xlane.xlu0 %3496
    %v3498 = vrcp.pop %v3494
    %v3499 = vrcp.pop %v3497
    %v3500 = vmul.f32 %v3489, %v3498
    %v3501 = vmul.f32 %v3491, %v3499
    %v3502 = vpack.c.bf16 %v3500, %v3500
    %v3503 = vpack.c.bf16 %v3501, %v3501
    %v3504 = vpack.c.bf16 %v3432, %v3432
    %v3505 = vpack.c.bf16 %v3434, %v3434
    %v3507 = vsel %vm893, %v3502, 0
    %v3510 = vsel %vm711, %v3504, 0
    %3512 = vmatpush.bf16.msra.mxu0 0
    %3513 = vmatpush.bf16.msra.mxu0 0
    %3514 = vmatpush.bf16.msra.mxu0 0
    %3515 = vmatpush.bf16.msra.mxu0 0
    %3516 = vmatpush.bf16.msra.mxu0 0
    %3517 = vmatpush.bf16.msra.mxu0 0
    %3518 = vmatpush.bf16.msra.mxu0 0
    %3519 = vmatpush.bf16.msra.mxu0 %v3510
    %3520 = vmatmul.bf16.gmra.mxu0 %v3507
    %v3521 = vpop.f32.mrf.mxu0
    %v3522 = vadd.f32 0.0, %v3521
    %v3523 = vpop.f32.mrf.mxu0
    %3524 = vdwg.mxu0
    %v3526 = vsel %vm893, %v3503, 0
    %v3529 = vsel %vm711, %v3505, 0
    %3531 = vmatpush.bf16.msra.mxu0 0
    %3532 = vmatpush.bf16.msra.mxu0 0
    %3533 = vmatpush.bf16.msra.mxu0 0
    %3534 = vmatpush.bf16.msra.mxu0 0
    %3535 = vmatpush.bf16.msra.mxu0 0
    %3536 = vmatpush.bf16.msra.mxu0 0
    %3537 = vmatpush.bf16.msra.mxu0 0
    %3538 = vmatpush.bf16.msra.mxu0 %v3529
    %3539 = vmatmul.bf16.gmra.mxu0 %v3526
    %v3540 = vpop.f32.mrf.mxu0
    %v3541 = vadd.f32 0.0, %v3540
    %v3542 = vpop.f32.mrf.mxu0
    %3543 = vdwg.mxu0
    %s3544 = scalar_lea.vmem %s93, 32
    %v3545 = vld [vmem:[%s3544] sm:$0xff]
    %v3546 = vld [vmem:[%s3544 + $0x8] sm:$0xff]
    %v3547 = vpack.c.bf16 %v3541, %v3522
    %v3548 = vpack.c.bf16 %v3546, %v3545
    %v3550 = vsel %vm2008, %v3547, 0
    %3552 = vmatpush.bf16.msra.mxu0 0
    %3553 = vmatpush.bf16.msra.mxu0 0
    %3554 = vmatpush.bf16.msra.mxu0 0
    %3555 = vmatpush.bf16.msra.mxu0 0
    %3556 = vmatpush.bf16.msra.mxu0 0
    %3557 = vmatpush.bf16.msra.mxu0 0
    %3558 = vmatpush.bf16.msra.mxu0 0
    %3559 = vmatpush.bf16.msra.mxu0 %v3548
    %3560 = vmatmul.bf16.gmra.mxu0 %v3550
    %v3561 = vpop.f32.mrf.mxu0
    %v3562 = vadd.f32 0.0, %v3561
    %v3563 = vpop.f32.mrf.mxu0
    %v3564 = vadd.f32 0.0, %v3563
    %3565 = vdwg.mxu0
    %v3566 = vadd.f32 %v3336, %v3562
    %v3567 = vadd.f32 %v3338, %v3564
    %s3568 = scalar_lea.vmem %s81, 192
    %v3569 = vld [vmem:[%s3568] sm:$0xff]
    %v3570 = vld [vmem:[%s3568 + $0x8] sm:$0xff]
    %v3571 = vld [vmem:[%s3568 + $0x10] sm:$0xff]
    %v3572 = vld [vmem:[%s3568 + $0x18] sm:$0xff]
    %v3573 = vld [vmem:[%s3568 + $0x20] sm:$0xff]
    %v3574 = vld [vmem:[%s3568 + $0x28] sm:$0xff]
    %v3575 = vld [vmem:[%s3568 + $0x30] sm:$0xff]
    %v3576 = vld [vmem:[%s3568 + $0x38] sm:$0xff]
    %v3577 = vpack.c.bf16 %v3570, %v3569
    %v3578 = vpack.c.bf16 %v3572, %v3571
    %v3579 = vpack.c.bf16 %v3574, %v3573
    %v3580 = vpack.c.bf16 %v3576, %v3575
    %s3581 = scalar_lea.vmem %s83, 3
    %v3582 = vld [vmem:[%s3581] sm:$0x1]
    %v3584 = vperm.slane %v3582, 0
    %3586 = vmatpush.bf16.msra.mxu0 0
    %3587 = vmatpush.bf16.msra.mxu0 0
    %3588 = vmatpush.bf16.msra.mxu0 0
    %3589 = vmatpush.bf16.msra.mxu0 0
    %3590 = vmatpush.bf16.msra.mxu0 %v3580
    %3591 = vmatpush.bf16.msra.mxu0 %v3579
    %3592 = vmatpush.bf16.msra.mxu0 %v3578
    %3593 = vmatpush.bf16.msra.mxu0 %v3577
    %3594 = vmatmul.bf16.gmra.mxu0 %v2905
    %v3595 = vpop.f32.mrf.mxu0
    %v3596 = vadd.f32 %v3584, %v3595
    %v3597 = vpop.f32.mrf.mxu0
    %v3598 = vadd.f32 %v3584, %v3597
    %3599 = vdwg.mxu0
    %s3600 = scalar_lea.vmem %s85, 192
    %v3601 = vld [vmem:[%s3600] sm:$0xff]
    %v3602 = vld [vmem:[%s3600 + $0x8] sm:$0xff]
    %v3603 = vld [vmem:[%s3600 + $0x10] sm:$0xff]
    %v3604 = vld [vmem:[%s3600 + $0x18] sm:$0xff]
    %v3605 = vld [vmem:[%s3600 + $0x20] sm:$0xff]
    %v3606 = vld [vmem:[%s3600 + $0x28] sm:$0xff]
    %v3607 = vld [vmem:[%s3600 + $0x30] sm:$0xff]
    %v3608 = vld [vmem:[%s3600 + $0x38] sm:$0xff]
    %v3609 = vpack.c.bf16 %v3602, %v3601
    %v3610 = vpack.c.bf16 %v3604, %v3603
    %v3611 = vpack.c.bf16 %v3606, %v3605
    %v3612 = vpack.c.bf16 %v3608, %v3607
    %s3613 = scalar_lea.vmem %s87, 3
    %v3614 = vld [vmem:[%s3613] sm:$0x1]
    %v3616 = vperm.slane %v3614, 0
    %3618 = vmatpush.bf16.msra.mxu0 0
    %3619 = vmatpush.bf16.msra.mxu0 0
    %3620 = vmatpush.bf16.msra.mxu0 0
    %3621 = vmatpush.bf16.msra.mxu0 0
    %3622 = vmatpush.bf16.msra.mxu0 %v3612
    %3623 = vmatpush.bf16.msra.mxu0 %v3611
    %3624 = vmatpush.bf16.msra.mxu0 %v3610
    %3625 = vmatpush.bf16.msra.mxu0 %v3609
    %3626 = vmatmul.bf16.gmra.mxu0 %v2939
    %v3627 = vpop.f32.mrf.mxu0
    %v3628 = vadd.f32 %v3616, %v3627
    %v3629 = vpop.f32.mrf.mxu0
    %v3630 = vadd.f32 %v3616, %v3629
    %3631 = vdwg.mxu0
    %s3632 = scalar_lea.vmem %s89, 192
    %v3633 = vld [vmem:[%s3632] sm:$0xff]
    %v3634 = vld [vmem:[%s3632 + $0x8] sm:$0xff]
    %v3635 = vld [vmem:[%s3632 + $0x10] sm:$0xff]
    %v3636 = vld [vmem:[%s3632 + $0x18] sm:$0xff]
    %v3637 = vld [vmem:[%s3632 + $0x20] sm:$0xff]
    %v3638 = vld [vmem:[%s3632 + $0x28] sm:$0xff]
    %v3639 = vld [vmem:[%s3632 + $0x30] sm:$0xff]
    %v3640 = vld [vmem:[%s3632 + $0x38] sm:$0xff]
    %v3641 = vpack.c.bf16 %v3634, %v3633
    %v3642 = vpack.c.bf16 %v3636, %v3635
    %v3643 = vpack.c.bf16 %v3638, %v3637
    %v3644 = vpack.c.bf16 %v3640, %v3639
    %s3645 = scalar_lea.vmem %s91, 3
    %v3646 = vld [vmem:[%s3645] sm:$0x1]
    %v3648 = vperm.slane %v3646, 0
    %3650 = vmatpush.bf16.msra.mxu0 0
    %3651 = vmatpush.bf16.msra.mxu0 0
    %3652 = vmatpush.bf16.msra.mxu0 0
    %3653 = vmatpush.bf16.msra.mxu0 0
    %3654 = vmatpush.bf16.msra.mxu0 %v3644
    %3655 = vmatpush.bf16.msra.mxu0 %v3643
    %3656 = vmatpush.bf16.msra.mxu0 %v3642
    %3657 = vmatpush.bf16.msra.mxu0 %v3641
    %3658 = vmatmul.bf16.gmra.mxu0 %v2939
    %v3659 = vpop.f32.mrf.mxu0
    %v3660 = vadd.f32 %v3648, %v3659
    %v3661 = vpop.f32.mrf.mxu0
    %v3662 = vadd.f32 %v3648, %v3661
    %3663 = vdwg.mxu0
    %v3664 = vpack.c.bf16 %v3596, %v3596
    %v3665 = vpack.c.bf16 %v3598, %v3598
    %v3666 = vpack.c.bf16 %v3628, %v3628
    %v3667 = vpack.c.bf16 %v3630, %v3630
    %v3669 = vsel %vm2008, %v3664, 0
    %v3672 = vsel %vm2008, %v3666, 0
    %3674 = vmatpush.bf16.xpose.msra.mxu0 0
    %3675 = vmatpush.bf16.xpose.msra.mxu0 0
    %3676 = vmatpush.bf16.xpose.msra.mxu0 0
    %3677 = vmatpush.bf16.xpose.msra.mxu0 0
    %3678 = vmatpush.bf16.xpose.msra.mxu0 0
    %3679 = vmatpush.bf16.xpose.msra.mxu0 0
    %3680 = vmatpush.bf16.xpose.msra.mxu0 0
    %3681 = vmatpush.bf16.xpose.msra.mxu0 %v3672
    %3682 = vmatmul.bf16.gmra.mxu0 %v3669
    %v3683 = vpop.f32.mrf.mxu0
    %v3684 = vadd.f32 0.0, %v3683
    %v3685 = vpop.f32.mrf.mxu0
    %3686 = vdwg.mxu0
    %v3688 = vsel %vm2008, %v3665, 0
    %v3691 = vsel %vm2008, %v3667, 0
    %3693 = vmatpush.bf16.xpose.msra.mxu0 0
    %3694 = vmatpush.bf16.xpose.msra.mxu0 0
    %3695 = vmatpush.bf16.xpose.msra.mxu0 0
    %3696 = vmatpush.bf16.xpose.msra.mxu0 0
    %3697 = vmatpush.bf16.xpose.msra.mxu0 0
    %3698 = vmatpush.bf16.xpose.msra.mxu0 0
    %3699 = vmatpush.bf16.xpose.msra.mxu0 0
    %3700 = vmatpush.bf16.xpose.msra.mxu0 %v3691
    %3701 = vmatmul.bf16.gmra.mxu0 %v3688
    %v3702 = vpop.f32.mrf.mxu0
    %v3703 = vadd.f32 0.0, %v3702
    %v3704 = vpop.f32.mrf.mxu0
    %3705 = vdwg.mxu0
    %v3706 = vmul.f32 %v3684, 0.25
    %v3707 = vmul.f32 %v3703, 0.25
    %v3708 = vsel %vm893, %v3706, -inf
    %3709 = vmax.xlane.f32.xlu0 %v3708
    %v3710 = vpop.xlane.xlu0 %3709
    %v3711 = vsel %vm893, %v3707, -inf
    %3712 = vmax.xlane.f32.xlu0 %v3711
    %v3713 = vpop.xlane.xlu0 %3712
    %v3714 = vsub.f32 %v3706, %v3710
    %v3715 = vsub.f32 %v3707, %v3713
    %v3716 = vmul.f32 %v3714, 1.442695
    %v3717 = vpow.pop %v3716
    %v3718 = vmul.f32 %v3715, 1.442695
    %v3719 = vpow.pop %v3718
    %v3720 = vsel %vm893, %v3717, 0.0
    %3721 = vadd.xlane.f32.xlu0 %v3720
    %v3722 = vpop.xlane.xlu0 %3721
    %v3723 = vsel %vm893, %v3719, 0.0
    %3724 = vadd.xlane.f32.xlu0 %v3723
    %v3725 = vpop.xlane.xlu0 %3724
    %v3726 = vrcp.pop %v3722
    %v3727 = vrcp.pop %v3725
    %v3728 = vmul.f32 %v3717, %v3726
    %v3729 = vmul.f32 %v3719, %v3727
    %v3730 = vpack.c.bf16 %v3728, %v3728
    %v3731 = vpack.c.bf16 %v3729, %v3729
    %v3732 = vpack.c.bf16 %v3660, %v3660
    %v3733 = vpack.c.bf16 %v3662, %v3662
    %v3735 = vsel %vm893, %v3730, 0
    %v3738 = vsel %vm711, %v3732, 0
    %3740 = vmatpush.bf16.msra.mxu0 0
    %3741 = vmatpush.bf16.msra.mxu0 0
    %3742 = vmatpush.bf16.msra.mxu0 0
    %3743 = vmatpush.bf16.msra.mxu0 0
    %3744 = vmatpush.bf16.msra.mxu0 0
    %3745 = vmatpush.bf16.msra.mxu0 0
    %3746 = vmatpush.bf16.msra.mxu0 0
    %3747 = vmatpush.bf16.msra.mxu0 %v3738
    %3748 = vmatmul.bf16.gmra.mxu0 %v3735
    %v3749 = vpop.f32.mrf.mxu0
    %v3750 = vadd.f32 0.0, %v3749
    %v3751 = vpop.f32.mrf.mxu0
    %3752 = vdwg.mxu0
    %v3754 = vsel %vm893, %v3731, 0
    %v3757 = vsel %vm711, %v3733, 0
    %3759 = vmatpush.bf16.msra.mxu0 0
    %3760 = vmatpush.bf16.msra.mxu0 0
    %3761 = vmatpush.bf16.msra.mxu0 0
    %3762 = vmatpush.bf16.msra.mxu0 0
    %3763 = vmatpush.bf16.msra.mxu0 0
    %3764 = vmatpush.bf16.msra.mxu0 0
    %3765 = vmatpush.bf16.msra.mxu0 0
    %3766 = vmatpush.bf16.msra.mxu0 %v3757
    %3767 = vmatmul.bf16.gmra.mxu0 %v3754
    %v3768 = vpop.f32.mrf.mxu0
    %v3769 = vadd.f32 0.0, %v3768
    %v3770 = vpop.f32.mrf.mxu0
    %3771 = vdwg.mxu0
    %s3772 = scalar_lea.vmem %s93, 48
    %v3773 = vld [vmem:[%s3772] sm:$0xff]
    %v3774 = vld [vmem:[%s3772 + $0x8] sm:$0xff]
    %v3775 = vpack.c.bf16 %v3769, %v3750
    %v3776 = vpack.c.bf16 %v3774, %v3773
    %v3778 = vsel %vm2008, %v3775, 0
    %3780 = vmatpush.bf16.msra.mxu0 0
    %3781 = vmatpush.bf16.msra.mxu0 0
    %3782 = vmatpush.bf16.msra.mxu0 0
    %3783 = vmatpush.bf16.msra.mxu0 0
    %3784 = vmatpush.bf16.msra.mxu0 0
    %3785 = vmatpush.bf16.msra.mxu0 0
    %3786 = vmatpush.bf16.msra.mxu0 0
    %3787 = vmatpush.bf16.msra.mxu0 %v3776
    %3788 = vmatmul.bf16.gmra.mxu0 %v3778
    %v3789 = vpop.f32.mrf.mxu0
    %v3790 = vadd.f32 0.0, %v3789
    %v3791 = vpop.f32.mrf.mxu0
    %v3792 = vadd.f32 0.0, %v3791
    %3793 = vdwg.mxu0
    %v3794 = vadd.f32 %v3566, %v3790
    %v3795 = vadd.f32 %v3567, %v3792
    %v3796 = vld [vmem:[#allocation16] sm:$0x1]
    %v3798 = vperm.slane %v3796, 0
    %v3800 = vadd.f32 %v3794, %v3798
    %v3801 = vadd.f32 %v3795, %v3798
    %v3802 = vadd.f32 %v2885, %v3800
    %v3803 = vadd.f32 %v2886, %v3801
    %v3804 = vsel %vm1781, %v3802, 0.0
    %3805 = vadd.xlane.f32.xlu0 %v3804
    %v3806 = vpop.xlane.xlu0 %3805
    %v3807 = vsel %vm1781, %v3803, 0.0
    %3808 = vadd.xlane.f32.xlu0 %v3807
    %v3809 = vpop.xlane.xlu0 %3808
    %v3810 = vmul.f32 %v3806, %v2836
    %v3811 = vmul.f32 %v3809, %v2836
    %v3812 = vsub.f32 %v3802, %v3810
    %v3813 = vsub.f32 %v3803, %v3811
    %v3814 = vmul.f32 %v3812, %v3812
    %v3815 = vmul.f32 %v3813, %v3813
    %v3816 = vsel %vm1781, %v3814, 0.0
    %3817 = vadd.xlane.f32.xlu0 %v3816
    %v3818 = vpop.xlane.xlu0 %3817
    %v3819 = vsel %vm1781, %v3815, 0.0
    %3820 = vadd.xlane.f32.xlu0 %v3819
    %v3821 = vpop.xlane.xlu0 %3820
    %v3822 = vmul.f32 %v3818, %v2836
    %v3823 = vmul.f32 %v3821, %v2836
    %v3824 = vadd.f32 %v3822, 1e-05
    %v3825 = vadd.f32 %v3823, 1e-05
    %v3826 = vrsqrt.pop %v3824
    %v3827 = vmul.f32 %v3826, %v3824
    %v3828 = vmul.f32 %v3827, %v3826
    %v3829 = vmul.f32 0.5, %v3828
    %v3830 = vsub.f32 1.5, %v3829
    %v3831 = vmul.f32 %v3826, %v3830
    %vm3832 = vweird.f32 %v3824
    %vm3833 = vweird.f32 %v3826
    %vm3834 = vmor %vm3832, %vm3833
    %v3835 = vsel %vm3834, %v3826, %v3831
    %v3836 = vrsqrt.pop %v3825
    %v3837 = vmul.f32 %v3836, %v3825
    %v3838 = vmul.f32 %v3837, %v3836
    %v3839 = vmul.f32 0.5, %v3838
    %v3840 = vsub.f32 1.5, %v3839
    %v3841 = vmul.f32 %v3836, %v3840
    %vm3842 = vweird.f32 %v3825
    %vm3843 = vweird.f32 %v3836
    %vm3844 = vmor %vm3842, %vm3843
    %v3845 = vsel %vm3844, %v3836, %v3841
    %v3846 = vmul.f32 %v3812, %v3835
    %v3847 = vmul.f32 %v3813, %v3845
    %v3848 = vld [vmem:[#allocation17] sm:$0x1]
    %v3850 = vperm.slane %v3848, 0
    %v3852 = vmul.f32 %v3846, %v3850
    %v3853 = vmul.f32 %v3847, %v3850
    %v3854 = vld [vmem:[#allocation19] sm:$0x1]
    %v3856 = vperm.slane %v3854, 0
    %v3858 = vadd.f32 %v3852, %v3856
    %v3859 = vadd.f32 %v3853, %v3856
    %v3860 = vld [vmem:[%s101] sm:$0xff]
    %v3861 = vld [vmem:[%s101 + $0x8] sm:$0xff]
    %v3862 = vld [vmem:[%s101 + $0x10] sm:$0xff]
    %v3863 = vld [vmem:[%s101 + $0x18] sm:$0xff]
    %v3864 = vld [vmem:[%s101 + $0x20] sm:$0xff]
    %v3865 = vld [vmem:[%s101 + $0x28] sm:$0xff]
    %v3866 = vld [vmem:[%s101 + $0x30] sm:$0xff]
    %v3867 = vld [vmem:[%s101 + $0x38] sm:$0xff]
    %v3868 = vpack.c.bf16 %v3859, %v3858
    %v3869 = vpack.c.bf16 %v3861, %v3860
    %v3870 = vpack.c.bf16 %v3863, %v3862
    %v3871 = vpack.c.bf16 %v3865, %v3864
    %v3872 = vpack.c.bf16 %v3867, %v3866
    %v3873 = vld [vmem:[#allocation20] sm:$0x1]
    %v3875 = vperm.slane %v3873, 0
    %v3878 = vsel %vm1781, %v3868, 0
    %3880 = vmatpush.bf16.msra.mxu0 0
    %3881 = vmatpush.bf16.msra.mxu0 0
    %3882 = vmatpush.bf16.msra.mxu0 0
    %3883 = vmatpush.bf16.msra.mxu0 0
    %3884 = vmatpush.bf16.msra.mxu0 %v3872
    %3885 = vmatpush.bf16.msra.mxu0 %v3871
    %3886 = vmatpush.bf16.msra.mxu0 %v3870
    %3887 = vmatpush.bf16.msra.mxu0 %v3869
    %3888 = vmatmul.bf16.gmra.mxu0 %v3878
    %v3889 = vpop.f32.mrf.mxu0
    %v3890 = vadd.f32 %v3875, %v3889
    %v3891 = vpop.f32.mrf.mxu0
    %v3892 = vadd.f32 %v3875, %v3891
    %3893 = vdwg.mxu0
    %v3894 = vmax.f32 %v3890, 0.0
    %v3895 = vmax.f32 %v3892, 0.0
    %v3896 = vld [vmem:[%s105] sm:$0xff]
    %v3897 = vld [vmem:[%s105 + $0x8] sm:$0xff]
    %v3898 = vld [vmem:[%s105 + $0x10] sm:$0xff]
    %v3899 = vld [vmem:[%s105 + $0x18] sm:$0xff]
    %v3900 = vld [vmem:[%s105 + $0x20] sm:$0xff]
    %v3901 = vld [vmem:[%s105 + $0x28] sm:$0xff]
    %v3902 = vld [vmem:[%s105 + $0x30] sm:$0xff]
    %v3903 = vld [vmem:[%s105 + $0x38] sm:$0xff]
    %v3904 = vld [vmem:[%s105 + $0x40] sm:$0xff]
    %v3905 = vld [vmem:[%s105 + $0x48] sm:$0xff]
    %v3906 = vld [vmem:[%s105 + $0x50] sm:$0xff]
    %v3907 = vld [vmem:[%s105 + $0x58] sm:$0xff]
    %v3908 = vld [vmem:[%s105 + $0x60] sm:$0xff]
    %v3909 = vld [vmem:[%s105 + $0x68] sm:$0xff]
    %v3910 = vld [vmem:[%s105 + $0x70] sm:$0xff]
    %v3911 = vld [vmem:[%s105 + $0x78] sm:$0xff]
    %v3912 = vpack.c.bf16 %v3895, %v3894
    %v3913 = vpack.c.bf16 %v3897, %v3896
    %v3914 = vpack.c.bf16 %v3899, %v3898
    %v3915 = vpack.c.bf16 %v3901, %v3900
    %v3916 = vpack.c.bf16 %v3903, %v3902
    %v3917 = vpack.c.bf16 %v3905, %v3904
    %v3918 = vpack.c.bf16 %v3907, %v3906
    %v3919 = vpack.c.bf16 %v3909, %v3908
    %v3920 = vpack.c.bf16 %v3911, %v3910
    %v3921 = vld [vmem:[#allocation22] sm:$0x1]
    %v3923 = vperm.slane %v3921, 0
    %3925 = vmatpush.bf16.msra.mxu0 %v3920
    %3926 = vmatpush.bf16.msra.mxu0 %v3919
    %3927 = vmatpush.bf16.msra.mxu0 %v3918
    %3928 = vmatpush.bf16.msra.mxu0 %v3917
    %3929 = vmatpush.bf16.msra.mxu0 %v3916
    %3930 = vmatpush.bf16.msra.mxu0 %v3915
    %3931 = vmatpush.bf16.msra.mxu0 %v3914
    %3932 = vmatpush.bf16.msra.mxu0 %v3913
    %3933 = vmatmul.bf16.gmra.mxu0 %v3912
    %v3934 = vpop.f32.mrf.mxu0
    %v3935 = vadd.f32 %v3923, %v3934
    %v3936 = vpop.f32.mrf.mxu0
    %v3937 = vadd.f32 %v3923, %v3936
    %3938 = vdwg.mxu0
    %v3939 = vadd.f32 %v3858, %v3935
    %v3940 = vadd.f32 %v3859, %v3937
    %v3941 = vsel %vm1781, %v3939, 0.0
    %3942 = vadd.xlane.f32.xlu0 %v3941
    %v3943 = vpop.xlane.xlu0 %3942
    %v3944 = vsel %vm1781, %v3940, 0.0
    %3945 = vadd.xlane.f32.xlu0 %v3944
    %v3946 = vpop.xlane.xlu0 %3945
    %v3947 = vmul.f32 %v3943, %v2836
    %v3948 = vmul.f32 %v3946, %v2836
    %v3949 = vsub.f32 %v3939, %v3947
    %v3950 = vsub.f32 %v3940, %v3948
    %v3951 = vmul.f32 %v3949, %v3949
    %v3952 = vmul.f32 %v3950, %v3950
    %v3953 = vsel %vm1781, %v3951, 0.0
    %3954 = vadd.xlane.f32.xlu0 %v3953
    %v3955 = vpop.xlane.xlu0 %3954
    %v3956 = vsel %vm1781, %v3952, 0.0
    %3957 = vadd.xlane.f32.xlu0 %v3956
    %v3958 = vpop.xlane.xlu0 %3957
    %v3959 = vmul.f32 %v3955, %v2836
    %v3960 = vmul.f32 %v3958, %v2836
    %v3961 = vadd.f32 %v3959, 1e-05
    %v3962 = vadd.f32 %v3960, 1e-05
    %v3963 = vrsqrt.pop %v3961
    %v3964 = vmul.f32 %v3963, %v3961
    %v3965 = vmul.f32 %v3964, %v3963
    %v3966 = vmul.f32 0.5, %v3965
    %v3967 = vsub.f32 1.5, %v3966
    %v3968 = vmul.f32 %v3963, %v3967
    %vm3969 = vweird.f32 %v3961
    %vm3970 = vweird.f32 %v3963
    %vm3971 = vmor %vm3969, %vm3970
    %v3972 = vsel %vm3971, %v3963, %v3968
    %v3973 = vrsqrt.pop %v3962
    %v3974 = vmul.f32 %v3973, %v3962
    %v3975 = vmul.f32 %v3974, %v3973
    %v3976 = vmul.f32 0.5, %v3975
    %v3977 = vsub.f32 1.5, %v3976
    %v3978 = vmul.f32 %v3973, %v3977
    %vm3979 = vweird.f32 %v3962
    %vm3980 = vweird.f32 %v3973
    %vm3981 = vmor %vm3979, %vm3980
    %v3982 = vsel %vm3981, %v3973, %v3978
    %v3983 = vmul.f32 %v3949, %v3972
    %v3984 = vmul.f32 %v3950, %v3982
    %v3985 = vld [vmem:[#allocation23] sm:$0x1]
    %v3987 = vperm.slane %v3985, 0
    %v3989 = vmul.f32 %v3983, %v3987
    %v3990 = vmul.f32 %v3984, %v3987
    %v3991 = vld [vmem:[#allocation25] sm:$0x1]
    %v3993 = vperm.slane %v3991, 0
    %v3995 = vadd.f32 %v3989, %v3993
    %v3996 = vadd.f32 %v3990, %v3993
    %v3997 = vld [vmem:[%s113] sm:$0xff]
    %v3998 = vld [vmem:[%s113 + $0x8] sm:$0xff]
    %v3999 = vld [vmem:[%s113 + $0x10] sm:$0xff]
    %v4000 = vld [vmem:[%s113 + $0x18] sm:$0xff]
    %v4001 = vld [vmem:[%s113 + $0x20] sm:$0xff]
    %v4002 = vld [vmem:[%s113 + $0x28] sm:$0xff]
    %v4003 = vld [vmem:[%s113 + $0x30] sm:$0xff]
    %v4004 = vld [vmem:[%s113 + $0x38] sm:$0xff]
    %v4005 = vpack.c.bf16 %v3996, %v3995
    %v4006 = vpack.c.bf16 %v3998, %v3997
    %v4007 = vpack.c.bf16 %v4000, %v3999
    %v4008 = vpack.c.bf16 %v4002, %v4001
    %v4009 = vpack.c.bf16 %v4004, %v4003
    %v4010 = vld [vmem:[%s115] sm:$0x1]
    %v4012 = vperm.slane %v4010, 0
    %v4015 = vsel %vm1781, %v4005, 0
    %4017 = vmatpush.bf16.msra.mxu0 0
    %4018 = vmatpush.bf16.msra.mxu0 0
    %4019 = vmatpush.bf16.msra.mxu0 0
    %4020 = vmatpush.bf16.msra.mxu0 0
    %4021 = vmatpush.bf16.msra.mxu0 %v4009
    %4022 = vmatpush.bf16.msra.mxu0 %v4008
    %4023 = vmatpush.bf16.msra.mxu0 %v4007
    %4024 = vmatpush.bf16.msra.mxu0 %v4006
    %4025 = vmatmul.bf16.gmra.mxu0 %v4015
    %v4026 = vpop.f32.mrf.mxu0
    %v4027 = vadd.f32 %v4012, %v4026
    %v4028 = vpop.f32.mrf.mxu0
    %v4029 = vadd.f32 %v4012, %v4028
    %4030 = vdwg.mxu0
    %v4031 = vld [vmem:[%s117] sm:$0xff]
    %v4032 = vld [vmem:[%s117 + $0x8] sm:$0xff]
    %v4033 = vld [vmem:[%s117 + $0x10] sm:$0xff]
    %v4034 = vld [vmem:[%s117 + $0x18] sm:$0xff]
    %v4035 = vld [vmem:[%s117 + $0x20] sm:$0xff]
    %v4036 = vld [vmem:[%s117 + $0x28] sm:$0xff]
    %v4037 = vld [vmem:[%s117 + $0x30] sm:$0xff]
    %v4038 = vld [vmem:[%s117 + $0x38] sm:$0xff]
    %v4039 = vpack.c.bf16 %v4032, %v4031
    %v4040 = vpack.c.bf16 %v4034, %v4033
    %v4041 = vpack.c.bf16 %v4036, %v4035
    %v4042 = vpack.c.bf16 %v4038, %v4037
    %v4043 = vld [vmem:[%s119] sm:$0x1]
    %v4045 = vperm.slane %v4043, 0
    %4047 = vmatpush.bf16.msra.mxu0 0
    %4048 = vmatpush.bf16.msra.mxu0 0
    %4049 = vmatpush.bf16.msra.mxu0 0
    %4050 = vmatpush.bf16.msra.mxu0 0
    %4051 = vmatpush.bf16.msra.mxu0 %v4042
    %4052 = vmatpush.bf16.msra.mxu0 %v4041
    %4053 = vmatpush.bf16.msra.mxu0 %v4040
    %4054 = vmatpush.bf16.msra.mxu0 %v4039
    %4055 = vmatmul.bf16.gmra.mxu0 %v4015
    %v4056 = vpop.f32.mrf.mxu0
    %v4057 = vadd.f32 %v4045, %v4056
    %v4058 = vpop.f32.mrf.mxu0
    %v4059 = vadd.f32 %v4045, %v4058
    %4060 = vdwg.mxu0
    %v4061 = vld [vmem:[%s121] sm:$0xff]
    %v4062 = vld [vmem:[%s121 + $0x8] sm:$0xff]
    %v4063 = vld [vmem:[%s121 + $0x10] sm:$0xff]
    %v4064 = vld [vmem:[%s121 + $0x18] sm:$0xff]
    %v4065 = vld [vmem:[%s121 + $0x20] sm:$0xff]
    %v4066 = vld [vmem:[%s121 + $0x28] sm:$0xff]
    %v4067 = vld [vmem:[%s121 + $0x30] sm:$0xff]
    %v4068 = vld [vmem:[%s121 + $0x38] sm:$0xff]
    %v4069 = vpack.c.bf16 %v4062, %v4061
    %v4070 = vpack.c.bf16 %v4064, %v4063
    %v4071 = vpack.c.bf16 %v4066, %v4065
    %v4072 = vpack.c.bf16 %v4068, %v4067
    %v4073 = vld [vmem:[%s123] sm:$0x1]
    %v4075 = vperm.slane %v4073, 0
    %4077 = vmatpush.bf16.msra.mxu0 0
    %4078 = vmatpush.bf16.msra.mxu0 0
    %4079 = vmatpush.bf16.msra.mxu0 0
    %4080 = vmatpush.bf16.msra.mxu0 0
    %4081 = vmatpush.bf16.msra.mxu0 %v4072
    %4082 = vmatpush.bf16.msra.mxu0 %v4071
    %4083 = vmatpush.bf16.msra.mxu0 %v4070
    %4084 = vmatpush.bf16.msra.mxu0 %v4069
    %4085 = vmatmul.bf16.gmra.mxu0 %v4015
    %v4086 = vpop.f32.mrf.mxu0
    %v4087 = vadd.f32 %v4075, %v4086
    %v4088 = vpop.f32.mrf.mxu0
    %v4089 = vadd.f32 %v4075, %v4088
    %4090 = vdwg.mxu0
    %v4091 = vpack.c.bf16 %v4027, %v4027
    %v4092 = vpack.c.bf16 %v4029, %v4029
    %v4093 = vpack.c.bf16 %v4057, %v4057
    %v4094 = vpack.c.bf16 %v4059, %v4059
    %v4096 = vsel %vm2008, %v4091, 0
    %v4099 = vsel %vm2008, %v4093, 0
    %4101 = vmatpush.bf16.xpose.msra.mxu0 0
    %4102 = vmatpush.bf16.xpose.msra.mxu0 0
    %4103 = vmatpush.bf16.xpose.msra.mxu0 0
    %4104 = vmatpush.bf16.xpose.msra.mxu0 0
    %4105 = vmatpush.bf16.xpose.msra.mxu0 0
    %4106 = vmatpush.bf16.xpose.msra.mxu0 0
    %4107 = vmatpush.bf16.xpose.msra.mxu0 0
    %4108 = vmatpush.bf16.xpose.msra.mxu0 %v4099
    %4109 = vmatmul.bf16.gmra.mxu0 %v4096
    %v4110 = vpop.f32.mrf.mxu0
    %v4111 = vadd.f32 0.0, %v4110
    %v4112 = vpop.f32.mrf.mxu0
    %4113 = vdwg.mxu0
    %v4115 = vsel %vm2008, %v4092, 0
    %v4118 = vsel %vm2008, %v4094, 0
    %4120 = vmatpush.bf16.xpose.msra.mxu0 0
    %4121 = vmatpush.bf16.xpose.msra.mxu0 0
    %4122 = vmatpush.bf16.xpose.msra.mxu0 0
    %4123 = vmatpush.bf16.xpose.msra.mxu0 0
    %4124 = vmatpush.bf16.xpose.msra.mxu0 0
    %4125 = vmatpush.bf16.xpose.msra.mxu0 0
    %4126 = vmatpush.bf16.xpose.msra.mxu0 0
    %4127 = vmatpush.bf16.xpose.msra.mxu0 %v4118
    %4128 = vmatmul.bf16.gmra.mxu0 %v4115
    %v4129 = vpop.f32.mrf.mxu0
    %v4130 = vadd.f32 0.0, %v4129
    %v4131 = vpop.f32.mrf.mxu0
    %4132 = vdwg.mxu0
    %v4133 = vmul.f32 %v4111, 0.25
    %v4134 = vmul.f32 %v4130, 0.25
    %v4135 = vsel %vm893, %v4133, -inf
    %4136 = vmax.xlane.f32.xlu0 %v4135
    %v4137 = vpop.xlane.xlu0 %4136
    %v4138 = vsel %vm893, %v4134, -inf
    %4139 = vmax.xlane.f32.xlu0 %v4138
    %v4140 = vpop.xlane.xlu0 %4139
    %v4141 = vsub.f32 %v4133, %v4137
    %v4142 = vsub.f32 %v4134, %v4140
    %v4143 = vmul.f32 %v4141, 1.442695
    %v4144 = vpow.pop %v4143
    %v4145 = vmul.f32 %v4142, 1.442695
    %v4146 = vpow.pop %v4145
    %v4147 = vsel %vm893, %v4144, 0.0
    %4148 = vadd.xlane.f32.xlu0 %v4147
    %v4149 = vpop.xlane.xlu0 %4148
    %v4150 = vsel %vm893, %v4146, 0.0
    %4151 = vadd.xlane.f32.xlu0 %v4150
    %v4152 = vpop.xlane.xlu0 %4151
    %v4153 = vrcp.pop %v4149
    %v4154 = vrcp.pop %v4152
    %v4155 = vmul.f32 %v4144, %v4153
    %v4156 = vmul.f32 %v4146, %v4154
    %v4157 = vpack.c.bf16 %v4155, %v4155
    %v4158 = vpack.c.bf16 %v4156, %v4156
    %v4159 = vpack.c.bf16 %v4087, %v4087
    %v4160 = vpack.c.bf16 %v4089, %v4089
    %v4162 = vsel %vm893, %v4157, 0
    %v4165 = vsel %vm711, %v4159, 0
    %4167 = vmatpush.bf16.msra.mxu0 0
    %4168 = vmatpush.bf16.msra.mxu0 0
    %4169 = vmatpush.bf16.msra.mxu0 0
    %4170 = vmatpush.bf16.msra.mxu0 0
    %4171 = vmatpush.bf16.msra.mxu0 0
    %4172 = vmatpush.bf16.msra.mxu0 0
    %4173 = vmatpush.bf16.msra.mxu0 0
    %4174 = vmatpush.bf16.msra.mxu0 %v4165
    %4175 = vmatmul.bf16.gmra.mxu0 %v4162
    %v4176 = vpop.f32.mrf.mxu0
    %v4177 = vadd.f32 0.0, %v4176
    %v4178 = vpop.f32.mrf.mxu0
    %4179 = vdwg.mxu0
    %v4181 = vsel %vm893, %v4158, 0
    %v4184 = vsel %vm711, %v4160, 0
    %4186 = vmatpush.bf16.msra.mxu0 0
    %4187 = vmatpush.bf16.msra.mxu0 0
    %4188 = vmatpush.bf16.msra.mxu0 0
    %4189 = vmatpush.bf16.msra.mxu0 0
    %4190 = vmatpush.bf16.msra.mxu0 0
    %4191 = vmatpush.bf16.msra.mxu0 0
    %4192 = vmatpush.bf16.msra.mxu0 0
    %4193 = vmatpush.bf16.msra.mxu0 %v4184
    %4194 = vmatmul.bf16.gmra.mxu0 %v4181
    %v4195 = vpop.f32.mrf.mxu0
    %v4196 = vadd.f32 0.0, %v4195
    %v4197 = vpop.f32.mrf.mxu0
    %4198 = vdwg.mxu0
    %v4199 = vld [vmem:[%s125] sm:$0xff]
    %v4200 = vld [vmem:[%s125 + $0x8] sm:$0xff]
    %v4201 = vpack.c.bf16 %v4196, %v4177
    %v4202 = vpack.c.bf16 %v4200, %v4199
    %s4203 = scalar_lea.vmem %s113, 64
    %v4204 = vld [vmem:[%s4203] sm:$0xff]
    %v4205 = vld [vmem:[%s4203 + $0x8] sm:$0xff]
    %v4206 = vld [vmem:[%s4203 + $0x10] sm:$0xff]
    %v4207 = vld [vmem:[%s4203 + $0x18] sm:$0xff]
    %v4208 = vld [vmem:[%s4203 + $0x20] sm:$0xff]
    %v4209 = vld [vmem:[%s4203 + $0x28] sm:$0xff]
    %v4210 = vld [vmem:[%s4203 + $0x30] sm:$0xff]
    %v4211 = vld [vmem:[%s4203 + $0x38] sm:$0xff]
    %v4212 = vpack.c.bf16 %v4205, %v4204
    %v4213 = vpack.c.bf16 %v4207, %v4206
    %v4214 = vpack.c.bf16 %v4209, %v4208
    %v4215 = vpack.c.bf16 %v4211, %v4210
    %s4216 = scalar_lea.vmem %s115, 1
    %v4217 = vld [vmem:[%s4216] sm:$0x1]
    %v4219 = vperm.slane %v4217, 0
    %4221 = vmatpush.bf16.msra.mxu0 0
    %4222 = vmatpush.bf16.msra.mxu0 0
    %4223 = vmatpush.bf16.msra.mxu0 0
    %4224 = vmatpush.bf16.msra.mxu0 0
    %4225 = vmatpush.bf16.msra.mxu0 %v4215
    %4226 = vmatpush.bf16.msra.mxu0 %v4214
    %4227 = vmatpush.bf16.msra.mxu0 %v4213
    %4228 = vmatpush.bf16.msra.mxu0 %v4212
    %4229 = vmatmul.bf16.gmra.mxu0 %v4015
    %v4230 = vpop.f32.mrf.mxu0
    %v4231 = vadd.f32 %v4219, %v4230
    %v4232 = vpop.f32.mrf.mxu0
    %v4233 = vadd.f32 %v4219, %v4232
    %4234 = vdwg.mxu0
    %s4235 = scalar_lea.vmem %s117, 64
    %v4236 = vld [vmem:[%s4235] sm:$0xff]
    %v4237 = vld [vmem:[%s4235 + $0x8] sm:$0xff]
    %v4238 = vld [vmem:[%s4235 + $0x10] sm:$0xff]
    %v4239 = vld [vmem:[%s4235 + $0x18] sm:$0xff]
    %v4240 = vld [vmem:[%s4235 + $0x20] sm:$0xff]
    %v4241 = vld [vmem:[%s4235 + $0x28] sm:$0xff]
    %v4242 = vld [vmem:[%s4235 + $0x30] sm:$0xff]
    %v4243 = vld [vmem:[%s4235 + $0x38] sm:$0xff]
    %v4244 = vpack.c.bf16 %v4237, %v4236
    %v4245 = vpack.c.bf16 %v4239, %v4238
    %v4246 = vpack.c.bf16 %v4241, %v4240
    %v4247 = vpack.c.bf16 %v4243, %v4242
    %s4248 = scalar_lea.vmem %s119, 1
    %v4249 = vld [vmem:[%s4248] sm:$0x1]
    %v4251 = vperm.slane %v4249, 0
    %4253 = vmatpush.bf16.msra.mxu0 0
    %4254 = vmatpush.bf16.msra.mxu0 0
    %4255 = vmatpush.bf16.msra.mxu0 0
    %4256 = vmatpush.bf16.msra.mxu0 0
    %4257 = vmatpush.bf16.msra.mxu0 %v4247
    %4258 = vmatpush.bf16.msra.mxu0 %v4246
    %4259 = vmatpush.bf16.msra.mxu0 %v4245
    %4260 = vmatpush.bf16.msra.mxu0 %v4244
    %4261 = vmatmul.bf16.gmra.mxu0 %v4015
    %v4262 = vpop.f32.mrf.mxu0
    %v4263 = vadd.f32 %v4251, %v4262
    %v4264 = vpop.f32.mrf.mxu0
    %v4265 = vadd.f32 %v4251, %v4264
    %4266 = vdwg.mxu0
    %s4267 = scalar_lea.vmem %s121, 64
    %v4268 = vld [vmem:[%s4267] sm:$0xff]
    %v4269 = vld [vmem:[%s4267 + $0x8] sm:$0xff]
    %v4270 = vld [vmem:[%s4267 + $0x10] sm:$0xff]
    %v4271 = vld [vmem:[%s4267 + $0x18] sm:$0xff]
    %v4272 = vld [vmem:[%s4267 + $0x20] sm:$0xff]
    %v4273 = vld [vmem:[%s4267 + $0x28] sm:$0xff]
    %v4274 = vld [vmem:[%s4267 + $0x30] sm:$0xff]
    %v4275 = vld [vmem:[%s4267 + $0x38] sm:$0xff]
    %v4276 = vpack.c.bf16 %v4269, %v4268
    %v4277 = vpack.c.bf16 %v4271, %v4270
    %v4278 = vpack.c.bf16 %v4273, %v4272
    %v4279 = vpack.c.bf16 %v4275, %v4274
    %s4280 = scalar_lea.vmem %s123, 1
    %v4281 = vld [vmem:[%s4280] sm:$0x1]
    %v4283 = vperm.slane %v4281, 0
    %4285 = vmatpush.bf16.msra.mxu0 0
    %4286 = vmatpush.bf16.msra.mxu0 0
    %4287 = vmatpush.bf16.msra.mxu0 0
    %4288 = vmatpush.bf16.msra.mxu0 0
    %4289 = vmatpush.bf16.msra.mxu0 %v4279
    %4290 = vmatpush.bf16.msra.mxu0 %v4278
    %4291 = vmatpush.bf16.msra.mxu0 %v4277
    %4292 = vmatpush.bf16.msra.mxu0 %v4276
    %4293 = vmatmul.bf16.gmra.mxu0 %v4015
    %v4294 = vpop.f32.mrf.mxu0
    %v4295 = vadd.f32 %v4283, %v4294
    %v4296 = vpop.f32.mrf.mxu0
    %v4297 = vadd.f32 %v4283, %v4296
    %4298 = vdwg.mxu0
    %v4299 = vpack.c.bf16 %v4231, %v4231
    %v4300 = vpack.c.bf16 %v4233, %v4233
    %v4301 = vpack.c.bf16 %v4263, %v4263
    %v4302 = vpack.c.bf16 %v4265, %v4265
    %v4304 = vsel %vm2008, %v4299, 0
    %v4307 = vsel %vm2008, %v4301, 0
    %4309 = vmatpush.bf16.xpose.msra.mxu0 0
    %4310 = vmatpush.bf16.xpose.msra.mxu0 0
    %4311 = vmatpush.bf16.xpose.msra.mxu0 0
    %4312 = vmatpush.bf16.xpose.msra.mxu0 0
    %4313 = vmatpush.bf16.xpose.msra.mxu0 0
    %4314 = vmatpush.bf16.xpose.msra.mxu0 0
    %4315 = vmatpush.bf16.xpose.msra.mxu0 0
    %4316 = vmatpush.bf16.xpose.msra.mxu0 %v4307
    %4317 = vmatmul.bf16.gmra.mxu0 %v4304
    %v4318 = vpop.f32.mrf.mxu0
    %v4319 = vadd.f32 0.0, %v4318
    %v4320 = vpop.f32.mrf.mxu0
    %4321 = vdwg.mxu0
    %v4323 = vsel %vm2008, %v4300, 0
    %v4326 = vsel %vm2008, %v4302, 0
    %4328 = vmatpush.bf16.xpose.msra.mxu0 0
    %4329 = vmatpush.bf16.xpose.msra.mxu0 0
    %4330 = vmatpush.bf16.xpose.msra.mxu0 0
    %4331 = vmatpush.bf16.xpose.msra.mxu0 0
    %4332 = vmatpush.bf16.xpose.msra.mxu0 0
    %4333 = vmatpush.bf16.xpose.msra.mxu0 0
    %4334 = vmatpush.bf16.xpose.msra.mxu0 0
    %4335 = vmatpush.bf16.xpose.msra.mxu0 %v4326
    %4336 = vmatmul.bf16.gmra.mxu0 %v4323
    %v4337 = vpop.f32.mrf.mxu0
    %v4338 = vadd.f32 0.0, %v4337
    %v4339 = vpop.f32.mrf.mxu0
    %4340 = vdwg.mxu0
    %v4341 = vmul.f32 %v4319, 0.25
    %v4342 = vmul.f32 %v4338, 0.25
    %v4343 = vsel %vm893, %v4341, -inf
    %4344 = vmax.xlane.f32.xlu0 %v4343
    %v4345 = vpop.xlane.xlu0 %4344
    %v4346 = vsel %vm893, %v4342, -inf
    %4347 = vmax.xlane.f32.xlu0 %v4346
    %v4348 = vpop.xlane.xlu0 %4347
    %v4349 = vsub.f32 %v4341, %v4345
    %v4350 = vsub.f32 %v4342, %v4348
    %v4351 = vmul.f32 %v4349, 1.442695
    %v4352 = vpow.pop %v4351
    %v4353 = vmul.f32 %v4350, 1.442695
    %v4354 = vpow.pop %v4353
    %v4355 = vsel %vm893, %v4352, 0.0
    %4356 = vadd.xlane.f32.xlu0 %v4355
    %v4357 = vpop.xlane.xlu0 %4356
    %v4358 = vsel %vm893, %v4354, 0.0
    %4359 = vadd.xlane.f32.xlu0 %v4358
    %v4360 = vpop.xlane.xlu0 %4359
    %v4361 = vrcp.pop %v4357
    %v4362 = vrcp.pop %v4360
    %v4363 = vmul.f32 %v4352, %v4361
    %v4364 = vmul.f32 %v4354, %v4362
    %v4365 = vpack.c.bf16 %v4363, %v4363
    %v4366 = vpack.c.bf16 %v4364, %v4364
    %v4367 = vpack.c.bf16 %v4295, %v4295
    %v4368 = vpack.c.bf16 %v4297, %v4297
    %v4370 = vsel %vm893, %v4365, 0
    %v4373 = vsel %vm711, %v4367, 0
    %4375 = vmatpush.bf16.msra.mxu0 0
    %4376 = vmatpush.bf16.msra.mxu0 0
    %4377 = vmatpush.bf16.msra.mxu0 0
    %4378 = vmatpush.bf16.msra.mxu0 0
    %4379 = vmatpush.bf16.msra.mxu0 0
    %4380 = vmatpush.bf16.msra.mxu0 0
    %4381 = vmatpush.bf16.msra.mxu0 0
    %4382 = vmatpush.bf16.msra.mxu0 %v4373
    %4383 = vmatmul.bf16.gmra.mxu0 %v4370
    %v4384 = vpop.f32.mrf.mxu0
    %v4385 = vadd.f32 0.0, %v4384
    %v4386 = vpop.f32.mrf.mxu0
    %4387 = vdwg.mxu0
    %v4389 = vsel %vm893, %v4366, 0
    %v4392 = vsel %vm711, %v4368, 0
    %4394 = vmatpush.bf16.msra.mxu0 0
    %4395 = vmatpush.bf16.msra.mxu0 0
    %4396 = vmatpush.bf16.msra.mxu0 0
    %4397 = vmatpush.bf16.msra.mxu0 0
    %4398 = vmatpush.bf16.msra.mxu0 0
    %4399 = vmatpush.bf16.msra.mxu0 0
    %4400 = vmatpush.bf16.msra.mxu0 0
    %4401 = vmatpush.bf16.msra.mxu0 %v4392
    %4402 = vmatmul.bf16.gmra.mxu0 %v4389
    %v4403 = vpop.f32.mrf.mxu0
    %v4404 = vadd.f32 0.0, %v4403
    %v4405 = vpop.f32.mrf.mxu0
    %4406 = vdwg.mxu0
    %s4407 = scalar_lea.vmem %s125, 16
    %v4408 = vld [vmem:[%s4407] sm:$0xff]
    %v4409 = vld [vmem:[%s4407 + $0x8] sm:$0xff]
    %v4410 = vpack.c.bf16 %v4404, %v4385
    %v4411 = vpack.c.bf16 %v4409, %v4408
    %v4413 = vsel %vm2008, %v4410, 0
    %4415 = vmatpush.bf16.msra.mxu0 0
    %4416 = vmatpush.bf16.msra.mxu0 0
    %4417 = vmatpush.bf16.msra.mxu0 0
    %4418 = vmatpush.bf16.msra.mxu0 0
    %4419 = vmatpush.bf16.msra.mxu0 0
    %4420 = vmatpush.bf16.msra.mxu0 0
    %4421 = vmatpush.bf16.msra.mxu0 0
    %4422 = vmatpush.bf16.msra.mxu0 %v4411
    %4423 = vmatmul.bf16.gmra.mxu0 %v4413
    %v4424 = vpop.f32.mrf.mxu0
    %v4425 = vadd.f32 0.0, %v4424
    %v4426 = vpop.f32.mrf.mxu0
    %v4427 = vadd.f32 0.0, %v4426
    %4428 = vdwg.mxu0
    %v4430 = vsel %vm2008, %v4201, 0
    %4432 = vmatpush.bf16.msra.mxu0 0
    %4433 = vmatpush.bf16.msra.mxu0 0
    %4434 = vmatpush.bf16.msra.mxu0 0
    %4435 = vmatpush.bf16.msra.mxu0 0
    %4436 = vmatpush.bf16.msra.mxu0 0
    %4437 = vmatpush.bf16.msra.mxu0 0
    %4438 = vmatpush.bf16.msra.mxu0 0
    %4439 = vmatpush.bf16.msra.mxu0 %v4202
    %4440 = vmatmul.bf16.gmra.mxu0 %v4430
    %v4441 = vpop.f32.mrf.mxu0
    %v4442 = vadd.f32 %v4425, %v4441
    %v4443 = vpop.f32.mrf.mxu0
    %v4444 = vadd.f32 %v4427, %v4443
    %4445 = vdwg.mxu0
    %s4446 = scalar_lea.vmem %s113, 128
    %v4447 = vld [vmem:[%s4446] sm:$0xff]
    %v4448 = vld [vmem:[%s4446 + $0x8] sm:$0xff]
    %v4449 = vld [vmem:[%s4446 + $0x10] sm:$0xff]
    %v4450 = vld [vmem:[%s4446 + $0x18] sm:$0xff]
    %v4451 = vld [vmem:[%s4446 + $0x20] sm:$0xff]
    %v4452 = vld [vmem:[%s4446 + $0x28] sm:$0xff]
    %v4453 = vld [vmem:[%s4446 + $0x30] sm:$0xff]
    %v4454 = vld [vmem:[%s4446 + $0x38] sm:$0xff]
    %v4455 = vpack.c.bf16 %v4448, %v4447
    %v4456 = vpack.c.bf16 %v4450, %v4449
    %v4457 = vpack.c.bf16 %v4452, %v4451
    %v4458 = vpack.c.bf16 %v4454, %v4453
    %s4459 = scalar_lea.vmem %s115, 2
    %v4460 = vld [vmem:[%s4459] sm:$0x1]
    %v4462 = vperm.slane %v4460, 0
    %4464 = vmatpush.bf16.msra.mxu0 0
    %4465 = vmatpush.bf16.msra.mxu0 0
    %4466 = vmatpush.bf16.msra.mxu0 0
    %4467 = vmatpush.bf16.msra.mxu0 0
    %4468 = vmatpush.bf16.msra.mxu0 %v4458
    %4469 = vmatpush.bf16.msra.mxu0 %v4457
    %4470 = vmatpush.bf16.msra.mxu0 %v4456
    %4471 = vmatpush.bf16.msra.mxu0 %v4455
    %4472 = vmatmul.bf16.gmra.mxu0 %v4015
    %v4473 = vpop.f32.mrf.mxu0
    %v4474 = vadd.f32 %v4462, %v4473
    %v4475 = vpop.f32.mrf.mxu0
    %v4476 = vadd.f32 %v4462, %v4475
    %4477 = vdwg.mxu0
    %s4478 = scalar_lea.vmem %s117, 128
    %v4479 = vld [vmem:[%s4478] sm:$0xff]
    %v4480 = vld [vmem:[%s4478 + $0x8] sm:$0xff]
    %v4481 = vld [vmem:[%s4478 + $0x10] sm:$0xff]
    %v4482 = vld [vmem:[%s4478 + $0x18] sm:$0xff]
    %v4483 = vld [vmem:[%s4478 + $0x20] sm:$0xff]
    %v4484 = vld [vmem:[%s4478 + $0x28] sm:$0xff]
    %v4485 = vld [vmem:[%s4478 + $0x30] sm:$0xff]
    %v4486 = vld [vmem:[%s4478 + $0x38] sm:$0xff]
    %v4487 = vpack.c.bf16 %v4480, %v4479
    %v4488 = vpack.c.bf16 %v4482, %v4481
    %v4489 = vpack.c.bf16 %v4484, %v4483
    %v4490 = vpack.c.bf16 %v4486, %v4485
    %s4491 = scalar_lea.vmem %s119, 2
    %v4492 = vld [vmem:[%s4491] sm:$0x1]
    %v4494 = vperm.slane %v4492, 0
    %4496 = vmatpush.bf16.msra.mxu0 0
    %4497 = vmatpush.bf16.msra.mxu0 0
    %4498 = vmatpush.bf16.msra.mxu0 0
    %4499 = vmatpush.bf16.msra.mxu0 0
    %4500 = vmatpush.bf16.msra.mxu0 %v4490
    %4501 = vmatpush.bf16.msra.mxu0 %v4489
    %4502 = vmatpush.bf16.msra.mxu0 %v4488
    %4503 = vmatpush.bf16.msra.mxu0 %v4487
    %4504 = vmatmul.bf16.gmra.mxu0 %v4015
    %v4505 = vpop.f32.mrf.mxu0
    %v4506 = vadd.f32 %v4494, %v4505
    %v4507 = vpop.f32.mrf.mxu0
    %v4508 = vadd.f32 %v4494, %v4507
    %4509 = vdwg.mxu0
    %s4510 = scalar_lea.vmem %s121, 128
    %v4511 = vld [vmem:[%s4510] sm:$0xff]
    %v4512 = vld [vmem:[%s4510 + $0x8] sm:$0xff]
    %v4513 = vld [vmem:[%s4510 + $0x10] sm:$0xff]
    %v4514 = vld [vmem:[%s4510 + $0x18] sm:$0xff]
    %v4515 = vld [vmem:[%s4510 + $0x20] sm:$0xff]
    %v4516 = vld [vmem:[%s4510 + $0x28] sm:$0xff]
    %v4517 = vld [vmem:[%s4510 + $0x30] sm:$0xff]
    %v4518 = vld [vmem:[%s4510 + $0x38] sm:$0xff]
    %v4519 = vpack.c.bf16 %v4512, %v4511
    %v4520 = vpack.c.bf16 %v4514, %v4513
    %v4521 = vpack.c.bf16 %v4516, %v4515
    %v4522 = vpack.c.bf16 %v4518, %v4517
    %s4523 = scalar_lea.vmem %s123, 2
    %v4524 = vld [vmem:[%s4523] sm:$0x1]
    %v4526 = vperm.slane %v4524, 0
    %4528 = vmatpush.bf16.msra.mxu0 0
    %4529 = vmatpush.bf16.msra.mxu0 0
    %4530 = vmatpush.bf16.msra.mxu0 0
    %4531 = vmatpush.bf16.msra.mxu0 0
    %4532 = vmatpush.bf16.msra.mxu0 %v4522
    %4533 = vmatpush.bf16.msra.mxu0 %v4521
    %4534 = vmatpush.bf16.msra.mxu0 %v4520
    %4535 = vmatpush.bf16.msra.mxu0 %v4519
    %4536 = vmatmul.bf16.gmra.mxu0 %v4015
    %v4537 = vpop.f32.mrf.mxu0
    %v4538 = vadd.f32 %v4526, %v4537
    %v4539 = vpop.f32.mrf.mxu0
    %v4540 = vadd.f32 %v4526, %v4539
    %4541 = vdwg.mxu0
    %v4542 = vpack.c.bf16 %v4474, %v4474
    %v4543 = vpack.c.bf16 %v4476, %v4476
    %v4544 = vpack.c.bf16 %v4506, %v4506
    %v4545 = vpack.c.bf16 %v4508, %v4508
    %v4547 = vsel %vm2008, %v4542, 0
    %v4550 = vsel %vm2008, %v4544, 0
    %4552 = vmatpush.bf16.xpose.msra.mxu0 0
    %4553 = vmatpush.bf16.xpose.msra.mxu0 0
    %4554 = vmatpush.bf16.xpose.msra.mxu0 0
    %4555 = vmatpush.bf16.xpose.msra.mxu0 0
    %4556 = vmatpush.bf16.xpose.msra.mxu0 0
    %4557 = vmatpush.bf16.xpose.msra.mxu0 0
    %4558 = vmatpush.bf16.xpose.msra.mxu0 0
    %4559 = vmatpush.bf16.xpose.msra.mxu0 %v4550
    %4560 = vmatmul.bf16.gmra.mxu0 %v4547
    %v4561 = vpop.f32.mrf.mxu0
    %v4562 = vadd.f32 0.0, %v4561
    %v4563 = vpop.f32.mrf.mxu0
    %4564 = vdwg.mxu0
    %v4566 = vsel %vm2008, %v4543, 0
    %v4569 = vsel %vm2008, %v4545, 0
    %4571 = vmatpush.bf16.xpose.msra.mxu0 0
    %4572 = vmatpush.bf16.xpose.msra.mxu0 0
    %4573 = vmatpush.bf16.xpose.msra.mxu0 0
    %4574 = vmatpush.bf16.xpose.msra.mxu0 0
    %4575 = vmatpush.bf16.xpose.msra.mxu0 0
    %4576 = vmatpush.bf16.xpose.msra.mxu0 0
    %4577 = vmatpush.bf16.xpose.msra.mxu0 0
    %4578 = vmatpush.bf16.xpose.msra.mxu0 %v4569
    %4579 = vmatmul.bf16.gmra.mxu0 %v4566
    %v4580 = vpop.f32.mrf.mxu0
    %v4581 = vadd.f32 0.0, %v4580
    %v4582 = vpop.f32.mrf.mxu0
    %4583 = vdwg.mxu0
    %v4584 = vmul.f32 %v4562, 0.25
    %v4585 = vmul.f32 %v4581, 0.25
    %v4586 = vsel %vm893, %v4584, -inf
    %4587 = vmax.xlane.f32.xlu0 %v4586
    %v4588 = vpop.xlane.xlu0 %4587
    %v4589 = vsel %vm893, %v4585, -inf
    %4590 = vmax.xlane.f32.xlu0 %v4589
    %v4591 = vpop.xlane.xlu0 %4590
    %v4592 = vsub.f32 %v4584, %v4588
    %v4593 = vsub.f32 %v4585, %v4591
    %v4594 = vmul.f32 %v4592, 1.442695
    %v4595 = vpow.pop %v4594
    %v4596 = vmul.f32 %v4593, 1.442695
    %v4597 = vpow.pop %v4596
    %v4598 = vsel %vm893, %v4595, 0.0
    %4599 = vadd.xlane.f32.xlu0 %v4598
    %v4600 = vpop.xlane.xlu0 %4599
    %v4601 = vsel %vm893, %v4597, 0.0
    %4602 = vadd.xlane.f32.xlu0 %v4601
    %v4603 = vpop.xlane.xlu0 %4602
    %v4604 = vrcp.pop %v4600
    %v4605 = vrcp.pop %v4603
    %v4606 = vmul.f32 %v4595, %v4604
    %v4607 = vmul.f32 %v4597, %v4605
    %v4608 = vpack.c.bf16 %v4606, %v4606
    %v4609 = vpack.c.bf16 %v4607, %v4607
    %v4610 = vpack.c.bf16 %v4538, %v4538
    %v4611 = vpack.c.bf16 %v4540, %v4540
    %v4613 = vsel %vm893, %v4608, 0
    %v4616 = vsel %vm711, %v4610, 0
    %4618 = vmatpush.bf16.msra.mxu0 0
    %4619 = vmatpush.bf16.msra.mxu0 0
    %4620 = vmatpush.bf16.msra.mxu0 0
    %4621 = vmatpush.bf16.msra.mxu0 0
    %4622 = vmatpush.bf16.msra.mxu0 0
    %4623 = vmatpush.bf16.msra.mxu0 0
    %4624 = vmatpush.bf16.msra.mxu0 0
    %4625 = vmatpush.bf16.msra.mxu0 %v4616
    %4626 = vmatmul.bf16.gmra.mxu0 %v4613
    %v4627 = vpop.f32.mrf.mxu0
    %v4628 = vadd.f32 0.0, %v4627
    %v4629 = vpop.f32.mrf.mxu0
    %4630 = vdwg.mxu0
    %v4632 = vsel %vm893, %v4609, 0
    %v4635 = vsel %vm711, %v4611, 0
    %4637 = vmatpush.bf16.msra.mxu0 0
    %4638 = vmatpush.bf16.msra.mxu0 0
    %4639 = vmatpush.bf16.msra.mxu0 0
    %4640 = vmatpush.bf16.msra.mxu0 0
    %4641 = vmatpush.bf16.msra.mxu0 0
    %4642 = vmatpush.bf16.msra.mxu0 0
    %4643 = vmatpush.bf16.msra.mxu0 0
    %4644 = vmatpush.bf16.msra.mxu0 %v4635
    %4645 = vmatmul.bf16.gmra.mxu0 %v4632
    %v4646 = vpop.f32.mrf.mxu0
    %v4647 = vadd.f32 0.0, %v4646
    %v4648 = vpop.f32.mrf.mxu0
    %4649 = vdwg.mxu0
    %s4650 = scalar_lea.vmem %s125, 32
    %v4651 = vld [vmem:[%s4650] sm:$0xff]
    %v4652 = vld [vmem:[%s4650 + $0x8] sm:$0xff]
    %v4653 = vpack.c.bf16 %v4647, %v4628
    %v4654 = vpack.c.bf16 %v4652, %v4651
    %v4656 = vsel %vm2008, %v4653, 0
    %4658 = vmatpush.bf16.msra.mxu0 0
    %4659 = vmatpush.bf16.msra.mxu0 0
    %4660 = vmatpush.bf16.msra.mxu0 0
    %4661 = vmatpush.bf16.msra.mxu0 0
    %4662 = vmatpush.bf16.msra.mxu0 0
    %4663 = vmatpush.bf16.msra.mxu0 0
    %4664 = vmatpush.bf16.msra.mxu0 0
    %4665 = vmatpush.bf16.msra.mxu0 %v4654
    %4666 = vmatmul.bf16.gmra.mxu0 %v4656
    %v4667 = vpop.f32.mrf.mxu0
    %v4668 = vadd.f32 0.0, %v4667
    %v4669 = vpop.f32.mrf.mxu0
    %v4670 = vadd.f32 0.0, %v4669
    %4671 = vdwg.mxu0
    %v4672 = vadd.f32 %v4442, %v4668
    %v4673 = vadd.f32 %v4444, %v4670
    %s4674 = scalar_lea.vmem %s113, 192
    %v4675 = vld [vmem:[%s4674] sm:$0xff]
    %v4676 = vld [vmem:[%s4674 + $0x8] sm:$0xff]
    %v4677 = vld [vmem:[%s4674 + $0x10] sm:$0xff]
    %v4678 = vld [vmem:[%s4674 + $0x18] sm:$0xff]
    %v4679 = vld [vmem:[%s4674 + $0x20] sm:$0xff]
    %v4680 = vld [vmem:[%s4674 + $0x28] sm:$0xff]
    %v4681 = vld [vmem:[%s4674 + $0x30] sm:$0xff]
    %v4682 = vld [vmem:[%s4674 + $0x38] sm:$0xff]
    %v4683 = vpack.c.bf16 %v4676, %v4675
    %v4684 = vpack.c.bf16 %v4678, %v4677
    %v4685 = vpack.c.bf16 %v4680, %v4679
    %v4686 = vpack.c.bf16 %v4682, %v4681
    %s4687 = scalar_lea.vmem %s115, 3
    %v4688 = vld [vmem:[%s4687] sm:$0x1]
    %v4690 = vperm.slane %v4688, 0
    %4692 = vmatpush.bf16.msra.mxu0 0
    %4693 = vmatpush.bf16.msra.mxu0 0
    %4694 = vmatpush.bf16.msra.mxu0 0
    %4695 = vmatpush.bf16.msra.mxu0 0
    %4696 = vmatpush.bf16.msra.mxu0 %v4686
    %4697 = vmatpush.bf16.msra.mxu0 %v4685
    %4698 = vmatpush.bf16.msra.mxu0 %v4684
    %4699 = vmatpush.bf16.msra.mxu0 %v4683
    %4700 = vmatmul.bf16.gmra.mxu0 %v4015
    %v4701 = vpop.f32.mrf.mxu0
    %v4702 = vadd.f32 %v4690, %v4701
    %v4703 = vpop.f32.mrf.mxu0
    %v4704 = vadd.f32 %v4690, %v4703
    %4705 = vdwg.mxu0
    %s4706 = scalar_lea.vmem %s117, 192
    %v4707 = vld [vmem:[%s4706] sm:$0xff]
    %v4708 = vld [vmem:[%s4706 + $0x8] sm:$0xff]
    %v4709 = vld [vmem:[%s4706 + $0x10] sm:$0xff]
    %v4710 = vld [vmem:[%s4706 + $0x18] sm:$0xff]
    %v4711 = vld [vmem:[%s4706 + $0x20] sm:$0xff]
    %v4712 = vld [vmem:[%s4706 + $0x28] sm:$0xff]
    %v4713 = vld [vmem:[%s4706 + $0x30] sm:$0xff]
    %v4714 = vld [vmem:[%s4706 + $0x38] sm:$0xff]
    %v4715 = vpack.c.bf16 %v4708, %v4707
    %v4716 = vpack.c.bf16 %v4710, %v4709
    %v4717 = vpack.c.bf16 %v4712, %v4711
    %v4718 = vpack.c.bf16 %v4714, %v4713
    %s4719 = scalar_lea.vmem %s119, 3
    %v4720 = vld [vmem:[%s4719] sm:$0x1]
    %v4722 = vperm.slane %v4720, 0
    %4724 = vmatpush.bf16.msra.mxu0 0
    %4725 = vmatpush.bf16.msra.mxu0 0
    %4726 = vmatpush.bf16.msra.mxu0 0
    %4727 = vmatpush.bf16.msra.mxu0 0
    %4728 = vmatpush.bf16.msra.mxu0 %v4718
    %4729 = vmatpush.bf16.msra.mxu0 %v4717
    %4730 = vmatpush.bf16.msra.mxu0 %v4716
    %4731 = vmatpush.bf16.msra.mxu0 %v4715
    %4732 = vmatmul.bf16.gmra.mxu0 %v4015
    %v4733 = vpop.f32.mrf.mxu0
    %v4734 = vadd.f32 %v4722, %v4733
    %v4735 = vpop.f32.mrf.mxu0
    %v4736 = vadd.f32 %v4722, %v4735
    %4737 = vdwg.mxu0
    %s4738 = scalar_lea.vmem %s121, 192
    %v4739 = vld [vmem:[%s4738] sm:$0xff]
    %v4740 = vld [vmem:[%s4738 + $0x8] sm:$0xff]
    %v4741 = vld [vmem:[%s4738 + $0x10] sm:$0xff]
    %v4742 = vld [vmem:[%s4738 + $0x18] sm:$0xff]
    %v4743 = vld [vmem:[%s4738 + $0x20] sm:$0xff]
    %v4744 = vld [vmem:[%s4738 + $0x28] sm:$0xff]
    %v4745 = vld [vmem:[%s4738 + $0x30] sm:$0xff]
    %v4746 = vld [vmem:[%s4738 + $0x38] sm:$0xff]
    %v4747 = vpack.c.bf16 %v4740, %v4739
    %v4748 = vpack.c.bf16 %v4742, %v4741
    %v4749 = vpack.c.bf16 %v4744, %v4743
    %v4750 = vpack.c.bf16 %v4746, %v4745
    %s4751 = scalar_lea.vmem %s123, 3
    %v4752 = vld [vmem:[%s4751] sm:$0x1]
    %v4754 = vperm.slane %v4752, 0
    %4756 = vmatpush.bf16.msra.mxu0 0
    %4757 = vmatpush.bf16.msra.mxu0 0
    %4758 = vmatpush.bf16.msra.mxu0 0
    %4759 = vmatpush.bf16.msra.mxu0 0
    %4760 = vmatpush.bf16.msra.mxu0 %v4750
    %4761 = vmatpush.bf16.msra.mxu0 %v4749
    %4762 = vmatpush.bf16.msra.mxu0 %v4748
    %4763 = vmatpush.bf16.msra.mxu0 %v4747
    %4764 = vmatmul.bf16.gmra.mxu0 %v4015
    %v4765 = vpop.f32.mrf.mxu0
    %v4766 = vadd.f32 %v4754, %v4765
    %v4767 = vpop.f32.mrf.mxu0
    %v4768 = vadd.f32 %v4754, %v4767
    %4769 = vdwg.mxu0
    %v4770 = vpack.c.bf16 %v4702, %v4702
    %v4771 = vpack.c.bf16 %v4704, %v4704
    %v4772 = vpack.c.bf16 %v4734, %v4734
    %v4773 = vpack.c.bf16 %v4736, %v4736
    %v4775 = vsel %vm2008, %v4770, 0
    %v4778 = vsel %vm2008, %v4772, 0
    %4780 = vmatpush.bf16.xpose.msra.mxu0 0
    %4781 = vmatpush.bf16.xpose.msra.mxu0 0
    %4782 = vmatpush.bf16.xpose.msra.mxu0 0
    %4783 = vmatpush.bf16.xpose.msra.mxu0 0
    %4784 = vmatpush.bf16.xpose.msra.mxu0 0
    %4785 = vmatpush.bf16.xpose.msra.mxu0 0
    %4786 = vmatpush.bf16.xpose.msra.mxu0 0
    %4787 = vmatpush.bf16.xpose.msra.mxu0 %v4778
    %4788 = vmatmul.bf16.gmra.mxu0 %v4775
    %v4789 = vpop.f32.mrf.mxu0
    %v4790 = vadd.f32 0.0, %v4789
    %v4791 = vpop.f32.mrf.mxu0
    %4792 = vdwg.mxu0
    %v4794 = vsel %vm2008, %v4771, 0
    %v4797 = vsel %vm2008, %v4773, 0
    %4799 = vmatpush.bf16.xpose.msra.mxu0 0
    %4800 = vmatpush.bf16.xpose.msra.mxu0 0
    %4801 = vmatpush.bf16.xpose.msra.mxu0 0
    %4802 = vmatpush.bf16.xpose.msra.mxu0 0
    %4803 = vmatpush.bf16.xpose.msra.mxu0 0
    %4804 = vmatpush.bf16.xpose.msra.mxu0 0
    %4805 = vmatpush.bf16.xpose.msra.mxu0 0
    %4806 = vmatpush.bf16.xpose.msra.mxu0 %v4797
    %4807 = vmatmul.bf16.gmra.mxu0 %v4794
    %v4808 = vpop.f32.mrf.mxu0
    %v4809 = vadd.f32 0.0, %v4808
    %v4810 = vpop.f32.mrf.mxu0
    %4811 = vdwg.mxu0
    %v4812 = vmul.f32 %v4790, 0.25
    %v4813 = vmul.f32 %v4809, 0.25
    %v4814 = vsel %vm893, %v4812, -inf
    %4815 = vmax.xlane.f32.xlu0 %v4814
    %v4816 = vpop.xlane.xlu0 %4815
    %v4817 = vsel %vm893, %v4813, -inf
    %4818 = vmax.xlane.f32.xlu0 %v4817
    %v4819 = vpop.xlane.xlu0 %4818
    %v4820 = vsub.f32 %v4812, %v4816
    %v4821 = vsub.f32 %v4813, %v4819
    %v4822 = vmul.f32 %v4820, 1.442695
    %v4823 = vpow.pop %v4822
    %v4824 = vmul.f32 %v4821, 1.442695
    %v4825 = vpow.pop %v4824
    %v4826 = vsel %vm893, %v4823, 0.0
    %4827 = vadd.xlane.f32.xlu0 %v4826
    %v4828 = vpop.xlane.xlu0 %4827
    %v4829 = vsel %vm893, %v4825, 0.0
    %4830 = vadd.xlane.f32.xlu0 %v4829
    %v4831 = vpop.xlane.xlu0 %4830
    %v4832 = vrcp.pop %v4828
    %v4833 = vrcp.pop %v4831
    %v4834 = vmul.f32 %v4823, %v4832
    %v4835 = vmul.f32 %v4825, %v4833
    %v4836 = vpack.c.bf16 %v4834, %v4834
    %v4837 = vpack.c.bf16 %v4835, %v4835
    %v4838 = vpack.c.bf16 %v4766, %v4766
    %v4839 = vpack.c.bf16 %v4768, %v4768
    %v4841 = vsel %vm893, %v4836, 0
    %v4844 = vsel %vm711, %v4838, 0
    %4846 = vmatpush.bf16.msra.mxu0 0
    %4847 = vmatpush.bf16.msra.mxu0 0
    %4848 = vmatpush.bf16.msra.mxu0 0
    %4849 = vmatpush.bf16.msra.mxu0 0
    %4850 = vmatpush.bf16.msra.mxu0 0
    %4851 = vmatpush.bf16.msra.mxu0 0
    %4852 = vmatpush.bf16.msra.mxu0 0
    %4853 = vmatpush.bf16.msra.mxu0 %v4844
    %4854 = vmatmul.bf16.gmra.mxu0 %v4841
    %v4855 = vpop.f32.mrf.mxu0
    %v4856 = vadd.f32 0.0, %v4855
    %v4857 = vpop.f32.mrf.mxu0
    %4858 = vdwg.mxu0
    %v4860 = vsel %vm893, %v4837, 0
    %v4863 = vsel %vm711, %v4839, 0
    %4865 = vmatpush.bf16.msra.mxu0 0
    %4866 = vmatpush.bf16.msra.mxu0 0
    %4867 = vmatpush.bf16.msra.mxu0 0
    %4868 = vmatpush.bf16.msra.mxu0 0
    %4869 = vmatpush.bf16.msra.mxu0 0
    %4870 = vmatpush.bf16.msra.mxu0 0
    %4871 = vmatpush.bf16.msra.mxu0 0
    %4872 = vmatpush.bf16.msra.mxu0 %v4863
    %4873 = vmatmul.bf16.gmra.mxu0 %v4860
    %v4874 = vpop.f32.mrf.mxu0
    %v4875 = vadd.f32 0.0, %v4874
    %v4876 = vpop.f32.mrf.mxu0
    %4877 = vdwg.mxu0
    %s4878 = scalar_lea.vmem %s125, 48
    %v4879 = vld [vmem:[%s4878] sm:$0xff]
    %v4880 = vld [vmem:[%s4878 + $0x8] sm:$0xff]
    %v4881 = vpack.c.bf16 %v4875, %v4856
    %v4882 = vpack.c.bf16 %v4880, %v4879
    %v4884 = vsel %vm2008, %v4881, 0
    %4886 = vmatpush.bf16.msra.mxu0 0
    %4887 = vmatpush.bf16.msra.mxu0 0
    %4888 = vmatpush.bf16.msra.mxu0 0
    %4889 = vmatpush.bf16.msra.mxu0 0
    %4890 = vmatpush.bf16.msra.mxu0 0
    %4891 = vmatpush.bf16.msra.mxu0 0
    %4892 = vmatpush.bf16.msra.mxu0 0
    %4893 = vmatpush.bf16.msra.mxu0 %v4882
    %4894 = vmatmul.bf16.gmra.mxu0 %v4884
    %v4895 = vpop.f32.mrf.mxu0
    %v4896 = vadd.f32 0.0, %v4895
    %v4897 = vpop.f32.mrf.mxu0
    %v4898 = vadd.f32 0.0, %v4897
    %4899 = vdwg.mxu0
    %v4900 = vadd.f32 %v4672, %v4896
    %v4901 = vadd.f32 %v4673, %v4898
    %v4902 = vld [vmem:[#allocation26] sm:$0x1]
    %v4904 = vperm.slane %v4902, 0
    %v4906 = vadd.f32 %v4900, %v4904
    %v4907 = vadd.f32 %v4901, %v4904
    %v4908 = vadd.f32 %v3995, %v4906
    %v4909 = vadd.f32 %v3996, %v4907
    %v4910 = vsel %vm1781, %v4908, 0.0
    %4911 = vadd.xlane.f32.xlu0 %v4910
    %v4912 = vpop.xlane.xlu0 %4911
    %v4913 = vsel %vm1781, %v4909, 0.0
    %4914 = vadd.xlane.f32.xlu0 %v4913
    %v4915 = vpop.xlane.xlu0 %4914
    %v4916 = vmul.f32 %v4912, %v2836
    %v4917 = vmul.f32 %v4915, %v2836
    %v4918 = vsub.f32 %v4908, %v4916
    %v4919 = vsub.f32 %v4909, %v4917
    %v4920 = vmul.f32 %v4918, %v4918
    %v4921 = vmul.f32 %v4919, %v4919
    %v4922 = vsel %vm1781, %v4920, 0.0
    %4923 = vadd.xlane.f32.xlu0 %v4922
    %v4924 = vpop.xlane.xlu0 %4923
    %v4925 = vsel %vm1781, %v4921, 0.0
    %4926 = vadd.xlane.f32.xlu0 %v4925
    %v4927 = vpop.xlane.xlu0 %4926
    %v4928 = vmul.f32 %v4924, %v2836
    %v4929 = vmul.f32 %v4927, %v2836
    %v4930 = vadd.f32 %v4928, 1e-05
    %v4931 = vadd.f32 %v4929, 1e-05
    %v4932 = vrsqrt.pop %v4930
    %v4933 = vmul.f32 %v4932, %v4930
    %v4934 = vmul.f32 %v4933, %v4932
    %v4935 = vmul.f32 0.5, %v4934
    %v4936 = vsub.f32 1.5, %v4935
    %v4937 = vmul.f32 %v4932, %v4936
    %vm4938 = vweird.f32 %v4930
    %vm4939 = vweird.f32 %v4932
    %vm4940 = vmor %vm4938, %vm4939
    %v4941 = vsel %vm4940, %v4932, %v4937
    %v4942 = vrsqrt.pop %v4931
    %v4943 = vmul.f32 %v4942, %v4931
    %v4944 = vmul.f32 %v4943, %v4942
    %v4945 = vmul.f32 0.5, %v4944
    %v4946 = vsub.f32 1.5, %v4945
    %v4947 = vmul.f32 %v4942, %v4946
    %vm4948 = vweird.f32 %v4931
    %vm4949 = vweird.f32 %v4942
    %vm4950 = vmor %vm4948, %vm4949
    %v4951 = vsel %vm4950, %v4942, %v4947
    %v4952 = vmul.f32 %v4918, %v4941
    %v4953 = vmul.f32 %v4919, %v4951
    %v4954 = vld [vmem:[#allocation28] sm:$0x1]
    %v4956 = vperm.slane %v4954, 0
    %v4958 = vmul.f32 %v4952, %v4956
    %v4959 = vmul.f32 %v4953, %v4956
    %v4960 = vld [vmem:[#allocation29] sm:$0x1]
    %v4962 = vperm.slane %v4960, 0
    %v4964 = vadd.f32 %v4958, %v4962
    %v4965 = vadd.f32 %v4959, %v4962
    %v4966 = vld [vmem:[%s133] sm:$0xff]
    %v4967 = vld [vmem:[%s133 + $0x8] sm:$0xff]
    %v4968 = vld [vmem:[%s133 + $0x10] sm:$0xff]
    %v4969 = vld [vmem:[%s133 + $0x18] sm:$0xff]
    %v4970 = vld [vmem:[%s133 + $0x20] sm:$0xff]
    %v4971 = vld [vmem:[%s133 + $0x28] sm:$0xff]
    %v4972 = vld [vmem:[%s133 + $0x30] sm:$0xff]
    %v4973 = vld [vmem:[%s133 + $0x38] sm:$0xff]
    %v4974 = vpack.c.bf16 %v4965, %v4964
    %v4975 = vpack.c.bf16 %v4967, %v4966
    %v4976 = vpack.c.bf16 %v4969, %v4968
    %v4977 = vpack.c.bf16 %v4971, %v4970
    %v4978 = vpack.c.bf16 %v4973, %v4972
    %v4979 = vld [vmem:[%s135] sm:$0x1]
    %v4981 = vperm.slane %v4979, 0
    %v4984 = vsel %vm1781, %v4974, 0
    %4986 = vmatpush.bf16.msra.mxu0 0
    %4987 = vmatpush.bf16.msra.mxu0 0
    %4988 = vmatpush.bf16.msra.mxu0 0
    %4989 = vmatpush.bf16.msra.mxu0 0
    %4990 = vmatpush.bf16.msra.mxu0 %v4978
    %4991 = vmatpush.bf16.msra.mxu0 %v4977
    %4992 = vmatpush.bf16.msra.mxu0 %v4976
    %4993 = vmatpush.bf16.msra.mxu0 %v4975
    %4994 = vmatmul.bf16.gmra.mxu0 %v4984
    %v4995 = vpop.f32.mrf.mxu0
    %v4996 = vadd.f32 %v4981, %v4995
    %v4997 = vpop.f32.mrf.mxu0
    %v4998 = vadd.f32 %v4981, %v4997
    %4999 = vdwg.mxu0
    %v5000 = vld [vmem:[%s137] sm:$0xff]
    %v5001 = vld [vmem:[%s137 + $0x8] sm:$0xff]
    %v5002 = vld [vmem:[%s137 + $0x10] sm:$0xff]
    %v5003 = vld [vmem:[%s137 + $0x18] sm:$0xff]
    %v5004 = vld [vmem:[%s137 + $0x20] sm:$0xff]
    %v5005 = vld [vmem:[%s137 + $0x28] sm:$0xff]
    %v5006 = vld [vmem:[%s137 + $0x30] sm:$0xff]
    %v5007 = vld [vmem:[%s137 + $0x38] sm:$0xff]
    %v5008 = vpack.c.bf16 %v5001, %v5000
    %v5009 = vpack.c.bf16 %v5003, %v5002
    %v5010 = vpack.c.bf16 %v5005, %v5004
    %v5011 = vpack.c.bf16 %v5007, %v5006
    %v5012 = vld [vmem:[%s139] sm:$0x1]
    %v5014 = vperm.slane %v5012, 0
    %5016 = vmatpush.bf16.msra.mxu0 0
    %5017 = vmatpush.bf16.msra.mxu0 0
    %5018 = vmatpush.bf16.msra.mxu0 0
    %5019 = vmatpush.bf16.msra.mxu0 0
    %5020 = vmatpush.bf16.msra.mxu0 %v5011
    %5021 = vmatpush.bf16.msra.mxu0 %v5010
    %5022 = vmatpush.bf16.msra.mxu0 %v5009
    %5023 = vmatpush.bf16.msra.mxu0 %v5008
    %5024 = vmatmul.bf16.gmra.mxu0 %v2939
    %v5025 = vpop.f32.mrf.mxu0
    %v5026 = vadd.f32 %v5014, %v5025
    %v5027 = vpop.f32.mrf.mxu0
    %v5028 = vadd.f32 %v5014, %v5027
    %5029 = vdwg.mxu0
    %v5030 = vld [vmem:[%s141] sm:$0xff]
    %v5031 = vld [vmem:[%s141 + $0x8] sm:$0xff]
    %v5032 = vld [vmem:[%s141 + $0x10] sm:$0xff]
    %v5033 = vld [vmem:[%s141 + $0x18] sm:$0xff]
    %v5034 = vld [vmem:[%s141 + $0x20] sm:$0xff]
    %v5035 = vld [vmem:[%s141 + $0x28] sm:$0xff]
    %v5036 = vld [vmem:[%s141 + $0x30] sm:$0xff]
    %v5037 = vld [vmem:[%s141 + $0x38] sm:$0xff]
    %v5038 = vpack.c.bf16 %v5031, %v5030
    %v5039 = vpack.c.bf16 %v5033, %v5032
    %v5040 = vpack.c.bf16 %v5035, %v5034
    %v5041 = vpack.c.bf16 %v5037, %v5036
    %v5042 = vld [vmem:[%s143] sm:$0x1]
    %v5044 = vperm.slane %v5042, 0
    %5046 = vmatpush.bf16.msra.mxu0 0
    %5047 = vmatpush.bf16.msra.mxu0 0
    %5048 = vmatpush.bf16.msra.mxu0 0
    %5049 = vmatpush.bf16.msra.mxu0 0
    %5050 = vmatpush.bf16.msra.mxu0 %v5041
    %5051 = vmatpush.bf16.msra.mxu0 %v5040
    %5052 = vmatpush.bf16.msra.mxu0 %v5039
    %5053 = vmatpush.bf16.msra.mxu0 %v5038
    %5054 = vmatmul.bf16.gmra.mxu0 %v2939
    %v5055 = vpop.f32.mrf.mxu0
    %v5056 = vadd.f32 %v5044, %v5055
    %v5057 = vpop.f32.mrf.mxu0
    %v5058 = vadd.f32 %v5044, %v5057
    %5059 = vdwg.mxu0
    %v5060 = vpack.c.bf16 %v4996, %v4996
    %v5061 = vpack.c.bf16 %v4998, %v4998
    %v5062 = vpack.c.bf16 %v5026, %v5026
    %v5063 = vpack.c.bf16 %v5028, %v5028
    %v5065 = vsel %vm2008, %v5060, 0
    %v5068 = vsel %vm2008, %v5062, 0
    %5070 = vmatpush.bf16.xpose.msra.mxu0 0
    %5071 = vmatpush.bf16.xpose.msra.mxu0 0
    %5072 = vmatpush.bf16.xpose.msra.mxu0 0
    %5073 = vmatpush.bf16.xpose.msra.mxu0 0
    %5074 = vmatpush.bf16.xpose.msra.mxu0 0
    %5075 = vmatpush.bf16.xpose.msra.mxu0 0
    %5076 = vmatpush.bf16.xpose.msra.mxu0 0
    %5077 = vmatpush.bf16.xpose.msra.mxu0 %v5068
    %5078 = vmatmul.bf16.gmra.mxu0 %v5065
    %v5079 = vpop.f32.mrf.mxu0
    %v5080 = vadd.f32 0.0, %v5079
    %v5081 = vpop.f32.mrf.mxu0
    %5082 = vdwg.mxu0
    %v5084 = vsel %vm2008, %v5061, 0
    %v5087 = vsel %vm2008, %v5063, 0
    %5089 = vmatpush.bf16.xpose.msra.mxu0 0
    %5090 = vmatpush.bf16.xpose.msra.mxu0 0
    %5091 = vmatpush.bf16.xpose.msra.mxu0 0
    %5092 = vmatpush.bf16.xpose.msra.mxu0 0
    %5093 = vmatpush.bf16.xpose.msra.mxu0 0
    %5094 = vmatpush.bf16.xpose.msra.mxu0 0
    %5095 = vmatpush.bf16.xpose.msra.mxu0 0
    %5096 = vmatpush.bf16.xpose.msra.mxu0 %v5087
    %5097 = vmatmul.bf16.gmra.mxu0 %v5084
    %v5098 = vpop.f32.mrf.mxu0
    %v5099 = vadd.f32 0.0, %v5098
    %v5100 = vpop.f32.mrf.mxu0
    %5101 = vdwg.mxu0
    %v5102 = vmul.f32 %v5080, 0.25
    %v5103 = vmul.f32 %v5099, 0.25
    %v5104 = vsel %vm893, %v5102, -inf
    %5105 = vmax.xlane.f32.xlu0 %v5104
    %v5106 = vpop.xlane.xlu0 %5105
    %v5107 = vsel %vm893, %v5103, -inf
    %5108 = vmax.xlane.f32.xlu0 %v5107
    %v5109 = vpop.xlane.xlu0 %5108
    %v5110 = vsub.f32 %v5102, %v5106
    %v5111 = vsub.f32 %v5103, %v5109
    %v5112 = vmul.f32 %v5110, 1.442695
    %v5113 = vpow.pop %v5112
    %v5114 = vmul.f32 %v5111, 1.442695
    %v5115 = vpow.pop %v5114
    %v5116 = vsel %vm893, %v5113, 0.0
    %5117 = vadd.xlane.f32.xlu0 %v5116
    %v5118 = vpop.xlane.xlu0 %5117
    %v5119 = vsel %vm893, %v5115, 0.0
    %5120 = vadd.xlane.f32.xlu0 %v5119
    %v5121 = vpop.xlane.xlu0 %5120
    %v5122 = vrcp.pop %v5118
    %v5123 = vrcp.pop %v5121
    %v5124 = vmul.f32 %v5113, %v5122
    %v5125 = vmul.f32 %v5115, %v5123
    %v5126 = vpack.c.bf16 %v5124, %v5124
    %v5127 = vpack.c.bf16 %v5125, %v5125
    %v5128 = vpack.c.bf16 %v5056, %v5056
    %v5129 = vpack.c.bf16 %v5058, %v5058
    %v5131 = vsel %vm893, %v5126, 0
    %v5134 = vsel %vm711, %v5128, 0
    %5136 = vmatpush.bf16.msra.mxu0 0
    %5137 = vmatpush.bf16.msra.mxu0 0
    %5138 = vmatpush.bf16.msra.mxu0 0
    %5139 = vmatpush.bf16.msra.mxu0 0
    %5140 = vmatpush.bf16.msra.mxu0 0
    %5141 = vmatpush.bf16.msra.mxu0 0
    %5142 = vmatpush.bf16.msra.mxu0 0
    %5143 = vmatpush.bf16.msra.mxu0 %v5134
    %5144 = vmatmul.bf16.gmra.mxu0 %v5131
    %v5145 = vpop.f32.mrf.mxu0
    %v5146 = vadd.f32 0.0, %v5145
    %v5147 = vpop.f32.mrf.mxu0
    %5148 = vdwg.mxu0
    %v5150 = vsel %vm893, %v5127, 0
    %v5153 = vsel %vm711, %v5129, 0
    %5155 = vmatpush.bf16.msra.mxu0 0
    %5156 = vmatpush.bf16.msra.mxu0 0
    %5157 = vmatpush.bf16.msra.mxu0 0
    %5158 = vmatpush.bf16.msra.mxu0 0
    %5159 = vmatpush.bf16.msra.mxu0 0
    %5160 = vmatpush.bf16.msra.mxu0 0
    %5161 = vmatpush.bf16.msra.mxu0 0
    %5162 = vmatpush.bf16.msra.mxu0 %v5153
    %5163 = vmatmul.bf16.gmra.mxu0 %v5150
    %v5164 = vpop.f32.mrf.mxu0
    %v5165 = vadd.f32 0.0, %v5164
    %v5166 = vpop.f32.mrf.mxu0
    %5167 = vdwg.mxu0
    %v5168 = vld [vmem:[%s145] sm:$0xff]
    %v5169 = vld [vmem:[%s145 + $0x8] sm:$0xff]
    %v5170 = vpack.c.bf16 %v5165, %v5146
    %v5171 = vpack.c.bf16 %v5169, %v5168
    %s5172 = scalar_lea.vmem %s133, 64
    %v5173 = vld [vmem:[%s5172] sm:$0xff]
    %v5174 = vld [vmem:[%s5172 + $0x8] sm:$0xff]
    %v5175 = vld [vmem:[%s5172 + $0x10] sm:$0xff]
    %v5176 = vld [vmem:[%s5172 + $0x18] sm:$0xff]
    %v5177 = vld [vmem:[%s5172 + $0x20] sm:$0xff]
    %v5178 = vld [vmem:[%s5172 + $0x28] sm:$0xff]
    %v5179 = vld [vmem:[%s5172 + $0x30] sm:$0xff]
    %v5180 = vld [vmem:[%s5172 + $0x38] sm:$0xff]
    %v5181 = vpack.c.bf16 %v5174, %v5173
    %v5182 = vpack.c.bf16 %v5176, %v5175
    %v5183 = vpack.c.bf16 %v5178, %v5177
    %v5184 = vpack.c.bf16 %v5180, %v5179
    %s5185 = scalar_lea.vmem %s135, 1
    %v5186 = vld [vmem:[%s5185] sm:$0x1]
    %v5188 = vperm.slane %v5186, 0
    %5190 = vmatpush.bf16.msra.mxu0 0
    %5191 = vmatpush.bf16.msra.mxu0 0
    %5192 = vmatpush.bf16.msra.mxu0 0
    %5193 = vmatpush.bf16.msra.mxu0 0
    %5194 = vmatpush.bf16.msra.mxu0 %v5184
    %5195 = vmatpush.bf16.msra.mxu0 %v5183
    %5196 = vmatpush.bf16.msra.mxu0 %v5182
    %5197 = vmatpush.bf16.msra.mxu0 %v5181
    %5198 = vmatmul.bf16.gmra.mxu0 %v4984
    %v5199 = vpop.f32.mrf.mxu0
    %v5200 = vadd.f32 %v5188, %v5199
    %v5201 = vpop.f32.mrf.mxu0
    %v5202 = vadd.f32 %v5188, %v5201
    %5203 = vdwg.mxu0
    %s5204 = scalar_lea.vmem %s137, 64
    %v5205 = vld [vmem:[%s5204] sm:$0xff]
    %v5206 = vld [vmem:[%s5204 + $0x8] sm:$0xff]
    %v5207 = vld [vmem:[%s5204 + $0x10] sm:$0xff]
    %v5208 = vld [vmem:[%s5204 + $0x18] sm:$0xff]
    %v5209 = vld [vmem:[%s5204 + $0x20] sm:$0xff]
    %v5210 = vld [vmem:[%s5204 + $0x28] sm:$0xff]
    %v5211 = vld [vmem:[%s5204 + $0x30] sm:$0xff]
    %v5212 = vld [vmem:[%s5204 + $0x38] sm:$0xff]
    %v5213 = vpack.c.bf16 %v5206, %v5205
    %v5214 = vpack.c.bf16 %v5208, %v5207
    %v5215 = vpack.c.bf16 %v5210, %v5209
    %v5216 = vpack.c.bf16 %v5212, %v5211
    %s5217 = scalar_lea.vmem %s139, 1
    %v5218 = vld [vmem:[%s5217] sm:$0x1]
    %v5220 = vperm.slane %v5218, 0
    %5222 = vmatpush.bf16.msra.mxu0 0
    %5223 = vmatpush.bf16.msra.mxu0 0
    %5224 = vmatpush.bf16.msra.mxu0 0
    %5225 = vmatpush.bf16.msra.mxu0 0
    %5226 = vmatpush.bf16.msra.mxu0 %v5216
    %5227 = vmatpush.bf16.msra.mxu0 %v5215
    %5228 = vmatpush.bf16.msra.mxu0 %v5214
    %5229 = vmatpush.bf16.msra.mxu0 %v5213
    %5230 = vmatmul.bf16.gmra.mxu0 %v2939
    %v5231 = vpop.f32.mrf.mxu0
    %v5232 = vadd.f32 %v5220, %v5231
    %v5233 = vpop.f32.mrf.mxu0
    %v5234 = vadd.f32 %v5220, %v5233
    %5235 = vdwg.mxu0
    %s5236 = scalar_lea.vmem %s141, 64
    %v5237 = vld [vmem:[%s5236] sm:$0xff]
    %v5238 = vld [vmem:[%s5236 + $0x8] sm:$0xff]
    %v5239 = vld [vmem:[%s5236 + $0x10] sm:$0xff]
    %v5240 = vld [vmem:[%s5236 + $0x18] sm:$0xff]
    %v5241 = vld [vmem:[%s5236 + $0x20] sm:$0xff]
    %v5242 = vld [vmem:[%s5236 + $0x28] sm:$0xff]
    %v5243 = vld [vmem:[%s5236 + $0x30] sm:$0xff]
    %v5244 = vld [vmem:[%s5236 + $0x38] sm:$0xff]
    %v5245 = vpack.c.bf16 %v5238, %v5237
    %v5246 = vpack.c.bf16 %v5240, %v5239
    %v5247 = vpack.c.bf16 %v5242, %v5241
    %v5248 = vpack.c.bf16 %v5244, %v5243
    %s5249 = scalar_lea.vmem %s143, 1
    %v5250 = vld [vmem:[%s5249] sm:$0x1]
    %v5252 = vperm.slane %v5250, 0
    %5254 = vmatpush.bf16.msra.mxu0 0
    %5255 = vmatpush.bf16.msra.mxu0 0
    %5256 = vmatpush.bf16.msra.mxu0 0
    %5257 = vmatpush.bf16.msra.mxu0 0
    %5258 = vmatpush.bf16.msra.mxu0 %v5248
    %5259 = vmatpush.bf16.msra.mxu0 %v5247
    %5260 = vmatpush.bf16.msra.mxu0 %v5246
    %5261 = vmatpush.bf16.msra.mxu0 %v5245
    %5262 = vmatmul.bf16.gmra.mxu0 %v2939
    %v5263 = vpop.f32.mrf.mxu0
    %v5264 = vadd.f32 %v5252, %v5263
    %v5265 = vpop.f32.mrf.mxu0
    %v5266 = vadd.f32 %v5252, %v5265
    %5267 = vdwg.mxu0
    %v5268 = vpack.c.bf16 %v5200, %v5200
    %v5269 = vpack.c.bf16 %v5202, %v5202
    %v5270 = vpack.c.bf16 %v5232, %v5232
    %v5271 = vpack.c.bf16 %v5234, %v5234
    %v5273 = vsel %vm2008, %v5268, 0
    %v5276 = vsel %vm2008, %v5270, 0
    %5278 = vmatpush.bf16.xpose.msra.mxu0 0
    %5279 = vmatpush.bf16.xpose.msra.mxu0 0
    %5280 = vmatpush.bf16.xpose.msra.mxu0 0
    %5281 = vmatpush.bf16.xpose.msra.mxu0 0
    %5282 = vmatpush.bf16.xpose.msra.mxu0 0
    %5283 = vmatpush.bf16.xpose.msra.mxu0 0
    %5284 = vmatpush.bf16.xpose.msra.mxu0 0
    %5285 = vmatpush.bf16.xpose.msra.mxu0 %v5276
    %5286 = vmatmul.bf16.gmra.mxu0 %v5273
    %v5287 = vpop.f32.mrf.mxu0
    %v5288 = vadd.f32 0.0, %v5287
    %v5289 = vpop.f32.mrf.mxu0
    %5290 = vdwg.mxu0
    %v5292 = vsel %vm2008, %v5269, 0
    %v5295 = vsel %vm2008, %v5271, 0
    %5297 = vmatpush.bf16.xpose.msra.mxu0 0
    %5298 = vmatpush.bf16.xpose.msra.mxu0 0
    %5299 = vmatpush.bf16.xpose.msra.mxu0 0
    %5300 = vmatpush.bf16.xpose.msra.mxu0 0
    %5301 = vmatpush.bf16.xpose.msra.mxu0 0
    %5302 = vmatpush.bf16.xpose.msra.mxu0 0
    %5303 = vmatpush.bf16.xpose.msra.mxu0 0
    %5304 = vmatpush.bf16.xpose.msra.mxu0 %v5295
    %5305 = vmatmul.bf16.gmra.mxu0 %v5292
    %v5306 = vpop.f32.mrf.mxu0
    %v5307 = vadd.f32 0.0, %v5306
    %v5308 = vpop.f32.mrf.mxu0
    %5309 = vdwg.mxu0
    %v5310 = vmul.f32 %v5288, 0.25
    %v5311 = vmul.f32 %v5307, 0.25
    %v5312 = vsel %vm893, %v5310, -inf
    %5313 = vmax.xlane.f32.xlu0 %v5312
    %v5314 = vpop.xlane.xlu0 %5313
    %v5315 = vsel %vm893, %v5311, -inf
    %5316 = vmax.xlane.f32.xlu0 %v5315
    %v5317 = vpop.xlane.xlu0 %5316
    %v5318 = vsub.f32 %v5310, %v5314
    %v5319 = vsub.f32 %v5311, %v5317
    %v5320 = vmul.f32 %v5318, 1.442695
    %v5321 = vpow.pop %v5320
    %v5322 = vmul.f32 %v5319, 1.442695
    %v5323 = vpow.pop %v5322
    %v5324 = vsel %vm893, %v5321, 0.0
    %5325 = vadd.xlane.f32.xlu0 %v5324
    %v5326 = vpop.xlane.xlu0 %5325
    %v5327 = vsel %vm893, %v5323, 0.0
    %5328 = vadd.xlane.f32.xlu0 %v5327
    %v5329 = vpop.xlane.xlu0 %5328
    %v5330 = vrcp.pop %v5326
    %v5331 = vrcp.pop %v5329
    %v5332 = vmul.f32 %v5321, %v5330
    %v5333 = vmul.f32 %v5323, %v5331
    %v5334 = vpack.c.bf16 %v5332, %v5332
    %v5335 = vpack.c.bf16 %v5333, %v5333
    %v5336 = vpack.c.bf16 %v5264, %v5264
    %v5337 = vpack.c.bf16 %v5266, %v5266
    %v5339 = vsel %vm893, %v5334, 0
    %v5342 = vsel %vm711, %v5336, 0
    %5344 = vmatpush.bf16.msra.mxu0 0
    %5345 = vmatpush.bf16.msra.mxu0 0
    %5346 = vmatpush.bf16.msra.mxu0 0
    %5347 = vmatpush.bf16.msra.mxu0 0
    %5348 = vmatpush.bf16.msra.mxu0 0
    %5349 = vmatpush.bf16.msra.mxu0 0
    %5350 = vmatpush.bf16.msra.mxu0 0
    %5351 = vmatpush.bf16.msra.mxu0 %v5342
    %5352 = vmatmul.bf16.gmra.mxu0 %v5339
    %v5353 = vpop.f32.mrf.mxu0
    %v5354 = vadd.f32 0.0, %v5353
    %v5355 = vpop.f32.mrf.mxu0
    %5356 = vdwg.mxu0
    %v5358 = vsel %vm893, %v5335, 0
    %v5361 = vsel %vm711, %v5337, 0
    %5363 = vmatpush.bf16.msra.mxu0 0
    %5364 = vmatpush.bf16.msra.mxu0 0
    %5365 = vmatpush.bf16.msra.mxu0 0
    %5366 = vmatpush.bf16.msra.mxu0 0
    %5367 = vmatpush.bf16.msra.mxu0 0
    %5368 = vmatpush.bf16.msra.mxu0 0
    %5369 = vmatpush.bf16.msra.mxu0 0
    %5370 = vmatpush.bf16.msra.mxu0 %v5361
    %5371 = vmatmul.bf16.gmra.mxu0 %v5358
    %v5372 = vpop.f32.mrf.mxu0
    %v5373 = vadd.f32 0.0, %v5372
    %v5374 = vpop.f32.mrf.mxu0
    %5375 = vdwg.mxu0
    %s5376 = scalar_lea.vmem %s145, 16
    %v5377 = vld [vmem:[%s5376] sm:$0xff]
    %v5378 = vld [vmem:[%s5376 + $0x8] sm:$0xff]
    %v5379 = vpack.c.bf16 %v5373, %v5354
    %v5380 = vpack.c.bf16 %v5378, %v5377
    %v5382 = vsel %vm2008, %v5379, 0
    %5384 = vmatpush.bf16.msra.mxu0 0
    %5385 = vmatpush.bf16.msra.mxu0 0
    %5386 = vmatpush.bf16.msra.mxu0 0
    %5387 = vmatpush.bf16.msra.mxu0 0
    %5388 = vmatpush.bf16.msra.mxu0 0
    %5389 = vmatpush.bf16.msra.mxu0 0
    %5390 = vmatpush.bf16.msra.mxu0 0
    %5391 = vmatpush.bf16.msra.mxu0 %v5380
    %5392 = vmatmul.bf16.gmra.mxu0 %v5382
    %v5393 = vpop.f32.mrf.mxu0
    %v5394 = vadd.f32 0.0, %v5393
    %v5395 = vpop.f32.mrf.mxu0
    %v5396 = vadd.f32 0.0, %v5395
    %5397 = vdwg.mxu0
    %v5399 = vsel %vm2008, %v5170, 0
    %5401 = vmatpush.bf16.msra.mxu0 0
    %5402 = vmatpush.bf16.msra.mxu0 0
    %5403 = vmatpush.bf16.msra.mxu0 0
    %5404 = vmatpush.bf16.msra.mxu0 0
    %5405 = vmatpush.bf16.msra.mxu0 0
    %5406 = vmatpush.bf16.msra.mxu0 0
    %5407 = vmatpush.bf16.msra.mxu0 0
    %5408 = vmatpush.bf16.msra.mxu0 %v5171
    %5409 = vmatmul.bf16.gmra.mxu0 %v5399
    %v5410 = vpop.f32.mrf.mxu0
    %v5411 = vadd.f32 %v5394, %v5410
    %v5412 = vpop.f32.mrf.mxu0
    %v5413 = vadd.f32 %v5396, %v5412
    %5414 = vdwg.mxu0
    %s5415 = scalar_lea.vmem %s133, 128
    %v5416 = vld [vmem:[%s5415] sm:$0xff]
    %v5417 = vld [vmem:[%s5415 + $0x8] sm:$0xff]
    %v5418 = vld [vmem:[%s5415 + $0x10] sm:$0xff]
    %v5419 = vld [vmem:[%s5415 + $0x18] sm:$0xff]
    %v5420 = vld [vmem:[%s5415 + $0x20] sm:$0xff]
    %v5421 = vld [vmem:[%s5415 + $0x28] sm:$0xff]
    %v5422 = vld [vmem:[%s5415 + $0x30] sm:$0xff]
    %v5423 = vld [vmem:[%s5415 + $0x38] sm:$0xff]
    %v5424 = vpack.c.bf16 %v5417, %v5416
    %v5425 = vpack.c.bf16 %v5419, %v5418
    %v5426 = vpack.c.bf16 %v5421, %v5420
    %v5427 = vpack.c.bf16 %v5423, %v5422
    %s5428 = scalar_lea.vmem %s135, 2
    %v5429 = vld [vmem:[%s5428] sm:$0x1]
    %v5431 = vperm.slane %v5429, 0
    %5433 = vmatpush.bf16.msra.mxu0 0
    %5434 = vmatpush.bf16.msra.mxu0 0
    %5435 = vmatpush.bf16.msra.mxu0 0
    %5436 = vmatpush.bf16.msra.mxu0 0
    %5437 = vmatpush.bf16.msra.mxu0 %v5427
    %5438 = vmatpush.bf16.msra.mxu0 %v5426
    %5439 = vmatpush.bf16.msra.mxu0 %v5425
    %5440 = vmatpush.bf16.msra.mxu0 %v5424
    %5441 = vmatmul.bf16.gmra.mxu0 %v4984
    %v5442 = vpop.f32.mrf.mxu0
    %v5443 = vadd.f32 %v5431, %v5442
    %v5444 = vpop.f32.mrf.mxu0
    %v5445 = vadd.f32 %v5431, %v5444
    %5446 = vdwg.mxu0
    %s5447 = scalar_lea.vmem %s137, 128
    %v5448 = vld [vmem:[%s5447] sm:$0xff]
    %v5449 = vld [vmem:[%s5447 + $0x8] sm:$0xff]
    %v5450 = vld [vmem:[%s5447 + $0x10] sm:$0xff]
    %v5451 = vld [vmem:[%s5447 + $0x18] sm:$0xff]
    %v5452 = vld [vmem:[%s5447 + $0x20] sm:$0xff]
    %v5453 = vld [vmem:[%s5447 + $0x28] sm:$0xff]
    %v5454 = vld [vmem:[%s5447 + $0x30] sm:$0xff]
    %v5455 = vld [vmem:[%s5447 + $0x38] sm:$0xff]
    %v5456 = vpack.c.bf16 %v5449, %v5448
    %v5457 = vpack.c.bf16 %v5451, %v5450
    %v5458 = vpack.c.bf16 %v5453, %v5452
    %v5459 = vpack.c.bf16 %v5455, %v5454
    %s5460 = scalar_lea.vmem %s139, 2
    %v5461 = vld [vmem:[%s5460] sm:$0x1]
    %v5463 = vperm.slane %v5461, 0
    %5465 = vmatpush.bf16.msra.mxu0 0
    %5466 = vmatpush.bf16.msra.mxu0 0
    %5467 = vmatpush.bf16.msra.mxu0 0
    %5468 = vmatpush.bf16.msra.mxu0 0
    %5469 = vmatpush.bf16.msra.mxu0 %v5459
    %5470 = vmatpush.bf16.msra.mxu0 %v5458
    %5471 = vmatpush.bf16.msra.mxu0 %v5457
    %5472 = vmatpush.bf16.msra.mxu0 %v5456
    %5473 = vmatmul.bf16.gmra.mxu0 %v2939
    %v5474 = vpop.f32.mrf.mxu0
    %v5475 = vadd.f32 %v5463, %v5474
    %v5476 = vpop.f32.mrf.mxu0
    %v5477 = vadd.f32 %v5463, %v5476
    %5478 = vdwg.mxu0
    %s5479 = scalar_lea.vmem %s141, 128
    %v5480 = vld [vmem:[%s5479] sm:$0xff]
    %v5481 = vld [vmem:[%s5479 + $0x8] sm:$0xff]
    %v5482 = vld [vmem:[%s5479 + $0x10] sm:$0xff]
    %v5483 = vld [vmem:[%s5479 + $0x18] sm:$0xff]
    %v5484 = vld [vmem:[%s5479 + $0x20] sm:$0xff]
    %v5485 = vld [vmem:[%s5479 + $0x28] sm:$0xff]
    %v5486 = vld [vmem:[%s5479 + $0x30] sm:$0xff]
    %v5487 = vld [vmem:[%s5479 + $0x38] sm:$0xff]
    %v5488 = vpack.c.bf16 %v5481, %v5480
    %v5489 = vpack.c.bf16 %v5483, %v5482
    %v5490 = vpack.c.bf16 %v5485, %v5484
    %v5491 = vpack.c.bf16 %v5487, %v5486
    %s5492 = scalar_lea.vmem %s143, 2
    %v5493 = vld [vmem:[%s5492] sm:$0x1]
    %v5495 = vperm.slane %v5493, 0
    %5497 = vmatpush.bf16.msra.mxu0 0
    %5498 = vmatpush.bf16.msra.mxu0 0
    %5499 = vmatpush.bf16.msra.mxu0 0
    %5500 = vmatpush.bf16.msra.mxu0 0
    %5501 = vmatpush.bf16.msra.mxu0 %v5491
    %5502 = vmatpush.bf16.msra.mxu0 %v5490
    %5503 = vmatpush.bf16.msra.mxu0 %v5489
    %5504 = vmatpush.bf16.msra.mxu0 %v5488
    %5505 = vmatmul.bf16.gmra.mxu0 %v2939
    %v5506 = vpop.f32.mrf.mxu0
    %v5507 = vadd.f32 %v5495, %v5506
    %v5508 = vpop.f32.mrf.mxu0
    %v5509 = vadd.f32 %v5495, %v5508
    %5510 = vdwg.mxu0
    %v5511 = vpack.c.bf16 %v5443, %v5443
    %v5512 = vpack.c.bf16 %v5445, %v5445
    %v5513 = vpack.c.bf16 %v5475, %v5475
    %v5514 = vpack.c.bf16 %v5477, %v5477
    %v5516 = vsel %vm2008, %v5511, 0
    %v5519 = vsel %vm2008, %v5513, 0
    %5521 = vmatpush.bf16.xpose.msra.mxu0 0
    %5522 = vmatpush.bf16.xpose.msra.mxu0 0
    %5523 = vmatpush.bf16.xpose.msra.mxu0 0
    %5524 = vmatpush.bf16.xpose.msra.mxu0 0
    %5525 = vmatpush.bf16.xpose.msra.mxu0 0
    %5526 = vmatpush.bf16.xpose.msra.mxu0 0
    %5527 = vmatpush.bf16.xpose.msra.mxu0 0
    %5528 = vmatpush.bf16.xpose.msra.mxu0 %v5519
    %5529 = vmatmul.bf16.gmra.mxu0 %v5516
    %v5530 = vpop.f32.mrf.mxu0
    %v5531 = vadd.f32 0.0, %v5530
    %v5532 = vpop.f32.mrf.mxu0
    %5533 = vdwg.mxu0
    %v5535 = vsel %vm2008, %v5512, 0
    %v5538 = vsel %vm2008, %v5514, 0
    %5540 = vmatpush.bf16.xpose.msra.mxu0 0
    %5541 = vmatpush.bf16.xpose.msra.mxu0 0
    %5542 = vmatpush.bf16.xpose.msra.mxu0 0
    %5543 = vmatpush.bf16.xpose.msra.mxu0 0
    %5544 = vmatpush.bf16.xpose.msra.mxu0 0
    %5545 = vmatpush.bf16.xpose.msra.mxu0 0
    %5546 = vmatpush.bf16.xpose.msra.mxu0 0
    %5547 = vmatpush.bf16.xpose.msra.mxu0 %v5538
    %5548 = vmatmul.bf16.gmra.mxu0 %v5535
    %v5549 = vpop.f32.mrf.mxu0
    %v5550 = vadd.f32 0.0, %v5549
    %v5551 = vpop.f32.mrf.mxu0
    %5552 = vdwg.mxu0
    %v5553 = vmul.f32 %v5531, 0.25
    %v5554 = vmul.f32 %v5550, 0.25
    %v5555 = vsel %vm893, %v5553, -inf
    %5556 = vmax.xlane.f32.xlu0 %v5555
    %v5557 = vpop.xlane.xlu0 %5556
    %v5558 = vsel %vm893, %v5554, -inf
    %5559 = vmax.xlane.f32.xlu0 %v5558
    %v5560 = vpop.xlane.xlu0 %5559
    %v5561 = vsub.f32 %v5553, %v5557
    %v5562 = vsub.f32 %v5554, %v5560
    %v5563 = vmul.f32 %v5561, 1.442695
    %v5564 = vpow.pop %v5563
    %v5565 = vmul.f32 %v5562, 1.442695
    %v5566 = vpow.pop %v5565
    %v5567 = vsel %vm893, %v5564, 0.0
    %5568 = vadd.xlane.f32.xlu0 %v5567
    %v5569 = vpop.xlane.xlu0 %5568
    %v5570 = vsel %vm893, %v5566, 0.0
    %5571 = vadd.xlane.f32.xlu0 %v5570
    %v5572 = vpop.xlane.xlu0 %5571
    %v5573 = vrcp.pop %v5569
    %v5574 = vrcp.pop %v5572
    %v5575 = vmul.f32 %v5564, %v5573
    %v5576 = vmul.f32 %v5566, %v5574
    %v5577 = vpack.c.bf16 %v5575, %v5575
    %v5578 = vpack.c.bf16 %v5576, %v5576
    %v5579 = vpack.c.bf16 %v5507, %v5507
    %v5580 = vpack.c.bf16 %v5509, %v5509
    %v5582 = vsel %vm893, %v5577, 0
    %v5585 = vsel %vm711, %v5579, 0
    %5587 = vmatpush.bf16.msra.mxu0 0
    %5588 = vmatpush.bf16.msra.mxu0 0
    %5589 = vmatpush.bf16.msra.mxu0 0
    %5590 = vmatpush.bf16.msra.mxu0 0
    %5591 = vmatpush.bf16.msra.mxu0 0
    %5592 = vmatpush.bf16.msra.mxu0 0
    %5593 = vmatpush.bf16.msra.mxu0 0
    %5594 = vmatpush.bf16.msra.mxu0 %v5585
    %5595 = vmatmul.bf16.gmra.mxu0 %v5582
    %v5596 = vpop.f32.mrf.mxu0
    %v5597 = vadd.f32 0.0, %v5596
    %v5598 = vpop.f32.mrf.mxu0
    %5599 = vdwg.mxu0
    %v5601 = vsel %vm893, %v5578, 0
    %v5604 = vsel %vm711, %v5580, 0
    %5606 = vmatpush.bf16.msra.mxu0 0
    %5607 = vmatpush.bf16.msra.mxu0 0
    %5608 = vmatpush.bf16.msra.mxu0 0
    %5609 = vmatpush.bf16.msra.mxu0 0
    %5610 = vmatpush.bf16.msra.mxu0 0
    %5611 = vmatpush.bf16.msra.mxu0 0
    %5612 = vmatpush.bf16.msra.mxu0 0
    %5613 = vmatpush.bf16.msra.mxu0 %v5604
    %5614 = vmatmul.bf16.gmra.mxu0 %v5601
    %v5615 = vpop.f32.mrf.mxu0
    %v5616 = vadd.f32 0.0, %v5615
    %v5617 = vpop.f32.mrf.mxu0
    %5618 = vdwg.mxu0
    %s5619 = scalar_lea.vmem %s145, 32
    %v5620 = vld [vmem:[%s5619] sm:$0xff]
    %v5621 = vld [vmem:[%s5619 + $0x8] sm:$0xff]
    %v5622 = vpack.c.bf16 %v5616, %v5597
    %v5623 = vpack.c.bf16 %v5621, %v5620
    %v5625 = vsel %vm2008, %v5622, 0
    %5627 = vmatpush.bf16.msra.mxu0 0
    %5628 = vmatpush.bf16.msra.mxu0 0
    %5629 = vmatpush.bf16.msra.mxu0 0
    %5630 = vmatpush.bf16.msra.mxu0 0
    %5631 = vmatpush.bf16.msra.mxu0 0
    %5632 = vmatpush.bf16.msra.mxu0 0
    %5633 = vmatpush.bf16.msra.mxu0 0
    %5634 = vmatpush.bf16.msra.mxu0 %v5623
    %5635 = vmatmul.bf16.gmra.mxu0 %v5625
    %v5636 = vpop.f32.mrf.mxu0
    %v5637 = vadd.f32 0.0, %v5636
    %v5638 = vpop.f32.mrf.mxu0
    %v5639 = vadd.f32 0.0, %v5638
    %5640 = vdwg.mxu0
    %v5641 = vadd.f32 %v5411, %v5637
    %v5642 = vadd.f32 %v5413, %v5639
    %s5643 = scalar_lea.vmem %s133, 192
    %v5644 = vld [vmem:[%s5643] sm:$0xff]
    %v5645 = vld [vmem:[%s5643 + $0x8] sm:$0xff]
    %v5646 = vld [vmem:[%s5643 + $0x10] sm:$0xff]
    %v5647 = vld [vmem:[%s5643 + $0x18] sm:$0xff]
    %v5648 = vld [vmem:[%s5643 + $0x20] sm:$0xff]
    %v5649 = vld [vmem:[%s5643 + $0x28] sm:$0xff]
    %v5650 = vld [vmem:[%s5643 + $0x30] sm:$0xff]
    %v5651 = vld [vmem:[%s5643 + $0x38] sm:$0xff]
    %v5652 = vpack.c.bf16 %v5645, %v5644
    %v5653 = vpack.c.bf16 %v5647, %v5646
    %v5654 = vpack.c.bf16 %v5649, %v5648
    %v5655 = vpack.c.bf16 %v5651, %v5650
    %s5656 = scalar_lea.vmem %s135, 3
    %v5657 = vld [vmem:[%s5656] sm:$0x1]
    %v5659 = vperm.slane %v5657, 0
    %5661 = vmatpush.bf16.msra.mxu0 0
    %5662 = vmatpush.bf16.msra.mxu0 0
    %5663 = vmatpush.bf16.msra.mxu0 0
    %5664 = vmatpush.bf16.msra.mxu0 0
    %5665 = vmatpush.bf16.msra.mxu0 %v5655
    %5666 = vmatpush.bf16.msra.mxu0 %v5654
    %5667 = vmatpush.bf16.msra.mxu0 %v5653
    %5668 = vmatpush.bf16.msra.mxu0 %v5652
    %5669 = vmatmul.bf16.gmra.mxu0 %v4984
    %v5670 = vpop.f32.mrf.mxu0
    %v5671 = vadd.f32 %v5659, %v5670
    %v5672 = vpop.f32.mrf.mxu0
    %v5673 = vadd.f32 %v5659, %v5672
    %5674 = vdwg.mxu0
    %s5675 = scalar_lea.vmem %s137, 192
    %v5676 = vld [vmem:[%s5675] sm:$0xff]
    %v5677 = vld [vmem:[%s5675 + $0x8] sm:$0xff]
    %v5678 = vld [vmem:[%s5675 + $0x10] sm:$0xff]
    %v5679 = vld [vmem:[%s5675 + $0x18] sm:$0xff]
    %v5680 = vld [vmem:[%s5675 + $0x20] sm:$0xff]
    %v5681 = vld [vmem:[%s5675 + $0x28] sm:$0xff]
    %v5682 = vld [vmem:[%s5675 + $0x30] sm:$0xff]
    %v5683 = vld [vmem:[%s5675 + $0x38] sm:$0xff]
    %v5684 = vpack.c.bf16 %v5677, %v5676
    %v5685 = vpack.c.bf16 %v5679, %v5678
    %v5686 = vpack.c.bf16 %v5681, %v5680
    %v5687 = vpack.c.bf16 %v5683, %v5682
    %s5688 = scalar_lea.vmem %s139, 3
    %v5689 = vld [vmem:[%s5688] sm:$0x1]
    %v5691 = vperm.slane %v5689, 0
    %5693 = vmatpush.bf16.msra.mxu0 0
    %5694 = vmatpush.bf16.msra.mxu0 0
    %5695 = vmatpush.bf16.msra.mxu0 0
    %5696 = vmatpush.bf16.msra.mxu0 0
    %5697 = vmatpush.bf16.msra.mxu0 %v5687
    %5698 = vmatpush.bf16.msra.mxu0 %v5686
    %5699 = vmatpush.bf16.msra.mxu0 %v5685
    %5700 = vmatpush.bf16.msra.mxu0 %v5684
    %5701 = vmatmul.bf16.gmra.mxu0 %v2939
    %v5702 = vpop.f32.mrf.mxu0
    %v5703 = vadd.f32 %v5691, %v5702
    %v5704 = vpop.f32.mrf.mxu0
    %v5705 = vadd.f32 %v5691, %v5704
    %5706 = vdwg.mxu0
    %s5707 = scalar_lea.vmem %s141, 192
    %v5708 = vld [vmem:[%s5707] sm:$0xff]
    %v5709 = vld [vmem:[%s5707 + $0x8] sm:$0xff]
    %v5710 = vld [vmem:[%s5707 + $0x10] sm:$0xff]
    %v5711 = vld [vmem:[%s5707 + $0x18] sm:$0xff]
    %v5712 = vld [vmem:[%s5707 + $0x20] sm:$0xff]
    %v5713 = vld [vmem:[%s5707 + $0x28] sm:$0xff]
    %v5714 = vld [vmem:[%s5707 + $0x30] sm:$0xff]
    %v5715 = vld [vmem:[%s5707 + $0x38] sm:$0xff]
    %v5716 = vpack.c.bf16 %v5709, %v5708
    %v5717 = vpack.c.bf16 %v5711, %v5710
    %v5718 = vpack.c.bf16 %v5713, %v5712
    %v5719 = vpack.c.bf16 %v5715, %v5714
    %s5720 = scalar_lea.vmem %s143, 3
    %v5721 = vld [vmem:[%s5720] sm:$0x1]
    %v5723 = vperm.slane %v5721, 0
    %5725 = vmatpush.bf16.msra.mxu0 0
    %5726 = vmatpush.bf16.msra.mxu0 0
    %5727 = vmatpush.bf16.msra.mxu0 0
    %5728 = vmatpush.bf16.msra.mxu0 0
    %5729 = vmatpush.bf16.msra.mxu0 %v5719
    %5730 = vmatpush.bf16.msra.mxu0 %v5718
    %5731 = vmatpush.bf16.msra.mxu0 %v5717
    %5732 = vmatpush.bf16.msra.mxu0 %v5716
    %5733 = vmatmul.bf16.gmra.mxu0 %v2939
    %v5734 = vpop.f32.mrf.mxu0
    %v5735 = vadd.f32 %v5723, %v5734
    %v5736 = vpop.f32.mrf.mxu0
    %v5737 = vadd.f32 %v5723, %v5736
    %5738 = vdwg.mxu0
    %v5739 = vpack.c.bf16 %v5671, %v5671
    %v5740 = vpack.c.bf16 %v5673, %v5673
    %v5741 = vpack.c.bf16 %v5703, %v5703
    %v5742 = vpack.c.bf16 %v5705, %v5705
    %v5744 = vsel %vm2008, %v5739, 0
    %v5747 = vsel %vm2008, %v5741, 0
    %5749 = vmatpush.bf16.xpose.msra.mxu0 0
    %5750 = vmatpush.bf16.xpose.msra.mxu0 0
    %5751 = vmatpush.bf16.xpose.msra.mxu0 0
    %5752 = vmatpush.bf16.xpose.msra.mxu0 0
    %5753 = vmatpush.bf16.xpose.msra.mxu0 0
    %5754 = vmatpush.bf16.xpose.msra.mxu0 0
    %5755 = vmatpush.bf16.xpose.msra.mxu0 0
    %5756 = vmatpush.bf16.xpose.msra.mxu0 %v5747
    %5757 = vmatmul.bf16.gmra.mxu0 %v5744
    %v5758 = vpop.f32.mrf.mxu0
    %v5759 = vadd.f32 0.0, %v5758
    %v5760 = vpop.f32.mrf.mxu0
    %5761 = vdwg.mxu0
    %v5763 = vsel %vm2008, %v5740, 0
    %v5766 = vsel %vm2008, %v5742, 0
    %5768 = vmatpush.bf16.xpose.msra.mxu0 0
    %5769 = vmatpush.bf16.xpose.msra.mxu0 0
    %5770 = vmatpush.bf16.xpose.msra.mxu0 0
    %5771 = vmatpush.bf16.xpose.msra.mxu0 0
    %5772 = vmatpush.bf16.xpose.msra.mxu0 0
    %5773 = vmatpush.bf16.xpose.msra.mxu0 0
    %5774 = vmatpush.bf16.xpose.msra.mxu0 0
    %5775 = vmatpush.bf16.xpose.msra.mxu0 %v5766
    %5776 = vmatmul.bf16.gmra.mxu0 %v5763
    %v5777 = vpop.f32.mrf.mxu0
    %v5778 = vadd.f32 0.0, %v5777
    %v5779 = vpop.f32.mrf.mxu0
    %5780 = vdwg.mxu0
    %v5781 = vmul.f32 %v5759, 0.25
    %v5782 = vmul.f32 %v5778, 0.25
    %v5783 = vsel %vm893, %v5781, -inf
    %5784 = vmax.xlane.f32.xlu0 %v5783
    %v5785 = vpop.xlane.xlu0 %5784
    %v5786 = vsel %vm893, %v5782, -inf
    %5787 = vmax.xlane.f32.xlu0 %v5786
    %v5788 = vpop.xlane.xlu0 %5787
    %v5789 = vsub.f32 %v5781, %v5785
    %v5790 = vsub.f32 %v5782, %v5788
    %v5791 = vmul.f32 %v5789, 1.442695
    %v5792 = vpow.pop %v5791
    %v5793 = vmul.f32 %v5790, 1.442695
    %v5794 = vpow.pop %v5793
    %v5795 = vsel %vm893, %v5792, 0.0
    %5796 = vadd.xlane.f32.xlu0 %v5795
    %v5797 = vpop.xlane.xlu0 %5796
    %v5798 = vsel %vm893, %v5794, 0.0
    %5799 = vadd.xlane.f32.xlu0 %v5798
    %v5800 = vpop.xlane.xlu0 %5799
    %v5801 = vrcp.pop %v5797
    %v5802 = vrcp.pop %v5800
    %v5803 = vmul.f32 %v5792, %v5801
    %v5804 = vmul.f32 %v5794, %v5802
    %v5805 = vpack.c.bf16 %v5803, %v5803
    %v5806 = vpack.c.bf16 %v5804, %v5804
    %v5807 = vpack.c.bf16 %v5735, %v5735
    %v5808 = vpack.c.bf16 %v5737, %v5737
    %v5810 = vsel %vm893, %v5805, 0
    %v5813 = vsel %vm711, %v5807, 0
    %5815 = vmatpush.bf16.msra.mxu0 0
    %5816 = vmatpush.bf16.msra.mxu0 0
    %5817 = vmatpush.bf16.msra.mxu0 0
    %5818 = vmatpush.bf16.msra.mxu0 0
    %5819 = vmatpush.bf16.msra.mxu0 0
    %5820 = vmatpush.bf16.msra.mxu0 0
    %5821 = vmatpush.bf16.msra.mxu0 0
    %5822 = vmatpush.bf16.msra.mxu0 %v5813
    %5823 = vmatmul.bf16.gmra.mxu0 %v5810
    %v5824 = vpop.f32.mrf.mxu0
    %v5825 = vadd.f32 0.0, %v5824
    %v5826 = vpop.f32.mrf.mxu0
    %5827 = vdwg.mxu0
    %v5829 = vsel %vm893, %v5806, 0
    %v5832 = vsel %vm711, %v5808, 0
    %5834 = vmatpush.bf16.msra.mxu0 0
    %5835 = vmatpush.bf16.msra.mxu0 0
    %5836 = vmatpush.bf16.msra.mxu0 0
    %5837 = vmatpush.bf16.msra.mxu0 0
    %5838 = vmatpush.bf16.msra.mxu0 0
    %5839 = vmatpush.bf16.msra.mxu0 0
    %5840 = vmatpush.bf16.msra.mxu0 0
    %5841 = vmatpush.bf16.msra.mxu0 %v5832
    %5842 = vmatmul.bf16.gmra.mxu0 %v5829
    %v5843 = vpop.f32.mrf.mxu0
    %v5844 = vadd.f32 0.0, %v5843
    %v5845 = vpop.f32.mrf.mxu0
    %5846 = vdwg.mxu0
    %s5847 = scalar_lea.vmem %s145, 48
    %v5848 = vld [vmem:[%s5847] sm:$0xff]
    %v5849 = vld [vmem:[%s5847 + $0x8] sm:$0xff]
    %v5850 = vpack.c.bf16 %v5844, %v5825
    %v5851 = vpack.c.bf16 %v5849, %v5848
    %v5853 = vsel %vm2008, %v5850, 0
    %5855 = vmatpush.bf16.msra.mxu0 0
    %5856 = vmatpush.bf16.msra.mxu0 0
    %5857 = vmatpush.bf16.msra.mxu0 0
    %5858 = vmatpush.bf16.msra.mxu0 0
    %5859 = vmatpush.bf16.msra.mxu0 0
    %5860 = vmatpush.bf16.msra.mxu0 0
    %5861 = vmatpush.bf16.msra.mxu0 0
    %5862 = vmatpush.bf16.msra.mxu0 %v5851
    %5863 = vmatmul.bf16.gmra.mxu0 %v5853
    %v5864 = vpop.f32.mrf.mxu0
    %v5865 = vadd.f32 0.0, %v5864
    %v5866 = vpop.f32.mrf.mxu0
    %v5867 = vadd.f32 0.0, %v5866
    %5868 = vdwg.mxu0
    %v5869 = vadd.f32 %v5641, %v5865
    %v5870 = vadd.f32 %v5642, %v5867
    %v5871 = vld [vmem:[#allocation31] sm:$0x1]
    %v5873 = vperm.slane %v5871, 0
    %v5875 = vadd.f32 %v5869, %v5873
    %v5876 = vadd.f32 %v5870, %v5873
    %v5877 = vadd.f32 %v4964, %v5875
    %v5878 = vadd.f32 %v4965, %v5876
    %v5879 = vsel %vm1781, %v5877, 0.0
    %5880 = vadd.xlane.f32.xlu0 %v5879
    %v5881 = vpop.xlane.xlu0 %5880
    %v5882 = vsel %vm1781, %v5878, 0.0
    %5883 = vadd.xlane.f32.xlu0 %v5882
    %v5884 = vpop.xlane.xlu0 %5883
    %v5885 = vmul.f32 %v5881, %v2836
    %v5886 = vmul.f32 %v5884, %v2836
    %v5887 = vsub.f32 %v5877, %v5885
    %v5888 = vsub.f32 %v5878, %v5886
    %v5889 = vmul.f32 %v5887, %v5887
    %v5890 = vmul.f32 %v5888, %v5888
    %v5891 = vsel %vm1781, %v5889, 0.0
    %5892 = vadd.xlane.f32.xlu0 %v5891
    %v5893 = vpop.xlane.xlu0 %5892
    %v5894 = vsel %vm1781, %v5890, 0.0
    %5895 = vadd.xlane.f32.xlu0 %v5894
    %v5896 = vpop.xlane.xlu0 %5895
    %v5897 = vmul.f32 %v5893, %v2836
    %v5898 = vmul.f32 %v5896, %v2836
    %v5899 = vadd.f32 %v5897, 1e-05
    %v5900 = vadd.f32 %v5898, 1e-05
    %v5901 = vrsqrt.pop %v5899
    %v5902 = vmul.f32 %v5901, %v5899
    %v5903 = vmul.f32 %v5902, %v5901
    %v5904 = vmul.f32 0.5, %v5903
    %v5905 = vsub.f32 1.5, %v5904
    %v5906 = vmul.f32 %v5901, %v5905
    %vm5907 = vweird.f32 %v5899
    %vm5908 = vweird.f32 %v5901
    %vm5909 = vmor %vm5907, %vm5908
    %v5910 = vsel %vm5909, %v5901, %v5906
    %v5911 = vrsqrt.pop %v5900
    %v5912 = vmul.f32 %v5911, %v5900
    %v5913 = vmul.f32 %v5912, %v5911
    %v5914 = vmul.f32 0.5, %v5913
    %v5915 = vsub.f32 1.5, %v5914
    %v5916 = vmul.f32 %v5911, %v5915
    %vm5917 = vweird.f32 %v5900
    %vm5918 = vweird.f32 %v5911
    %vm5919 = vmor %vm5917, %vm5918
    %v5920 = vsel %vm5919, %v5911, %v5916
    %v5921 = vmul.f32 %v5887, %v5910
    %v5922 = vmul.f32 %v5888, %v5920
    %v5923 = vld [vmem:[#allocation32] sm:$0x1]
    %v5925 = vperm.slane %v5923, 0
    %v5927 = vmul.f32 %v5921, %v5925
    %v5928 = vmul.f32 %v5922, %v5925
    %v5929 = vld [vmem:[#allocation34] sm:$0x1]
    %v5931 = vperm.slane %v5929, 0
    %v5933 = vadd.f32 %v5927, %v5931
    %v5934 = vadd.f32 %v5928, %v5931
    %v5935 = vld [vmem:[%s153] sm:$0xff]
    %v5936 = vld [vmem:[%s153 + $0x8] sm:$0xff]
    %v5937 = vld [vmem:[%s153 + $0x10] sm:$0xff]
    %v5938 = vld [vmem:[%s153 + $0x18] sm:$0xff]
    %v5939 = vld [vmem:[%s153 + $0x20] sm:$0xff]
    %v5940 = vld [vmem:[%s153 + $0x28] sm:$0xff]
    %v5941 = vld [vmem:[%s153 + $0x30] sm:$0xff]
    %v5942 = vld [vmem:[%s153 + $0x38] sm:$0xff]
    %v5943 = vpack.c.bf16 %v5934, %v5933
    %v5944 = vpack.c.bf16 %v5936, %v5935
    %v5945 = vpack.c.bf16 %v5938, %v5937
    %v5946 = vpack.c.bf16 %v5940, %v5939
    %v5947 = vpack.c.bf16 %v5942, %v5941
    %v5948 = vld [vmem:[#allocation35] sm:$0x1]
    %v5950 = vperm.slane %v5948, 0
    %v5953 = vsel %vm1781, %v5943, 0
    %5955 = vmatpush.bf16.msra.mxu0 0
    %5956 = vmatpush.bf16.msra.mxu0 0
    %5957 = vmatpush.bf16.msra.mxu0 0
    %5958 = vmatpush.bf16.msra.mxu0 0
    %5959 = vmatpush.bf16.msra.mxu0 %v5947
    %5960 = vmatpush.bf16.msra.mxu0 %v5946
    %5961 = vmatpush.bf16.msra.mxu0 %v5945
    %5962 = vmatpush.bf16.msra.mxu0 %v5944
    %5963 = vmatmul.bf16.gmra.mxu0 %v5953
    %v5964 = vpop.f32.mrf.mxu0
    %v5965 = vadd.f32 %v5950, %v5964
    %v5966 = vpop.f32.mrf.mxu0
    %v5967 = vadd.f32 %v5950, %v5966
    %5968 = vdwg.mxu0
    %v5969 = vmax.f32 %v5965, 0.0
    %v5970 = vmax.f32 %v5967, 0.0
    %v5971 = vld [vmem:[%s157] sm:$0xff]
    %v5972 = vld [vmem:[%s157 + $0x8] sm:$0xff]
    %v5973 = vld [vmem:[%s157 + $0x10] sm:$0xff]
    %v5974 = vld [vmem:[%s157 + $0x18] sm:$0xff]
    %v5975 = vld [vmem:[%s157 + $0x20] sm:$0xff]
    %v5976 = vld [vmem:[%s157 + $0x28] sm:$0xff]
    %v5977 = vld [vmem:[%s157 + $0x30] sm:$0xff]
    %v5978 = vld [vmem:[%s157 + $0x38] sm:$0xff]
    %v5979 = vld [vmem:[%s157 + $0x40] sm:$0xff]
    %v5980 = vld [vmem:[%s157 + $0x48] sm:$0xff]
    %v5981 = vld [vmem:[%s157 + $0x50] sm:$0xff]
    %v5982 = vld [vmem:[%s157 + $0x58] sm:$0xff]
    %v5983 = vld [vmem:[%s157 + $0x60] sm:$0xff]
    %v5984 = vld [vmem:[%s157 + $0x68] sm:$0xff]
    %v5985 = vld [vmem:[%s157 + $0x70] sm:$0xff]
    %v5986 = vld [vmem:[%s157 + $0x78] sm:$0xff]
    %v5987 = vpack.c.bf16 %v5970, %v5969
    %v5988 = vpack.c.bf16 %v5972, %v5971
    %v5989 = vpack.c.bf16 %v5974, %v5973
    %v5990 = vpack.c.bf16 %v5976, %v5975
    %v5991 = vpack.c.bf16 %v5978, %v5977
    %v5992 = vpack.c.bf16 %v5980, %v5979
    %v5993 = vpack.c.bf16 %v5982, %v5981
    %v5994 = vpack.c.bf16 %v5984, %v5983
    %v5995 = vpack.c.bf16 %v5986, %v5985
    %v5996 = vld [vmem:[#allocation37] sm:$0x1]
    %v5998 = vperm.slane %v5996, 0
    %6000 = vmatpush.bf16.msra.mxu0 %v5995
    %6001 = vmatpush.bf16.msra.mxu0 %v5994
    %6002 = vmatpush.bf16.msra.mxu0 %v5993
    %6003 = vmatpush.bf16.msra.mxu0 %v5992
    %6004 = vmatpush.bf16.msra.mxu0 %v5991
    %6005 = vmatpush.bf16.msra.mxu0 %v5990
    %6006 = vmatpush.bf16.msra.mxu0 %v5989
    %6007 = vmatpush.bf16.msra.mxu0 %v5988
    %6008 = vmatmul.bf16.gmra.mxu0 %v5987
    %v6009 = vpop.f32.mrf.mxu0
    %v6010 = vadd.f32 %v5998, %v6009
    %v6011 = vpop.f32.mrf.mxu0
    %v6012 = vadd.f32 %v5998, %v6011
    %6013 = vdwg.mxu0
    %v6014 = vadd.f32 %v5933, %v6010
    %v6015 = vadd.f32 %v5934, %v6012
    %v6016 = vsel %vm1781, %v6014, 0.0
    %6017 = vadd.xlane.f32.xlu0 %v6016
    %v6018 = vpop.xlane.xlu0 %6017
    %v6019 = vsel %vm1781, %v6015, 0.0
    %6020 = vadd.xlane.f32.xlu0 %v6019
    %v6021 = vpop.xlane.xlu0 %6020
    %v6022 = vmul.f32 %v6018, %v2836
    %v6023 = vmul.f32 %v6021, %v2836
    %v6024 = vsub.f32 %v6014, %v6022
    %v6025 = vsub.f32 %v6015, %v6023
    %v6026 = vmul.f32 %v6024, %v6024
    %v6027 = vmul.f32 %v6025, %v6025
    %v6028 = vsel %vm1781, %v6026, 0.0
    %6029 = vadd.xlane.f32.xlu0 %v6028
    %v6030 = vpop.xlane.xlu0 %6029
    %v6031 = vsel %vm1781, %v6027, 0.0
    %6032 = vadd.xlane.f32.xlu0 %v6031
    %v6033 = vpop.xlane.xlu0 %6032
    %v6034 = vmul.f32 %v6030, %v2836
    %v6035 = vmul.f32 %v6033, %v2836
    %v6036 = vadd.f32 %v6034, 1e-05
    %v6037 = vadd.f32 %v6035, 1e-05
    %v6038 = vrsqrt.pop %v6036
    %v6039 = vmul.f32 %v6038, %v6036
    %v6040 = vmul.f32 %v6039, %v6038
    %v6041 = vmul.f32 0.5, %v6040
    %v6042 = vsub.f32 1.5, %v6041
    %v6043 = vmul.f32 %v6038, %v6042
    %vm6044 = vweird.f32 %v6036
    %vm6045 = vweird.f32 %v6038
    %vm6046 = vmor %vm6044, %vm6045
    %v6047 = vsel %vm6046, %v6038, %v6043
    %v6048 = vrsqrt.pop %v6037
    %v6049 = vmul.f32 %v6048, %v6037
    %v6050 = vmul.f32 %v6049, %v6048
    %v6051 = vmul.f32 0.5, %v6050
    %v6052 = vsub.f32 1.5, %v6051
    %v6053 = vmul.f32 %v6048, %v6052
    %vm6054 = vweird.f32 %v6037
    %vm6055 = vweird.f32 %v6048
    %vm6056 = vmor %vm6054, %vm6055
    %v6057 = vsel %vm6056, %v6048, %v6053
    %v6058 = vmul.f32 %v6024, %v6047
    %v6059 = vmul.f32 %v6025, %v6057
    %v6060 = vld [vmem:[#allocation38] sm:$0x1]
    %v6062 = vperm.slane %v6060, 0
    %v6064 = vmul.f32 %v6058, %v6062
    %v6065 = vmul.f32 %v6059, %v6062
    %v6066 = vld [vmem:[#allocation40] sm:$0x1]
    %v6068 = vperm.slane %v6066, 0
    %v6070 = vadd.f32 %v6064, %v6068
    %v6071 = vadd.f32 %v6065, %v6068
    %v6072 = vld [vmem:[%s165] sm:$0xff]
    %v6073 = vld [vmem:[%s165 + $0x8] sm:$0xff]
    %v6074 = vld [vmem:[%s165 + $0x10] sm:$0xff]
    %v6075 = vld [vmem:[%s165 + $0x18] sm:$0xff]
    %v6076 = vld [vmem:[%s165 + $0x20] sm:$0xff]
    %v6077 = vld [vmem:[%s165 + $0x28] sm:$0xff]
    %v6078 = vld [vmem:[%s165 + $0x30] sm:$0xff]
    %v6079 = vld [vmem:[%s165 + $0x38] sm:$0xff]
    %v6080 = vpack.c.bf16 %v6071, %v6070
    %v6081 = vpack.c.bf16 %v6073, %v6072
    %v6082 = vpack.c.bf16 %v6075, %v6074
    %v6083 = vpack.c.bf16 %v6077, %v6076
    %v6084 = vpack.c.bf16 %v6079, %v6078
    %v6085 = vld [vmem:[#allocation41] sm:$0x1]
    %v6087 = vperm.slane %v6085, 0
    %v6090 = vsel %vm1781, %v6080, 0
    %6092 = vmatpush.bf16.msra.mxu0 0
    %6093 = vmatpush.bf16.msra.mxu0 0
    %6094 = vmatpush.bf16.msra.mxu0 0
    %6095 = vmatpush.bf16.msra.mxu0 0
    %6096 = vmatpush.bf16.msra.mxu0 %v6084
    %6097 = vmatpush.bf16.msra.mxu0 %v6083
    %6098 = vmatpush.bf16.msra.mxu0 %v6082
    %6099 = vmatpush.bf16.msra.mxu0 %v6081
    %6100 = vmatmul.bf16.gmra.mxu0 %v6090
    %v6101 = vpop.f32.mrf.mxu0
    %v6102 = vadd.f32 %v6087, %v6101
    %v6103 = vpop.f32.mrf.mxu0
    %v6104 = vadd.f32 %v6087, %v6103
    %6105 = vdwg.mxu0
    %6106 = vst [vmem:[#allocation43] sm:$0xff] %v6102
    %6107 = vst [vmem:[#allocation43 + $0x8] sm:$0xff] %v6104
    // Predicated region
    $region442: #{vqa_forward.1} parent=1 // pred_check
      _
    $region443: #{vqa_forward.1} parent=1 // pred_check_branch
      %6109 = sbr.rel (0) target = $region445
    $region444: #{vqa_forward.1} parent=1 // pred_region
      %6111 = vsyncadd [#allocation4], 0
      %s6112 = sshll.u32 [#allocation43], 4
      %s6113 = int_to_ptr.vmem [resolvable:$true] %s6112
      %s6114 = sshll.u32 %s169, 4
      %s6115 = int_to_ptr.hbm [resolvable:$true] %s6114
      %6120 = dma.vmem_to_hbm [thread:$0]  %s6113, 256, %s6115, [#allocation4], 128, 128, 8
    $region445: #{vqa_forward.1} parent=1 // pred_fallthru
      _
    // Predicated region
    $region446: #{vqa_forward.1} parent=1 // pred_check
      _
    $region447: #{vqa_forward.1} parent=1 // pred_check_branch
      %6122 = sbr.rel (0) target = $region449
    $region448: #{vqa_forward.1} parent=1 // pred_region
      %6124 = dma.done [#allocation4], 256
    $region449: #{vqa_forward.1} parent=1 // pred_fallthru
      _
    %6125 = vsyncpa [#allocation3], 1
    %6126 = vsyncpa [#allocation6], 1
    %6127 = vsyncpa [#allocation9], 1
    %6128 = vsyncpa [#allocation12], 1
    %6129 = vsyncpa [#allocation15], 1
    %6130 = vsyncpa [#allocation18], 1
    %6131 = vsyncpa [#allocation21], 1
    %6132 = vsyncpa [#allocation24], 1
    %6133 = vsyncpa [#allocation27], 1
    %6134 = vsyncpa [#allocation30], 1
    %6135 = vsyncpa [#allocation33], 1
    %6136 = vsyncpa [#allocation36], 1
    %6137 = vsyncpa [#allocation39], 1
    %6138 = vsyncpa [#allocation42], 1
    %6139 = vsyncpa [#allocation4], 1

</llo_original>
